<compile_context>
chip_gen: v5e
topology: v5e:2x2
jax: 0.10.0
libtpu: 0.0.40
codegen_flags: <defaults>
</compile_context>

<pallas_src>
import jax
import jax.numpy as jnp
from jax import lax
from jax.experimental import pallas as pl
from jax.experimental.pallas import tpu as pltpu

BN_EPS = 1e-5


def _bn_relu(acc, gamma, beta, m):
    """BatchNorm2d (training mode, biased variance) + ReLU.

    acc:   (M, C) f32 conv output (M = N*H*W)
    gamma, beta: (1, C)
    One pass over `acc`: per-channel sum and sum-of-squares, then a single
    fused multiply-add + max per element.  rsqrt runs on the EUP slot.
    """
    inv_m = 1.0 / m
    s1 = jnp.sum(acc, axis=0, keepdims=True)            # (1, C)
    s2 = jnp.sum(acc * acc, axis=0, keepdims=True)       # (1, C)
    mean = s1 * inv_m
    var = s2 * inv_m - mean * mean                       # biased variance
    scale = gamma * lax.rsqrt(var + BN_EPS)              # (1, C)
    shift = beta - mean * scale                          # (1, C)
    return jnp.maximum(acc * scale + shift, 0.0)


def _double_conv_kernel(x_ref, w1_ref, b1_ref, g1_ref, bt1_ref,
                        w2_ref, b2_ref, g2_ref, bt2_ref,
                        o_ref,
                        xpad1, xpad2, col1, col2):
    # x_ref : (N, H, W, Cin)          un-padded NHWC input (VMEM)
    # w1_ref: (9*Cin,  Cmid)          layer-1 weight, im2col layout
    # w2_ref: (9*Cmid, Cout)          layer-2 weight, im2col layout
    # b*/g*/bt* : (1, C)              conv bias, BN gamma, BN beta
    # o_ref : (N*H, W*Cout)           lane-dense output slab
    # xpad1 : (N, H+2, W+2, Cin)      scratch: zero-padded layer-1 input
    # xpad2 : (N, H+2, W+2, Cmid)     scratch: zero-padded layer-1 OUTPUT
    # col1  : (N*H*W, 9*Cin)          scratch: im2col patches, layer 1
    # col2  : (N*H*W, 9*Cmid)         scratch: im2col patches, layer 2
    N, Hp2, Wp2, Cin = xpad1.shape
    H, W = Hp2 - 2, Wp2 - 2
    Cmid = xpad2.shape[3]
    Cout = w2_ref.shape[1]
    M = N * H * W

    # ---------------- layer 1: pad -> im2col -> single K=9*Cin matmul -------
    xpad1[...] = jnp.zeros_like(xpad1)                  # in-kernel "same" pad
    xpad1[:, 1:H + 1, 1:W + 1, :] = x_ref[...]

    for kh in range(3):
        for kw in range(3):
            t = kh * 3 + kw
            col1[:, t * Cin:(t + 1) * Cin] = (
                xpad1[:, kh:kh + H, kw:kw + W, :].reshape(M, Cin))

    acc1 = jnp.dot(col1[...], w1_ref[...],
                   preferred_element_type=jnp.float32) + b1_ref[...]
    y1 = _bn_relu(acc1, g1_ref[...], bt1_ref[...], M)    # (M, Cmid)

    # ------------- layer 2: intermediate stays resident in VMEM -------------
    xpad2[...] = jnp.zeros_like(xpad2)
    xpad2[:, 1:H + 1, 1:W + 1, :] = y1.reshape(N, H, W, Cmid)

    for kh in range(3):
        for kw in range(3):
            t = kh * 3 + kw
            col2[:, t * Cmid:(t + 1) * Cmid] = (
                xpad2[:, kh:kh + H, kw:kw + W, :].reshape(M, Cmid))

    acc2 = jnp.dot(col2[...], w2_ref[...],
                   preferred_element_type=jnp.float32) + b2_ref[...]
    y2 = _bn_relu(acc2, g2_ref[...], bt2_ref[...], M)    # (M, Cout)

    # -------- lane-dense output: (N*H, W*Cout) -- last dim = 128 here -------
    y2 = y2.reshape(N * H, W, Cout)
    for w in range(W):
        o_ref[:, w * Cout:(w + 1) * Cout] = y2[:, w, :]


def double_conv_forward(x_nchw, params):
    """Pallas implementation of double_conv.forward (NCHW in / NCHW out)."""
    N, Cin, H, W = x_nchw.shape
    Cmid = params["w1"].shape[-1]
    Cout = params["w2"].shape[-1]

    x_nhwc = jnp.transpose(x_nchw, (0, 2, 3, 1)).astype(jnp.float32)

    vmem = pl.BlockSpec(memory_space=pltpu.MemorySpace.VMEM)
    out2d = pl.pallas_call(
        _double_conv_kernel,
        out_shape=jax.ShapeDtypeStruct((N * H, W * Cout), jnp.float32),
        in_specs=[vmem] * 9,
        out_specs=vmem,
        scratch_shapes=[
            pltpu.VMEM((N, H + 2, W + 2, Cin), jnp.float32),   # padded x
            pltpu.VMEM((N, H + 2, W + 2, Cmid), jnp.float32),  # padded layer-1 out
            pltpu.VMEM((N * H * W, 9 * Cin), jnp.float32),     # im2col, layer 1
            pltpu.VMEM((N * H * W, 9 * Cmid), jnp.float32),    # im2col, layer 2
        ],
    )(
        x_nhwc,
        params["w1"].reshape(9 * Cin, Cmid).astype(jnp.float32),
        params["b1"].reshape(1, Cmid).astype(jnp.float32),
        params["g1"].reshape(1, Cmid).astype(jnp.float32),
        params["bt1"].reshape(1, Cmid).astype(jnp.float32),
        params["w2"].reshape(9 * Cmid, Cout).astype(jnp.float32),
        params["b2"].reshape(1, Cout).astype(jnp.float32),
        params["g2"].reshape(1, Cout).astype(jnp.float32),
        params["bt2"].reshape(1, Cout).astype(jnp.float32),
    )
    # (N*H, W*Cout) -> (N, H, W, Cout) is a free reshape; one transpose to NCHW.
    return jnp.transpose(out2d.reshape(N, H, W, Cout), (0, 3, 1, 2))


def ref_double_conv(x_nchw, params):
    """Pure-JAX reference (same math as Conv2d / BatchNorm2d(train) / ReLU)."""
    def layer(x, w, b, g, bt):
        y = lax.conv_general_dilated(
            x, w, window_strides=(1, 1), padding="SAME",
            dimension_numbers=("NHWC", "HWIO", "NHWC")) + b
        mean = jnp.mean(y, axis=(0, 1, 2), keepdims=True)
        var = jnp.mean((y - mean) ** 2, axis=(0, 1, 2), keepdims=True)
        y = (y - mean) / jnp.sqrt(var + BN_EPS) * g + bt
        return jnp.maximum(y, 0.0)

    x = jnp.transpose(x_nchw, (0, 2, 3, 1))
    y = layer(x, params["w1"], params["b1"], params["g1"], params["bt1"])
    y = layer(y, params["w2"], params["b2"], params["g2"], params["bt2"])
    return jnp.transpose(y, (0, 3, 1, 2))


def init_params(key, in_ch, out_ch):
    ks = jax.random.split(key, 8)
    return {
        # conv weights in HWIO layout: (3, 3, Cin, Cout)
        "w1": 0.1 * jax.random.normal(ks[0], (3, 3, in_ch, out_ch), jnp.float32),
        "b1": 0.1 * jax.random.normal(ks[1], (out_ch,), jnp.float32),
        "g1": 1.0 + 0.1 * jax.random.normal(ks[2], (out_ch,), jnp.float32),
        "bt1": 0.1 * jax.random.normal(ks[3], (out_ch,), jnp.float32),
        "w2": 0.1 * jax.random.normal(ks[4], (3, 3, out_ch, out_ch), jnp.float32),
        "b2": 0.1 * jax.random.normal(ks[5], (out_ch,), jnp.float32),
        "g2": 1.0 + 0.1 * jax.random.normal(ks[6], (out_ch,), jnp.float32),
        "bt2": 0.1 * jax.random.normal(ks[7], (out_ch,), jnp.float32),
    }


if __name__ == "__main__":
    key = jax.random.PRNGKey(0)
    k_x, k_p = jax.random.split(key)

    N, in_ch, out_ch, H, W = 2, 4, 8, 16, 16
    x = jax.random.normal(k_x, (N, in_ch, H, W), jnp.float32)   # NCHW like PyTorch
    params = init_params(k_p, in_ch, out_ch)

    out = jax.block_until_ready(double_conv_forward(x, params))

    ref = jax.block_until_ready(ref_double_conv(x, params))
    assert out.shape == (N, out_ch, H, W), out.shape
    assert jnp.allclose(out, ref, rtol=1e-4, atol=1e-4), float(
        jnp.max(jnp.abs(out - ref)))

    print("KERNEL_OK")
</pallas_src>

<mosaic_0001>
module attributes {stable_mosaic.version = 11 : i64} {
  func.func @_double_conv_kernel(%arg0: memref<2x16x16x4xf32, #tpu.memory_space<vmem>>, %arg1: memref<36x8xf32, #tpu.memory_space<vmem>>, %arg2: memref<1x8xf32, #tpu.memory_space<vmem>>, %arg3: memref<1x8xf32, #tpu.memory_space<vmem>>, %arg4: memref<1x8xf32, #tpu.memory_space<vmem>>, %arg5: memref<72x8xf32, #tpu.memory_space<vmem>>, %arg6: memref<1x8xf32, #tpu.memory_space<vmem>>, %arg7: memref<1x8xf32, #tpu.memory_space<vmem>>, %arg8: memref<1x8xf32, #tpu.memory_space<vmem>>, %arg9: memref<32x128xf32, #tpu.memory_space<vmem>>, %arg10: memref<2x18x18x4xf32, #tpu.memory_space<vmem>>, %arg11: memref<2x18x18x8xf32, #tpu.memory_space<vmem>>, %arg12: memref<512x36xf32, #tpu.memory_space<vmem>>, %arg13: memref<512x72xf32, #tpu.memory_space<vmem>>) attributes {dimension_semantics = [], scalar_prefetch = 0 : i64, scratch_operands = 4 : i64, tpu.core_type = #tpu.core_type<tc>} {
    %cst = arith.constant 0.000000e+00 : f32
    %0 = vector.broadcast %cst : f32 to vector<2x18x18x4xf32>
    %c0 = arith.constant 0 : index
    %c0_0 = arith.constant 0 : index
    %c0_1 = arith.constant 0 : index
    %c0_2 = arith.constant 0 : index
    %1 = vector.load %arg10[%c0, %c0_0, %c0_1, %c0_2] : memref<2x18x18x4xf32, #tpu.memory_space<vmem>>, vector<2x18x18x4xf32>
    tpu.vector_store %arg10[%c0, %c0_0, %c0_1, %c0_2], %0 {strides = array<i32>} : memref<2x18x18x4xf32, #tpu.memory_space<vmem>>, vector<2x18x18x4xf32>,
    %c0_3 = arith.constant 0 : index
    %c0_4 = arith.constant 0 : index
    %c0_5 = arith.constant 0 : index
    %c0_6 = arith.constant 0 : index
    %2 = vector.load %arg0[%c0_3, %c0_4, %c0_5, %c0_6] : memref<2x16x16x4xf32, #tpu.memory_space<vmem>>, vector<2x16x16x4xf32>
    %c0_7 = arith.constant 0 : index
    %c1 = arith.constant 1 : index
    %c1_8 = arith.constant 1 : index
    %c0_9 = arith.constant 0 : index
    %3 = vector.load %arg10[%c0_7, %c1, %c1_8, %c0_9] : memref<2x18x18x4xf32, #tpu.memory_space<vmem>>, vector<2x16x16x4xf32>
    tpu.vector_store %arg10[%c0_7, %c1, %c1_8, %c0_9], %2 {strides = array<i32>} : memref<2x18x18x4xf32, #tpu.memory_space<vmem>>, vector<2x16x16x4xf32>,
    %c0_10 = arith.constant 0 : index
    %c0_11 = arith.constant 0 : index
    %c0_12 = arith.constant 0 : index
    %c0_13 = arith.constant 0 : index
    %4 = vector.load %arg10[%c0_10, %c0_11, %c0_12, %c0_13] : memref<2x18x18x4xf32, #tpu.memory_space<vmem>>, vector<2x16x16x4xf32>
    %5 = vector.shape_cast %4 : vector<2x16x16x4xf32> to vector<512x4xf32>
    %c0_14 = arith.constant 0 : index
    %c0_15 = arith.constant 0 : index
    %6 = vector.load %arg12[%c0_14, %c0_15] : memref<512x36xf32, #tpu.memory_space<vmem>>, vector<512x4xf32>
    tpu.vector_store %arg12[%c0_14, %c0_15], %5 {strides = array<i32>} : memref<512x36xf32, #tpu.memory_space<vmem>>, vector<512x4xf32>,
    %c0_16 = arith.constant 0 : index
    %c0_17 = arith.constant 0 : index
    %c1_18 = arith.constant 1 : index
    %c0_19 = arith.constant 0 : index
    %7 = vector.load %arg10[%c0_16, %c0_17, %c1_18, %c0_19] : memref<2x18x18x4xf32, #tpu.memory_space<vmem>>, vector<2x16x16x4xf32>
    %8 = vector.shape_cast %7 : vector<2x16x16x4xf32> to vector<512x4xf32>
    %c0_20 = arith.constant 0 : index
    %c4 = arith.constant 4 : index
    %9 = vector.load %arg12[%c0_20, %c4] : memref<512x36xf32, #tpu.memory_space<vmem>>, vector<512x4xf32>
    tpu.vector_store %arg12[%c0_20, %c4], %8 {strides = array<i32>} : memref<512x36xf32, #tpu.memory_space<vmem>>, vector<512x4xf32>,
    %c0_21 = arith.constant 0 : index
    %c0_22 = arith.constant 0 : index
    %c2 = arith.constant 2 : index
    %c0_23 = arith.constant 0 : index
    %10 = vector.load %arg10[%c0_21, %c0_22, %c2, %c0_23] : memref<2x18x18x4xf32, #tpu.memory_space<vmem>>, vector<2x16x16x4xf32>
    %11 = vector.shape_cast %10 : vector<2x16x16x4xf32> to vector<512x4xf32>
    %c0_24 = arith.constant 0 : index
    %c8 = arith.constant 8 : index
    %12 = vector.load %arg12[%c0_24, %c8] : memref<512x36xf32, #tpu.memory_space<vmem>>, vector<512x4xf32>
    tpu.vector_store %arg12[%c0_24, %c8], %11 {strides = array<i32>} : memref<512x36xf32, #tpu.memory_space<vmem>>, vector<512x4xf32>,
    %c0_25 = arith.constant 0 : index
    %c1_26 = arith.constant 1 : index
    %c0_27 = arith.constant 0 : index
    %c0_28 = arith.constant 0 : index
    %13 = vector.load %arg10[%c0_25, %c1_26, %c0_27, %c0_28] : memref<2x18x18x4xf32, #tpu.memory_space<vmem>>, vector<2x16x16x4xf32>
    %14 = vector.shape_cast %13 : vector<2x16x16x4xf32> to vector<512x4xf32>
    %c0_29 = arith.constant 0 : index
    %c12 = arith.constant 12 : index
    %15 = vector.load %arg12[%c0_29, %c12] : memref<512x36xf32, #tpu.memory_space<vmem>>, vector<512x4xf32>
    tpu.vector_store %arg12[%c0_29, %c12], %14 {strides = array<i32>} : memref<512x36xf32, #tpu.memory_space<vmem>>, vector<512x4xf32>,
    %c0_30 = arith.constant 0 : index
    %c1_31 = arith.constant 1 : index
    %c1_32 = arith.constant 1 : index
    %c0_33 = arith.constant 0 : index
    %16 = vector.load %arg10[%c0_30, %c1_31, %c1_32, %c0_33] : memref<2x18x18x4xf32, #tpu.memory_space<vmem>>, vector<2x16x16x4xf32>
    %17 = vector.shape_cast %16 : vector<2x16x16x4xf32> to vector<512x4xf32>
    %c0_34 = arith.constant 0 : index
    %c16 = arith.constant 16 : index
    %18 = vector.load %arg12[%c0_34, %c16] : memref<512x36xf32, #tpu.memory_space<vmem>>, vector<512x4xf32>
    tpu.vector_store %arg12[%c0_34, %c16], %17 {strides = array<i32>} : memref<512x36xf32, #tpu.memory_space<vmem>>, vector<512x4xf32>,
    %c0_35 = arith.constant 0 : index
    %c1_36 = arith.constant 1 : index
    %c2_37 = arith.constant 2 : index
    %c0_38 = arith.constant 0 : index
    %19 = vector.load %arg10[%c0_35, %c1_36, %c2_37, %c0_38] : memref<2x18x18x4xf32, #tpu.memory_space<vmem>>, vector<2x16x16x4xf32>
    %20 = vector.shape_cast %19 : vector<2x16x16x4xf32> to vector<512x4xf32>
    %c0_39 = arith.constant 0 : index
    %c20 = arith.constant 20 : index
    %21 = vector.load %arg12[%c0_39, %c20] : memref<512x36xf32, #tpu.memory_space<vmem>>, vector<512x4xf32>
    tpu.vector_store %arg12[%c0_39, %c20], %20 {strides = array<i32>} : memref<512x36xf32, #tpu.memory_space<vmem>>, vector<512x4xf32>,
    %c0_40 = arith.constant 0 : index
    %c2_41 = arith.constant 2 : index
    %c0_42 = arith.constant 0 : index
    %c0_43 = arith.constant 0 : index
    %22 = vector.load %arg10[%c0_40, %c2_41, %c0_42, %c0_43] : memref<2x18x18x4xf32, #tpu.memory_space<vmem>>, vector<2x16x16x4xf32>
    %23 = vector.shape_cast %22 : vector<2x16x16x4xf32> to vector<512x4xf32>
    %c0_44 = arith.constant 0 : index
    %c24 = arith.constant 24 : index
    %24 = vector.load %arg12[%c0_44, %c24] : memref<512x36xf32, #tpu.memory_space<vmem>>, vector<512x4xf32>
    tpu.vector_store %arg12[%c0_44, %c24], %23 {strides = array<i32>} : memref<512x36xf32, #tpu.memory_space<vmem>>, vector<512x4xf32>,
    %c0_45 = arith.constant 0 : index
    %c2_46 = arith.constant 2 : index
    %c1_47 = arith.constant 1 : index
    %c0_48 = arith.constant 0 : index
    %25 = vector.load %arg10[%c0_45, %c2_46, %c1_47, %c0_48] : memref<2x18x18x4xf32, #tpu.memory_space<vmem>>, vector<2x16x16x4xf32>
    %26 = vector.shape_cast %25 : vector<2x16x16x4xf32> to vector<512x4xf32>
    %c0_49 = arith.constant 0 : index
    %c28 = arith.constant 28 : index
    %27 = vector.load %arg12[%c0_49, %c28] : memref<512x36xf32, #tpu.memory_space<vmem>>, vector<512x4xf32>
    tpu.vector_store %arg12[%c0_49, %c28], %26 {strides = array<i32>} : memref<512x36xf32, #tpu.memory_space<vmem>>, vector<512x4xf32>,
    %c0_50 = arith.constant 0 : index
    %c2_51 = arith.constant 2 : index
    %c2_52 = arith.constant 2 : index
    %c0_53 = arith.constant 0 : index
    %28 = vector.load %arg10[%c0_50, %c2_51, %c2_52, %c0_53] : memref<2x18x18x4xf32, #tpu.memory_space<vmem>>, vector<2x16x16x4xf32>
    %29 = vector.shape_cast %28 : vector<2x16x16x4xf32> to vector<512x4xf32>
    %c0_54 = arith.constant 0 : index
    %c32 = arith.constant 32 : index
    %30 = vector.load %arg12[%c0_54, %c32] : memref<512x36xf32, #tpu.memory_space<vmem>>, vector<512x4xf32>
    tpu.vector_store %arg12[%c0_54, %c32], %29 {strides = array<i32>} : memref<512x36xf32, #tpu.memory_space<vmem>>, vector<512x4xf32>,
    %c0_55 = arith.constant 0 : index
    %c0_56 = arith.constant 0 : index
    %31 = vector.load %arg12[%c0_55, %c0_56] : memref<512x36xf32, #tpu.memory_space<vmem>>, vector<512x36xf32>
    %c0_57 = arith.constant 0 : index
    %c0_58 = arith.constant 0 : index
    %32 = vector.load %arg1[%c0_57, %c0_58] : memref<36x8xf32, #tpu.memory_space<vmem>>, vector<36x8xf32>
    %cst_59 = arith.constant dense<0.000000e+00> : vector<512x8xf32>
    %33 = tpu.matmul %31, %32, %cst_59 {dimension_numbers = #tpu.dot_dimension_numbers<[1], [0], [0], [1], [0, 0, 1, 1], [], []>} : vector<512x36xf32>, vector<36x8xf32>, vector<512x8xf32> -> vector<512x8xf32>
    %c0_60 = arith.constant 0 : index
    %c0_61 = arith.constant 0 : index
    %34 = vector.load %arg2[%c0_60, %c0_61] : memref<1x8xf32, #tpu.memory_space<vmem>>, vector<1x8xf32>
    %35 = vector.broadcast %34 : vector<1x8xf32> to vector<512x8xf32>
    %36 = arith.addf %33, %35 : vector<512x8xf32>
    %c0_62 = arith.constant 0 : index
    %c0_63 = arith.constant 0 : index
    %37 = vector.load %arg3[%c0_62, %c0_63] : memref<1x8xf32, #tpu.memory_space<vmem>>, vector<1x8xf32>
    %c0_64 = arith.constant 0 : index
    %c0_65 = arith.constant 0 : index
    %38 = vector.load %arg4[%c0_64, %c0_65] : memref<1x8xf32, #tpu.memory_space<vmem>>, vector<1x8xf32>
    %cst_66 = arith.constant dense<0.000000e+00> : vector<8xf32>
    %39 = vector.multi_reduction <add>, %36, %cst_66 [0] : vector<512x8xf32> to vector<8xf32>
    %40 = vector.shape_cast %39 : vector<8xf32> to vector<1x8xf32>
    %41 = arith.mulf %36, %36 : vector<512x8xf32>
    %cst_67 = arith.constant dense<0.000000e+00> : vector<8xf32>
    %42 = vector.multi_reduction <add>, %41, %cst_67 [0] : vector<512x8xf32> to vector<8xf32>
    %43 = vector.shape_cast %42 : vector<8xf32> to vector<1x8xf32>
    %cst_68 = arith.constant 0.001953125 : f32
    %44 = vector.broadcast %cst_68 : f32 to vector<1x8xf32>
    %45 = arith.mulf %40, %44 : vector<1x8xf32>
    %cst_69 = arith.constant 0.001953125 : f32
    %46 = vector.broadcast %cst_69 : f32 to vector<1x8xf32>
    %47 = arith.mulf %43, %46 : vector<1x8xf32>
    %48 = arith.mulf %45, %45 : vector<1x8xf32>
    %49 = arith.subf %47, %48 : vector<1x8xf32>
    %cst_70 = arith.constant 9.99999974E-6 : f32
    %50 = vector.broadcast %cst_70 : f32 to vector<1x8xf32>
    %51 = arith.addf %49, %50 : vector<1x8xf32>
    %52 = math.rsqrt %51 : vector<1x8xf32>
    %53 = arith.mulf %37, %52 : vector<1x8xf32>
    %54 = arith.mulf %45, %53 : vector<1x8xf32>
    %55 = arith.subf %38, %54 : vector<1x8xf32>
    %56 = vector.broadcast %53 : vector<1x8xf32> to vector<512x8xf32>
    %57 = arith.mulf %36, %56 : vector<512x8xf32>
    %58 = vector.broadcast %55 : vector<1x8xf32> to vector<512x8xf32>
    %59 = arith.addf %57, %58 : vector<512x8xf32>
    %cst_71 = arith.constant 0.000000e+00 : f32
    %60 = vector.broadcast %cst_71 : f32 to vector<512x8xf32>
    %61 = arith.maximumf %59, %60 : vector<512x8xf32>
    %cst_72 = arith.constant 0.000000e+00 : f32
    %62 = vector.broadcast %cst_72 : f32 to vector<2x18x18x8xf32>
    %c0_73 = arith.constant 0 : index
    %c0_74 = arith.constant 0 : index
    %c0_75 = arith.constant 0 : index
    %c0_76 = arith.constant 0 : index
    %63 = vector.load %arg11[%c0_73, %c0_74, %c0_75, %c0_76] : memref<2x18x18x8xf32, #tpu.memory_space<vmem>>, vector<2x18x18x8xf32>
    tpu.vector_store %arg11[%c0_73, %c0_74, %c0_75, %c0_76], %62 {strides = array<i32>} : memref<2x18x18x8xf32, #tpu.memory_space<vmem>>, vector<2x18x18x8xf32>,
    %64 = vector.shape_cast %61 : vector<512x8xf32> to vector<2x16x16x8xf32>
    %c0_77 = arith.constant 0 : index
    %c1_78 = arith.constant 1 : index
    %c1_79 = arith.constant 1 : index
    %c0_80 = arith.constant 0 : index
    %65 = vector.load %arg11[%c0_77, %c1_78, %c1_79, %c0_80] : memref<2x18x18x8xf32, #tpu.memory_space<vmem>>, vector<2x16x16x8xf32>
    tpu.vector_store %arg11[%c0_77, %c1_78, %c1_79, %c0_80], %64 {strides = array<i32>} : memref<2x18x18x8xf32, #tpu.memory_space<vmem>>, vector<2x16x16x8xf32>,
    %c0_81 = arith.constant 0 : index
    %c0_82 = arith.constant 0 : index
    %c0_83 = arith.constant 0 : index
    %c0_84 = arith.constant 0 : index
    %66 = vector.load %arg11[%c0_81, %c0_82, %c0_83, %c0_84] : memref<2x18x18x8xf32, #tpu.memory_space<vmem>>, vector<2x16x16x8xf32>
    %67 = vector.shape_cast %66 : vector<2x16x16x8xf32> to vector<512x8xf32>
    %c0_85 = arith.constant 0 : index
    %c0_86 = arith.constant 0 : index
    %68 = vector.load %arg13[%c0_85, %c0_86] : memref<512x72xf32, #tpu.memory_space<vmem>>, vector<512x8xf32>
    tpu.vector_store %arg13[%c0_85, %c0_86], %67 {strides = array<i32>} : memref<512x72xf32, #tpu.memory_space<vmem>>, vector<512x8xf32>,
    %c0_87 = arith.constant 0 : index
    %c0_88 = arith.constant 0 : index
    %c1_89 = arith.constant 1 : index
    %c0_90 = arith.constant 0 : index
    %69 = vector.load %arg11[%c0_87, %c0_88, %c1_89, %c0_90] : memref<2x18x18x8xf32, #tpu.memory_space<vmem>>, vector<2x16x16x8xf32>
    %70 = vector.shape_cast %69 : vector<2x16x16x8xf32> to vector<512x8xf32>
    %c0_91 = arith.constant 0 : index
    %c8_92 = arith.constant 8 : index
    %71 = vector.load %arg13[%c0_91, %c8_92] : memref<512x72xf32, #tpu.memory_space<vmem>>, vector<512x8xf32>
    tpu.vector_store %arg13[%c0_91, %c8_92], %70 {strides = array<i32>} : memref<512x72xf32, #tpu.memory_space<vmem>>, vector<512x8xf32>,
    %c0_93 = arith.constant 0 : index
    %c0_94 = arith.constant 0 : index
    %c2_95 = arith.constant 2 : index
    %c0_96 = arith.constant 0 : index
    %72 = vector.load %arg11[%c0_93, %c0_94, %c2_95, %c0_96] : memref<2x18x18x8xf32, #tpu.memory_space<vmem>>, vector<2x16x16x8xf32>
    %73 = vector.shape_cast %72 : vector<2x16x16x8xf32> to vector<512x8xf32>
    %c0_97 = arith.constant 0 : index
    %c16_98 = arith.constant 16 : index
    %74 = vector.load %arg13[%c0_97, %c16_98] : memref<512x72xf32, #tpu.memory_space<vmem>>, vector<512x8xf32>
    tpu.vector_store %arg13[%c0_97, %c16_98], %73 {strides = array<i32>} : memref<512x72xf32, #tpu.memory_space<vmem>>, vector<512x8xf32>,
    %c0_99 = arith.constant 0 : index
    %c1_100 = arith.constant 1 : index
    %c0_101 = arith.constant 0 : index
    %c0_102 = arith.constant 0 : index
    %75 = vector.load %arg11[%c0_99, %c1_100, %c0_101, %c0_102] : memref<2x18x18x8xf32, #tpu.memory_space<vmem>>, vector<2x16x16x8xf32>
    %76 = vector.shape_cast %75 : vector<2x16x16x8xf32> to vector<512x8xf32>
    %c0_103 = arith.constant 0 : index
    %c24_104 = arith.constant 24 : index
    %77 = vector.load %arg13[%c0_103, %c24_104] : memref<512x72xf32, #tpu.memory_space<vmem>>, vector<512x8xf32>
    tpu.vector_store %arg13[%c0_103, %c24_104], %76 {strides = array<i32>} : memref<512x72xf32, #tpu.memory_space<vmem>>, vector<512x8xf32>,
    %c0_105 = arith.constant 0 : index
    %c1_106 = arith.constant 1 : index
    %c1_107 = arith.constant 1 : index
    %c0_108 = arith.constant 0 : index
    %78 = vector.load %arg11[%c0_105, %c1_106, %c1_107, %c0_108] : memref<2x18x18x8xf32, #tpu.memory_space<vmem>>, vector<2x16x16x8xf32>
    %79 = vector.shape_cast %78 : vector<2x16x16x8xf32> to vector<512x8xf32>
    %c0_109 = arith.constant 0 : index
    %c32_110 = arith.constant 32 : index
    %80 = vector.load %arg13[%c0_109, %c32_110] : memref<512x72xf32, #tpu.memory_space<vmem>>, vector<512x8xf32>
    tpu.vector_store %arg13[%c0_109, %c32_110], %79 {strides = array<i32>} : memref<512x72xf32, #tpu.memory_space<vmem>>, vector<512x8xf32>,
    %c0_111 = arith.constant 0 : index
    %c1_112 = arith.constant 1 : index
    %c2_113 = arith.constant 2 : index
    %c0_114 = arith.constant 0 : index
    %81 = vector.load %arg11[%c0_111, %c1_112, %c2_113, %c0_114] : memref<2x18x18x8xf32, #tpu.memory_space<vmem>>, vector<2x16x16x8xf32>
    %82 = vector.shape_cast %81 : vector<2x16x16x8xf32> to vector<512x8xf32>
    %c0_115 = arith.constant 0 : index
    %c40 = arith.constant 40 : index
    %83 = vector.load %arg13[%c0_115, %c40] : memref<512x72xf32, #tpu.memory_space<vmem>>, vector<512x8xf32>
    tpu.vector_store %arg13[%c0_115, %c40], %82 {strides = array<i32>} : memref<512x72xf32, #tpu.memory_space<vmem>>, vector<512x8xf32>,
    %c0_116 = arith.constant 0 : index
    %c2_117 = arith.constant 2 : index
    %c0_118 = arith.constant 0 : index
    %c0_119 = arith.constant 0 : index
    %84 = vector.load %arg11[%c0_116, %c2_117, %c0_118, %c0_119] : memref<2x18x18x8xf32, #tpu.memory_space<vmem>>, vector<2x16x16x8xf32>
    %85 = vector.shape_cast %84 : vector<2x16x16x8xf32> to vector<512x8xf32>
    %c0_120 = arith.constant 0 : index
    %c48 = arith.constant 48 : index
    %86 = vector.load %arg13[%c0_120, %c48] : memref<512x72xf32, #tpu.memory_space<vmem>>, vector<512x8xf32>
    tpu.vector_store %arg13[%c0_120, %c48], %85 {strides = array<i32>} : memref<512x72xf32, #tpu.memory_space<vmem>>, vector<512x8xf32>,
    %c0_121 = arith.constant 0 : index
    %c2_122 = arith.constant 2 : index
    %c1_123 = arith.constant 1 : index
    %c0_124 = arith.constant 0 : index
    %87 = vector.load %arg11[%c0_121, %c2_122, %c1_123, %c0_124] : memref<2x18x18x8xf32, #tpu.memory_space<vmem>>, vector<2x16x16x8xf32>
    %88 = vector.shape_cast %87 : vector<2x16x16x8xf32> to vector<512x8xf32>
    %c0_125 = arith.constant 0 : index
    %c56 = arith.constant 56 : index
    %89 = vector.load %arg13[%c0_125, %c56] : memref<512x72xf32, #tpu.memory_space<vmem>>, vector<512x8xf32>
    tpu.vector_store %arg13[%c0_125, %c56], %88 {strides = array<i32>} : memref<512x72xf32, #tpu.memory_space<vmem>>, vector<512x8xf32>,
    %c0_126 = arith.constant 0 : index
    %c2_127 = arith.constant 2 : index
    %c2_128 = arith.constant 2 : index
    %c0_129 = arith.constant 0 : index
    %90 = vector.load %arg11[%c0_126, %c2_127, %c2_128, %c0_129] : memref<2x18x18x8xf32, #tpu.memory_space<vmem>>, vector<2x16x16x8xf32>
    %91 = vector.shape_cast %90 : vector<2x16x16x8xf32> to vector<512x8xf32>
    %c0_130 = arith.constant 0 : index
    %c64 = arith.constant 64 : index
    %92 = vector.load %arg13[%c0_130, %c64] : memref<512x72xf32, #tpu.memory_space<vmem>>, vector<512x8xf32>
    tpu.vector_store %arg13[%c0_130, %c64], %91 {strides = array<i32>} : memref<512x72xf32, #tpu.memory_space<vmem>>, vector<512x8xf32>,
    %c0_131 = arith.constant 0 : index
    %c0_132 = arith.constant 0 : index
    %93 = vector.load %arg13[%c0_131, %c0_132] : memref<512x72xf32, #tpu.memory_space<vmem>>, vector<512x72xf32>
    %c0_133 = arith.constant 0 : index
    %c0_134 = arith.constant 0 : index
    %94 = vector.load %arg5[%c0_133, %c0_134] : memref<72x8xf32, #tpu.memory_space<vmem>>, vector<72x8xf32>
    %cst_135 = arith.constant dense<0.000000e+00> : vector<512x8xf32>
    %95 = tpu.matmul %93, %94, %cst_135 {dimension_numbers = #tpu.dot_dimension_numbers<[1], [0], [0], [1], [0, 0, 1, 1], [], []>} : vector<512x72xf32>, vector<72x8xf32>, vector<512x8xf32> -> vector<512x8xf32>
    %c0_136 = arith.constant 0 : index
    %c0_137 = arith.constant 0 : index
    %96 = vector.load %arg6[%c0_136, %c0_137] : memref<1x8xf32, #tpu.memory_space<vmem>>, vector<1x8xf32>
    %97 = vector.broadcast %96 : vector<1x8xf32> to vector<512x8xf32>
    %98 = arith.addf %95, %97 : vector<512x8xf32>
    %c0_138 = arith.constant 0 : index
    %c0_139 = arith.constant 0 : index
    %99 = vector.load %arg7[%c0_138, %c0_139] : memref<1x8xf32, #tpu.memory_space<vmem>>, vector<1x8xf32>
    %c0_140 = arith.constant 0 : index
    %c0_141 = arith.constant 0 : index
    %100 = vector.load %arg8[%c0_140, %c0_141] : memref<1x8xf32, #tpu.memory_space<vmem>>, vector<1x8xf32>
    %cst_142 = arith.constant dense<0.000000e+00> : vector<8xf32>
    %101 = vector.multi_reduction <add>, %98, %cst_142 [0] : vector<512x8xf32> to vector<8xf32>
    %102 = vector.shape_cast %101 : vector<8xf32> to vector<1x8xf32>
    %103 = arith.mulf %98, %98 : vector<512x8xf32>
    %cst_143 = arith.constant dense<0.000000e+00> : vector<8xf32>
    %104 = vector.multi_reduction <add>, %103, %cst_143 [0] : vector<512x8xf32> to vector<8xf32>
    %105 = vector.shape_cast %104 : vector<8xf32> to vector<1x8xf32>
    %cst_144 = arith.constant 0.001953125 : f32
    %106 = vector.broadcast %cst_144 : f32 to vector<1x8xf32>
    %107 = arith.mulf %102, %106 : vector<1x8xf32>
    %cst_145 = arith.constant 0.001953125 : f32
    %108 = vector.broadcast %cst_145 : f32 to vector<1x8xf32>
    %109 = arith.mulf %105, %108 : vector<1x8xf32>
    %110 = arith.mulf %107, %107 : vector<1x8xf32>
    %111 = arith.subf %109, %110 : vector<1x8xf32>
    %cst_146 = arith.constant 9.99999974E-6 : f32
    %112 = vector.broadcast %cst_146 : f32 to vector<1x8xf32>
    %113 = arith.addf %111, %112 : vector<1x8xf32>
    %114 = math.rsqrt %113 : vector<1x8xf32>
    %115 = arith.mulf %99, %114 : vector<1x8xf32>
    %116 = arith.mulf %107, %115 : vector<1x8xf32>
    %117 = arith.subf %100, %116 : vector<1x8xf32>
    %118 = vector.broadcast %115 : vector<1x8xf32> to vector<512x8xf32>
    %119 = arith.mulf %98, %118 : vector<512x8xf32>
    %120 = vector.broadcast %117 : vector<1x8xf32> to vector<512x8xf32>
    %121 = arith.addf %119, %120 : vector<512x8xf32>
    %cst_147 = arith.constant 0.000000e+00 : f32
    %122 = vector.broadcast %cst_147 : f32 to vector<512x8xf32>
    %123 = arith.maximumf %121, %122 : vector<512x8xf32>
    %124 = vector.shape_cast %123 : vector<512x8xf32> to vector<32x16x8xf32>
    %125 = vector.extract_strided_slice %124 {offsets = [0, 0, 0], sizes = [32, 1, 8], strides = [1, 1, 1]} : vector<32x16x8xf32> to vector<32x1x8xf32>
    %126 = vector.shape_cast %125 : vector<32x1x8xf32> to vector<32x8xf32>
    %c0_148 = arith.constant 0 : index
    %c0_149 = arith.constant 0 : index
    %127 = vector.load %arg9[%c0_148, %c0_149] : memref<32x128xf32, #tpu.memory_space<vmem>>, vector<32x8xf32>
    tpu.vector_store %arg9[%c0_148, %c0_149], %126 {strides = array<i32>} : memref<32x128xf32, #tpu.memory_space<vmem>>, vector<32x8xf32>,
    %128 = vector.extract_strided_slice %124 {offsets = [0, 1, 0], sizes = [32, 1, 8], strides = [1, 1, 1]} : vector<32x16x8xf32> to vector<32x1x8xf32>
    %129 = vector.shape_cast %128 : vector<32x1x8xf32> to vector<32x8xf32>
    %c0_150 = arith.constant 0 : index
    %c8_151 = arith.constant 8 : index
    %130 = vector.load %arg9[%c0_150, %c8_151] : memref<32x128xf32, #tpu.memory_space<vmem>>, vector<32x8xf32>
    tpu.vector_store %arg9[%c0_150, %c8_151], %129 {strides = array<i32>} : memref<32x128xf32, #tpu.memory_space<vmem>>, vector<32x8xf32>,
    %131 = vector.extract_strided_slice %124 {offsets = [0, 2, 0], sizes = [32, 1, 8], strides = [1, 1, 1]} : vector<32x16x8xf32> to vector<32x1x8xf32>
    %132 = vector.shape_cast %131 : vector<32x1x8xf32> to vector<32x8xf32>
    %c0_152 = arith.constant 0 : index
    %c16_153 = arith.constant 16 : index
    %133 = vector.load %arg9[%c0_152, %c16_153] : memref<32x128xf32, #tpu.memory_space<vmem>>, vector<32x8xf32>
    tpu.vector_store %arg9[%c0_152, %c16_153], %132 {strides = array<i32>} : memref<32x128xf32, #tpu.memory_space<vmem>>, vector<32x8xf32>,
    %134 = vector.extract_strided_slice %124 {offsets = [0, 3, 0], sizes = [32, 1, 8], strides = [1, 1, 1]} : vector<32x16x8xf32> to vector<32x1x8xf32>
    %135 = vector.shape_cast %134 : vector<32x1x8xf32> to vector<32x8xf32>
    %c0_154 = arith.constant 0 : index
    %c24_155 = arith.constant 24 : index
    %136 = vector.load %arg9[%c0_154, %c24_155] : memref<32x128xf32, #tpu.memory_space<vmem>>, vector<32x8xf32>
    tpu.vector_store %arg9[%c0_154, %c24_155], %135 {strides = array<i32>} : memref<32x128xf32, #tpu.memory_space<vmem>>, vector<32x8xf32>,
    %137 = vector.extract_strided_slice %124 {offsets = [0, 4, 0], sizes = [32, 1, 8], strides = [1, 1, 1]} : vector<32x16x8xf32> to vector<32x1x8xf32>
    %138 = vector.shape_cast %137 : vector<32x1x8xf32> to vector<32x8xf32>
    %c0_156 = arith.constant 0 : index
    %c32_157 = arith.constant 32 : index
    %139 = vector.load %arg9[%c0_156, %c32_157] : memref<32x128xf32, #tpu.memory_space<vmem>>, vector<32x8xf32>
    tpu.vector_store %arg9[%c0_156, %c32_157], %138 {strides = array<i32>} : memref<32x128xf32, #tpu.memory_space<vmem>>, vector<32x8xf32>,
    %140 = vector.extract_strided_slice %124 {offsets = [0, 5, 0], sizes = [32, 1, 8], strides = [1, 1, 1]} : vector<32x16x8xf32> to vector<32x1x8xf32>
    %141 = vector.shape_cast %140 : vector<32x1x8xf32> to vector<32x8xf32>
    %c0_158 = arith.constant 0 : index
    %c40_159 = arith.constant 40 : index
    %142 = vector.load %arg9[%c0_158, %c40_159] : memref<32x128xf32, #tpu.memory_space<vmem>>, vector<32x8xf32>
    tpu.vector_store %arg9[%c0_158, %c40_159], %141 {strides = array<i32>} : memref<32x128xf32, #tpu.memory_space<vmem>>, vector<32x8xf32>,
    %143 = vector.extract_strided_slice %124 {offsets = [0, 6, 0], sizes = [32, 1, 8], strides = [1, 1, 1]} : vector<32x16x8xf32> to vector<32x1x8xf32>
    %144 = vector.shape_cast %143 : vector<32x1x8xf32> to vector<32x8xf32>
    %c0_160 = arith.constant 0 : index
    %c48_161 = arith.constant 48 : index
    %145 = vector.load %arg9[%c0_160, %c48_161] : memref<32x128xf32, #tpu.memory_space<vmem>>, vector<32x8xf32>
    tpu.vector_store %arg9[%c0_160, %c48_161], %144 {strides = array<i32>} : memref<32x128xf32, #tpu.memory_space<vmem>>, vector<32x8xf32>,
    %146 = vector.extract_strided_slice %124 {offsets = [0, 7, 0], sizes = [32, 1, 8], strides = [1, 1, 1]} : vector<32x16x8xf32> to vector<32x1x8xf32>
    %147 = vector.shape_cast %146 : vector<32x1x8xf32> to vector<32x8xf32>
    %c0_162 = arith.constant 0 : index
    %c56_163 = arith.constant 56 : index
    %148 = vector.load %arg9[%c0_162, %c56_163] : memref<32x128xf32, #tpu.memory_space<vmem>>, vector<32x8xf32>
    tpu.vector_store %arg9[%c0_162, %c56_163], %147 {strides = array<i32>} : memref<32x128xf32, #tpu.memory_space<vmem>>, vector<32x8xf32>,
    %149 = vector.extract_strided_slice %124 {offsets = [0, 8, 0], sizes = [32, 1, 8], strides = [1, 1, 1]} : vector<32x16x8xf32> to vector<32x1x8xf32>
    %150 = vector.shape_cast %149 : vector<32x1x8xf32> to vector<32x8xf32>
    %c0_164 = arith.constant 0 : index
    %c64_165 = arith.constant 64 : index
    %151 = vector.load %arg9[%c0_164, %c64_165] : memref<32x128xf32, #tpu.memory_space<vmem>>, vector<32x8xf32>
    tpu.vector_store %arg9[%c0_164, %c64_165], %150 {strides = array<i32>} : memref<32x128xf32, #tpu.memory_space<vmem>>, vector<32x8xf32>,
    %152 = vector.extract_strided_slice %124 {offsets = [0, 9, 0], sizes = [32, 1, 8], strides = [1, 1, 1]} : vector<32x16x8xf32> to vector<32x1x8xf32>
    %153 = vector.shape_cast %152 : vector<32x1x8xf32> to vector<32x8xf32>
    %c0_166 = arith.constant 0 : index
    %c72 = arith.constant 72 : index
    %154 = vector.load %arg9[%c0_166, %c72] : memref<32x128xf32, #tpu.memory_space<vmem>>, vector<32x8xf32>
    tpu.vector_store %arg9[%c0_166, %c72], %153 {strides = array<i32>} : memref<32x128xf32, #tpu.memory_space<vmem>>, vector<32x8xf32>,
    %155 = vector.extract_strided_slice %124 {offsets = [0, 10, 0], sizes = [32, 1, 8], strides = [1, 1, 1]} : vector<32x16x8xf32> to vector<32x1x8xf32>
    %156 = vector.shape_cast %155 : vector<32x1x8xf32> to vector<32x8xf32>
    %c0_167 = arith.constant 0 : index
    %c80 = arith.constant 80 : index
    %157 = vector.load %arg9[%c0_167, %c80] : memref<32x128xf32, #tpu.memory_space<vmem>>, vector<32x8xf32>
    tpu.vector_store %arg9[%c0_167, %c80], %156 {strides = array<i32>} : memref<32x128xf32, #tpu.memory_space<vmem>>, vector<32x8xf32>,
    %158 = vector.extract_strided_slice %124 {offsets = [0, 11, 0], sizes = [32, 1, 8], strides = [1, 1, 1]} : vector<32x16x8xf32> to vector<32x1x8xf32>
    %159 = vector.shape_cast %158 : vector<32x1x8xf32> to vector<32x8xf32>
    %c0_168 = arith.constant 0 : index
    %c88 = arith.constant 88 : index
    %160 = vector.load %arg9[%c0_168, %c88] : memref<32x128xf32, #tpu.memory_space<vmem>>, vector<32x8xf32>
    tpu.vector_store %arg9[%c0_168, %c88], %159 {strides = array<i32>} : memref<32x128xf32, #tpu.memory_space<vmem>>, vector<32x8xf32>,
    %161 = vector.extract_strided_slice %124 {offsets = [0, 12, 0], sizes = [32, 1, 8], strides = [1, 1, 1]} : vector<32x16x8xf32> to vector<32x1x8xf32>
    %162 = vector.shape_cast %161 : vector<32x1x8xf32> to vector<32x8xf32>
    %c0_169 = arith.constant 0 : index
    %c96 = arith.constant 96 : index
    %163 = vector.load %arg9[%c0_169, %c96] : memref<32x128xf32, #tpu.memory_space<vmem>>, vector<32x8xf32>
    tpu.vector_store %arg9[%c0_169, %c96], %162 {strides = array<i32>} : memref<32x128xf32, #tpu.memory_space<vmem>>, vector<32x8xf32>,
    %164 = vector.extract_strided_slice %124 {offsets = [0, 13, 0], sizes = [32, 1, 8], strides = [1, 1, 1]} : vector<32x16x8xf32> to vector<32x1x8xf32>
    %165 = vector.shape_cast %164 : vector<32x1x8xf32> to vector<32x8xf32>
    %c0_170 = arith.constant 0 : index
    %c104 = arith.constant 104 : index
    %166 = vector.load %arg9[%c0_170, %c104] : memref<32x128xf32, #tpu.memory_space<vmem>>, vector<32x8xf32>
    tpu.vector_store %arg9[%c0_170, %c104], %165 {strides = array<i32>} : memref<32x128xf32, #tpu.memory_space<vmem>>, vector<32x8xf32>,
    %167 = vector.extract_strided_slice %124 {offsets = [0, 14, 0], sizes = [32, 1, 8], strides = [1, 1, 1]} : vector<32x16x8xf32> to vector<32x1x8xf32>
    %168 = vector.shape_cast %167 : vector<32x1x8xf32> to vector<32x8xf32>
    %c0_171 = arith.constant 0 : index
    %c112 = arith.constant 112 : index
    %169 = vector.load %arg9[%c0_171, %c112] : memref<32x128xf32, #tpu.memory_space<vmem>>, vector<32x8xf32>
    tpu.vector_store %arg9[%c0_171, %c112], %168 {strides = array<i32>} : memref<32x128xf32, #tpu.memory_space<vmem>>, vector<32x8xf32>,
    %170 = vector.extract_strided_slice %124 {offsets = [0, 15, 0], sizes = [32, 1, 8], strides = [1, 1, 1]} : vector<32x16x8xf32> to vector<32x1x8xf32>
    %171 = vector.shape_cast %170 : vector<32x1x8xf32> to vector<32x8xf32>
    %c0_172 = arith.constant 0 : index
    %c120 = arith.constant 120 : index
    %172 = vector.load %arg9[%c0_172, %c120] : memref<32x128xf32, #tpu.memory_space<vmem>>, vector<32x8xf32>
    tpu.vector_store %arg9[%c0_172, %c120], %171 {strides = array<i32>} : memref<32x128xf32, #tpu.memory_space<vmem>>, vector<32x8xf32>,
    return
  }
}

</mosaic_0001>

<llo_original>
// kernel: tpu_custom_call.1
$region0: #{tpu_custom_call.1}
  #allocation0 [shape = 'u32[]', space=smem, size = 0x4, offset = 0x4, fixed_abs, tag = 'smem constant byte address 0x4 - core index']
  #allocation1 [shape = 'u32[72,128]{1,0:T(1,128)}', space=vmem, size = 0x9000, scoped, tag = 'internal scratch']
  #allocation2 [shape = 'f32[2,18,18,4]{3,2,1,0:T(8,128)}', space=vmem, size = 0x6c000, scoped, tag = 'scratch operand']
  #allocation3 [shape = 'f32[2,18,18,8]{3,2,1,0:T(8,128)}', space=vmem, size = 0x6c000, scoped, tag = 'scratch operand']
  #allocation4 [shape = 'f32[512,36]{1,0:T(8,128)}', space=vmem, size = 0x40000, scoped, tag = 'scratch operand']
  #allocation5 [shape = 'f32[512,72]{1,0:T(8,128)}', space=vmem, size = 0x40000, scoped, tag = 'scratch operand']
  %s0 = inlined_call_operand.vmem [shape: f32[2,16,16,4], index: 0, kind: input, shape index: {}]
  %s1 = inlined_call_operand.vmem [shape: f32[36,8], index: 1, kind: input, shape index: {}]
  %s2 = inlined_call_operand.vmem [shape: f32[1,8], index: 2, kind: input, shape index: {}]
  %s3 = inlined_call_operand.vmem [shape: f32[1,8], index: 3, kind: input, shape index: {}]
  %s4 = inlined_call_operand.vmem [shape: f32[1,8], index: 4, kind: input, shape index: {}]
  %s5 = inlined_call_operand.vmem [shape: f32[72,8], index: 5, kind: input, shape index: {}]
  %s6 = inlined_call_operand.vmem [shape: f32[1,8], index: 6, kind: input, shape index: {}]
  %s7 = inlined_call_operand.vmem [shape: f32[1,8], index: 7, kind: input, shape index: {}]
  %s8 = inlined_call_operand.vmem [shape: f32[1,8], index: 8, kind: input, shape index: {}]
  %s9 = inlined_call_operand.hbm [shape: f32[32,128], index: 9, kind: output, shape index: {}]
  %s10 = sld [smem:[#allocation0]]
  $region46: #{tpu_custom_call.1} parent=0
    _
  %s12 = ssub.s32 1, %s10
  %s13 = scalar_select 0, %s12, %s10
  $region1: #{tpu_custom_call.1} parent=0
    #allocation6 [shape = 'u8[16384]{0}', space=vmem, size = 0x4000, scoped, tag = 'output window, operand 0, single buffered']
    #allocation7 [shape = 's32[1]{0}', space=sflag, size = 0x4, scoped, tag = 'scoped memory for tpu_custom_call.1']
    %14 = vsyncpa [#allocation7], 0
    // Predicated region
    $region2: #{tpu_custom_call.1} parent=1 // pred_check
      _
    $region3: #{tpu_custom_call.1} parent=1 // pred_check_branch
      %16 = sbr.rel (0) target = $region5
    $region4: #{tpu_custom_call.1} parent=1 // pred_region
      _
    $region5: #{tpu_custom_call.1} parent=1 // pred_fallthru
      _
    // Predicated region
    $region6: #{tpu_custom_call.1} parent=1 // pred_check
      _
    $region7: #{tpu_custom_call.1} parent=1 // pred_check_branch
      %18 = sbr.rel (0) target = $region9
    $region8: #{tpu_custom_call.1} parent=1 // pred_region
      _
    $region9: #{tpu_custom_call.1} parent=1 // pred_fallthru
      _
    // Predicated region
    $region10: #{tpu_custom_call.1} parent=1 // pred_check
      _
    $region11: #{tpu_custom_call.1} parent=1 // pred_check_branch
      %20 = sbr.rel (0) target = $region13
    $region12: #{tpu_custom_call.1} parent=1 // pred_region
      _
    $region13: #{tpu_custom_call.1} parent=1 // pred_fallthru
      _
    // Predicated region
    $region14: #{tpu_custom_call.1} parent=1 // pred_check
      _
    $region15: #{tpu_custom_call.1} parent=1 // pred_check_branch
      %22 = sbr.rel (0) target = $region17
    $region16: #{tpu_custom_call.1} parent=1 // pred_region
      _
    $region17: #{tpu_custom_call.1} parent=1 // pred_fallthru
      _
    // Predicated region
    $region18: #{tpu_custom_call.1} parent=1 // pred_check
      _
    $region19: #{tpu_custom_call.1} parent=1 // pred_check_branch
      %24 = sbr.rel (0) target = $region21
    $region20: #{tpu_custom_call.1} parent=1 // pred_region
      _
    $region21: #{tpu_custom_call.1} parent=1 // pred_fallthru
      _
    // Predicated region
    $region22: #{tpu_custom_call.1} parent=1 // pred_check
      _
    $region23: #{tpu_custom_call.1} parent=1 // pred_check_branch
      %26 = sbr.rel (0) target = $region25
    $region24: #{tpu_custom_call.1} parent=1 // pred_region
      _
    $region25: #{tpu_custom_call.1} parent=1 // pred_fallthru
      _
    // Predicated region
    $region26: #{tpu_custom_call.1} parent=1 // pred_check
      _
    $region27: #{tpu_custom_call.1} parent=1 // pred_check_branch
      %28 = sbr.rel (0) target = $region29
    $region28: #{tpu_custom_call.1} parent=1 // pred_region
      _
    $region29: #{tpu_custom_call.1} parent=1 // pred_fallthru
      _
    // Predicated region
    $region30: #{tpu_custom_call.1} parent=1 // pred_check
      _
    $region31: #{tpu_custom_call.1} parent=1 // pred_check_branch
      %30 = sbr.rel (0) target = $region33
    $region32: #{tpu_custom_call.1} parent=1 // pred_region
      _
    $region33: #{tpu_custom_call.1} parent=1 // pred_fallthru
      _
    // Predicated region
    $region34: #{tpu_custom_call.1} parent=1 // pred_check
      _
    $region35: #{tpu_custom_call.1} parent=1 // pred_check_branch
      %32 = sbr.rel (0) target = $region37
    $region36: #{tpu_custom_call.1} parent=1 // pred_region
      _
    $region37: #{tpu_custom_call.1} parent=1 // pred_fallthru
      _
    %vm33 = vcmask 31744
    %34 = vst.msk [vmem:[#allocation2] sm:$0xff] %vm33, 0.0
    %35 = vst.msk [vmem:[#allocation2 + $0x8] sm:$0xff] %vm33, 0.0
    %vm36 = vcmask 25600
    %37 = vst.msk [vmem:[#allocation2 + $0x10] sm:$0x3] %vm36, 0.0
    %38 = vst.msk [vmem:[#allocation2 + $0x18] sm:$0xff] %vm33, 0.0
    %39 = vst.msk [vmem:[#allocation2 + $0x20] sm:$0xff] %vm33, 0.0
    %40 = vst.msk [vmem:[#allocation2 + $0x28] sm:$0x3] %vm36, 0.0
    %41 = vst.msk [vmem:[#allocation2 + $0x30] sm:$0xff] %vm33, 0.0
    %42 = vst.msk [vmem:[#allocation2 + $0x38] sm:$0xff] %vm33, 0.0
    %43 = vst.msk [vmem:[#allocation2 + $0x40] sm:$0x3] %vm36, 0.0
    %44 = vst.msk [vmem:[#allocation2 + $0x48] sm:$0xff] %vm33, 0.0
    %45 = vst.msk [vmem:[#allocation2 + $0x50] sm:$0xff] %vm33, 0.0
    %46 = vst.msk [vmem:[#allocation2 + $0x58] sm:$0x3] %vm36, 0.0
    %47 = vst.msk [vmem:[#allocation2 + $0x60] sm:$0xff] %vm33, 0.0
    %48 = vst.msk [vmem:[#allocation2 + $0x68] sm:$0xff] %vm33, 0.0
    %49 = vst.msk [vmem:[#allocation2 + $0x70] sm:$0x3] %vm36, 0.0
    %50 = vst.msk [vmem:[#allocation2 + $0x78] sm:$0xff] %vm33, 0.0
    %51 = vst.msk [vmem:[#allocation2 + $0x80] sm:$0xff] %vm33, 0.0
    %52 = vst.msk [vmem:[#allocation2 + $0x88] sm:$0x3] %vm36, 0.0
    %53 = vst.msk [vmem:[#allocation2 + $0x90] sm:$0xff] %vm33, 0.0
    %54 = vst.msk [vmem:[#allocation2 + $0x98] sm:$0xff] %vm33, 0.0
    %55 = vst.msk [vmem:[#allocation2 + $0xa0] sm:$0x3] %vm36, 0.0
    %56 = vst.msk [vmem:[#allocation2 + $0xa8] sm:$0xff] %vm33, 0.0
    %57 = vst.msk [vmem:[#allocation2 + $0xb0] sm:$0xff] %vm33, 0.0
    %58 = vst.msk [vmem:[#allocation2 + $0xb8] sm:$0x3] %vm36, 0.0
    %59 = vst.msk [vmem:[#allocation2 + $0xc0] sm:$0xff] %vm33, 0.0
    %60 = vst.msk [vmem:[#allocation2 + $0xc8] sm:$0xff] %vm33, 0.0
    %61 = vst.msk [vmem:[#allocation2 + $0xd0] sm:$0x3] %vm36, 0.0
    %62 = vst.msk [vmem:[#allocation2 + $0xd8] sm:$0xff] %vm33, 0.0
    %63 = vst.msk [vmem:[#allocation2 + $0xe0] sm:$0xff] %vm33, 0.0
    %64 = vst.msk [vmem:[#allocation2 + $0xe8] sm:$0x3] %vm36, 0.0
    %65 = vst.msk [vmem:[#allocation2 + $0xf0] sm:$0xff] %vm33, 0.0
    %66 = vst.msk [vmem:[#allocation2 + $0xf8] sm:$0xff] %vm33, 0.0
    %67 = vst.msk [vmem:[#allocation2 + $0x100] sm:$0x3] %vm36, 0.0
    %68 = vst.msk [vmem:[#allocation2 + $0x108] sm:$0xff] %vm33, 0.0
    %69 = vst.msk [vmem:[#allocation2 + $0x110] sm:$0xff] %vm33, 0.0
    %70 = vst.msk [vmem:[#allocation2 + $0x118] sm:$0x3] %vm36, 0.0
    %71 = vst.msk [vmem:[#allocation2 + $0x120] sm:$0xff] %vm33, 0.0
    %72 = vst.msk [vmem:[#allocation2 + $0x128] sm:$0xff] %vm33, 0.0
    %73 = vst.msk [vmem:[#allocation2 + $0x130] sm:$0x3] %vm36, 0.0
    %74 = vst.msk [vmem:[#allocation2 + $0x138] sm:$0xff] %vm33, 0.0
    %75 = vst.msk [vmem:[#allocation2 + $0x140] sm:$0xff] %vm33, 0.0
    %76 = vst.msk [vmem:[#allocation2 + $0x148] sm:$0x3] %vm36, 0.0
    %77 = vst.msk [vmem:[#allocation2 + $0x150] sm:$0xff] %vm33, 0.0
    %78 = vst.msk [vmem:[#allocation2 + $0x158] sm:$0xff] %vm33, 0.0
    %79 = vst.msk [vmem:[#allocation2 + $0x160] sm:$0x3] %vm36, 0.0
    %80 = vst.msk [vmem:[#allocation2 + $0x168] sm:$0xff] %vm33, 0.0
    %81 = vst.msk [vmem:[#allocation2 + $0x170] sm:$0xff] %vm33, 0.0
    %82 = vst.msk [vmem:[#allocation2 + $0x178] sm:$0x3] %vm36, 0.0
    %83 = vst.msk [vmem:[#allocation2 + $0x180] sm:$0xff] %vm33, 0.0
    %84 = vst.msk [vmem:[#allocation2 + $0x188] sm:$0xff] %vm33, 0.0
    %85 = vst.msk [vmem:[#allocation2 + $0x190] sm:$0x3] %vm36, 0.0
    %86 = vst.msk [vmem:[#allocation2 + $0x198] sm:$0xff] %vm33, 0.0
    %87 = vst.msk [vmem:[#allocation2 + $0x1a0] sm:$0xff] %vm33, 0.0
    %88 = vst.msk [vmem:[#allocation2 + $0x1a8] sm:$0x3] %vm36, 0.0
    %89 = vst.msk [vmem:[#allocation2 + $0x1b0] sm:$0xff] %vm33, 0.0
    %90 = vst.msk [vmem:[#allocation2 + $0x1b8] sm:$0xff] %vm33, 0.0
    %91 = vst.msk [vmem:[#allocation2 + $0x1c0] sm:$0x3] %vm36, 0.0
    %92 = vst.msk [vmem:[#allocation2 + $0x1c8] sm:$0xff] %vm33, 0.0
    %93 = vst.msk [vmem:[#allocation2 + $0x1d0] sm:$0xff] %vm33, 0.0
    %94 = vst.msk [vmem:[#allocation2 + $0x1d8] sm:$0x3] %vm36, 0.0
    %95 = vst.msk [vmem:[#allocation2 + $0x1e0] sm:$0xff] %vm33, 0.0
    %96 = vst.msk [vmem:[#allocation2 + $0x1e8] sm:$0xff] %vm33, 0.0
    %97 = vst.msk [vmem:[#allocation2 + $0x1f0] sm:$0x3] %vm36, 0.0
    %98 = vst.msk [vmem:[#allocation2 + $0x1f8] sm:$0xff] %vm33, 0.0
    %99 = vst.msk [vmem:[#allocation2 + $0x200] sm:$0xff] %vm33, 0.0
    %100 = vst.msk [vmem:[#allocation2 + $0x208] sm:$0x3] %vm36, 0.0
    %101 = vst.msk [vmem:[#allocation2 + $0x210] sm:$0xff] %vm33, 0.0
    %102 = vst.msk [vmem:[#allocation2 + $0x218] sm:$0xff] %vm33, 0.0
    %103 = vst.msk [vmem:[#allocation2 + $0x220] sm:$0x3] %vm36, 0.0
    %104 = vst.msk [vmem:[#allocation2 + $0x228] sm:$0xff] %vm33, 0.0
    %105 = vst.msk [vmem:[#allocation2 + $0x230] sm:$0xff] %vm33, 0.0
    %106 = vst.msk [vmem:[#allocation2 + $0x238] sm:$0x3] %vm36, 0.0
    %107 = vst.msk [vmem:[#allocation2 + $0x240] sm:$0xff] %vm33, 0.0
    %108 = vst.msk [vmem:[#allocation2 + $0x248] sm:$0xff] %vm33, 0.0
    %109 = vst.msk [vmem:[#allocation2 + $0x250] sm:$0x3] %vm36, 0.0
    %110 = vst.msk [vmem:[#allocation2 + $0x258] sm:$0xff] %vm33, 0.0
    %111 = vst.msk [vmem:[#allocation2 + $0x260] sm:$0xff] %vm33, 0.0
    %112 = vst.msk [vmem:[#allocation2 + $0x268] sm:$0x3] %vm36, 0.0
    %113 = vst.msk [vmem:[#allocation2 + $0x270] sm:$0xff] %vm33, 0.0
    %114 = vst.msk [vmem:[#allocation2 + $0x278] sm:$0xff] %vm33, 0.0
    %115 = vst.msk [vmem:[#allocation2 + $0x280] sm:$0x3] %vm36, 0.0
    %116 = vst.msk [vmem:[#allocation2 + $0x288] sm:$0xff] %vm33, 0.0
    %117 = vst.msk [vmem:[#allocation2 + $0x290] sm:$0xff] %vm33, 0.0
    %118 = vst.msk [vmem:[#allocation2 + $0x298] sm:$0x3] %vm36, 0.0
    %119 = vst.msk [vmem:[#allocation2 + $0x2a0] sm:$0xff] %vm33, 0.0
    %120 = vst.msk [vmem:[#allocation2 + $0x2a8] sm:$0xff] %vm33, 0.0
    %121 = vst.msk [vmem:[#allocation2 + $0x2b0] sm:$0x3] %vm36, 0.0
    %122 = vst.msk [vmem:[#allocation2 + $0x2b8] sm:$0xff] %vm33, 0.0
    %123 = vst.msk [vmem:[#allocation2 + $0x2c0] sm:$0xff] %vm33, 0.0
    %124 = vst.msk [vmem:[#allocation2 + $0x2c8] sm:$0x3] %vm36, 0.0
    %125 = vst.msk [vmem:[#allocation2 + $0x2d0] sm:$0xff] %vm33, 0.0
    %126 = vst.msk [vmem:[#allocation2 + $0x2d8] sm:$0xff] %vm33, 0.0
    %127 = vst.msk [vmem:[#allocation2 + $0x2e0] sm:$0x3] %vm36, 0.0
    %128 = vst.msk [vmem:[#allocation2 + $0x2e8] sm:$0xff] %vm33, 0.0
    %129 = vst.msk [vmem:[#allocation2 + $0x2f0] sm:$0xff] %vm33, 0.0
    %130 = vst.msk [vmem:[#allocation2 + $0x2f8] sm:$0x3] %vm36, 0.0
    %131 = vst.msk [vmem:[#allocation2 + $0x300] sm:$0xff] %vm33, 0.0
    %132 = vst.msk [vmem:[#allocation2 + $0x308] sm:$0xff] %vm33, 0.0
    %133 = vst.msk [vmem:[#allocation2 + $0x310] sm:$0x3] %vm36, 0.0
    %134 = vst.msk [vmem:[#allocation2 + $0x318] sm:$0xff] %vm33, 0.0
    %135 = vst.msk [vmem:[#allocation2 + $0x320] sm:$0xff] %vm33, 0.0
    %136 = vst.msk [vmem:[#allocation2 + $0x328] sm:$0x3] %vm36, 0.0
    %137 = vst.msk [vmem:[#allocation2 + $0x330] sm:$0xff] %vm33, 0.0
    %138 = vst.msk [vmem:[#allocation2 + $0x338] sm:$0xff] %vm33, 0.0
    %139 = vst.msk [vmem:[#allocation2 + $0x340] sm:$0x3] %vm36, 0.0
    %140 = vst.msk [vmem:[#allocation2 + $0x348] sm:$0xff] %vm33, 0.0
    %141 = vst.msk [vmem:[#allocation2 + $0x350] sm:$0xff] %vm33, 0.0
    %142 = vst.msk [vmem:[#allocation2 + $0x358] sm:$0x3] %vm36, 0.0
    %v143 = vld [vmem:[%s0] sm:$0xff]
    %v144 = vld [vmem:[%s0 + $0x8] sm:$0xff]
    %v145 = vld [vmem:[%s0 + $0x10] sm:$0xff]
    %v146 = vld [vmem:[%s0 + $0x18] sm:$0xff]
    %v147 = vld [vmem:[%s0 + $0x20] sm:$0xff]
    %v148 = vld [vmem:[%s0 + $0x28] sm:$0xff]
    %v149 = vld [vmem:[%s0 + $0x30] sm:$0xff]
    %v150 = vld [vmem:[%s0 + $0x38] sm:$0xff]
    %v151 = vld [vmem:[%s0 + $0x40] sm:$0xff]
    %v152 = vld [vmem:[%s0 + $0x48] sm:$0xff]
    %v153 = vld [vmem:[%s0 + $0x50] sm:$0xff]
    %v154 = vld [vmem:[%s0 + $0x58] sm:$0xff]
    %v155 = vld [vmem:[%s0 + $0x60] sm:$0xff]
    %v156 = vld [vmem:[%s0 + $0x68] sm:$0xff]
    %v157 = vld [vmem:[%s0 + $0x70] sm:$0xff]
    %v158 = vld [vmem:[%s0 + $0x78] sm:$0xff]
    %v159 = vld [vmem:[%s0 + $0x80] sm:$0xff]
    %v160 = vld [vmem:[%s0 + $0x88] sm:$0xff]
    %v161 = vld [vmem:[%s0 + $0x90] sm:$0xff]
    %v162 = vld [vmem:[%s0 + $0x98] sm:$0xff]
    %v163 = vld [vmem:[%s0 + $0xa0] sm:$0xff]
    %v164 = vld [vmem:[%s0 + $0xa8] sm:$0xff]
    %v165 = vld [vmem:[%s0 + $0xb0] sm:$0xff]
    %v166 = vld [vmem:[%s0 + $0xb8] sm:$0xff]
    %v167 = vld [vmem:[%s0 + $0xc0] sm:$0xff]
    %v168 = vld [vmem:[%s0 + $0xc8] sm:$0xff]
    %v169 = vld [vmem:[%s0 + $0xd0] sm:$0xff]
    %v170 = vld [vmem:[%s0 + $0xd8] sm:$0xff]
    %v171 = vld [vmem:[%s0 + $0xe0] sm:$0xff]
    %v172 = vld [vmem:[%s0 + $0xe8] sm:$0xff]
    %v173 = vld [vmem:[%s0 + $0xf0] sm:$0xff]
    %v174 = vld [vmem:[%s0 + $0xf8] sm:$0xff]
    %v175 = vld [vmem:[%s0 + $0x100] sm:$0xff]
    %v176 = vld [vmem:[%s0 + $0x108] sm:$0xff]
    %v177 = vld [vmem:[%s0 + $0x110] sm:$0xff]
    %v178 = vld [vmem:[%s0 + $0x118] sm:$0xff]
    %v179 = vld [vmem:[%s0 + $0x120] sm:$0xff]
    %v180 = vld [vmem:[%s0 + $0x128] sm:$0xff]
    %v181 = vld [vmem:[%s0 + $0x130] sm:$0xff]
    %v182 = vld [vmem:[%s0 + $0x138] sm:$0xff]
    %v183 = vld [vmem:[%s0 + $0x140] sm:$0xff]
    %v184 = vld [vmem:[%s0 + $0x148] sm:$0xff]
    %v185 = vld [vmem:[%s0 + $0x150] sm:$0xff]
    %v186 = vld [vmem:[%s0 + $0x158] sm:$0xff]
    %v187 = vld [vmem:[%s0 + $0x160] sm:$0xff]
    %v188 = vld [vmem:[%s0 + $0x168] sm:$0xff]
    %v189 = vld [vmem:[%s0 + $0x170] sm:$0xff]
    %v190 = vld [vmem:[%s0 + $0x178] sm:$0xff]
    %v191 = vld [vmem:[%s0 + $0x180] sm:$0xff]
    %v192 = vld [vmem:[%s0 + $0x188] sm:$0xff]
    %v193 = vld [vmem:[%s0 + $0x190] sm:$0xff]
    %v194 = vld [vmem:[%s0 + $0x198] sm:$0xff]
    %v195 = vld [vmem:[%s0 + $0x1a0] sm:$0xff]
    %v196 = vld [vmem:[%s0 + $0x1a8] sm:$0xff]
    %v197 = vld [vmem:[%s0 + $0x1b0] sm:$0xff]
    %v198 = vld [vmem:[%s0 + $0x1b8] sm:$0xff]
    %v199 = vld [vmem:[%s0 + $0x1c0] sm:$0xff]
    %v200 = vld [vmem:[%s0 + $0x1c8] sm:$0xff]
    %v201 = vld [vmem:[%s0 + $0x1d0] sm:$0xff]
    %v202 = vld [vmem:[%s0 + $0x1d8] sm:$0xff]
    %v203 = vld [vmem:[%s0 + $0x1e0] sm:$0xff]
    %v204 = vld [vmem:[%s0 + $0x1e8] sm:$0xff]
    %v205 = vld [vmem:[%s0 + $0x1f0] sm:$0xff]
    %v206 = vld [vmem:[%s0 + $0x1f8] sm:$0xff]
    %s207 = scalar_lea.vmem [#allocation2], 24
    %208 = vst.msk [vmem:[%s207 + $0x1] sm:$0xff] %vm33, %v143
    %209 = vst.msk [vmem:[%s207 + $0x9] sm:$0xff] %vm33, %v144
    %210 = vst.msk [vmem:[%s207 + $0x19] sm:$0xff] %vm33, %v145
    %211 = vst.msk [vmem:[%s207 + $0x21] sm:$0xff] %vm33, %v146
    %212 = vst.msk [vmem:[%s207 + $0x31] sm:$0xff] %vm33, %v147
    %213 = vst.msk [vmem:[%s207 + $0x39] sm:$0xff] %vm33, %v148
    %214 = vst.msk [vmem:[%s207 + $0x49] sm:$0xff] %vm33, %v149
    %215 = vst.msk [vmem:[%s207 + $0x51] sm:$0xff] %vm33, %v150
    %216 = vst.msk [vmem:[%s207 + $0x61] sm:$0xff] %vm33, %v151
    %217 = vst.msk [vmem:[%s207 + $0x69] sm:$0xff] %vm33, %v152
    %218 = vst.msk [vmem:[%s207 + $0x79] sm:$0xff] %vm33, %v153
    %219 = vst.msk [vmem:[%s207 + $0x81] sm:$0xff] %vm33, %v154
    %220 = vst.msk [vmem:[%s207 + $0x91] sm:$0xff] %vm33, %v155
    %221 = vst.msk [vmem:[%s207 + $0x99] sm:$0xff] %vm33, %v156
    %222 = vst.msk [vmem:[%s207 + $0xa9] sm:$0xff] %vm33, %v157
    %223 = vst.msk [vmem:[%s207 + $0xb1] sm:$0xff] %vm33, %v158
    %224 = vst.msk [vmem:[%s207 + $0xc1] sm:$0xff] %vm33, %v159
    %225 = vst.msk [vmem:[%s207 + $0xc9] sm:$0xff] %vm33, %v160
    %226 = vst.msk [vmem:[%s207 + $0xd9] sm:$0xff] %vm33, %v161
    %227 = vst.msk [vmem:[%s207 + $0xe1] sm:$0xff] %vm33, %v162
    %228 = vst.msk [vmem:[%s207 + $0xf1] sm:$0xff] %vm33, %v163
    %229 = vst.msk [vmem:[%s207 + $0xf9] sm:$0xff] %vm33, %v164
    %230 = vst.msk [vmem:[%s207 + $0x109] sm:$0xff] %vm33, %v165
    %231 = vst.msk [vmem:[%s207 + $0x111] sm:$0xff] %vm33, %v166
    %232 = vst.msk [vmem:[%s207 + $0x121] sm:$0xff] %vm33, %v167
    %233 = vst.msk [vmem:[%s207 + $0x129] sm:$0xff] %vm33, %v168
    %234 = vst.msk [vmem:[%s207 + $0x139] sm:$0xff] %vm33, %v169
    %235 = vst.msk [vmem:[%s207 + $0x141] sm:$0xff] %vm33, %v170
    %236 = vst.msk [vmem:[%s207 + $0x151] sm:$0xff] %vm33, %v171
    %237 = vst.msk [vmem:[%s207 + $0x159] sm:$0xff] %vm33, %v172
    %238 = vst.msk [vmem:[%s207 + $0x169] sm:$0xff] %vm33, %v173
    %239 = vst.msk [vmem:[%s207 + $0x171] sm:$0xff] %vm33, %v174
    %240 = vst.msk [vmem:[%s207 + $0x1b1] sm:$0xff] %vm33, %v175
    %241 = vst.msk [vmem:[%s207 + $0x1b9] sm:$0xff] %vm33, %v176
    %242 = vst.msk [vmem:[%s207 + $0x1c9] sm:$0xff] %vm33, %v177
    %243 = vst.msk [vmem:[%s207 + $0x1d1] sm:$0xff] %vm33, %v178
    %244 = vst.msk [vmem:[%s207 + $0x1e1] sm:$0xff] %vm33, %v179
    %245 = vst.msk [vmem:[%s207 + $0x1e9] sm:$0xff] %vm33, %v180
    %246 = vst.msk [vmem:[%s207 + $0x1f9] sm:$0xff] %vm33, %v181
    %247 = vst.msk [vmem:[%s207 + $0x201] sm:$0xff] %vm33, %v182
    %248 = vst.msk [vmem:[%s207 + $0x211] sm:$0xff] %vm33, %v183
    %249 = vst.msk [vmem:[%s207 + $0x219] sm:$0xff] %vm33, %v184
    %250 = vst.msk [vmem:[%s207 + $0x229] sm:$0xff] %vm33, %v185
    %251 = vst.msk [vmem:[%s207 + $0x231] sm:$0xff] %vm33, %v186
    %252 = vst.msk [vmem:[%s207 + $0x241] sm:$0xff] %vm33, %v187
    %253 = vst.msk [vmem:[%s207 + $0x249] sm:$0xff] %vm33, %v188
    %254 = vst.msk [vmem:[%s207 + $0x259] sm:$0xff] %vm33, %v189
    %255 = vst.msk [vmem:[%s207 + $0x261] sm:$0xff] %vm33, %v190
    %256 = vst.msk [vmem:[%s207 + $0x271] sm:$0xff] %vm33, %v191
    %257 = vst.msk [vmem:[%s207 + $0x279] sm:$0xff] %vm33, %v192
    %258 = vst.msk [vmem:[%s207 + $0x289] sm:$0xff] %vm33, %v193
    %259 = vst.msk [vmem:[%s207 + $0x291] sm:$0xff] %vm33, %v194
    %260 = vst.msk [vmem:[%s207 + $0x2a1] sm:$0xff] %vm33, %v195
    %261 = vst.msk [vmem:[%s207 + $0x2a9] sm:$0xff] %vm33, %v196
    %262 = vst.msk [vmem:[%s207 + $0x2b9] sm:$0xff] %vm33, %v197
    %263 = vst.msk [vmem:[%s207 + $0x2c1] sm:$0xff] %vm33, %v198
    %264 = vst.msk [vmem:[%s207 + $0x2d1] sm:$0xff] %vm33, %v199
    %265 = vst.msk [vmem:[%s207 + $0x2d9] sm:$0xff] %vm33, %v200
    %266 = vst.msk [vmem:[%s207 + $0x2e9] sm:$0xff] %vm33, %v201
    %267 = vst.msk [vmem:[%s207 + $0x2f1] sm:$0xff] %vm33, %v202
    %268 = vst.msk [vmem:[%s207 + $0x301] sm:$0xff] %vm33, %v203
    %269 = vst.msk [vmem:[%s207 + $0x309] sm:$0xff] %vm33, %v204
    %270 = vst.msk [vmem:[%s207 + $0x319] sm:$0xff] %vm33, %v205
    %271 = vst.msk [vmem:[%s207 + $0x321] sm:$0xff] %vm33, %v206
    %v272 = vld [vmem:[#allocation2] sm:$0xff]
    %v273 = vld [vmem:[#allocation2 + $0x8] sm:$0xff]
    %v274 = vld [vmem:[#allocation2 + $0x18] sm:$0xff]
    %v275 = vld [vmem:[#allocation2 + $0x20] sm:$0xff]
    %v276 = vld [vmem:[#allocation2 + $0x30] sm:$0xff]
    %v277 = vld [vmem:[#allocation2 + $0x38] sm:$0xff]
    %v278 = vld [vmem:[#allocation2 + $0x48] sm:$0xff]
    %v279 = vld [vmem:[#allocation2 + $0x50] sm:$0xff]
    %v280 = vld [vmem:[#allocation2 + $0x60] sm:$0xff]
    %v281 = vld [vmem:[#allocation2 + $0x68] sm:$0xff]
    %v282 = vld [vmem:[#allocation2 + $0x78] sm:$0xff]
    %v283 = vld [vmem:[#allocation2 + $0x80] sm:$0xff]
    %v284 = vld [vmem:[#allocation2 + $0x90] sm:$0xff]
    %v285 = vld [vmem:[#allocation2 + $0x98] sm:$0xff]
    %v286 = vld [vmem:[#allocation2 + $0xa8] sm:$0xff]
    %v287 = vld [vmem:[#allocation2 + $0xb0] sm:$0xff]
    %v288 = vld [vmem:[#allocation2 + $0xc0] sm:$0xff]
    %v289 = vld [vmem:[#allocation2 + $0xc8] sm:$0xff]
    %v290 = vld [vmem:[#allocation2 + $0xd8] sm:$0xff]
    %v291 = vld [vmem:[#allocation2 + $0xe0] sm:$0xff]
    %v292 = vld [vmem:[#allocation2 + $0xf0] sm:$0xff]
    %v293 = vld [vmem:[#allocation2 + $0xf8] sm:$0xff]
    %v294 = vld [vmem:[#allocation2 + $0x108] sm:$0xff]
    %v295 = vld [vmem:[#allocation2 + $0x110] sm:$0xff]
    %v296 = vld [vmem:[#allocation2 + $0x120] sm:$0xff]
    %v297 = vld [vmem:[#allocation2 + $0x128] sm:$0xff]
    %v298 = vld [vmem:[#allocation2 + $0x138] sm:$0xff]
    %v299 = vld [vmem:[#allocation2 + $0x140] sm:$0xff]
    %v300 = vld [vmem:[#allocation2 + $0x150] sm:$0xff]
    %v301 = vld [vmem:[#allocation2 + $0x158] sm:$0xff]
    %v302 = vld [vmem:[#allocation2 + $0x168] sm:$0xff]
    %v303 = vld [vmem:[#allocation2 + $0x170] sm:$0xff]
    %v304 = vld [vmem:[#allocation2 + $0x1b0] sm:$0xff]
    %v305 = vld [vmem:[#allocation2 + $0x1b8] sm:$0xff]
    %v306 = vld [vmem:[#allocation2 + $0x1c8] sm:$0xff]
    %v307 = vld [vmem:[#allocation2 + $0x1d0] sm:$0xff]
    %v308 = vld [vmem:[#allocation2 + $0x1e0] sm:$0xff]
    %v309 = vld [vmem:[#allocation2 + $0x1e8] sm:$0xff]
    %v310 = vld [vmem:[#allocation2 + $0x1f8] sm:$0xff]
    %v311 = vld [vmem:[#allocation2 + $0x200] sm:$0xff]
    %v312 = vld [vmem:[#allocation2 + $0x210] sm:$0xff]
    %v313 = vld [vmem:[#allocation2 + $0x218] sm:$0xff]
    %v314 = vld [vmem:[#allocation2 + $0x228] sm:$0xff]
    %v315 = vld [vmem:[#allocation2 + $0x230] sm:$0xff]
    %v316 = vld [vmem:[#allocation2 + $0x240] sm:$0xff]
    %v317 = vld [vmem:[#allocation2 + $0x248] sm:$0xff]
    %v318 = vld [vmem:[#allocation2 + $0x258] sm:$0xff]
    %v319 = vld [vmem:[#allocation2 + $0x260] sm:$0xff]
    %v320 = vld [vmem:[#allocation2 + $0x270] sm:$0xff]
    %v321 = vld [vmem:[#allocation2 + $0x278] sm:$0xff]
    %v322 = vld [vmem:[#allocation2 + $0x288] sm:$0xff]
    %v323 = vld [vmem:[#allocation2 + $0x290] sm:$0xff]
    %v324 = vld [vmem:[#allocation2 + $0x2a0] sm:$0xff]
    %v325 = vld [vmem:[#allocation2 + $0x2a8] sm:$0xff]
    %v326 = vld [vmem:[#allocation2 + $0x2b8] sm:$0xff]
    %v327 = vld [vmem:[#allocation2 + $0x2c0] sm:$0xff]
    %v328 = vld [vmem:[#allocation2 + $0x2d0] sm:$0xff]
    %v329 = vld [vmem:[#allocation2 + $0x2d8] sm:$0xff]
    %v330 = vld [vmem:[#allocation2 + $0x2e8] sm:$0xff]
    %v331 = vld [vmem:[#allocation2 + $0x2f0] sm:$0xff]
    %v332 = vld [vmem:[#allocation2 + $0x300] sm:$0xff]
    %v333 = vld [vmem:[#allocation2 + $0x308] sm:$0xff]
    %v334 = vld [vmem:[#allocation2 + $0x318] sm:$0xff]
    %v335 = vld [vmem:[#allocation2 + $0x320] sm:$0xff]
    %336 = vst.msk [vmem:[#allocation4] sm:$0xff] %vm33, %v272
    %337 = vst.msk [vmem:[#allocation4 + $0x8] sm:$0xff] %vm33, %v273
    %338 = vst.msk [vmem:[#allocation4 + $0x10] sm:$0xff] %vm33, %v274
    %339 = vst.msk [vmem:[#allocation4 + $0x18] sm:$0xff] %vm33, %v275
    %340 = vst.msk [vmem:[#allocation4 + $0x20] sm:$0xff] %vm33, %v276
    %341 = vst.msk [vmem:[#allocation4 + $0x28] sm:$0xff] %vm33, %v277
    %342 = vst.msk [vmem:[#allocation4 + $0x30] sm:$0xff] %vm33, %v278
    %343 = vst.msk [vmem:[#allocation4 + $0x38] sm:$0xff] %vm33, %v279
    %344 = vst.msk [vmem:[#allocation4 + $0x40] sm:$0xff] %vm33, %v280
    %345 = vst.msk [vmem:[#allocation4 + $0x48] sm:$0xff] %vm33, %v281
    %346 = vst.msk [vmem:[#allocation4 + $0x50] sm:$0xff] %vm33, %v282
    %347 = vst.msk [vmem:[#allocation4 + $0x58] sm:$0xff] %vm33, %v283
    %348 = vst.msk [vmem:[#allocation4 + $0x60] sm:$0xff] %vm33, %v284
    %349 = vst.msk [vmem:[#allocation4 + $0x68] sm:$0xff] %vm33, %v285
    %350 = vst.msk [vmem:[#allocation4 + $0x70] sm:$0xff] %vm33, %v286
    %351 = vst.msk [vmem:[#allocation4 + $0x78] sm:$0xff] %vm33, %v287
    %352 = vst.msk [vmem:[#allocation4 + $0x80] sm:$0xff] %vm33, %v288
    %353 = vst.msk [vmem:[#allocation4 + $0x88] sm:$0xff] %vm33, %v289
    %354 = vst.msk [vmem:[#allocation4 + $0x90] sm:$0xff] %vm33, %v290
    %355 = vst.msk [vmem:[#allocation4 + $0x98] sm:$0xff] %vm33, %v291
    %356 = vst.msk [vmem:[#allocation4 + $0xa0] sm:$0xff] %vm33, %v292
    %357 = vst.msk [vmem:[#allocation4 + $0xa8] sm:$0xff] %vm33, %v293
    %358 = vst.msk [vmem:[#allocation4 + $0xb0] sm:$0xff] %vm33, %v294
    %359 = vst.msk [vmem:[#allocation4 + $0xb8] sm:$0xff] %vm33, %v295
    %360 = vst.msk [vmem:[#allocation4 + $0xc0] sm:$0xff] %vm33, %v296
    %361 = vst.msk [vmem:[#allocation4 + $0xc8] sm:$0xff] %vm33, %v297
    %362 = vst.msk [vmem:[#allocation4 + $0xd0] sm:$0xff] %vm33, %v298
    %363 = vst.msk [vmem:[#allocation4 + $0xd8] sm:$0xff] %vm33, %v299
    %364 = vst.msk [vmem:[#allocation4 + $0xe0] sm:$0xff] %vm33, %v300
    %365 = vst.msk [vmem:[#allocation4 + $0xe8] sm:$0xff] %vm33, %v301
    %366 = vst.msk [vmem:[#allocation4 + $0xf0] sm:$0xff] %vm33, %v302
    %367 = vst.msk [vmem:[#allocation4 + $0xf8] sm:$0xff] %vm33, %v303
    %368 = vst.msk [vmem:[#allocation4 + $0x100] sm:$0xff] %vm33, %v304
    %369 = vst.msk [vmem:[#allocation4 + $0x108] sm:$0xff] %vm33, %v305
    %370 = vst.msk [vmem:[#allocation4 + $0x110] sm:$0xff] %vm33, %v306
    %371 = vst.msk [vmem:[#allocation4 + $0x118] sm:$0xff] %vm33, %v307
    %372 = vst.msk [vmem:[#allocation4 + $0x120] sm:$0xff] %vm33, %v308
    %373 = vst.msk [vmem:[#allocation4 + $0x128] sm:$0xff] %vm33, %v309
    %374 = vst.msk [vmem:[#allocation4 + $0x130] sm:$0xff] %vm33, %v310
    %375 = vst.msk [vmem:[#allocation4 + $0x138] sm:$0xff] %vm33, %v311
    %376 = vst.msk [vmem:[#allocation4 + $0x140] sm:$0xff] %vm33, %v312
    %377 = vst.msk [vmem:[#allocation4 + $0x148] sm:$0xff] %vm33, %v313
    %378 = vst.msk [vmem:[#allocation4 + $0x150] sm:$0xff] %vm33, %v314
    %379 = vst.msk [vmem:[#allocation4 + $0x158] sm:$0xff] %vm33, %v315
    %380 = vst.msk [vmem:[#allocation4 + $0x160] sm:$0xff] %vm33, %v316
    %381 = vst.msk [vmem:[#allocation4 + $0x168] sm:$0xff] %vm33, %v317
    %382 = vst.msk [vmem:[#allocation4 + $0x170] sm:$0xff] %vm33, %v318
    %383 = vst.msk [vmem:[#allocation4 + $0x178] sm:$0xff] %vm33, %v319
    %384 = vst.msk [vmem:[#allocation4 + $0x180] sm:$0xff] %vm33, %v320
    %385 = vst.msk [vmem:[#allocation4 + $0x188] sm:$0xff] %vm33, %v321
    %386 = vst.msk [vmem:[#allocation4 + $0x190] sm:$0xff] %vm33, %v322
    %387 = vst.msk [vmem:[#allocation4 + $0x198] sm:$0xff] %vm33, %v323
    %388 = vst.msk [vmem:[#allocation4 + $0x1a0] sm:$0xff] %vm33, %v324
    %389 = vst.msk [vmem:[#allocation4 + $0x1a8] sm:$0xff] %vm33, %v325
    %390 = vst.msk [vmem:[#allocation4 + $0x1b0] sm:$0xff] %vm33, %v326
    %391 = vst.msk [vmem:[#allocation4 + $0x1b8] sm:$0xff] %vm33, %v327
    %392 = vst.msk [vmem:[#allocation4 + $0x1c0] sm:$0xff] %vm33, %v328
    %393 = vst.msk [vmem:[#allocation4 + $0x1c8] sm:$0xff] %vm33, %v329
    %394 = vst.msk [vmem:[#allocation4 + $0x1d0] sm:$0xff] %vm33, %v330
    %395 = vst.msk [vmem:[#allocation4 + $0x1d8] sm:$0xff] %vm33, %v331
    %396 = vst.msk [vmem:[#allocation4 + $0x1e0] sm:$0xff] %vm33, %v332
    %397 = vst.msk [vmem:[#allocation4 + $0x1e8] sm:$0xff] %vm33, %v333
    %398 = vst.msk [vmem:[#allocation4 + $0x1f0] sm:$0xff] %vm33, %v334
    %399 = vst.msk [vmem:[#allocation4 + $0x1f8] sm:$0xff] %vm33, %v335
    %v400 = vld [vmem:[#allocation2 + $0x1] sm:$0xff]
    %v401 = vld [vmem:[#allocation2 + $0x9] sm:$0xff]
    %v402 = vld [vmem:[#allocation2 + $0x19] sm:$0xff]
    %v403 = vld [vmem:[#allocation2 + $0x21] sm:$0xff]
    %v404 = vld [vmem:[#allocation2 + $0x31] sm:$0xff]
    %v405 = vld [vmem:[#allocation2 + $0x39] sm:$0xff]
    %v406 = vld [vmem:[#allocation2 + $0x49] sm:$0xff]
    %v407 = vld [vmem:[#allocation2 + $0x51] sm:$0xff]
    %v408 = vld [vmem:[#allocation2 + $0x61] sm:$0xff]
    %v409 = vld [vmem:[#allocation2 + $0x69] sm:$0xff]
    %v410 = vld [vmem:[#allocation2 + $0x79] sm:$0xff]
    %v411 = vld [vmem:[#allocation2 + $0x81] sm:$0xff]
    %v412 = vld [vmem:[#allocation2 + $0x91] sm:$0xff]
    %v413 = vld [vmem:[#allocation2 + $0x99] sm:$0xff]
    %v414 = vld [vmem:[#allocation2 + $0xa9] sm:$0xff]
    %v415 = vld [vmem:[#allocation2 + $0xb1] sm:$0xff]
    %v416 = vld [vmem:[#allocation2 + $0xc1] sm:$0xff]
    %v417 = vld [vmem:[#allocation2 + $0xc9] sm:$0xff]
    %v418 = vld [vmem:[#allocation2 + $0xd9] sm:$0xff]
    %v419 = vld [vmem:[#allocation2 + $0xe1] sm:$0xff]
    %v420 = vld [vmem:[#allocation2 + $0xf1] sm:$0xff]
    %v421 = vld [vmem:[#allocation2 + $0xf9] sm:$0xff]
    %v422 = vld [vmem:[#allocation2 + $0x109] sm:$0xff]
    %v423 = vld [vmem:[#allocation2 + $0x111] sm:$0xff]
    %v424 = vld [vmem:[#allocation2 + $0x121] sm:$0xff]
    %v425 = vld [vmem:[#allocation2 + $0x129] sm:$0xff]
    %v426 = vld [vmem:[#allocation2 + $0x139] sm:$0xff]
    %v427 = vld [vmem:[#allocation2 + $0x141] sm:$0xff]
    %v428 = vld [vmem:[#allocation2 + $0x151] sm:$0xff]
    %v429 = vld [vmem:[#allocation2 + $0x159] sm:$0xff]
    %v430 = vld [vmem:[#allocation2 + $0x169] sm:$0xff]
    %v431 = vld [vmem:[#allocation2 + $0x171] sm:$0xff]
    %v432 = vld [vmem:[#allocation2 + $0x1b1] sm:$0xff]
    %v433 = vld [vmem:[#allocation2 + $0x1b9] sm:$0xff]
    %v434 = vld [vmem:[#allocation2 + $0x1c9] sm:$0xff]
    %v435 = vld [vmem:[#allocation2 + $0x1d1] sm:$0xff]
    %v436 = vld [vmem:[#allocation2 + $0x1e1] sm:$0xff]
    %v437 = vld [vmem:[#allocation2 + $0x1e9] sm:$0xff]
    %v438 = vld [vmem:[#allocation2 + $0x1f9] sm:$0xff]
    %v439 = vld [vmem:[#allocation2 + $0x201] sm:$0xff]
    %v440 = vld [vmem:[#allocation2 + $0x211] sm:$0xff]
    %v441 = vld [vmem:[#allocation2 + $0x219] sm:$0xff]
    %v442 = vld [vmem:[#allocation2 + $0x229] sm:$0xff]
    %v443 = vld [vmem:[#allocation2 + $0x231] sm:$0xff]
    %v444 = vld [vmem:[#allocation2 + $0x241] sm:$0xff]
    %v445 = vld [vmem:[#allocation2 + $0x249] sm:$0xff]
    %v446 = vld [vmem:[#allocation2 + $0x259] sm:$0xff]
    %v447 = vld [vmem:[#allocation2 + $0x261] sm:$0xff]
    %v448 = vld [vmem:[#allocation2 + $0x271] sm:$0xff]
    %v449 = vld [vmem:[#allocation2 + $0x279] sm:$0xff]
    %v450 = vld [vmem:[#allocation2 + $0x289] sm:$0xff]
    %v451 = vld [vmem:[#allocation2 + $0x291] sm:$0xff]
    %v452 = vld [vmem:[#allocation2 + $0x2a1] sm:$0xff]
    %v453 = vld [vmem:[#allocation2 + $0x2a9] sm:$0xff]
    %v454 = vld [vmem:[#allocation2 + $0x2b9] sm:$0xff]
    %v455 = vld [vmem:[#allocation2 + $0x2c1] sm:$0xff]
    %v456 = vld [vmem:[#allocation2 + $0x2d1] sm:$0xff]
    %v457 = vld [vmem:[#allocation2 + $0x2d9] sm:$0xff]
    %v458 = vld [vmem:[#allocation2 + $0x2e9] sm:$0xff]
    %v459 = vld [vmem:[#allocation2 + $0x2f1] sm:$0xff]
    %v460 = vld [vmem:[#allocation2 + $0x301] sm:$0xff]
    %v461 = vld [vmem:[#allocation2 + $0x309] sm:$0xff]
    %v462 = vld [vmem:[#allocation2 + $0x319] sm:$0xff]
    %v463 = vld [vmem:[#allocation2 + $0x321] sm:$0xff]
    %528 = vrot.lane.b32.xlu0 %v400, 4
    %v529 = vpop.permute.xlu0 %528
    %530 = vrot.lane.b32.xlu0 %v401, 4
    %v531 = vpop.permute.xlu0 %530
    %532 = vrot.lane.b32.xlu0 %v402, 4
    %v533 = vpop.permute.xlu0 %532
    %534 = vrot.lane.b32.xlu0 %v403, 4
    %v535 = vpop.permute.xlu0 %534
    %536 = vrot.lane.b32.xlu0 %v404, 4
    %v537 = vpop.permute.xlu0 %536
    %538 = vrot.lane.b32.xlu0 %v405, 4
    %v539 = vpop.permute.xlu0 %538
    %540 = vrot.lane.b32.xlu0 %v406, 4
    %v541 = vpop.permute.xlu0 %540
    %542 = vrot.lane.b32.xlu0 %v407, 4
    %v543 = vpop.permute.xlu0 %542
    %544 = vrot.lane.b32.xlu0 %v408, 4
    %v545 = vpop.permute.xlu0 %544
    %546 = vrot.lane.b32.xlu0 %v409, 4
    %v547 = vpop.permute.xlu0 %546
    %548 = vrot.lane.b32.xlu0 %v410, 4
    %v549 = vpop.permute.xlu0 %548
    %550 = vrot.lane.b32.xlu0 %v411, 4
    %v551 = vpop.permute.xlu0 %550
    %552 = vrot.lane.b32.xlu0 %v412, 4
    %v553 = vpop.permute.xlu0 %552
    %554 = vrot.lane.b32.xlu0 %v413, 4
    %v555 = vpop.permute.xlu0 %554
    %556 = vrot.lane.b32.xlu0 %v414, 4
    %v557 = vpop.permute.xlu0 %556
    %558 = vrot.lane.b32.xlu0 %v415, 4
    %v559 = vpop.permute.xlu0 %558
    %560 = vrot.lane.b32.xlu0 %v416, 4
    %v561 = vpop.permute.xlu0 %560
    %562 = vrot.lane.b32.xlu0 %v417, 4
    %v563 = vpop.permute.xlu0 %562
    %564 = vrot.lane.b32.xlu0 %v418, 4
    %v565 = vpop.permute.xlu0 %564
    %566 = vrot.lane.b32.xlu0 %v419, 4
    %v567 = vpop.permute.xlu0 %566
    %568 = vrot.lane.b32.xlu0 %v420, 4
    %v569 = vpop.permute.xlu0 %568
    %570 = vrot.lane.b32.xlu0 %v421, 4
    %v571 = vpop.permute.xlu0 %570
    %572 = vrot.lane.b32.xlu0 %v422, 4
    %v573 = vpop.permute.xlu0 %572
    %574 = vrot.lane.b32.xlu0 %v423, 4
    %v575 = vpop.permute.xlu0 %574
    %576 = vrot.lane.b32.xlu0 %v424, 4
    %v577 = vpop.permute.xlu0 %576
    %578 = vrot.lane.b32.xlu0 %v425, 4
    %v579 = vpop.permute.xlu0 %578
    %580 = vrot.lane.b32.xlu0 %v426, 4
    %v581 = vpop.permute.xlu0 %580
    %582 = vrot.lane.b32.xlu0 %v427, 4
    %v583 = vpop.permute.xlu0 %582
    %584 = vrot.lane.b32.xlu0 %v428, 4
    %v585 = vpop.permute.xlu0 %584
    %586 = vrot.lane.b32.xlu0 %v429, 4
    %v587 = vpop.permute.xlu0 %586
    %588 = vrot.lane.b32.xlu0 %v430, 4
    %v589 = vpop.permute.xlu0 %588
    %590 = vrot.lane.b32.xlu0 %v431, 4
    %v591 = vpop.permute.xlu0 %590
    %592 = vrot.lane.b32.xlu0 %v432, 4
    %v593 = vpop.permute.xlu0 %592
    %594 = vrot.lane.b32.xlu0 %v433, 4
    %v595 = vpop.permute.xlu0 %594
    %596 = vrot.lane.b32.xlu0 %v434, 4
    %v597 = vpop.permute.xlu0 %596
    %598 = vrot.lane.b32.xlu0 %v435, 4
    %v599 = vpop.permute.xlu0 %598
    %600 = vrot.lane.b32.xlu0 %v436, 4
    %v601 = vpop.permute.xlu0 %600
    %602 = vrot.lane.b32.xlu0 %v437, 4
    %v603 = vpop.permute.xlu0 %602
    %604 = vrot.lane.b32.xlu0 %v438, 4
    %v605 = vpop.permute.xlu0 %604
    %606 = vrot.lane.b32.xlu0 %v439, 4
    %v607 = vpop.permute.xlu0 %606
    %608 = vrot.lane.b32.xlu0 %v440, 4
    %v609 = vpop.permute.xlu0 %608
    %610 = vrot.lane.b32.xlu0 %v441, 4
    %v611 = vpop.permute.xlu0 %610
    %612 = vrot.lane.b32.xlu0 %v442, 4
    %v613 = vpop.permute.xlu0 %612
    %614 = vrot.lane.b32.xlu0 %v443, 4
    %v615 = vpop.permute.xlu0 %614
    %616 = vrot.lane.b32.xlu0 %v444, 4
    %v617 = vpop.permute.xlu0 %616
    %618 = vrot.lane.b32.xlu0 %v445, 4
    %v619 = vpop.permute.xlu0 %618
    %620 = vrot.lane.b32.xlu0 %v446, 4
    %v621 = vpop.permute.xlu0 %620
    %622 = vrot.lane.b32.xlu0 %v447, 4
    %v623 = vpop.permute.xlu0 %622
    %624 = vrot.lane.b32.xlu0 %v448, 4
    %v625 = vpop.permute.xlu0 %624
    %626 = vrot.lane.b32.xlu0 %v449, 4
    %v627 = vpop.permute.xlu0 %626
    %628 = vrot.lane.b32.xlu0 %v450, 4
    %v629 = vpop.permute.xlu0 %628
    %630 = vrot.lane.b32.xlu0 %v451, 4
    %v631 = vpop.permute.xlu0 %630
    %632 = vrot.lane.b32.xlu0 %v452, 4
    %v633 = vpop.permute.xlu0 %632
    %634 = vrot.lane.b32.xlu0 %v453, 4
    %v635 = vpop.permute.xlu0 %634
    %636 = vrot.lane.b32.xlu0 %v454, 4
    %v637 = vpop.permute.xlu0 %636
    %638 = vrot.lane.b32.xlu0 %v455, 4
    %v639 = vpop.permute.xlu0 %638
    %640 = vrot.lane.b32.xlu0 %v456, 4
    %v641 = vpop.permute.xlu0 %640
    %642 = vrot.lane.b32.xlu0 %v457, 4
    %v643 = vpop.permute.xlu0 %642
    %644 = vrot.lane.b32.xlu0 %v458, 4
    %v645 = vpop.permute.xlu0 %644
    %646 = vrot.lane.b32.xlu0 %v459, 4
    %v647 = vpop.permute.xlu0 %646
    %648 = vrot.lane.b32.xlu0 %v460, 4
    %v649 = vpop.permute.xlu0 %648
    %650 = vrot.lane.b32.xlu0 %v461, 4
    %v651 = vpop.permute.xlu0 %650
    %652 = vrot.lane.b32.xlu0 %v462, 4
    %v653 = vpop.permute.xlu0 %652
    %654 = vrot.lane.b32.xlu0 %v463, 4
    %v655 = vpop.permute.xlu0 %654
    %vm720 = vcmask 64544
    %721 = vst.msk [vmem:[#allocation4] sm:$0xff] %vm720, %v529
    %722 = vst.msk [vmem:[#allocation4 + $0x8] sm:$0xff] %vm720, %v531
    %723 = vst.msk [vmem:[#allocation4 + $0x10] sm:$0xff] %vm720, %v533
    %724 = vst.msk [vmem:[#allocation4 + $0x18] sm:$0xff] %vm720, %v535
    %725 = vst.msk [vmem:[#allocation4 + $0x20] sm:$0xff] %vm720, %v537
    %726 = vst.msk [vmem:[#allocation4 + $0x28] sm:$0xff] %vm720, %v539
    %727 = vst.msk [vmem:[#allocation4 + $0x30] sm:$0xff] %vm720, %v541
    %728 = vst.msk [vmem:[#allocation4 + $0x38] sm:$0xff] %vm720, %v543
    %729 = vst.msk [vmem:[#allocation4 + $0x40] sm:$0xff] %vm720, %v545
    %730 = vst.msk [vmem:[#allocation4 + $0x48] sm:$0xff] %vm720, %v547
    %731 = vst.msk [vmem:[#allocation4 + $0x50] sm:$0xff] %vm720, %v549
    %732 = vst.msk [vmem:[#allocation4 + $0x58] sm:$0xff] %vm720, %v551
    %733 = vst.msk [vmem:[#allocation4 + $0x60] sm:$0xff] %vm720, %v553
    %734 = vst.msk [vmem:[#allocation4 + $0x68] sm:$0xff] %vm720, %v555
    %735 = vst.msk [vmem:[#allocation4 + $0x70] sm:$0xff] %vm720, %v557
    %736 = vst.msk [vmem:[#allocation4 + $0x78] sm:$0xff] %vm720, %v559
    %737 = vst.msk [vmem:[#allocation4 + $0x80] sm:$0xff] %vm720, %v561
    %738 = vst.msk [vmem:[#allocation4 + $0x88] sm:$0xff] %vm720, %v563
    %739 = vst.msk [vmem:[#allocation4 + $0x90] sm:$0xff] %vm720, %v565
    %740 = vst.msk [vmem:[#allocation4 + $0x98] sm:$0xff] %vm720, %v567
    %741 = vst.msk [vmem:[#allocation4 + $0xa0] sm:$0xff] %vm720, %v569
    %742 = vst.msk [vmem:[#allocation4 + $0xa8] sm:$0xff] %vm720, %v571
    %743 = vst.msk [vmem:[#allocation4 + $0xb0] sm:$0xff] %vm720, %v573
    %744 = vst.msk [vmem:[#allocation4 + $0xb8] sm:$0xff] %vm720, %v575
    %745 = vst.msk [vmem:[#allocation4 + $0xc0] sm:$0xff] %vm720, %v577
    %746 = vst.msk [vmem:[#allocation4 + $0xc8] sm:$0xff] %vm720, %v579
    %747 = vst.msk [vmem:[#allocation4 + $0xd0] sm:$0xff] %vm720, %v581
    %748 = vst.msk [vmem:[#allocation4 + $0xd8] sm:$0xff] %vm720, %v583
    %749 = vst.msk [vmem:[#allocation4 + $0xe0] sm:$0xff] %vm720, %v585
    %750 = vst.msk [vmem:[#allocation4 + $0xe8] sm:$0xff] %vm720, %v587
    %751 = vst.msk [vmem:[#allocation4 + $0xf0] sm:$0xff] %vm720, %v589
    %752 = vst.msk [vmem:[#allocation4 + $0xf8] sm:$0xff] %vm720, %v591
    %753 = vst.msk [vmem:[#allocation4 + $0x100] sm:$0xff] %vm720, %v593
    %754 = vst.msk [vmem:[#allocation4 + $0x108] sm:$0xff] %vm720, %v595
    %755 = vst.msk [vmem:[#allocation4 + $0x110] sm:$0xff] %vm720, %v597
    %756 = vst.msk [vmem:[#allocation4 + $0x118] sm:$0xff] %vm720, %v599
    %757 = vst.msk [vmem:[#allocation4 + $0x120] sm:$0xff] %vm720, %v601
    %758 = vst.msk [vmem:[#allocation4 + $0x128] sm:$0xff] %vm720, %v603
    %759 = vst.msk [vmem:[#allocation4 + $0x130] sm:$0xff] %vm720, %v605
    %760 = vst.msk [vmem:[#allocation4 + $0x138] sm:$0xff] %vm720, %v607
    %761 = vst.msk [vmem:[#allocation4 + $0x140] sm:$0xff] %vm720, %v609
    %762 = vst.msk [vmem:[#allocation4 + $0x148] sm:$0xff] %vm720, %v611
    %763 = vst.msk [vmem:[#allocation4 + $0x150] sm:$0xff] %vm720, %v613
    %764 = vst.msk [vmem:[#allocation4 + $0x158] sm:$0xff] %vm720, %v615
    %765 = vst.msk [vmem:[#allocation4 + $0x160] sm:$0xff] %vm720, %v617
    %766 = vst.msk [vmem:[#allocation4 + $0x168] sm:$0xff] %vm720, %v619
    %767 = vst.msk [vmem:[#allocation4 + $0x170] sm:$0xff] %vm720, %v621
    %768 = vst.msk [vmem:[#allocation4 + $0x178] sm:$0xff] %vm720, %v623
    %769 = vst.msk [vmem:[#allocation4 + $0x180] sm:$0xff] %vm720, %v625
    %770 = vst.msk [vmem:[#allocation4 + $0x188] sm:$0xff] %vm720, %v627
    %771 = vst.msk [vmem:[#allocation4 + $0x190] sm:$0xff] %vm720, %v629
    %772 = vst.msk [vmem:[#allocation4 + $0x198] sm:$0xff] %vm720, %v631
    %773 = vst.msk [vmem:[#allocation4 + $0x1a0] sm:$0xff] %vm720, %v633
    %774 = vst.msk [vmem:[#allocation4 + $0x1a8] sm:$0xff] %vm720, %v635
    %775 = vst.msk [vmem:[#allocation4 + $0x1b0] sm:$0xff] %vm720, %v637
    %776 = vst.msk [vmem:[#allocation4 + $0x1b8] sm:$0xff] %vm720, %v639
    %777 = vst.msk [vmem:[#allocation4 + $0x1c0] sm:$0xff] %vm720, %v641
    %778 = vst.msk [vmem:[#allocation4 + $0x1c8] sm:$0xff] %vm720, %v643
    %779 = vst.msk [vmem:[#allocation4 + $0x1d0] sm:$0xff] %vm720, %v645
    %780 = vst.msk [vmem:[#allocation4 + $0x1d8] sm:$0xff] %vm720, %v647
    %781 = vst.msk [vmem:[#allocation4 + $0x1e0] sm:$0xff] %vm720, %v649
    %782 = vst.msk [vmem:[#allocation4 + $0x1e8] sm:$0xff] %vm720, %v651
    %783 = vst.msk [vmem:[#allocation4 + $0x1f0] sm:$0xff] %vm720, %v653
    %784 = vst.msk [vmem:[#allocation4 + $0x1f8] sm:$0xff] %vm720, %v655
    %v785 = vld [vmem:[#allocation2 + $0x2] sm:$0xff]
    %v786 = vld [vmem:[#allocation2 + $0xa] sm:$0xff]
    %v787 = vld [vmem:[#allocation2 + $0x1a] sm:$0xff]
    %v788 = vld [vmem:[#allocation2 + $0x22] sm:$0xff]
    %v789 = vld [vmem:[#allocation2 + $0x32] sm:$0xff]
    %v790 = vld [vmem:[#allocation2 + $0x3a] sm:$0xff]
    %v791 = vld [vmem:[#allocation2 + $0x4a] sm:$0xff]
    %v792 = vld [vmem:[#allocation2 + $0x52] sm:$0xff]
    %v793 = vld [vmem:[#allocation2 + $0x62] sm:$0xff]
    %v794 = vld [vmem:[#allocation2 + $0x6a] sm:$0xff]
    %v795 = vld [vmem:[#allocation2 + $0x7a] sm:$0xff]
    %v796 = vld [vmem:[#allocation2 + $0x82] sm:$0xff]
    %v797 = vld [vmem:[#allocation2 + $0x92] sm:$0xff]
    %v798 = vld [vmem:[#allocation2 + $0x9a] sm:$0xff]
    %v799 = vld [vmem:[#allocation2 + $0xaa] sm:$0xff]
    %v800 = vld [vmem:[#allocation2 + $0xb2] sm:$0xff]
    %v801 = vld [vmem:[#allocation2 + $0xc2] sm:$0xff]
    %v802 = vld [vmem:[#allocation2 + $0xca] sm:$0xff]
    %v803 = vld [vmem:[#allocation2 + $0xda] sm:$0xff]
    %v804 = vld [vmem:[#allocation2 + $0xe2] sm:$0xff]
    %v805 = vld [vmem:[#allocation2 + $0xf2] sm:$0xff]
    %v806 = vld [vmem:[#allocation2 + $0xfa] sm:$0xff]
    %v807 = vld [vmem:[#allocation2 + $0x10a] sm:$0xff]
    %v808 = vld [vmem:[#allocation2 + $0x112] sm:$0xff]
    %v809 = vld [vmem:[#allocation2 + $0x122] sm:$0xff]
    %v810 = vld [vmem:[#allocation2 + $0x12a] sm:$0xff]
    %v811 = vld [vmem:[#allocation2 + $0x13a] sm:$0xff]
    %v812 = vld [vmem:[#allocation2 + $0x142] sm:$0xff]
    %v813 = vld [vmem:[#allocation2 + $0x152] sm:$0xff]
    %v814 = vld [vmem:[#allocation2 + $0x15a] sm:$0xff]
    %v815 = vld [vmem:[#allocation2 + $0x16a] sm:$0xff]
    %v816 = vld [vmem:[#allocation2 + $0x172] sm:$0xff]
    %v817 = vld [vmem:[#allocation2 + $0x1b2] sm:$0xff]
    %v818 = vld [vmem:[#allocation2 + $0x1ba] sm:$0xff]
    %v819 = vld [vmem:[#allocation2 + $0x1ca] sm:$0xff]
    %v820 = vld [vmem:[#allocation2 + $0x1d2] sm:$0xff]
    %v821 = vld [vmem:[#allocation2 + $0x1e2] sm:$0xff]
    %v822 = vld [vmem:[#allocation2 + $0x1ea] sm:$0xff]
    %v823 = vld [vmem:[#allocation2 + $0x1fa] sm:$0xff]
    %v824 = vld [vmem:[#allocation2 + $0x202] sm:$0xff]
    %v825 = vld [vmem:[#allocation2 + $0x212] sm:$0xff]
    %v826 = vld [vmem:[#allocation2 + $0x21a] sm:$0xff]
    %v827 = vld [vmem:[#allocation2 + $0x22a] sm:$0xff]
    %v828 = vld [vmem:[#allocation2 + $0x232] sm:$0xff]
    %v829 = vld [vmem:[#allocation2 + $0x242] sm:$0xff]
    %v830 = vld [vmem:[#allocation2 + $0x24a] sm:$0xff]
    %v831 = vld [vmem:[#allocation2 + $0x25a] sm:$0xff]
    %v832 = vld [vmem:[#allocation2 + $0x262] sm:$0xff]
    %v833 = vld [vmem:[#allocation2 + $0x272] sm:$0xff]
    %v834 = vld [vmem:[#allocation2 + $0x27a] sm:$0xff]
    %v835 = vld [vmem:[#allocation2 + $0x28a] sm:$0xff]
    %v836 = vld [vmem:[#allocation2 + $0x292] sm:$0xff]
    %v837 = vld [vmem:[#allocation2 + $0x2a2] sm:$0xff]
    %v838 = vld [vmem:[#allocation2 + $0x2aa] sm:$0xff]
    %v839 = vld [vmem:[#allocation2 + $0x2ba] sm:$0xff]
    %v840 = vld [vmem:[#allocation2 + $0x2c2] sm:$0xff]
    %v841 = vld [vmem:[#allocation2 + $0x2d2] sm:$0xff]
    %v842 = vld [vmem:[#allocation2 + $0x2da] sm:$0xff]
    %v843 = vld [vmem:[#allocation2 + $0x2ea] sm:$0xff]
    %v844 = vld [vmem:[#allocation2 + $0x2f2] sm:$0xff]
    %v845 = vld [vmem:[#allocation2 + $0x302] sm:$0xff]
    %v846 = vld [vmem:[#allocation2 + $0x30a] sm:$0xff]
    %v847 = vld [vmem:[#allocation2 + $0x31a] sm:$0xff]
    %v848 = vld [vmem:[#allocation2 + $0x322] sm:$0xff]
    %913 = vrot.lane.b32.xlu0 %v785, 8
    %v914 = vpop.permute.xlu0 %913
    %915 = vrot.lane.b32.xlu0 %v786, 8
    %v916 = vpop.permute.xlu0 %915
    %917 = vrot.lane.b32.xlu0 %v787, 8
    %v918 = vpop.permute.xlu0 %917
    %919 = vrot.lane.b32.xlu0 %v788, 8
    %v920 = vpop.permute.xlu0 %919
    %921 = vrot.lane.b32.xlu0 %v789, 8
    %v922 = vpop.permute.xlu0 %921
    %923 = vrot.lane.b32.xlu0 %v790, 8
    %v924 = vpop.permute.xlu0 %923
    %925 = vrot.lane.b32.xlu0 %v791, 8
    %v926 = vpop.permute.xlu0 %925
    %927 = vrot.lane.b32.xlu0 %v792, 8
    %v928 = vpop.permute.xlu0 %927
    %929 = vrot.lane.b32.xlu0 %v793, 8
    %v930 = vpop.permute.xlu0 %929
    %931 = vrot.lane.b32.xlu0 %v794, 8
    %v932 = vpop.permute.xlu0 %931
    %933 = vrot.lane.b32.xlu0 %v795, 8
    %v934 = vpop.permute.xlu0 %933
    %935 = vrot.lane.b32.xlu0 %v796, 8
    %v936 = vpop.permute.xlu0 %935
    %937 = vrot.lane.b32.xlu0 %v797, 8
    %v938 = vpop.permute.xlu0 %937
    %939 = vrot.lane.b32.xlu0 %v798, 8
    %v940 = vpop.permute.xlu0 %939
    %941 = vrot.lane.b32.xlu0 %v799, 8
    %v942 = vpop.permute.xlu0 %941
    %943 = vrot.lane.b32.xlu0 %v800, 8
    %v944 = vpop.permute.xlu0 %943
    %945 = vrot.lane.b32.xlu0 %v801, 8
    %v946 = vpop.permute.xlu0 %945
    %947 = vrot.lane.b32.xlu0 %v802, 8
    %v948 = vpop.permute.xlu0 %947
    %949 = vrot.lane.b32.xlu0 %v803, 8
    %v950 = vpop.permute.xlu0 %949
    %951 = vrot.lane.b32.xlu0 %v804, 8
    %v952 = vpop.permute.xlu0 %951
    %953 = vrot.lane.b32.xlu0 %v805, 8
    %v954 = vpop.permute.xlu0 %953
    %955 = vrot.lane.b32.xlu0 %v806, 8
    %v956 = vpop.permute.xlu0 %955
    %957 = vrot.lane.b32.xlu0 %v807, 8
    %v958 = vpop.permute.xlu0 %957
    %959 = vrot.lane.b32.xlu0 %v808, 8
    %v960 = vpop.permute.xlu0 %959
    %961 = vrot.lane.b32.xlu0 %v809, 8
    %v962 = vpop.permute.xlu0 %961
    %963 = vrot.lane.b32.xlu0 %v810, 8
    %v964 = vpop.permute.xlu0 %963
    %965 = vrot.lane.b32.xlu0 %v811, 8
    %v966 = vpop.permute.xlu0 %965
    %967 = vrot.lane.b32.xlu0 %v812, 8
    %v968 = vpop.permute.xlu0 %967
    %969 = vrot.lane.b32.xlu0 %v813, 8
    %v970 = vpop.permute.xlu0 %969
    %971 = vrot.lane.b32.xlu0 %v814, 8
    %v972 = vpop.permute.xlu0 %971
    %973 = vrot.lane.b32.xlu0 %v815, 8
    %v974 = vpop.permute.xlu0 %973
    %975 = vrot.lane.b32.xlu0 %v816, 8
    %v976 = vpop.permute.xlu0 %975
    %977 = vrot.lane.b32.xlu0 %v817, 8
    %v978 = vpop.permute.xlu0 %977
    %979 = vrot.lane.b32.xlu0 %v818, 8
    %v980 = vpop.permute.xlu0 %979
    %981 = vrot.lane.b32.xlu0 %v819, 8
    %v982 = vpop.permute.xlu0 %981
    %983 = vrot.lane.b32.xlu0 %v820, 8
    %v984 = vpop.permute.xlu0 %983
    %985 = vrot.lane.b32.xlu0 %v821, 8
    %v986 = vpop.permute.xlu0 %985
    %987 = vrot.lane.b32.xlu0 %v822, 8
    %v988 = vpop.permute.xlu0 %987
    %989 = vrot.lane.b32.xlu0 %v823, 8
    %v990 = vpop.permute.xlu0 %989
    %991 = vrot.lane.b32.xlu0 %v824, 8
    %v992 = vpop.permute.xlu0 %991
    %993 = vrot.lane.b32.xlu0 %v825, 8
    %v994 = vpop.permute.xlu0 %993
    %995 = vrot.lane.b32.xlu0 %v826, 8
    %v996 = vpop.permute.xlu0 %995
    %997 = vrot.lane.b32.xlu0 %v827, 8
    %v998 = vpop.permute.xlu0 %997
    %999 = vrot.lane.b32.xlu0 %v828, 8
    %v1000 = vpop.permute.xlu0 %999
    %1001 = vrot.lane.b32.xlu0 %v829, 8
    %v1002 = vpop.permute.xlu0 %1001
    %1003 = vrot.lane.b32.xlu0 %v830, 8
    %v1004 = vpop.permute.xlu0 %1003
    %1005 = vrot.lane.b32.xlu0 %v831, 8
    %v1006 = vpop.permute.xlu0 %1005
    %1007 = vrot.lane.b32.xlu0 %v832, 8
    %v1008 = vpop.permute.xlu0 %1007
    %1009 = vrot.lane.b32.xlu0 %v833, 8
    %v1010 = vpop.permute.xlu0 %1009
    %1011 = vrot.lane.b32.xlu0 %v834, 8
    %v1012 = vpop.permute.xlu0 %1011
    %1013 = vrot.lane.b32.xlu0 %v835, 8
    %v1014 = vpop.permute.xlu0 %1013
    %1015 = vrot.lane.b32.xlu0 %v836, 8
    %v1016 = vpop.permute.xlu0 %1015
    %1017 = vrot.lane.b32.xlu0 %v837, 8
    %v1018 = vpop.permute.xlu0 %1017
    %1019 = vrot.lane.b32.xlu0 %v838, 8
    %v1020 = vpop.permute.xlu0 %1019
    %1021 = vrot.lane.b32.xlu0 %v839, 8
    %v1022 = vpop.permute.xlu0 %1021
    %1023 = vrot.lane.b32.xlu0 %v840, 8
    %v1024 = vpop.permute.xlu0 %1023
    %1025 = vrot.lane.b32.xlu0 %v841, 8
    %v1026 = vpop.permute.xlu0 %1025
    %1027 = vrot.lane.b32.xlu0 %v842, 8
    %v1028 = vpop.permute.xlu0 %1027
    %1029 = vrot.lane.b32.xlu0 %v843, 8
    %v1030 = vpop.permute.xlu0 %1029
    %1031 = vrot.lane.b32.xlu0 %v844, 8
    %v1032 = vpop.permute.xlu0 %1031
    %1033 = vrot.lane.b32.xlu0 %v845, 8
    %v1034 = vpop.permute.xlu0 %1033
    %1035 = vrot.lane.b32.xlu0 %v846, 8
    %v1036 = vpop.permute.xlu0 %1035
    %1037 = vrot.lane.b32.xlu0 %v847, 8
    %v1038 = vpop.permute.xlu0 %1037
    %1039 = vrot.lane.b32.xlu0 %v848, 8
    %v1040 = vpop.permute.xlu0 %1039
    %vm1105 = vcmask 97344
    %1106 = vst.msk [vmem:[#allocation4] sm:$0xff] %vm1105, %v914
    %1107 = vst.msk [vmem:[#allocation4 + $0x8] sm:$0xff] %vm1105, %v916
    %1108 = vst.msk [vmem:[#allocation4 + $0x10] sm:$0xff] %vm1105, %v918
    %1109 = vst.msk [vmem:[#allocation4 + $0x18] sm:$0xff] %vm1105, %v920
    %1110 = vst.msk [vmem:[#allocation4 + $0x20] sm:$0xff] %vm1105, %v922
    %1111 = vst.msk [vmem:[#allocation4 + $0x28] sm:$0xff] %vm1105, %v924
    %1112 = vst.msk [vmem:[#allocation4 + $0x30] sm:$0xff] %vm1105, %v926
    %1113 = vst.msk [vmem:[#allocation4 + $0x38] sm:$0xff] %vm1105, %v928
    %1114 = vst.msk [vmem:[#allocation4 + $0x40] sm:$0xff] %vm1105, %v930
    %1115 = vst.msk [vmem:[#allocation4 + $0x48] sm:$0xff] %vm1105, %v932
    %1116 = vst.msk [vmem:[#allocation4 + $0x50] sm:$0xff] %vm1105, %v934
    %1117 = vst.msk [vmem:[#allocation4 + $0x58] sm:$0xff] %vm1105, %v936
    %1118 = vst.msk [vmem:[#allocation4 + $0x60] sm:$0xff] %vm1105, %v938
    %1119 = vst.msk [vmem:[#allocation4 + $0x68] sm:$0xff] %vm1105, %v940
    %1120 = vst.msk [vmem:[#allocation4 + $0x70] sm:$0xff] %vm1105, %v942
    %1121 = vst.msk [vmem:[#allocation4 + $0x78] sm:$0xff] %vm1105, %v944
    %1122 = vst.msk [vmem:[#allocation4 + $0x80] sm:$0xff] %vm1105, %v946
    %1123 = vst.msk [vmem:[#allocation4 + $0x88] sm:$0xff] %vm1105, %v948
    %1124 = vst.msk [vmem:[#allocation4 + $0x90] sm:$0xff] %vm1105, %v950
    %1125 = vst.msk [vmem:[#allocation4 + $0x98] sm:$0xff] %vm1105, %v952
    %1126 = vst.msk [vmem:[#allocation4 + $0xa0] sm:$0xff] %vm1105, %v954
    %1127 = vst.msk [vmem:[#allocation4 + $0xa8] sm:$0xff] %vm1105, %v956
    %1128 = vst.msk [vmem:[#allocation4 + $0xb0] sm:$0xff] %vm1105, %v958
    %1129 = vst.msk [vmem:[#allocation4 + $0xb8] sm:$0xff] %vm1105, %v960
    %1130 = vst.msk [vmem:[#allocation4 + $0xc0] sm:$0xff] %vm1105, %v962
    %1131 = vst.msk [vmem:[#allocation4 + $0xc8] sm:$0xff] %vm1105, %v964
    %1132 = vst.msk [vmem:[#allocation4 + $0xd0] sm:$0xff] %vm1105, %v966
    %1133 = vst.msk [vmem:[#allocation4 + $0xd8] sm:$0xff] %vm1105, %v968
    %1134 = vst.msk [vmem:[#allocation4 + $0xe0] sm:$0xff] %vm1105, %v970
    %1135 = vst.msk [vmem:[#allocation4 + $0xe8] sm:$0xff] %vm1105, %v972
    %1136 = vst.msk [vmem:[#allocation4 + $0xf0] sm:$0xff] %vm1105, %v974
    %1137 = vst.msk [vmem:[#allocation4 + $0xf8] sm:$0xff] %vm1105, %v976
    %1138 = vst.msk [vmem:[#allocation4 + $0x100] sm:$0xff] %vm1105, %v978
    %1139 = vst.msk [vmem:[#allocation4 + $0x108] sm:$0xff] %vm1105, %v980
    %1140 = vst.msk [vmem:[#allocation4 + $0x110] sm:$0xff] %vm1105, %v982
    %1141 = vst.msk [vmem:[#allocation4 + $0x118] sm:$0xff] %vm1105, %v984
    %1142 = vst.msk [vmem:[#allocation4 + $0x120] sm:$0xff] %vm1105, %v986
    %1143 = vst.msk [vmem:[#allocation4 + $0x128] sm:$0xff] %vm1105, %v988
    %1144 = vst.msk [vmem:[#allocation4 + $0x130] sm:$0xff] %vm1105, %v990
    %1145 = vst.msk [vmem:[#allocation4 + $0x138] sm:$0xff] %vm1105, %v992
    %1146 = vst.msk [vmem:[#allocation4 + $0x140] sm:$0xff] %vm1105, %v994
    %1147 = vst.msk [vmem:[#allocation4 + $0x148] sm:$0xff] %vm1105, %v996
    %1148 = vst.msk [vmem:[#allocation4 + $0x150] sm:$0xff] %vm1105, %v998
    %1149 = vst.msk [vmem:[#allocation4 + $0x158] sm:$0xff] %vm1105, %v1000
    %1150 = vst.msk [vmem:[#allocation4 + $0x160] sm:$0xff] %vm1105, %v1002
    %1151 = vst.msk [vmem:[#allocation4 + $0x168] sm:$0xff] %vm1105, %v1004
    %1152 = vst.msk [vmem:[#allocation4 + $0x170] sm:$0xff] %vm1105, %v1006
    %1153 = vst.msk [vmem:[#allocation4 + $0x178] sm:$0xff] %vm1105, %v1008
    %1154 = vst.msk [vmem:[#allocation4 + $0x180] sm:$0xff] %vm1105, %v1010
    %1155 = vst.msk [vmem:[#allocation4 + $0x188] sm:$0xff] %vm1105, %v1012
    %1156 = vst.msk [vmem:[#allocation4 + $0x190] sm:$0xff] %vm1105, %v1014
    %1157 = vst.msk [vmem:[#allocation4 + $0x198] sm:$0xff] %vm1105, %v1016
    %1158 = vst.msk [vmem:[#allocation4 + $0x1a0] sm:$0xff] %vm1105, %v1018
    %1159 = vst.msk [vmem:[#allocation4 + $0x1a8] sm:$0xff] %vm1105, %v1020
    %1160 = vst.msk [vmem:[#allocation4 + $0x1b0] sm:$0xff] %vm1105, %v1022
    %1161 = vst.msk [vmem:[#allocation4 + $0x1b8] sm:$0xff] %vm1105, %v1024
    %1162 = vst.msk [vmem:[#allocation4 + $0x1c0] sm:$0xff] %vm1105, %v1026
    %1163 = vst.msk [vmem:[#allocation4 + $0x1c8] sm:$0xff] %vm1105, %v1028
    %1164 = vst.msk [vmem:[#allocation4 + $0x1d0] sm:$0xff] %vm1105, %v1030
    %1165 = vst.msk [vmem:[#allocation4 + $0x1d8] sm:$0xff] %vm1105, %v1032
    %1166 = vst.msk [vmem:[#allocation4 + $0x1e0] sm:$0xff] %vm1105, %v1034
    %1167 = vst.msk [vmem:[#allocation4 + $0x1e8] sm:$0xff] %vm1105, %v1036
    %1168 = vst.msk [vmem:[#allocation4 + $0x1f0] sm:$0xff] %vm1105, %v1038
    %1169 = vst.msk [vmem:[#allocation4 + $0x1f8] sm:$0xff] %vm1105, %v1040
    %v1170 = vld [vmem:[%s207] sm:$0xff]
    %v1171 = vld [vmem:[%s207 + $0x8] sm:$0xff]
    %v1172 = vld [vmem:[%s207 + $0x18] sm:$0xff]
    %v1173 = vld [vmem:[%s207 + $0x20] sm:$0xff]
    %v1174 = vld [vmem:[%s207 + $0x30] sm:$0xff]
    %v1175 = vld [vmem:[%s207 + $0x38] sm:$0xff]
    %v1176 = vld [vmem:[%s207 + $0x48] sm:$0xff]
    %v1177 = vld [vmem:[%s207 + $0x50] sm:$0xff]
    %v1178 = vld [vmem:[%s207 + $0x60] sm:$0xff]
    %v1179 = vld [vmem:[%s207 + $0x68] sm:$0xff]
    %v1180 = vld [vmem:[%s207 + $0x78] sm:$0xff]
    %v1181 = vld [vmem:[%s207 + $0x80] sm:$0xff]
    %v1182 = vld [vmem:[%s207 + $0x90] sm:$0xff]
    %v1183 = vld [vmem:[%s207 + $0x98] sm:$0xff]
    %v1184 = vld [vmem:[%s207 + $0xa8] sm:$0xff]
    %v1185 = vld [vmem:[%s207 + $0xb0] sm:$0xff]
    %v1186 = vld [vmem:[%s207 + $0xc0] sm:$0xff]
    %v1187 = vld [vmem:[%s207 + $0xc8] sm:$0xff]
    %v1188 = vld [vmem:[%s207 + $0xd8] sm:$0xff]
    %v1189 = vld [vmem:[%s207 + $0xe0] sm:$0xff]
    %v1190 = vld [vmem:[%s207 + $0xf0] sm:$0xff]
    %v1191 = vld [vmem:[%s207 + $0xf8] sm:$0xff]
    %v1192 = vld [vmem:[%s207 + $0x108] sm:$0xff]
    %v1193 = vld [vmem:[%s207 + $0x110] sm:$0xff]
    %v1194 = vld [vmem:[%s207 + $0x120] sm:$0xff]
    %v1195 = vld [vmem:[%s207 + $0x128] sm:$0xff]
    %v1196 = vld [vmem:[%s207 + $0x138] sm:$0xff]
    %v1197 = vld [vmem:[%s207 + $0x140] sm:$0xff]
    %v1198 = vld [vmem:[%s207 + $0x150] sm:$0xff]
    %v1199 = vld [vmem:[%s207 + $0x158] sm:$0xff]
    %v1200 = vld [vmem:[%s207 + $0x168] sm:$0xff]
    %v1201 = vld [vmem:[%s207 + $0x170] sm:$0xff]
    %v1202 = vld [vmem:[%s207 + $0x1b0] sm:$0xff]
    %v1203 = vld [vmem:[%s207 + $0x1b8] sm:$0xff]
    %v1204 = vld [vmem:[%s207 + $0x1c8] sm:$0xff]
    %v1205 = vld [vmem:[%s207 + $0x1d0] sm:$0xff]
    %v1206 = vld [vmem:[%s207 + $0x1e0] sm:$0xff]
    %v1207 = vld [vmem:[%s207 + $0x1e8] sm:$0xff]
    %v1208 = vld [vmem:[%s207 + $0x1f8] sm:$0xff]
    %v1209 = vld [vmem:[%s207 + $0x200] sm:$0xff]
    %v1210 = vld [vmem:[%s207 + $0x210] sm:$0xff]
    %v1211 = vld [vmem:[%s207 + $0x218] sm:$0xff]
    %v1212 = vld [vmem:[%s207 + $0x228] sm:$0xff]
    %v1213 = vld [vmem:[%s207 + $0x230] sm:$0xff]
    %v1214 = vld [vmem:[%s207 + $0x240] sm:$0xff]
    %v1215 = vld [vmem:[%s207 + $0x248] sm:$0xff]
    %v1216 = vld [vmem:[%s207 + $0x258] sm:$0xff]
    %v1217 = vld [vmem:[%s207 + $0x260] sm:$0xff]
    %v1218 = vld [vmem:[%s207 + $0x270] sm:$0xff]
    %v1219 = vld [vmem:[%s207 + $0x278] sm:$0xff]
    %v1220 = vld [vmem:[%s207 + $0x288] sm:$0xff]
    %v1221 = vld [vmem:[%s207 + $0x290] sm:$0xff]
    %v1222 = vld [vmem:[%s207 + $0x2a0] sm:$0xff]
    %v1223 = vld [vmem:[%s207 + $0x2a8] sm:$0xff]
    %v1224 = vld [vmem:[%s207 + $0x2b8] sm:$0xff]
    %v1225 = vld [vmem:[%s207 + $0x2c0] sm:$0xff]
    %v1226 = vld [vmem:[%s207 + $0x2d0] sm:$0xff]
    %v1227 = vld [vmem:[%s207 + $0x2d8] sm:$0xff]
    %v1228 = vld [vmem:[%s207 + $0x2e8] sm:$0xff]
    %v1229 = vld [vmem:[%s207 + $0x2f0] sm:$0xff]
    %v1230 = vld [vmem:[%s207 + $0x300] sm:$0xff]
    %v1231 = vld [vmem:[%s207 + $0x308] sm:$0xff]
    %v1232 = vld [vmem:[%s207 + $0x318] sm:$0xff]
    %v1233 = vld [vmem:[%s207 + $0x320] sm:$0xff]
    %1298 = vrot.lane.b32.xlu0 %v1170, 12
    %v1299 = vpop.permute.xlu0 %1298
    %1300 = vrot.lane.b32.xlu0 %v1171, 12
    %v1301 = vpop.permute.xlu0 %1300
    %1302 = vrot.lane.b32.xlu0 %v1172, 12
    %v1303 = vpop.permute.xlu0 %1302
    %1304 = vrot.lane.b32.xlu0 %v1173, 12
    %v1305 = vpop.permute.xlu0 %1304
    %1306 = vrot.lane.b32.xlu0 %v1174, 12
    %v1307 = vpop.permute.xlu0 %1306
    %1308 = vrot.lane.b32.xlu0 %v1175, 12
    %v1309 = vpop.permute.xlu0 %1308
    %1310 = vrot.lane.b32.xlu0 %v1176, 12
    %v1311 = vpop.permute.xlu0 %1310
    %1312 = vrot.lane.b32.xlu0 %v1177, 12
    %v1313 = vpop.permute.xlu0 %1312
    %1314 = vrot.lane.b32.xlu0 %v1178, 12
    %v1315 = vpop.permute.xlu0 %1314
    %1316 = vrot.lane.b32.xlu0 %v1179, 12
    %v1317 = vpop.permute.xlu0 %1316
    %1318 = vrot.lane.b32.xlu0 %v1180, 12
    %v1319 = vpop.permute.xlu0 %1318
    %1320 = vrot.lane.b32.xlu0 %v1181, 12
    %v1321 = vpop.permute.xlu0 %1320
    %1322 = vrot.lane.b32.xlu0 %v1182, 12
    %v1323 = vpop.permute.xlu0 %1322
    %1324 = vrot.lane.b32.xlu0 %v1183, 12
    %v1325 = vpop.permute.xlu0 %1324
    %1326 = vrot.lane.b32.xlu0 %v1184, 12
    %v1327 = vpop.permute.xlu0 %1326
    %1328 = vrot.lane.b32.xlu0 %v1185, 12
    %v1329 = vpop.permute.xlu0 %1328
    %1330 = vrot.lane.b32.xlu0 %v1186, 12
    %v1331 = vpop.permute.xlu0 %1330
    %1332 = vrot.lane.b32.xlu0 %v1187, 12
    %v1333 = vpop.permute.xlu0 %1332
    %1334 = vrot.lane.b32.xlu0 %v1188, 12
    %v1335 = vpop.permute.xlu0 %1334
    %1336 = vrot.lane.b32.xlu0 %v1189, 12
    %v1337 = vpop.permute.xlu0 %1336
    %1338 = vrot.lane.b32.xlu0 %v1190, 12
    %v1339 = vpop.permute.xlu0 %1338
    %1340 = vrot.lane.b32.xlu0 %v1191, 12
    %v1341 = vpop.permute.xlu0 %1340
    %1342 = vrot.lane.b32.xlu0 %v1192, 12
    %v1343 = vpop.permute.xlu0 %1342
    %1344 = vrot.lane.b32.xlu0 %v1193, 12
    %v1345 = vpop.permute.xlu0 %1344
    %1346 = vrot.lane.b32.xlu0 %v1194, 12
    %v1347 = vpop.permute.xlu0 %1346
    %1348 = vrot.lane.b32.xlu0 %v1195, 12
    %v1349 = vpop.permute.xlu0 %1348
    %1350 = vrot.lane.b32.xlu0 %v1196, 12
    %v1351 = vpop.permute.xlu0 %1350
    %1352 = vrot.lane.b32.xlu0 %v1197, 12
    %v1353 = vpop.permute.xlu0 %1352
    %1354 = vrot.lane.b32.xlu0 %v1198, 12
    %v1355 = vpop.permute.xlu0 %1354
    %1356 = vrot.lane.b32.xlu0 %v1199, 12
    %v1357 = vpop.permute.xlu0 %1356
    %1358 = vrot.lane.b32.xlu0 %v1200, 12
    %v1359 = vpop.permute.xlu0 %1358
    %1360 = vrot.lane.b32.xlu0 %v1201, 12
    %v1361 = vpop.permute.xlu0 %1360
    %1362 = vrot.lane.b32.xlu0 %v1202, 12
    %v1363 = vpop.permute.xlu0 %1362
    %1364 = vrot.lane.b32.xlu0 %v1203, 12
    %v1365 = vpop.permute.xlu0 %1364
    %1366 = vrot.lane.b32.xlu0 %v1204, 12
    %v1367 = vpop.permute.xlu0 %1366
    %1368 = vrot.lane.b32.xlu0 %v1205, 12
    %v1369 = vpop.permute.xlu0 %1368
    %1370 = vrot.lane.b32.xlu0 %v1206, 12
    %v1371 = vpop.permute.xlu0 %1370
    %1372 = vrot.lane.b32.xlu0 %v1207, 12
    %v1373 = vpop.permute.xlu0 %1372
    %1374 = vrot.lane.b32.xlu0 %v1208, 12
    %v1375 = vpop.permute.xlu0 %1374
    %1376 = vrot.lane.b32.xlu0 %v1209, 12
    %v1377 = vpop.permute.xlu0 %1376
    %1378 = vrot.lane.b32.xlu0 %v1210, 12
    %v1379 = vpop.permute.xlu0 %1378
    %1380 = vrot.lane.b32.xlu0 %v1211, 12
    %v1381 = vpop.permute.xlu0 %1380
    %1382 = vrot.lane.b32.xlu0 %v1212, 12
    %v1383 = vpop.permute.xlu0 %1382
    %1384 = vrot.lane.b32.xlu0 %v1213, 12
    %v1385 = vpop.permute.xlu0 %1384
    %1386 = vrot.lane.b32.xlu0 %v1214, 12
    %v1387 = vpop.permute.xlu0 %1386
    %1388 = vrot.lane.b32.xlu0 %v1215, 12
    %v1389 = vpop.permute.xlu0 %1388
    %1390 = vrot.lane.b32.xlu0 %v1216, 12
    %v1391 = vpop.permute.xlu0 %1390
    %1392 = vrot.lane.b32.xlu0 %v1217, 12
    %v1393 = vpop.permute.xlu0 %1392
    %1394 = vrot.lane.b32.xlu0 %v1218, 12
    %v1395 = vpop.permute.xlu0 %1394
    %1396 = vrot.lane.b32.xlu0 %v1219, 12
    %v1397 = vpop.permute.xlu0 %1396
    %1398 = vrot.lane.b32.xlu0 %v1220, 12
    %v1399 = vpop.permute.xlu0 %1398
    %1400 = vrot.lane.b32.xlu0 %v1221, 12
    %v1401 = vpop.permute.xlu0 %1400
    %1402 = vrot.lane.b32.xlu0 %v1222, 12
    %v1403 = vpop.permute.xlu0 %1402
    %1404 = vrot.lane.b32.xlu0 %v1223, 12
    %v1405 = vpop.permute.xlu0 %1404
    %1406 = vrot.lane.b32.xlu0 %v1224, 12
    %v1407 = vpop.permute.xlu0 %1406
    %1408 = vrot.lane.b32.xlu0 %v1225, 12
    %v1409 = vpop.permute.xlu0 %1408
    %1410 = vrot.lane.b32.xlu0 %v1226, 12
    %v1411 = vpop.permute.xlu0 %1410
    %1412 = vrot.lane.b32.xlu0 %v1227, 12
    %v1413 = vpop.permute.xlu0 %1412
    %1414 = vrot.lane.b32.xlu0 %v1228, 12
    %v1415 = vpop.permute.xlu0 %1414
    %1416 = vrot.lane.b32.xlu0 %v1229, 12
    %v1417 = vpop.permute.xlu0 %1416
    %1418 = vrot.lane.b32.xlu0 %v1230, 12
    %v1419 = vpop.permute.xlu0 %1418
    %1420 = vrot.lane.b32.xlu0 %v1231, 12
    %v1421 = vpop.permute.xlu0 %1420
    %1422 = vrot.lane.b32.xlu0 %v1232, 12
    %v1423 = vpop.permute.xlu0 %1422
    %1424 = vrot.lane.b32.xlu0 %v1233, 12
    %v1425 = vpop.permute.xlu0 %1424
    %vm1490 = vcmask 130144
    %1491 = vst.msk [vmem:[#allocation4] sm:$0xff] %vm1490, %v1299
    %1492 = vst.msk [vmem:[#allocation4 + $0x8] sm:$0xff] %vm1490, %v1301
    %1493 = vst.msk [vmem:[#allocation4 + $0x10] sm:$0xff] %vm1490, %v1303
    %1494 = vst.msk [vmem:[#allocation4 + $0x18] sm:$0xff] %vm1490, %v1305
    %1495 = vst.msk [vmem:[#allocation4 + $0x20] sm:$0xff] %vm1490, %v1307
    %1496 = vst.msk [vmem:[#allocation4 + $0x28] sm:$0xff] %vm1490, %v1309
    %1497 = vst.msk [vmem:[#allocation4 + $0x30] sm:$0xff] %vm1490, %v1311
    %1498 = vst.msk [vmem:[#allocation4 + $0x38] sm:$0xff] %vm1490, %v1313
    %1499 = vst.msk [vmem:[#allocation4 + $0x40] sm:$0xff] %vm1490, %v1315
    %1500 = vst.msk [vmem:[#allocation4 + $0x48] sm:$0xff] %vm1490, %v1317
    %1501 = vst.msk [vmem:[#allocation4 + $0x50] sm:$0xff] %vm1490, %v1319
    %1502 = vst.msk [vmem:[#allocation4 + $0x58] sm:$0xff] %vm1490, %v1321
    %1503 = vst.msk [vmem:[#allocation4 + $0x60] sm:$0xff] %vm1490, %v1323
    %1504 = vst.msk [vmem:[#allocation4 + $0x68] sm:$0xff] %vm1490, %v1325
    %1505 = vst.msk [vmem:[#allocation4 + $0x70] sm:$0xff] %vm1490, %v1327
    %1506 = vst.msk [vmem:[#allocation4 + $0x78] sm:$0xff] %vm1490, %v1329
    %1507 = vst.msk [vmem:[#allocation4 + $0x80] sm:$0xff] %vm1490, %v1331
    %1508 = vst.msk [vmem:[#allocation4 + $0x88] sm:$0xff] %vm1490, %v1333
    %1509 = vst.msk [vmem:[#allocation4 + $0x90] sm:$0xff] %vm1490, %v1335
    %1510 = vst.msk [vmem:[#allocation4 + $0x98] sm:$0xff] %vm1490, %v1337
    %1511 = vst.msk [vmem:[#allocation4 + $0xa0] sm:$0xff] %vm1490, %v1339
    %1512 = vst.msk [vmem:[#allocation4 + $0xa8] sm:$0xff] %vm1490, %v1341
    %1513 = vst.msk [vmem:[#allocation4 + $0xb0] sm:$0xff] %vm1490, %v1343
    %1514 = vst.msk [vmem:[#allocation4 + $0xb8] sm:$0xff] %vm1490, %v1345
    %1515 = vst.msk [vmem:[#allocation4 + $0xc0] sm:$0xff] %vm1490, %v1347
    %1516 = vst.msk [vmem:[#allocation4 + $0xc8] sm:$0xff] %vm1490, %v1349
    %1517 = vst.msk [vmem:[#allocation4 + $0xd0] sm:$0xff] %vm1490, %v1351
    %1518 = vst.msk [vmem:[#allocation4 + $0xd8] sm:$0xff] %vm1490, %v1353
    %1519 = vst.msk [vmem:[#allocation4 + $0xe0] sm:$0xff] %vm1490, %v1355
    %1520 = vst.msk [vmem:[#allocation4 + $0xe8] sm:$0xff] %vm1490, %v1357
    %1521 = vst.msk [vmem:[#allocation4 + $0xf0] sm:$0xff] %vm1490, %v1359
    %1522 = vst.msk [vmem:[#allocation4 + $0xf8] sm:$0xff] %vm1490, %v1361
    %1523 = vst.msk [vmem:[#allocation4 + $0x100] sm:$0xff] %vm1490, %v1363
    %1524 = vst.msk [vmem:[#allocation4 + $0x108] sm:$0xff] %vm1490, %v1365
    %1525 = vst.msk [vmem:[#allocation4 + $0x110] sm:$0xff] %vm1490, %v1367
    %1526 = vst.msk [vmem:[#allocation4 + $0x118] sm:$0xff] %vm1490, %v1369
    %1527 = vst.msk [vmem:[#allocation4 + $0x120] sm:$0xff] %vm1490, %v1371
    %1528 = vst.msk [vmem:[#allocation4 + $0x128] sm:$0xff] %vm1490, %v1373
    %1529 = vst.msk [vmem:[#allocation4 + $0x130] sm:$0xff] %vm1490, %v1375
    %1530 = vst.msk [vmem:[#allocation4 + $0x138] sm:$0xff] %vm1490, %v1377
    %1531 = vst.msk [vmem:[#allocation4 + $0x140] sm:$0xff] %vm1490, %v1379
    %1532 = vst.msk [vmem:[#allocation4 + $0x148] sm:$0xff] %vm1490, %v1381
    %1533 = vst.msk [vmem:[#allocation4 + $0x150] sm:$0xff] %vm1490, %v1383
    %1534 = vst.msk [vmem:[#allocation4 + $0x158] sm:$0xff] %vm1490, %v1385
    %1535 = vst.msk [vmem:[#allocation4 + $0x160] sm:$0xff] %vm1490, %v1387
    %1536 = vst.msk [vmem:[#allocation4 + $0x168] sm:$0xff] %vm1490, %v1389
    %1537 = vst.msk [vmem:[#allocation4 + $0x170] sm:$0xff] %vm1490, %v1391
    %1538 = vst.msk [vmem:[#allocation4 + $0x178] sm:$0xff] %vm1490, %v1393
    %1539 = vst.msk [vmem:[#allocation4 + $0x180] sm:$0xff] %vm1490, %v1395
    %1540 = vst.msk [vmem:[#allocation4 + $0x188] sm:$0xff] %vm1490, %v1397
    %1541 = vst.msk [vmem:[#allocation4 + $0x190] sm:$0xff] %vm1490, %v1399
    %1542 = vst.msk [vmem:[#allocation4 + $0x198] sm:$0xff] %vm1490, %v1401
    %1543 = vst.msk [vmem:[#allocation4 + $0x1a0] sm:$0xff] %vm1490, %v1403
    %1544 = vst.msk [vmem:[#allocation4 + $0x1a8] sm:$0xff] %vm1490, %v1405
    %1545 = vst.msk [vmem:[#allocation4 + $0x1b0] sm:$0xff] %vm1490, %v1407
    %1546 = vst.msk [vmem:[#allocation4 + $0x1b8] sm:$0xff] %vm1490, %v1409
    %1547 = vst.msk [vmem:[#allocation4 + $0x1c0] sm:$0xff] %vm1490, %v1411
    %1548 = vst.msk [vmem:[#allocation4 + $0x1c8] sm:$0xff] %vm1490, %v1413
    %1549 = vst.msk [vmem:[#allocation4 + $0x1d0] sm:$0xff] %vm1490, %v1415
    %1550 = vst.msk [vmem:[#allocation4 + $0x1d8] sm:$0xff] %vm1490, %v1417
    %1551 = vst.msk [vmem:[#allocation4 + $0x1e0] sm:$0xff] %vm1490, %v1419
    %1552 = vst.msk [vmem:[#allocation4 + $0x1e8] sm:$0xff] %vm1490, %v1421
    %1553 = vst.msk [vmem:[#allocation4 + $0x1f0] sm:$0xff] %vm1490, %v1423
    %1554 = vst.msk [vmem:[#allocation4 + $0x1f8] sm:$0xff] %vm1490, %v1425
    %v1555 = vld [vmem:[%s207 + $0x1] sm:$0xff]
    %v1556 = vld [vmem:[%s207 + $0x9] sm:$0xff]
    %v1557 = vld [vmem:[%s207 + $0x19] sm:$0xff]
    %v1558 = vld [vmem:[%s207 + $0x21] sm:$0xff]
    %v1559 = vld [vmem:[%s207 + $0x31] sm:$0xff]
    %v1560 = vld [vmem:[%s207 + $0x39] sm:$0xff]
    %v1561 = vld [vmem:[%s207 + $0x49] sm:$0xff]
    %v1562 = vld [vmem:[%s207 + $0x51] sm:$0xff]
    %v1563 = vld [vmem:[%s207 + $0x61] sm:$0xff]
    %v1564 = vld [vmem:[%s207 + $0x69] sm:$0xff]
    %v1565 = vld [vmem:[%s207 + $0x79] sm:$0xff]
    %v1566 = vld [vmem:[%s207 + $0x81] sm:$0xff]
    %v1567 = vld [vmem:[%s207 + $0x91] sm:$0xff]
    %v1568 = vld [vmem:[%s207 + $0x99] sm:$0xff]
    %v1569 = vld [vmem:[%s207 + $0xa9] sm:$0xff]
    %v1570 = vld [vmem:[%s207 + $0xb1] sm:$0xff]
    %v1571 = vld [vmem:[%s207 + $0xc1] sm:$0xff]
    %v1572 = vld [vmem:[%s207 + $0xc9] sm:$0xff]
    %v1573 = vld [vmem:[%s207 + $0xd9] sm:$0xff]
    %v1574 = vld [vmem:[%s207 + $0xe1] sm:$0xff]
    %v1575 = vld [vmem:[%s207 + $0xf1] sm:$0xff]
    %v1576 = vld [vmem:[%s207 + $0xf9] sm:$0xff]
    %v1577 = vld [vmem:[%s207 + $0x109] sm:$0xff]
    %v1578 = vld [vmem:[%s207 + $0x111] sm:$0xff]
    %v1579 = vld [vmem:[%s207 + $0x121] sm:$0xff]
    %v1580 = vld [vmem:[%s207 + $0x129] sm:$0xff]
    %v1581 = vld [vmem:[%s207 + $0x139] sm:$0xff]
    %v1582 = vld [vmem:[%s207 + $0x141] sm:$0xff]
    %v1583 = vld [vmem:[%s207 + $0x151] sm:$0xff]
    %v1584 = vld [vmem:[%s207 + $0x159] sm:$0xff]
    %v1585 = vld [vmem:[%s207 + $0x169] sm:$0xff]
    %v1586 = vld [vmem:[%s207 + $0x171] sm:$0xff]
    %v1587 = vld [vmem:[%s207 + $0x1b1] sm:$0xff]
    %v1588 = vld [vmem:[%s207 + $0x1b9] sm:$0xff]
    %v1589 = vld [vmem:[%s207 + $0x1c9] sm:$0xff]
    %v1590 = vld [vmem:[%s207 + $0x1d1] sm:$0xff]
    %v1591 = vld [vmem:[%s207 + $0x1e1] sm:$0xff]
    %v1592 = vld [vmem:[%s207 + $0x1e9] sm:$0xff]
    %v1593 = vld [vmem:[%s207 + $0x1f9] sm:$0xff]
    %v1594 = vld [vmem:[%s207 + $0x201] sm:$0xff]
    %v1595 = vld [vmem:[%s207 + $0x211] sm:$0xff]
    %v1596 = vld [vmem:[%s207 + $0x219] sm:$0xff]
    %v1597 = vld [vmem:[%s207 + $0x229] sm:$0xff]
    %v1598 = vld [vmem:[%s207 + $0x231] sm:$0xff]
    %v1599 = vld [vmem:[%s207 + $0x241] sm:$0xff]
    %v1600 = vld [vmem:[%s207 + $0x249] sm:$0xff]
    %v1601 = vld [vmem:[%s207 + $0x259] sm:$0xff]
    %v1602 = vld [vmem:[%s207 + $0x261] sm:$0xff]
    %v1603 = vld [vmem:[%s207 + $0x271] sm:$0xff]
    %v1604 = vld [vmem:[%s207 + $0x279] sm:$0xff]
    %v1605 = vld [vmem:[%s207 + $0x289] sm:$0xff]
    %v1606 = vld [vmem:[%s207 + $0x291] sm:$0xff]
    %v1607 = vld [vmem:[%s207 + $0x2a1] sm:$0xff]
    %v1608 = vld [vmem:[%s207 + $0x2a9] sm:$0xff]
    %v1609 = vld [vmem:[%s207 + $0x2b9] sm:$0xff]
    %v1610 = vld [vmem:[%s207 + $0x2c1] sm:$0xff]
    %v1611 = vld [vmem:[%s207 + $0x2d1] sm:$0xff]
    %v1612 = vld [vmem:[%s207 + $0x2d9] sm:$0xff]
    %v1613 = vld [vmem:[%s207 + $0x2e9] sm:$0xff]
    %v1614 = vld [vmem:[%s207 + $0x2f1] sm:$0xff]
    %v1615 = vld [vmem:[%s207 + $0x301] sm:$0xff]
    %v1616 = vld [vmem:[%s207 + $0x309] sm:$0xff]
    %v1617 = vld [vmem:[%s207 + $0x319] sm:$0xff]
    %v1618 = vld [vmem:[%s207 + $0x321] sm:$0xff]
    %1683 = vrot.lane.b32.xlu0 %v1555, 16
    %v1684 = vpop.permute.xlu0 %1683
    %1685 = vrot.lane.b32.xlu0 %v1556, 16
    %v1686 = vpop.permute.xlu0 %1685
    %1687 = vrot.lane.b32.xlu0 %v1557, 16
    %v1688 = vpop.permute.xlu0 %1687
    %1689 = vrot.lane.b32.xlu0 %v1558, 16
    %v1690 = vpop.permute.xlu0 %1689
    %1691 = vrot.lane.b32.xlu0 %v1559, 16
    %v1692 = vpop.permute.xlu0 %1691
    %1693 = vrot.lane.b32.xlu0 %v1560, 16
    %v1694 = vpop.permute.xlu0 %1693
    %1695 = vrot.lane.b32.xlu0 %v1561, 16
    %v1696 = vpop.permute.xlu0 %1695
    %1697 = vrot.lane.b32.xlu0 %v1562, 16
    %v1698 = vpop.permute.xlu0 %1697
    %1699 = vrot.lane.b32.xlu0 %v1563, 16
    %v1700 = vpop.permute.xlu0 %1699
    %1701 = vrot.lane.b32.xlu0 %v1564, 16
    %v1702 = vpop.permute.xlu0 %1701
    %1703 = vrot.lane.b32.xlu0 %v1565, 16
    %v1704 = vpop.permute.xlu0 %1703
    %1705 = vrot.lane.b32.xlu0 %v1566, 16
    %v1706 = vpop.permute.xlu0 %1705
    %1707 = vrot.lane.b32.xlu0 %v1567, 16
    %v1708 = vpop.permute.xlu0 %1707
    %1709 = vrot.lane.b32.xlu0 %v1568, 16
    %v1710 = vpop.permute.xlu0 %1709
    %1711 = vrot.lane.b32.xlu0 %v1569, 16
    %v1712 = vpop.permute.xlu0 %1711
    %1713 = vrot.lane.b32.xlu0 %v1570, 16
    %v1714 = vpop.permute.xlu0 %1713
    %1715 = vrot.lane.b32.xlu0 %v1571, 16
    %v1716 = vpop.permute.xlu0 %1715
    %1717 = vrot.lane.b32.xlu0 %v1572, 16
    %v1718 = vpop.permute.xlu0 %1717
    %1719 = vrot.lane.b32.xlu0 %v1573, 16
    %v1720 = vpop.permute.xlu0 %1719
    %1721 = vrot.lane.b32.xlu0 %v1574, 16
    %v1722 = vpop.permute.xlu0 %1721
    %1723 = vrot.lane.b32.xlu0 %v1575, 16
    %v1724 = vpop.permute.xlu0 %1723
    %1725 = vrot.lane.b32.xlu0 %v1576, 16
    %v1726 = vpop.permute.xlu0 %1725
    %1727 = vrot.lane.b32.xlu0 %v1577, 16
    %v1728 = vpop.permute.xlu0 %1727
    %1729 = vrot.lane.b32.xlu0 %v1578, 16
    %v1730 = vpop.permute.xlu0 %1729
    %1731 = vrot.lane.b32.xlu0 %v1579, 16
    %v1732 = vpop.permute.xlu0 %1731
    %1733 = vrot.lane.b32.xlu0 %v1580, 16
    %v1734 = vpop.permute.xlu0 %1733
    %1735 = vrot.lane.b32.xlu0 %v1581, 16
    %v1736 = vpop.permute.xlu0 %1735
    %1737 = vrot.lane.b32.xlu0 %v1582, 16
    %v1738 = vpop.permute.xlu0 %1737
    %1739 = vrot.lane.b32.xlu0 %v1583, 16
    %v1740 = vpop.permute.xlu0 %1739
    %1741 = vrot.lane.b32.xlu0 %v1584, 16
    %v1742 = vpop.permute.xlu0 %1741
    %1743 = vrot.lane.b32.xlu0 %v1585, 16
    %v1744 = vpop.permute.xlu0 %1743
    %1745 = vrot.lane.b32.xlu0 %v1586, 16
    %v1746 = vpop.permute.xlu0 %1745
    %1747 = vrot.lane.b32.xlu0 %v1587, 16
    %v1748 = vpop.permute.xlu0 %1747
    %1749 = vrot.lane.b32.xlu0 %v1588, 16
    %v1750 = vpop.permute.xlu0 %1749
    %1751 = vrot.lane.b32.xlu0 %v1589, 16
    %v1752 = vpop.permute.xlu0 %1751
    %1753 = vrot.lane.b32.xlu0 %v1590, 16
    %v1754 = vpop.permute.xlu0 %1753
    %1755 = vrot.lane.b32.xlu0 %v1591, 16
    %v1756 = vpop.permute.xlu0 %1755
    %1757 = vrot.lane.b32.xlu0 %v1592, 16
    %v1758 = vpop.permute.xlu0 %1757
    %1759 = vrot.lane.b32.xlu0 %v1593, 16
    %v1760 = vpop.permute.xlu0 %1759
    %1761 = vrot.lane.b32.xlu0 %v1594, 16
    %v1762 = vpop.permute.xlu0 %1761
    %1763 = vrot.lane.b32.xlu0 %v1595, 16
    %v1764 = vpop.permute.xlu0 %1763
    %1765 = vrot.lane.b32.xlu0 %v1596, 16
    %v1766 = vpop.permute.xlu0 %1765
    %1767 = vrot.lane.b32.xlu0 %v1597, 16
    %v1768 = vpop.permute.xlu0 %1767
    %1769 = vrot.lane.b32.xlu0 %v1598, 16
    %v1770 = vpop.permute.xlu0 %1769
    %1771 = vrot.lane.b32.xlu0 %v1599, 16
    %v1772 = vpop.permute.xlu0 %1771
    %1773 = vrot.lane.b32.xlu0 %v1600, 16
    %v1774 = vpop.permute.xlu0 %1773
    %1775 = vrot.lane.b32.xlu0 %v1601, 16
    %v1776 = vpop.permute.xlu0 %1775
    %1777 = vrot.lane.b32.xlu0 %v1602, 16
    %v1778 = vpop.permute.xlu0 %1777
    %1779 = vrot.lane.b32.xlu0 %v1603, 16
    %v1780 = vpop.permute.xlu0 %1779
    %1781 = vrot.lane.b32.xlu0 %v1604, 16
    %v1782 = vpop.permute.xlu0 %1781
    %1783 = vrot.lane.b32.xlu0 %v1605, 16
    %v1784 = vpop.permute.xlu0 %1783
    %1785 = vrot.lane.b32.xlu0 %v1606, 16
    %v1786 = vpop.permute.xlu0 %1785
    %1787 = vrot.lane.b32.xlu0 %v1607, 16
    %v1788 = vpop.permute.xlu0 %1787
    %1789 = vrot.lane.b32.xlu0 %v1608, 16
    %v1790 = vpop.permute.xlu0 %1789
    %1791 = vrot.lane.b32.xlu0 %v1609, 16
    %v1792 = vpop.permute.xlu0 %1791
    %1793 = vrot.lane.b32.xlu0 %v1610, 16
    %v1794 = vpop.permute.xlu0 %1793
    %1795 = vrot.lane.b32.xlu0 %v1611, 16
    %v1796 = vpop.permute.xlu0 %1795
    %1797 = vrot.lane.b32.xlu0 %v1612, 16
    %v1798 = vpop.permute.xlu0 %1797
    %1799 = vrot.lane.b32.xlu0 %v1613, 16
    %v1800 = vpop.permute.xlu0 %1799
    %1801 = vrot.lane.b32.xlu0 %v1614, 16
    %v1802 = vpop.permute.xlu0 %1801
    %1803 = vrot.lane.b32.xlu0 %v1615, 16
    %v1804 = vpop.permute.xlu0 %1803
    %1805 = vrot.lane.b32.xlu0 %v1616, 16
    %v1806 = vpop.permute.xlu0 %1805
    %1807 = vrot.lane.b32.xlu0 %v1617, 16
    %v1808 = vpop.permute.xlu0 %1807
    %1809 = vrot.lane.b32.xlu0 %v1618, 16
    %v1810 = vpop.permute.xlu0 %1809
    %vm1875 = vcmask 162944
    %1876 = vst.msk [vmem:[#allocation4] sm:$0xff] %vm1875, %v1684
    %1877 = vst.msk [vmem:[#allocation4 + $0x8] sm:$0xff] %vm1875, %v1686
    %1878 = vst.msk [vmem:[#allocation4 + $0x10] sm:$0xff] %vm1875, %v1688
    %1879 = vst.msk [vmem:[#allocation4 + $0x18] sm:$0xff] %vm1875, %v1690
    %1880 = vst.msk [vmem:[#allocation4 + $0x20] sm:$0xff] %vm1875, %v1692
    %1881 = vst.msk [vmem:[#allocation4 + $0x28] sm:$0xff] %vm1875, %v1694
    %1882 = vst.msk [vmem:[#allocation4 + $0x30] sm:$0xff] %vm1875, %v1696
    %1883 = vst.msk [vmem:[#allocation4 + $0x38] sm:$0xff] %vm1875, %v1698
    %1884 = vst.msk [vmem:[#allocation4 + $0x40] sm:$0xff] %vm1875, %v1700
    %1885 = vst.msk [vmem:[#allocation4 + $0x48] sm:$0xff] %vm1875, %v1702
    %1886 = vst.msk [vmem:[#allocation4 + $0x50] sm:$0xff] %vm1875, %v1704
    %1887 = vst.msk [vmem:[#allocation4 + $0x58] sm:$0xff] %vm1875, %v1706
    %1888 = vst.msk [vmem:[#allocation4 + $0x60] sm:$0xff] %vm1875, %v1708
    %1889 = vst.msk [vmem:[#allocation4 + $0x68] sm:$0xff] %vm1875, %v1710
    %1890 = vst.msk [vmem:[#allocation4 + $0x70] sm:$0xff] %vm1875, %v1712
    %1891 = vst.msk [vmem:[#allocation4 + $0x78] sm:$0xff] %vm1875, %v1714
    %1892 = vst.msk [vmem:[#allocation4 + $0x80] sm:$0xff] %vm1875, %v1716
    %1893 = vst.msk [vmem:[#allocation4 + $0x88] sm:$0xff] %vm1875, %v1718
    %1894 = vst.msk [vmem:[#allocation4 + $0x90] sm:$0xff] %vm1875, %v1720
    %1895 = vst.msk [vmem:[#allocation4 + $0x98] sm:$0xff] %vm1875, %v1722
    %1896 = vst.msk [vmem:[#allocation4 + $0xa0] sm:$0xff] %vm1875, %v1724
    %1897 = vst.msk [vmem:[#allocation4 + $0xa8] sm:$0xff] %vm1875, %v1726
    %1898 = vst.msk [vmem:[#allocation4 + $0xb0] sm:$0xff] %vm1875, %v1728
    %1899 = vst.msk [vmem:[#allocation4 + $0xb8] sm:$0xff] %vm1875, %v1730
    %1900 = vst.msk [vmem:[#allocation4 + $0xc0] sm:$0xff] %vm1875, %v1732
    %1901 = vst.msk [vmem:[#allocation4 + $0xc8] sm:$0xff] %vm1875, %v1734
    %1902 = vst.msk [vmem:[#allocation4 + $0xd0] sm:$0xff] %vm1875, %v1736
    %1903 = vst.msk [vmem:[#allocation4 + $0xd8] sm:$0xff] %vm1875, %v1738
    %1904 = vst.msk [vmem:[#allocation4 + $0xe0] sm:$0xff] %vm1875, %v1740
    %1905 = vst.msk [vmem:[#allocation4 + $0xe8] sm:$0xff] %vm1875, %v1742
    %1906 = vst.msk [vmem:[#allocation4 + $0xf0] sm:$0xff] %vm1875, %v1744
    %1907 = vst.msk [vmem:[#allocation4 + $0xf8] sm:$0xff] %vm1875, %v1746
    %1908 = vst.msk [vmem:[#allocation4 + $0x100] sm:$0xff] %vm1875, %v1748
    %1909 = vst.msk [vmem:[#allocation4 + $0x108] sm:$0xff] %vm1875, %v1750
    %1910 = vst.msk [vmem:[#allocation4 + $0x110] sm:$0xff] %vm1875, %v1752
    %1911 = vst.msk [vmem:[#allocation4 + $0x118] sm:$0xff] %vm1875, %v1754
    %1912 = vst.msk [vmem:[#allocation4 + $0x120] sm:$0xff] %vm1875, %v1756
    %1913 = vst.msk [vmem:[#allocation4 + $0x128] sm:$0xff] %vm1875, %v1758
    %1914 = vst.msk [vmem:[#allocation4 + $0x130] sm:$0xff] %vm1875, %v1760
    %1915 = vst.msk [vmem:[#allocation4 + $0x138] sm:$0xff] %vm1875, %v1762
    %1916 = vst.msk [vmem:[#allocation4 + $0x140] sm:$0xff] %vm1875, %v1764
    %1917 = vst.msk [vmem:[#allocation4 + $0x148] sm:$0xff] %vm1875, %v1766
    %1918 = vst.msk [vmem:[#allocation4 + $0x150] sm:$0xff] %vm1875, %v1768
    %1919 = vst.msk [vmem:[#allocation4 + $0x158] sm:$0xff] %vm1875, %v1770
    %1920 = vst.msk [vmem:[#allocation4 + $0x160] sm:$0xff] %vm1875, %v1772
    %1921 = vst.msk [vmem:[#allocation4 + $0x168] sm:$0xff] %vm1875, %v1774
    %1922 = vst.msk [vmem:[#allocation4 + $0x170] sm:$0xff] %vm1875, %v1776
    %1923 = vst.msk [vmem:[#allocation4 + $0x178] sm:$0xff] %vm1875, %v1778
    %1924 = vst.msk [vmem:[#allocation4 + $0x180] sm:$0xff] %vm1875, %v1780
    %1925 = vst.msk [vmem:[#allocation4 + $0x188] sm:$0xff] %vm1875, %v1782
    %1926 = vst.msk [vmem:[#allocation4 + $0x190] sm:$0xff] %vm1875, %v1784
    %1927 = vst.msk [vmem:[#allocation4 + $0x198] sm:$0xff] %vm1875, %v1786
    %1928 = vst.msk [vmem:[#allocation4 + $0x1a0] sm:$0xff] %vm1875, %v1788
    %1929 = vst.msk [vmem:[#allocation4 + $0x1a8] sm:$0xff] %vm1875, %v1790
    %1930 = vst.msk [vmem:[#allocation4 + $0x1b0] sm:$0xff] %vm1875, %v1792
    %1931 = vst.msk [vmem:[#allocation4 + $0x1b8] sm:$0xff] %vm1875, %v1794
    %1932 = vst.msk [vmem:[#allocation4 + $0x1c0] sm:$0xff] %vm1875, %v1796
    %1933 = vst.msk [vmem:[#allocation4 + $0x1c8] sm:$0xff] %vm1875, %v1798
    %1934 = vst.msk [vmem:[#allocation4 + $0x1d0] sm:$0xff] %vm1875, %v1800
    %1935 = vst.msk [vmem:[#allocation4 + $0x1d8] sm:$0xff] %vm1875, %v1802
    %1936 = vst.msk [vmem:[#allocation4 + $0x1e0] sm:$0xff] %vm1875, %v1804
    %1937 = vst.msk [vmem:[#allocation4 + $0x1e8] sm:$0xff] %vm1875, %v1806
    %1938 = vst.msk [vmem:[#allocation4 + $0x1f0] sm:$0xff] %vm1875, %v1808
    %1939 = vst.msk [vmem:[#allocation4 + $0x1f8] sm:$0xff] %vm1875, %v1810
    %v1940 = vld [vmem:[%s207 + $0x2] sm:$0xff]
    %v1941 = vld [vmem:[%s207 + $0xa] sm:$0xff]
    %v1942 = vld [vmem:[%s207 + $0x1a] sm:$0xff]
    %v1943 = vld [vmem:[%s207 + $0x22] sm:$0xff]
    %v1944 = vld [vmem:[%s207 + $0x32] sm:$0xff]
    %v1945 = vld [vmem:[%s207 + $0x3a] sm:$0xff]
    %v1946 = vld [vmem:[%s207 + $0x4a] sm:$0xff]
    %v1947 = vld [vmem:[%s207 + $0x52] sm:$0xff]
    %v1948 = vld [vmem:[%s207 + $0x62] sm:$0xff]
    %v1949 = vld [vmem:[%s207 + $0x6a] sm:$0xff]
    %v1950 = vld [vmem:[%s207 + $0x7a] sm:$0xff]
    %v1951 = vld [vmem:[%s207 + $0x82] sm:$0xff]
    %v1952 = vld [vmem:[%s207 + $0x92] sm:$0xff]
    %v1953 = vld [vmem:[%s207 + $0x9a] sm:$0xff]
    %v1954 = vld [vmem:[%s207 + $0xaa] sm:$0xff]
    %v1955 = vld [vmem:[%s207 + $0xb2] sm:$0xff]
    %v1956 = vld [vmem:[%s207 + $0xc2] sm:$0xff]
    %v1957 = vld [vmem:[%s207 + $0xca] sm:$0xff]
    %v1958 = vld [vmem:[%s207 + $0xda] sm:$0xff]
    %v1959 = vld [vmem:[%s207 + $0xe2] sm:$0xff]
    %v1960 = vld [vmem:[%s207 + $0xf2] sm:$0xff]
    %v1961 = vld [vmem:[%s207 + $0xfa] sm:$0xff]
    %v1962 = vld [vmem:[%s207 + $0x10a] sm:$0xff]
    %v1963 = vld [vmem:[%s207 + $0x112] sm:$0xff]
    %v1964 = vld [vmem:[%s207 + $0x122] sm:$0xff]
    %v1965 = vld [vmem:[%s207 + $0x12a] sm:$0xff]
    %v1966 = vld [vmem:[%s207 + $0x13a] sm:$0xff]
    %v1967 = vld [vmem:[%s207 + $0x142] sm:$0xff]
    %v1968 = vld [vmem:[%s207 + $0x152] sm:$0xff]
    %v1969 = vld [vmem:[%s207 + $0x15a] sm:$0xff]
    %v1970 = vld [vmem:[%s207 + $0x16a] sm:$0xff]
    %v1971 = vld [vmem:[%s207 + $0x172] sm:$0xff]
    %v1972 = vld [vmem:[%s207 + $0x1b2] sm:$0xff]
    %v1973 = vld [vmem:[%s207 + $0x1ba] sm:$0xff]
    %v1974 = vld [vmem:[%s207 + $0x1ca] sm:$0xff]
    %v1975 = vld [vmem:[%s207 + $0x1d2] sm:$0xff]
    %v1976 = vld [vmem:[%s207 + $0x1e2] sm:$0xff]
    %v1977 = vld [vmem:[%s207 + $0x1ea] sm:$0xff]
    %v1978 = vld [vmem:[%s207 + $0x1fa] sm:$0xff]
    %v1979 = vld [vmem:[%s207 + $0x202] sm:$0xff]
    %v1980 = vld [vmem:[%s207 + $0x212] sm:$0xff]
    %v1981 = vld [vmem:[%s207 + $0x21a] sm:$0xff]
    %v1982 = vld [vmem:[%s207 + $0x22a] sm:$0xff]
    %v1983 = vld [vmem:[%s207 + $0x232] sm:$0xff]
    %v1984 = vld [vmem:[%s207 + $0x242] sm:$0xff]
    %v1985 = vld [vmem:[%s207 + $0x24a] sm:$0xff]
    %v1986 = vld [vmem:[%s207 + $0x25a] sm:$0xff]
    %v1987 = vld [vmem:[%s207 + $0x262] sm:$0xff]
    %v1988 = vld [vmem:[%s207 + $0x272] sm:$0xff]
    %v1989 = vld [vmem:[%s207 + $0x27a] sm:$0xff]
    %v1990 = vld [vmem:[%s207 + $0x28a] sm:$0xff]
    %v1991 = vld [vmem:[%s207 + $0x292] sm:$0xff]
    %v1992 = vld [vmem:[%s207 + $0x2a2] sm:$0xff]
    %v1993 = vld [vmem:[%s207 + $0x2aa] sm:$0xff]
    %v1994 = vld [vmem:[%s207 + $0x2ba] sm:$0xff]
    %v1995 = vld [vmem:[%s207 + $0x2c2] sm:$0xff]
    %v1996 = vld [vmem:[%s207 + $0x2d2] sm:$0xff]
    %v1997 = vld [vmem:[%s207 + $0x2da] sm:$0xff]
    %v1998 = vld [vmem:[%s207 + $0x2ea] sm:$0xff]
    %v1999 = vld [vmem:[%s207 + $0x2f2] sm:$0xff]
    %v2000 = vld [vmem:[%s207 + $0x302] sm:$0xff]
    %v2001 = vld [vmem:[%s207 + $0x30a] sm:$0xff]
    %v2002 = vld [vmem:[%s207 + $0x31a] sm:$0xff]
    %v2003 = vld [vmem:[%s207 + $0x322] sm:$0xff]
    %2068 = vrot.lane.b32.xlu0 %v1940, 20
    %v2069 = vpop.permute.xlu0 %2068
    %2070 = vrot.lane.b32.xlu0 %v1941, 20
    %v2071 = vpop.permute.xlu0 %2070
    %2072 = vrot.lane.b32.xlu0 %v1942, 20
    %v2073 = vpop.permute.xlu0 %2072
    %2074 = vrot.lane.b32.xlu0 %v1943, 20
    %v2075 = vpop.permute.xlu0 %2074
    %2076 = vrot.lane.b32.xlu0 %v1944, 20
    %v2077 = vpop.permute.xlu0 %2076
    %2078 = vrot.lane.b32.xlu0 %v1945, 20
    %v2079 = vpop.permute.xlu0 %2078
    %2080 = vrot.lane.b32.xlu0 %v1946, 20
    %v2081 = vpop.permute.xlu0 %2080
    %2082 = vrot.lane.b32.xlu0 %v1947, 20
    %v2083 = vpop.permute.xlu0 %2082
    %2084 = vrot.lane.b32.xlu0 %v1948, 20
    %v2085 = vpop.permute.xlu0 %2084
    %2086 = vrot.lane.b32.xlu0 %v1949, 20
    %v2087 = vpop.permute.xlu0 %2086
    %2088 = vrot.lane.b32.xlu0 %v1950, 20
    %v2089 = vpop.permute.xlu0 %2088
    %2090 = vrot.lane.b32.xlu0 %v1951, 20
    %v2091 = vpop.permute.xlu0 %2090
    %2092 = vrot.lane.b32.xlu0 %v1952, 20
    %v2093 = vpop.permute.xlu0 %2092
    %2094 = vrot.lane.b32.xlu0 %v1953, 20
    %v2095 = vpop.permute.xlu0 %2094
    %2096 = vrot.lane.b32.xlu0 %v1954, 20
    %v2097 = vpop.permute.xlu0 %2096
    %2098 = vrot.lane.b32.xlu0 %v1955, 20
    %v2099 = vpop.permute.xlu0 %2098
    %2100 = vrot.lane.b32.xlu0 %v1956, 20
    %v2101 = vpop.permute.xlu0 %2100
    %2102 = vrot.lane.b32.xlu0 %v1957, 20
    %v2103 = vpop.permute.xlu0 %2102
    %2104 = vrot.lane.b32.xlu0 %v1958, 20
    %v2105 = vpop.permute.xlu0 %2104
    %2106 = vrot.lane.b32.xlu0 %v1959, 20
    %v2107 = vpop.permute.xlu0 %2106
    %2108 = vrot.lane.b32.xlu0 %v1960, 20
    %v2109 = vpop.permute.xlu0 %2108
    %2110 = vrot.lane.b32.xlu0 %v1961, 20
    %v2111 = vpop.permute.xlu0 %2110
    %2112 = vrot.lane.b32.xlu0 %v1962, 20
    %v2113 = vpop.permute.xlu0 %2112
    %2114 = vrot.lane.b32.xlu0 %v1963, 20
    %v2115 = vpop.permute.xlu0 %2114
    %2116 = vrot.lane.b32.xlu0 %v1964, 20
    %v2117 = vpop.permute.xlu0 %2116
    %2118 = vrot.lane.b32.xlu0 %v1965, 20
    %v2119 = vpop.permute.xlu0 %2118
    %2120 = vrot.lane.b32.xlu0 %v1966, 20
    %v2121 = vpop.permute.xlu0 %2120
    %2122 = vrot.lane.b32.xlu0 %v1967, 20
    %v2123 = vpop.permute.xlu0 %2122
    %2124 = vrot.lane.b32.xlu0 %v1968, 20
    %v2125 = vpop.permute.xlu0 %2124
    %2126 = vrot.lane.b32.xlu0 %v1969, 20
    %v2127 = vpop.permute.xlu0 %2126
    %2128 = vrot.lane.b32.xlu0 %v1970, 20
    %v2129 = vpop.permute.xlu0 %2128
    %2130 = vrot.lane.b32.xlu0 %v1971, 20
    %v2131 = vpop.permute.xlu0 %2130
    %2132 = vrot.lane.b32.xlu0 %v1972, 20
    %v2133 = vpop.permute.xlu0 %2132
    %2134 = vrot.lane.b32.xlu0 %v1973, 20
    %v2135 = vpop.permute.xlu0 %2134
    %2136 = vrot.lane.b32.xlu0 %v1974, 20
    %v2137 = vpop.permute.xlu0 %2136
    %2138 = vrot.lane.b32.xlu0 %v1975, 20
    %v2139 = vpop.permute.xlu0 %2138
    %2140 = vrot.lane.b32.xlu0 %v1976, 20
    %v2141 = vpop.permute.xlu0 %2140
    %2142 = vrot.lane.b32.xlu0 %v1977, 20
    %v2143 = vpop.permute.xlu0 %2142
    %2144 = vrot.lane.b32.xlu0 %v1978, 20
    %v2145 = vpop.permute.xlu0 %2144
    %2146 = vrot.lane.b32.xlu0 %v1979, 20
    %v2147 = vpop.permute.xlu0 %2146
    %2148 = vrot.lane.b32.xlu0 %v1980, 20
    %v2149 = vpop.permute.xlu0 %2148
    %2150 = vrot.lane.b32.xlu0 %v1981, 20
    %v2151 = vpop.permute.xlu0 %2150
    %2152 = vrot.lane.b32.xlu0 %v1982, 20
    %v2153 = vpop.permute.xlu0 %2152
    %2154 = vrot.lane.b32.xlu0 %v1983, 20
    %v2155 = vpop.permute.xlu0 %2154
    %2156 = vrot.lane.b32.xlu0 %v1984, 20
    %v2157 = vpop.permute.xlu0 %2156
    %2158 = vrot.lane.b32.xlu0 %v1985, 20
    %v2159 = vpop.permute.xlu0 %2158
    %2160 = vrot.lane.b32.xlu0 %v1986, 20
    %v2161 = vpop.permute.xlu0 %2160
    %2162 = vrot.lane.b32.xlu0 %v1987, 20
    %v2163 = vpop.permute.xlu0 %2162
    %2164 = vrot.lane.b32.xlu0 %v1988, 20
    %v2165 = vpop.permute.xlu0 %2164
    %2166 = vrot.lane.b32.xlu0 %v1989, 20
    %v2167 = vpop.permute.xlu0 %2166
    %2168 = vrot.lane.b32.xlu0 %v1990, 20
    %v2169 = vpop.permute.xlu0 %2168
    %2170 = vrot.lane.b32.xlu0 %v1991, 20
    %v2171 = vpop.permute.xlu0 %2170
    %2172 = vrot.lane.b32.xlu0 %v1992, 20
    %v2173 = vpop.permute.xlu0 %2172
    %2174 = vrot.lane.b32.xlu0 %v1993, 20
    %v2175 = vpop.permute.xlu0 %2174
    %2176 = vrot.lane.b32.xlu0 %v1994, 20
    %v2177 = vpop.permute.xlu0 %2176
    %2178 = vrot.lane.b32.xlu0 %v1995, 20
    %v2179 = vpop.permute.xlu0 %2178
    %2180 = vrot.lane.b32.xlu0 %v1996, 20
    %v2181 = vpop.permute.xlu0 %2180
    %2182 = vrot.lane.b32.xlu0 %v1997, 20
    %v2183 = vpop.permute.xlu0 %2182
    %2184 = vrot.lane.b32.xlu0 %v1998, 20
    %v2185 = vpop.permute.xlu0 %2184
    %2186 = vrot.lane.b32.xlu0 %v1999, 20
    %v2187 = vpop.permute.xlu0 %2186
    %2188 = vrot.lane.b32.xlu0 %v2000, 20
    %v2189 = vpop.permute.xlu0 %2188
    %2190 = vrot.lane.b32.xlu0 %v2001, 20
    %v2191 = vpop.permute.xlu0 %2190
    %2192 = vrot.lane.b32.xlu0 %v2002, 20
    %v2193 = vpop.permute.xlu0 %2192
    %2194 = vrot.lane.b32.xlu0 %v2003, 20
    %v2195 = vpop.permute.xlu0 %2194
    %vm2260 = vcmask 195744
    %2261 = vst.msk [vmem:[#allocation4] sm:$0xff] %vm2260, %v2069
    %2262 = vst.msk [vmem:[#allocation4 + $0x8] sm:$0xff] %vm2260, %v2071
    %2263 = vst.msk [vmem:[#allocation4 + $0x10] sm:$0xff] %vm2260, %v2073
    %2264 = vst.msk [vmem:[#allocation4 + $0x18] sm:$0xff] %vm2260, %v2075
    %2265 = vst.msk [vmem:[#allocation4 + $0x20] sm:$0xff] %vm2260, %v2077
    %2266 = vst.msk [vmem:[#allocation4 + $0x28] sm:$0xff] %vm2260, %v2079
    %2267 = vst.msk [vmem:[#allocation4 + $0x30] sm:$0xff] %vm2260, %v2081
    %2268 = vst.msk [vmem:[#allocation4 + $0x38] sm:$0xff] %vm2260, %v2083
    %2269 = vst.msk [vmem:[#allocation4 + $0x40] sm:$0xff] %vm2260, %v2085
    %2270 = vst.msk [vmem:[#allocation4 + $0x48] sm:$0xff] %vm2260, %v2087
    %2271 = vst.msk [vmem:[#allocation4 + $0x50] sm:$0xff] %vm2260, %v2089
    %2272 = vst.msk [vmem:[#allocation4 + $0x58] sm:$0xff] %vm2260, %v2091
    %2273 = vst.msk [vmem:[#allocation4 + $0x60] sm:$0xff] %vm2260, %v2093
    %2274 = vst.msk [vmem:[#allocation4 + $0x68] sm:$0xff] %vm2260, %v2095
    %2275 = vst.msk [vmem:[#allocation4 + $0x70] sm:$0xff] %vm2260, %v2097
    %2276 = vst.msk [vmem:[#allocation4 + $0x78] sm:$0xff] %vm2260, %v2099
    %2277 = vst.msk [vmem:[#allocation4 + $0x80] sm:$0xff] %vm2260, %v2101
    %2278 = vst.msk [vmem:[#allocation4 + $0x88] sm:$0xff] %vm2260, %v2103
    %2279 = vst.msk [vmem:[#allocation4 + $0x90] sm:$0xff] %vm2260, %v2105
    %2280 = vst.msk [vmem:[#allocation4 + $0x98] sm:$0xff] %vm2260, %v2107
    %2281 = vst.msk [vmem:[#allocation4 + $0xa0] sm:$0xff] %vm2260, %v2109
    %2282 = vst.msk [vmem:[#allocation4 + $0xa8] sm:$0xff] %vm2260, %v2111
    %2283 = vst.msk [vmem:[#allocation4 + $0xb0] sm:$0xff] %vm2260, %v2113
    %2284 = vst.msk [vmem:[#allocation4 + $0xb8] sm:$0xff] %vm2260, %v2115
    %2285 = vst.msk [vmem:[#allocation4 + $0xc0] sm:$0xff] %vm2260, %v2117
    %2286 = vst.msk [vmem:[#allocation4 + $0xc8] sm:$0xff] %vm2260, %v2119
    %2287 = vst.msk [vmem:[#allocation4 + $0xd0] sm:$0xff] %vm2260, %v2121
    %2288 = vst.msk [vmem:[#allocation4 + $0xd8] sm:$0xff] %vm2260, %v2123
    %2289 = vst.msk [vmem:[#allocation4 + $0xe0] sm:$0xff] %vm2260, %v2125
    %2290 = vst.msk [vmem:[#allocation4 + $0xe8] sm:$0xff] %vm2260, %v2127
    %2291 = vst.msk [vmem:[#allocation4 + $0xf0] sm:$0xff] %vm2260, %v2129
    %2292 = vst.msk [vmem:[#allocation4 + $0xf8] sm:$0xff] %vm2260, %v2131
    %2293 = vst.msk [vmem:[#allocation4 + $0x100] sm:$0xff] %vm2260, %v2133
    %2294 = vst.msk [vmem:[#allocation4 + $0x108] sm:$0xff] %vm2260, %v2135
    %2295 = vst.msk [vmem:[#allocation4 + $0x110] sm:$0xff] %vm2260, %v2137
    %2296 = vst.msk [vmem:[#allocation4 + $0x118] sm:$0xff] %vm2260, %v2139
    %2297 = vst.msk [vmem:[#allocation4 + $0x120] sm:$0xff] %vm2260, %v2141
    %2298 = vst.msk [vmem:[#allocation4 + $0x128] sm:$0xff] %vm2260, %v2143
    %2299 = vst.msk [vmem:[#allocation4 + $0x130] sm:$0xff] %vm2260, %v2145
    %2300 = vst.msk [vmem:[#allocation4 + $0x138] sm:$0xff] %vm2260, %v2147
    %2301 = vst.msk [vmem:[#allocation4 + $0x140] sm:$0xff] %vm2260, %v2149
    %2302 = vst.msk [vmem:[#allocation4 + $0x148] sm:$0xff] %vm2260, %v2151
    %2303 = vst.msk [vmem:[#allocation4 + $0x150] sm:$0xff] %vm2260, %v2153
    %2304 = vst.msk [vmem:[#allocation4 + $0x158] sm:$0xff] %vm2260, %v2155
    %2305 = vst.msk [vmem:[#allocation4 + $0x160] sm:$0xff] %vm2260, %v2157
    %2306 = vst.msk [vmem:[#allocation4 + $0x168] sm:$0xff] %vm2260, %v2159
    %2307 = vst.msk [vmem:[#allocation4 + $0x170] sm:$0xff] %vm2260, %v2161
    %2308 = vst.msk [vmem:[#allocation4 + $0x178] sm:$0xff] %vm2260, %v2163
    %2309 = vst.msk [vmem:[#allocation4 + $0x180] sm:$0xff] %vm2260, %v2165
    %2310 = vst.msk [vmem:[#allocation4 + $0x188] sm:$0xff] %vm2260, %v2167
    %2311 = vst.msk [vmem:[#allocation4 + $0x190] sm:$0xff] %vm2260, %v2169
    %2312 = vst.msk [vmem:[#allocation4 + $0x198] sm:$0xff] %vm2260, %v2171
    %2313 = vst.msk [vmem:[#allocation4 + $0x1a0] sm:$0xff] %vm2260, %v2173
    %2314 = vst.msk [vmem:[#allocation4 + $0x1a8] sm:$0xff] %vm2260, %v2175
    %2315 = vst.msk [vmem:[#allocation4 + $0x1b0] sm:$0xff] %vm2260, %v2177
    %2316 = vst.msk [vmem:[#allocation4 + $0x1b8] sm:$0xff] %vm2260, %v2179
    %2317 = vst.msk [vmem:[#allocation4 + $0x1c0] sm:$0xff] %vm2260, %v2181
    %2318 = vst.msk [vmem:[#allocation4 + $0x1c8] sm:$0xff] %vm2260, %v2183
    %2319 = vst.msk [vmem:[#allocation4 + $0x1d0] sm:$0xff] %vm2260, %v2185
    %2320 = vst.msk [vmem:[#allocation4 + $0x1d8] sm:$0xff] %vm2260, %v2187
    %2321 = vst.msk [vmem:[#allocation4 + $0x1e0] sm:$0xff] %vm2260, %v2189
    %2322 = vst.msk [vmem:[#allocation4 + $0x1e8] sm:$0xff] %vm2260, %v2191
    %2323 = vst.msk [vmem:[#allocation4 + $0x1f0] sm:$0xff] %vm2260, %v2193
    %2324 = vst.msk [vmem:[#allocation4 + $0x1f8] sm:$0xff] %vm2260, %v2195
    %s2325 = scalar_lea.vmem [#allocation2], 48
    %v2326 = vld [vmem:[%s2325] sm:$0xff]
    %v2327 = vld [vmem:[%s2325 + $0x8] sm:$0xff]
    %v2328 = vld [vmem:[%s2325 + $0x18] sm:$0xff]
    %v2329 = vld [vmem:[%s2325 + $0x20] sm:$0xff]
    %v2330 = vld [vmem:[%s2325 + $0x30] sm:$0xff]
    %v2331 = vld [vmem:[%s2325 + $0x38] sm:$0xff]
    %v2332 = vld [vmem:[%s2325 + $0x48] sm:$0xff]
    %v2333 = vld [vmem:[%s2325 + $0x50] sm:$0xff]
    %v2334 = vld [vmem:[%s2325 + $0x60] sm:$0xff]
    %v2335 = vld [vmem:[%s2325 + $0x68] sm:$0xff]
    %v2336 = vld [vmem:[%s2325 + $0x78] sm:$0xff]
    %v2337 = vld [vmem:[%s2325 + $0x80] sm:$0xff]
    %v2338 = vld [vmem:[%s2325 + $0x90] sm:$0xff]
    %v2339 = vld [vmem:[%s2325 + $0x98] sm:$0xff]
    %v2340 = vld [vmem:[%s2325 + $0xa8] sm:$0xff]
    %v2341 = vld [vmem:[%s2325 + $0xb0] sm:$0xff]
    %v2342 = vld [vmem:[%s2325 + $0xc0] sm:$0xff]
    %v2343 = vld [vmem:[%s2325 + $0xc8] sm:$0xff]
    %v2344 = vld [vmem:[%s2325 + $0xd8] sm:$0xff]
    %v2345 = vld [vmem:[%s2325 + $0xe0] sm:$0xff]
    %v2346 = vld [vmem:[%s2325 + $0xf0] sm:$0xff]
    %v2347 = vld [vmem:[%s2325 + $0xf8] sm:$0xff]
    %v2348 = vld [vmem:[%s2325 + $0x108] sm:$0xff]
    %v2349 = vld [vmem:[%s2325 + $0x110] sm:$0xff]
    %v2350 = vld [vmem:[%s2325 + $0x120] sm:$0xff]
    %v2351 = vld [vmem:[%s2325 + $0x128] sm:$0xff]
    %v2352 = vld [vmem:[%s2325 + $0x138] sm:$0xff]
    %v2353 = vld [vmem:[%s2325 + $0x140] sm:$0xff]
    %v2354 = vld [vmem:[%s2325 + $0x150] sm:$0xff]
    %v2355 = vld [vmem:[%s2325 + $0x158] sm:$0xff]
    %v2356 = vld [vmem:[%s2325 + $0x168] sm:$0xff]
    %v2357 = vld [vmem:[%s2325 + $0x170] sm:$0xff]
    %v2358 = vld [vmem:[%s2325 + $0x1b0] sm:$0xff]
    %v2359 = vld [vmem:[%s2325 + $0x1b8] sm:$0xff]
    %v2360 = vld [vmem:[%s2325 + $0x1c8] sm:$0xff]
    %v2361 = vld [vmem:[%s2325 + $0x1d0] sm:$0xff]
    %v2362 = vld [vmem:[%s2325 + $0x1e0] sm:$0xff]
    %v2363 = vld [vmem:[%s2325 + $0x1e8] sm:$0xff]
    %v2364 = vld [vmem:[%s2325 + $0x1f8] sm:$0xff]
    %v2365 = vld [vmem:[%s2325 + $0x200] sm:$0xff]
    %v2366 = vld [vmem:[%s2325 + $0x210] sm:$0xff]
    %v2367 = vld [vmem:[%s2325 + $0x218] sm:$0xff]
    %v2368 = vld [vmem:[%s2325 + $0x228] sm:$0xff]
    %v2369 = vld [vmem:[%s2325 + $0x230] sm:$0xff]
    %v2370 = vld [vmem:[%s2325 + $0x240] sm:$0xff]
    %v2371 = vld [vmem:[%s2325 + $0x248] sm:$0xff]
    %v2372 = vld [vmem:[%s2325 + $0x258] sm:$0xff]
    %v2373 = vld [vmem:[%s2325 + $0x260] sm:$0xff]
    %v2374 = vld [vmem:[%s2325 + $0x270] sm:$0xff]
    %v2375 = vld [vmem:[%s2325 + $0x278] sm:$0xff]
    %v2376 = vld [vmem:[%s2325 + $0x288] sm:$0xff]
    %v2377 = vld [vmem:[%s2325 + $0x290] sm:$0xff]
    %v2378 = vld [vmem:[%s2325 + $0x2a0] sm:$0xff]
    %v2379 = vld [vmem:[%s2325 + $0x2a8] sm:$0xff]
    %v2380 = vld [vmem:[%s2325 + $0x2b8] sm:$0xff]
    %v2381 = vld [vmem:[%s2325 + $0x2c0] sm:$0xff]
    %v2382 = vld [vmem:[%s2325 + $0x2d0] sm:$0xff]
    %v2383 = vld [vmem:[%s2325 + $0x2d8] sm:$0xff]
    %v2384 = vld [vmem:[%s2325 + $0x2e8] sm:$0xff]
    %v2385 = vld [vmem:[%s2325 + $0x2f0] sm:$0xff]
    %v2386 = vld [vmem:[%s2325 + $0x300] sm:$0xff]
    %v2387 = vld [vmem:[%s2325 + $0x308] sm:$0xff]
    %v2388 = vld [vmem:[%s2325 + $0x318] sm:$0xff]
    %v2389 = vld [vmem:[%s2325 + $0x320] sm:$0xff]
    %2454 = vrot.lane.b32.xlu0 %v2326, 24
    %v2455 = vpop.permute.xlu0 %2454
    %2456 = vrot.lane.b32.xlu0 %v2327, 24
    %v2457 = vpop.permute.xlu0 %2456
    %2458 = vrot.lane.b32.xlu0 %v2328, 24
    %v2459 = vpop.permute.xlu0 %2458
    %2460 = vrot.lane.b32.xlu0 %v2329, 24
    %v2461 = vpop.permute.xlu0 %2460
    %2462 = vrot.lane.b32.xlu0 %v2330, 24
    %v2463 = vpop.permute.xlu0 %2462
    %2464 = vrot.lane.b32.xlu0 %v2331, 24
    %v2465 = vpop.permute.xlu0 %2464
    %2466 = vrot.lane.b32.xlu0 %v2332, 24
    %v2467 = vpop.permute.xlu0 %2466
    %2468 = vrot.lane.b32.xlu0 %v2333, 24
    %v2469 = vpop.permute.xlu0 %2468
    %2470 = vrot.lane.b32.xlu0 %v2334, 24
    %v2471 = vpop.permute.xlu0 %2470
    %2472 = vrot.lane.b32.xlu0 %v2335, 24
    %v2473 = vpop.permute.xlu0 %2472
    %2474 = vrot.lane.b32.xlu0 %v2336, 24
    %v2475 = vpop.permute.xlu0 %2474
    %2476 = vrot.lane.b32.xlu0 %v2337, 24
    %v2477 = vpop.permute.xlu0 %2476
    %2478 = vrot.lane.b32.xlu0 %v2338, 24
    %v2479 = vpop.permute.xlu0 %2478
    %2480 = vrot.lane.b32.xlu0 %v2339, 24
    %v2481 = vpop.permute.xlu0 %2480
    %2482 = vrot.lane.b32.xlu0 %v2340, 24
    %v2483 = vpop.permute.xlu0 %2482
    %2484 = vrot.lane.b32.xlu0 %v2341, 24
    %v2485 = vpop.permute.xlu0 %2484
    %2486 = vrot.lane.b32.xlu0 %v2342, 24
    %v2487 = vpop.permute.xlu0 %2486
    %2488 = vrot.lane.b32.xlu0 %v2343, 24
    %v2489 = vpop.permute.xlu0 %2488
    %2490 = vrot.lane.b32.xlu0 %v2344, 24
    %v2491 = vpop.permute.xlu0 %2490
    %2492 = vrot.lane.b32.xlu0 %v2345, 24
    %v2493 = vpop.permute.xlu0 %2492
    %2494 = vrot.lane.b32.xlu0 %v2346, 24
    %v2495 = vpop.permute.xlu0 %2494
    %2496 = vrot.lane.b32.xlu0 %v2347, 24
    %v2497 = vpop.permute.xlu0 %2496
    %2498 = vrot.lane.b32.xlu0 %v2348, 24
    %v2499 = vpop.permute.xlu0 %2498
    %2500 = vrot.lane.b32.xlu0 %v2349, 24
    %v2501 = vpop.permute.xlu0 %2500
    %2502 = vrot.lane.b32.xlu0 %v2350, 24
    %v2503 = vpop.permute.xlu0 %2502
    %2504 = vrot.lane.b32.xlu0 %v2351, 24
    %v2505 = vpop.permute.xlu0 %2504
    %2506 = vrot.lane.b32.xlu0 %v2352, 24
    %v2507 = vpop.permute.xlu0 %2506
    %2508 = vrot.lane.b32.xlu0 %v2353, 24
    %v2509 = vpop.permute.xlu0 %2508
    %2510 = vrot.lane.b32.xlu0 %v2354, 24
    %v2511 = vpop.permute.xlu0 %2510
    %2512 = vrot.lane.b32.xlu0 %v2355, 24
    %v2513 = vpop.permute.xlu0 %2512
    %2514 = vrot.lane.b32.xlu0 %v2356, 24
    %v2515 = vpop.permute.xlu0 %2514
    %2516 = vrot.lane.b32.xlu0 %v2357, 24
    %v2517 = vpop.permute.xlu0 %2516
    %2518 = vrot.lane.b32.xlu0 %v2358, 24
    %v2519 = vpop.permute.xlu0 %2518
    %2520 = vrot.lane.b32.xlu0 %v2359, 24
    %v2521 = vpop.permute.xlu0 %2520
    %2522 = vrot.lane.b32.xlu0 %v2360, 24
    %v2523 = vpop.permute.xlu0 %2522
    %2524 = vrot.lane.b32.xlu0 %v2361, 24
    %v2525 = vpop.permute.xlu0 %2524
    %2526 = vrot.lane.b32.xlu0 %v2362, 24
    %v2527 = vpop.permute.xlu0 %2526
    %2528 = vrot.lane.b32.xlu0 %v2363, 24
    %v2529 = vpop.permute.xlu0 %2528
    %2530 = vrot.lane.b32.xlu0 %v2364, 24
    %v2531 = vpop.permute.xlu0 %2530
    %2532 = vrot.lane.b32.xlu0 %v2365, 24
    %v2533 = vpop.permute.xlu0 %2532
    %2534 = vrot.lane.b32.xlu0 %v2366, 24
    %v2535 = vpop.permute.xlu0 %2534
    %2536 = vrot.lane.b32.xlu0 %v2367, 24
    %v2537 = vpop.permute.xlu0 %2536
    %2538 = vrot.lane.b32.xlu0 %v2368, 24
    %v2539 = vpop.permute.xlu0 %2538
    %2540 = vrot.lane.b32.xlu0 %v2369, 24
    %v2541 = vpop.permute.xlu0 %2540
    %2542 = vrot.lane.b32.xlu0 %v2370, 24
    %v2543 = vpop.permute.xlu0 %2542
    %2544 = vrot.lane.b32.xlu0 %v2371, 24
    %v2545 = vpop.permute.xlu0 %2544
    %2546 = vrot.lane.b32.xlu0 %v2372, 24
    %v2547 = vpop.permute.xlu0 %2546
    %2548 = vrot.lane.b32.xlu0 %v2373, 24
    %v2549 = vpop.permute.xlu0 %2548
    %2550 = vrot.lane.b32.xlu0 %v2374, 24
    %v2551 = vpop.permute.xlu0 %2550
    %2552 = vrot.lane.b32.xlu0 %v2375, 24
    %v2553 = vpop.permute.xlu0 %2552
    %2554 = vrot.lane.b32.xlu0 %v2376, 24
    %v2555 = vpop.permute.xlu0 %2554
    %2556 = vrot.lane.b32.xlu0 %v2377, 24
    %v2557 = vpop.permute.xlu0 %2556
    %2558 = vrot.lane.b32.xlu0 %v2378, 24
    %v2559 = vpop.permute.xlu0 %2558
    %2560 = vrot.lane.b32.xlu0 %v2379, 24
    %v2561 = vpop.permute.xlu0 %2560
    %2562 = vrot.lane.b32.xlu0 %v2380, 24
    %v2563 = vpop.permute.xlu0 %2562
    %2564 = vrot.lane.b32.xlu0 %v2381, 24
    %v2565 = vpop.permute.xlu0 %2564
    %2566 = vrot.lane.b32.xlu0 %v2382, 24
    %v2567 = vpop.permute.xlu0 %2566
    %2568 = vrot.lane.b32.xlu0 %v2383, 24
    %v2569 = vpop.permute.xlu0 %2568
    %2570 = vrot.lane.b32.xlu0 %v2384, 24
    %v2571 = vpop.permute.xlu0 %2570
    %2572 = vrot.lane.b32.xlu0 %v2385, 24
    %v2573 = vpop.permute.xlu0 %2572
    %2574 = vrot.lane.b32.xlu0 %v2386, 24
    %v2575 = vpop.permute.xlu0 %2574
    %2576 = vrot.lane.b32.xlu0 %v2387, 24
    %v2577 = vpop.permute.xlu0 %2576
    %2578 = vrot.lane.b32.xlu0 %v2388, 24
    %v2579 = vpop.permute.xlu0 %2578
    %2580 = vrot.lane.b32.xlu0 %v2389, 24
    %v2581 = vpop.permute.xlu0 %2580
    %vm2646 = vcmask 228544
    %2647 = vst.msk [vmem:[#allocation4] sm:$0xff] %vm2646, %v2455
    %2648 = vst.msk [vmem:[#allocation4 + $0x8] sm:$0xff] %vm2646, %v2457
    %2649 = vst.msk [vmem:[#allocation4 + $0x10] sm:$0xff] %vm2646, %v2459
    %2650 = vst.msk [vmem:[#allocation4 + $0x18] sm:$0xff] %vm2646, %v2461
    %2651 = vst.msk [vmem:[#allocation4 + $0x20] sm:$0xff] %vm2646, %v2463
    %2652 = vst.msk [vmem:[#allocation4 + $0x28] sm:$0xff] %vm2646, %v2465
    %2653 = vst.msk [vmem:[#allocation4 + $0x30] sm:$0xff] %vm2646, %v2467
    %2654 = vst.msk [vmem:[#allocation4 + $0x38] sm:$0xff] %vm2646, %v2469
    %2655 = vst.msk [vmem:[#allocation4 + $0x40] sm:$0xff] %vm2646, %v2471
    %2656 = vst.msk [vmem:[#allocation4 + $0x48] sm:$0xff] %vm2646, %v2473
    %2657 = vst.msk [vmem:[#allocation4 + $0x50] sm:$0xff] %vm2646, %v2475
    %2658 = vst.msk [vmem:[#allocation4 + $0x58] sm:$0xff] %vm2646, %v2477
    %2659 = vst.msk [vmem:[#allocation4 + $0x60] sm:$0xff] %vm2646, %v2479
    %2660 = vst.msk [vmem:[#allocation4 + $0x68] sm:$0xff] %vm2646, %v2481
    %2661 = vst.msk [vmem:[#allocation4 + $0x70] sm:$0xff] %vm2646, %v2483
    %2662 = vst.msk [vmem:[#allocation4 + $0x78] sm:$0xff] %vm2646, %v2485
    %2663 = vst.msk [vmem:[#allocation4 + $0x80] sm:$0xff] %vm2646, %v2487
    %2664 = vst.msk [vmem:[#allocation4 + $0x88] sm:$0xff] %vm2646, %v2489
    %2665 = vst.msk [vmem:[#allocation4 + $0x90] sm:$0xff] %vm2646, %v2491
    %2666 = vst.msk [vmem:[#allocation4 + $0x98] sm:$0xff] %vm2646, %v2493
    %2667 = vst.msk [vmem:[#allocation4 + $0xa0] sm:$0xff] %vm2646, %v2495
    %2668 = vst.msk [vmem:[#allocation4 + $0xa8] sm:$0xff] %vm2646, %v2497
    %2669 = vst.msk [vmem:[#allocation4 + $0xb0] sm:$0xff] %vm2646, %v2499
    %2670 = vst.msk [vmem:[#allocation4 + $0xb8] sm:$0xff] %vm2646, %v2501
    %2671 = vst.msk [vmem:[#allocation4 + $0xc0] sm:$0xff] %vm2646, %v2503
    %2672 = vst.msk [vmem:[#allocation4 + $0xc8] sm:$0xff] %vm2646, %v2505
    %2673 = vst.msk [vmem:[#allocation4 + $0xd0] sm:$0xff] %vm2646, %v2507
    %2674 = vst.msk [vmem:[#allocation4 + $0xd8] sm:$0xff] %vm2646, %v2509
    %2675 = vst.msk [vmem:[#allocation4 + $0xe0] sm:$0xff] %vm2646, %v2511
    %2676 = vst.msk [vmem:[#allocation4 + $0xe8] sm:$0xff] %vm2646, %v2513
    %2677 = vst.msk [vmem:[#allocation4 + $0xf0] sm:$0xff] %vm2646, %v2515
    %2678 = vst.msk [vmem:[#allocation4 + $0xf8] sm:$0xff] %vm2646, %v2517
    %2679 = vst.msk [vmem:[#allocation4 + $0x100] sm:$0xff] %vm2646, %v2519
    %2680 = vst.msk [vmem:[#allocation4 + $0x108] sm:$0xff] %vm2646, %v2521
    %2681 = vst.msk [vmem:[#allocation4 + $0x110] sm:$0xff] %vm2646, %v2523
    %2682 = vst.msk [vmem:[#allocation4 + $0x118] sm:$0xff] %vm2646, %v2525
    %2683 = vst.msk [vmem:[#allocation4 + $0x120] sm:$0xff] %vm2646, %v2527
    %2684 = vst.msk [vmem:[#allocation4 + $0x128] sm:$0xff] %vm2646, %v2529
    %2685 = vst.msk [vmem:[#allocation4 + $0x130] sm:$0xff] %vm2646, %v2531
    %2686 = vst.msk [vmem:[#allocation4 + $0x138] sm:$0xff] %vm2646, %v2533
    %2687 = vst.msk [vmem:[#allocation4 + $0x140] sm:$0xff] %vm2646, %v2535
    %2688 = vst.msk [vmem:[#allocation4 + $0x148] sm:$0xff] %vm2646, %v2537
    %2689 = vst.msk [vmem:[#allocation4 + $0x150] sm:$0xff] %vm2646, %v2539
    %2690 = vst.msk [vmem:[#allocation4 + $0x158] sm:$0xff] %vm2646, %v2541
    %2691 = vst.msk [vmem:[#allocation4 + $0x160] sm:$0xff] %vm2646, %v2543
    %2692 = vst.msk [vmem:[#allocation4 + $0x168] sm:$0xff] %vm2646, %v2545
    %2693 = vst.msk [vmem:[#allocation4 + $0x170] sm:$0xff] %vm2646, %v2547
    %2694 = vst.msk [vmem:[#allocation4 + $0x178] sm:$0xff] %vm2646, %v2549
    %2695 = vst.msk [vmem:[#allocation4 + $0x180] sm:$0xff] %vm2646, %v2551
    %2696 = vst.msk [vmem:[#allocation4 + $0x188] sm:$0xff] %vm2646, %v2553
    %2697 = vst.msk [vmem:[#allocation4 + $0x190] sm:$0xff] %vm2646, %v2555
    %2698 = vst.msk [vmem:[#allocation4 + $0x198] sm:$0xff] %vm2646, %v2557
    %2699 = vst.msk [vmem:[#allocation4 + $0x1a0] sm:$0xff] %vm2646, %v2559
    %2700 = vst.msk [vmem:[#allocation4 + $0x1a8] sm:$0xff] %vm2646, %v2561
    %2701 = vst.msk [vmem:[#allocation4 + $0x1b0] sm:$0xff] %vm2646, %v2563
    %2702 = vst.msk [vmem:[#allocation4 + $0x1b8] sm:$0xff] %vm2646, %v2565
    %2703 = vst.msk [vmem:[#allocation4 + $0x1c0] sm:$0xff] %vm2646, %v2567
    %2704 = vst.msk [vmem:[#allocation4 + $0x1c8] sm:$0xff] %vm2646, %v2569
    %2705 = vst.msk [vmem:[#allocation4 + $0x1d0] sm:$0xff] %vm2646, %v2571
    %2706 = vst.msk [vmem:[#allocation4 + $0x1d8] sm:$0xff] %vm2646, %v2573
    %2707 = vst.msk [vmem:[#allocation4 + $0x1e0] sm:$0xff] %vm2646, %v2575
    %2708 = vst.msk [vmem:[#allocation4 + $0x1e8] sm:$0xff] %vm2646, %v2577
    %2709 = vst.msk [vmem:[#allocation4 + $0x1f0] sm:$0xff] %vm2646, %v2579
    %2710 = vst.msk [vmem:[#allocation4 + $0x1f8] sm:$0xff] %vm2646, %v2581
    %v2711 = vld [vmem:[%s2325 + $0x1] sm:$0xff]
    %v2712 = vld [vmem:[%s2325 + $0x9] sm:$0xff]
    %v2713 = vld [vmem:[%s2325 + $0x19] sm:$0xff]
    %v2714 = vld [vmem:[%s2325 + $0x21] sm:$0xff]
    %v2715 = vld [vmem:[%s2325 + $0x31] sm:$0xff]
    %v2716 = vld [vmem:[%s2325 + $0x39] sm:$0xff]
    %v2717 = vld [vmem:[%s2325 + $0x49] sm:$0xff]
    %v2718 = vld [vmem:[%s2325 + $0x51] sm:$0xff]
    %v2719 = vld [vmem:[%s2325 + $0x61] sm:$0xff]
    %v2720 = vld [vmem:[%s2325 + $0x69] sm:$0xff]
    %v2721 = vld [vmem:[%s2325 + $0x79] sm:$0xff]
    %v2722 = vld [vmem:[%s2325 + $0x81] sm:$0xff]
    %v2723 = vld [vmem:[%s2325 + $0x91] sm:$0xff]
    %v2724 = vld [vmem:[%s2325 + $0x99] sm:$0xff]
    %v2725 = vld [vmem:[%s2325 + $0xa9] sm:$0xff]
    %v2726 = vld [vmem:[%s2325 + $0xb1] sm:$0xff]
    %v2727 = vld [vmem:[%s2325 + $0xc1] sm:$0xff]
    %v2728 = vld [vmem:[%s2325 + $0xc9] sm:$0xff]
    %v2729 = vld [vmem:[%s2325 + $0xd9] sm:$0xff]
    %v2730 = vld [vmem:[%s2325 + $0xe1] sm:$0xff]
    %v2731 = vld [vmem:[%s2325 + $0xf1] sm:$0xff]
    %v2732 = vld [vmem:[%s2325 + $0xf9] sm:$0xff]
    %v2733 = vld [vmem:[%s2325 + $0x109] sm:$0xff]
    %v2734 = vld [vmem:[%s2325 + $0x111] sm:$0xff]
    %v2735 = vld [vmem:[%s2325 + $0x121] sm:$0xff]
    %v2736 = vld [vmem:[%s2325 + $0x129] sm:$0xff]
    %v2737 = vld [vmem:[%s2325 + $0x139] sm:$0xff]
    %v2738 = vld [vmem:[%s2325 + $0x141] sm:$0xff]
    %v2739 = vld [vmem:[%s2325 + $0x151] sm:$0xff]
    %v2740 = vld [vmem:[%s2325 + $0x159] sm:$0xff]
    %v2741 = vld [vmem:[%s2325 + $0x169] sm:$0xff]
    %v2742 = vld [vmem:[%s2325 + $0x171] sm:$0xff]
    %v2743 = vld [vmem:[%s2325 + $0x1b1] sm:$0xff]
    %v2744 = vld [vmem:[%s2325 + $0x1b9] sm:$0xff]
    %v2745 = vld [vmem:[%s2325 + $0x1c9] sm:$0xff]
    %v2746 = vld [vmem:[%s2325 + $0x1d1] sm:$0xff]
    %v2747 = vld [vmem:[%s2325 + $0x1e1] sm:$0xff]
    %v2748 = vld [vmem:[%s2325 + $0x1e9] sm:$0xff]
    %v2749 = vld [vmem:[%s2325 + $0x1f9] sm:$0xff]
    %v2750 = vld [vmem:[%s2325 + $0x201] sm:$0xff]
    %v2751 = vld [vmem:[%s2325 + $0x211] sm:$0xff]
    %v2752 = vld [vmem:[%s2325 + $0x219] sm:$0xff]
    %v2753 = vld [vmem:[%s2325 + $0x229] sm:$0xff]
    %v2754 = vld [vmem:[%s2325 + $0x231] sm:$0xff]
    %v2755 = vld [vmem:[%s2325 + $0x241] sm:$0xff]
    %v2756 = vld [vmem:[%s2325 + $0x249] sm:$0xff]
    %v2757 = vld [vmem:[%s2325 + $0x259] sm:$0xff]
    %v2758 = vld [vmem:[%s2325 + $0x261] sm:$0xff]
    %v2759 = vld [vmem:[%s2325 + $0x271] sm:$0xff]
    %v2760 = vld [vmem:[%s2325 + $0x279] sm:$0xff]
    %v2761 = vld [vmem:[%s2325 + $0x289] sm:$0xff]
    %v2762 = vld [vmem:[%s2325 + $0x291] sm:$0xff]
    %v2763 = vld [vmem:[%s2325 + $0x2a1] sm:$0xff]
    %v2764 = vld [vmem:[%s2325 + $0x2a9] sm:$0xff]
    %v2765 = vld [vmem:[%s2325 + $0x2b9] sm:$0xff]
    %v2766 = vld [vmem:[%s2325 + $0x2c1] sm:$0xff]
    %v2767 = vld [vmem:[%s2325 + $0x2d1] sm:$0xff]
    %v2768 = vld [vmem:[%s2325 + $0x2d9] sm:$0xff]
    %v2769 = vld [vmem:[%s2325 + $0x2e9] sm:$0xff]
    %v2770 = vld [vmem:[%s2325 + $0x2f1] sm:$0xff]
    %v2771 = vld [vmem:[%s2325 + $0x301] sm:$0xff]
    %v2772 = vld [vmem:[%s2325 + $0x309] sm:$0xff]
    %v2773 = vld [vmem:[%s2325 + $0x319] sm:$0xff]
    %v2774 = vld [vmem:[%s2325 + $0x321] sm:$0xff]
    %2839 = vrot.lane.b32.xlu0 %v2711, 28
    %v2840 = vpop.permute.xlu0 %2839
    %2841 = vrot.lane.b32.xlu0 %v2712, 28
    %v2842 = vpop.permute.xlu0 %2841
    %2843 = vrot.lane.b32.xlu0 %v2713, 28
    %v2844 = vpop.permute.xlu0 %2843
    %2845 = vrot.lane.b32.xlu0 %v2714, 28
    %v2846 = vpop.permute.xlu0 %2845
    %2847 = vrot.lane.b32.xlu0 %v2715, 28
    %v2848 = vpop.permute.xlu0 %2847
    %2849 = vrot.lane.b32.xlu0 %v2716, 28
    %v2850 = vpop.permute.xlu0 %2849
    %2851 = vrot.lane.b32.xlu0 %v2717, 28
    %v2852 = vpop.permute.xlu0 %2851
    %2853 = vrot.lane.b32.xlu0 %v2718, 28
    %v2854 = vpop.permute.xlu0 %2853
    %2855 = vrot.lane.b32.xlu0 %v2719, 28
    %v2856 = vpop.permute.xlu0 %2855
    %2857 = vrot.lane.b32.xlu0 %v2720, 28
    %v2858 = vpop.permute.xlu0 %2857
    %2859 = vrot.lane.b32.xlu0 %v2721, 28
    %v2860 = vpop.permute.xlu0 %2859
    %2861 = vrot.lane.b32.xlu0 %v2722, 28
    %v2862 = vpop.permute.xlu0 %2861
    %2863 = vrot.lane.b32.xlu0 %v2723, 28
    %v2864 = vpop.permute.xlu0 %2863
    %2865 = vrot.lane.b32.xlu0 %v2724, 28
    %v2866 = vpop.permute.xlu0 %2865
    %2867 = vrot.lane.b32.xlu0 %v2725, 28
    %v2868 = vpop.permute.xlu0 %2867
    %2869 = vrot.lane.b32.xlu0 %v2726, 28
    %v2870 = vpop.permute.xlu0 %2869
    %2871 = vrot.lane.b32.xlu0 %v2727, 28
    %v2872 = vpop.permute.xlu0 %2871
    %2873 = vrot.lane.b32.xlu0 %v2728, 28
    %v2874 = vpop.permute.xlu0 %2873
    %2875 = vrot.lane.b32.xlu0 %v2729, 28
    %v2876 = vpop.permute.xlu0 %2875
    %2877 = vrot.lane.b32.xlu0 %v2730, 28
    %v2878 = vpop.permute.xlu0 %2877
    %2879 = vrot.lane.b32.xlu0 %v2731, 28
    %v2880 = vpop.permute.xlu0 %2879
    %2881 = vrot.lane.b32.xlu0 %v2732, 28
    %v2882 = vpop.permute.xlu0 %2881
    %2883 = vrot.lane.b32.xlu0 %v2733, 28
    %v2884 = vpop.permute.xlu0 %2883
    %2885 = vrot.lane.b32.xlu0 %v2734, 28
    %v2886 = vpop.permute.xlu0 %2885
    %2887 = vrot.lane.b32.xlu0 %v2735, 28
    %v2888 = vpop.permute.xlu0 %2887
    %2889 = vrot.lane.b32.xlu0 %v2736, 28
    %v2890 = vpop.permute.xlu0 %2889
    %2891 = vrot.lane.b32.xlu0 %v2737, 28
    %v2892 = vpop.permute.xlu0 %2891
    %2893 = vrot.lane.b32.xlu0 %v2738, 28
    %v2894 = vpop.permute.xlu0 %2893
    %2895 = vrot.lane.b32.xlu0 %v2739, 28
    %v2896 = vpop.permute.xlu0 %2895
    %2897 = vrot.lane.b32.xlu0 %v2740, 28
    %v2898 = vpop.permute.xlu0 %2897
    %2899 = vrot.lane.b32.xlu0 %v2741, 28
    %v2900 = vpop.permute.xlu0 %2899
    %2901 = vrot.lane.b32.xlu0 %v2742, 28
    %v2902 = vpop.permute.xlu0 %2901
    %2903 = vrot.lane.b32.xlu0 %v2743, 28
    %v2904 = vpop.permute.xlu0 %2903
    %2905 = vrot.lane.b32.xlu0 %v2744, 28
    %v2906 = vpop.permute.xlu0 %2905
    %2907 = vrot.lane.b32.xlu0 %v2745, 28
    %v2908 = vpop.permute.xlu0 %2907
    %2909 = vrot.lane.b32.xlu0 %v2746, 28
    %v2910 = vpop.permute.xlu0 %2909
    %2911 = vrot.lane.b32.xlu0 %v2747, 28
    %v2912 = vpop.permute.xlu0 %2911
    %2913 = vrot.lane.b32.xlu0 %v2748, 28
    %v2914 = vpop.permute.xlu0 %2913
    %2915 = vrot.lane.b32.xlu0 %v2749, 28
    %v2916 = vpop.permute.xlu0 %2915
    %2917 = vrot.lane.b32.xlu0 %v2750, 28
    %v2918 = vpop.permute.xlu0 %2917
    %2919 = vrot.lane.b32.xlu0 %v2751, 28
    %v2920 = vpop.permute.xlu0 %2919
    %2921 = vrot.lane.b32.xlu0 %v2752, 28
    %v2922 = vpop.permute.xlu0 %2921
    %2923 = vrot.lane.b32.xlu0 %v2753, 28
    %v2924 = vpop.permute.xlu0 %2923
    %2925 = vrot.lane.b32.xlu0 %v2754, 28
    %v2926 = vpop.permute.xlu0 %2925
    %2927 = vrot.lane.b32.xlu0 %v2755, 28
    %v2928 = vpop.permute.xlu0 %2927
    %2929 = vrot.lane.b32.xlu0 %v2756, 28
    %v2930 = vpop.permute.xlu0 %2929
    %2931 = vrot.lane.b32.xlu0 %v2757, 28
    %v2932 = vpop.permute.xlu0 %2931
    %2933 = vrot.lane.b32.xlu0 %v2758, 28
    %v2934 = vpop.permute.xlu0 %2933
    %2935 = vrot.lane.b32.xlu0 %v2759, 28
    %v2936 = vpop.permute.xlu0 %2935
    %2937 = vrot.lane.b32.xlu0 %v2760, 28
    %v2938 = vpop.permute.xlu0 %2937
    %2939 = vrot.lane.b32.xlu0 %v2761, 28
    %v2940 = vpop.permute.xlu0 %2939
    %2941 = vrot.lane.b32.xlu0 %v2762, 28
    %v2942 = vpop.permute.xlu0 %2941
    %2943 = vrot.lane.b32.xlu0 %v2763, 28
    %v2944 = vpop.permute.xlu0 %2943
    %2945 = vrot.lane.b32.xlu0 %v2764, 28
    %v2946 = vpop.permute.xlu0 %2945
    %2947 = vrot.lane.b32.xlu0 %v2765, 28
    %v2948 = vpop.permute.xlu0 %2947
    %2949 = vrot.lane.b32.xlu0 %v2766, 28
    %v2950 = vpop.permute.xlu0 %2949
    %2951 = vrot.lane.b32.xlu0 %v2767, 28
    %v2952 = vpop.permute.xlu0 %2951
    %2953 = vrot.lane.b32.xlu0 %v2768, 28
    %v2954 = vpop.permute.xlu0 %2953
    %2955 = vrot.lane.b32.xlu0 %v2769, 28
    %v2956 = vpop.permute.xlu0 %2955
    %2957 = vrot.lane.b32.xlu0 %v2770, 28
    %v2958 = vpop.permute.xlu0 %2957
    %2959 = vrot.lane.b32.xlu0 %v2771, 28
    %v2960 = vpop.permute.xlu0 %2959
    %2961 = vrot.lane.b32.xlu0 %v2772, 28
    %v2962 = vpop.permute.xlu0 %2961
    %2963 = vrot.lane.b32.xlu0 %v2773, 28
    %v2964 = vpop.permute.xlu0 %2963
    %2965 = vrot.lane.b32.xlu0 %v2774, 28
    %v2966 = vpop.permute.xlu0 %2965
    %vm3031 = vcmask 261344
    %3032 = vst.msk [vmem:[#allocation4] sm:$0xff] %vm3031, %v2840
    %3033 = vst.msk [vmem:[#allocation4 + $0x8] sm:$0xff] %vm3031, %v2842
    %3034 = vst.msk [vmem:[#allocation4 + $0x10] sm:$0xff] %vm3031, %v2844
    %3035 = vst.msk [vmem:[#allocation4 + $0x18] sm:$0xff] %vm3031, %v2846
    %3036 = vst.msk [vmem:[#allocation4 + $0x20] sm:$0xff] %vm3031, %v2848
    %3037 = vst.msk [vmem:[#allocation4 + $0x28] sm:$0xff] %vm3031, %v2850
    %3038 = vst.msk [vmem:[#allocation4 + $0x30] sm:$0xff] %vm3031, %v2852
    %3039 = vst.msk [vmem:[#allocation4 + $0x38] sm:$0xff] %vm3031, %v2854
    %3040 = vst.msk [vmem:[#allocation4 + $0x40] sm:$0xff] %vm3031, %v2856
    %3041 = vst.msk [vmem:[#allocation4 + $0x48] sm:$0xff] %vm3031, %v2858
    %3042 = vst.msk [vmem:[#allocation4 + $0x50] sm:$0xff] %vm3031, %v2860
    %3043 = vst.msk [vmem:[#allocation4 + $0x58] sm:$0xff] %vm3031, %v2862
    %3044 = vst.msk [vmem:[#allocation4 + $0x60] sm:$0xff] %vm3031, %v2864
    %3045 = vst.msk [vmem:[#allocation4 + $0x68] sm:$0xff] %vm3031, %v2866
    %3046 = vst.msk [vmem:[#allocation4 + $0x70] sm:$0xff] %vm3031, %v2868
    %3047 = vst.msk [vmem:[#allocation4 + $0x78] sm:$0xff] %vm3031, %v2870
    %3048 = vst.msk [vmem:[#allocation4 + $0x80] sm:$0xff] %vm3031, %v2872
    %3049 = vst.msk [vmem:[#allocation4 + $0x88] sm:$0xff] %vm3031, %v2874
    %3050 = vst.msk [vmem:[#allocation4 + $0x90] sm:$0xff] %vm3031, %v2876
    %3051 = vst.msk [vmem:[#allocation4 + $0x98] sm:$0xff] %vm3031, %v2878
    %3052 = vst.msk [vmem:[#allocation4 + $0xa0] sm:$0xff] %vm3031, %v2880
    %3053 = vst.msk [vmem:[#allocation4 + $0xa8] sm:$0xff] %vm3031, %v2882
    %3054 = vst.msk [vmem:[#allocation4 + $0xb0] sm:$0xff] %vm3031, %v2884
    %3055 = vst.msk [vmem:[#allocation4 + $0xb8] sm:$0xff] %vm3031, %v2886
    %3056 = vst.msk [vmem:[#allocation4 + $0xc0] sm:$0xff] %vm3031, %v2888
    %3057 = vst.msk [vmem:[#allocation4 + $0xc8] sm:$0xff] %vm3031, %v2890
    %3058 = vst.msk [vmem:[#allocation4 + $0xd0] sm:$0xff] %vm3031, %v2892
    %3059 = vst.msk [vmem:[#allocation4 + $0xd8] sm:$0xff] %vm3031, %v2894
    %3060 = vst.msk [vmem:[#allocation4 + $0xe0] sm:$0xff] %vm3031, %v2896
    %3061 = vst.msk [vmem:[#allocation4 + $0xe8] sm:$0xff] %vm3031, %v2898
    %3062 = vst.msk [vmem:[#allocation4 + $0xf0] sm:$0xff] %vm3031, %v2900
    %3063 = vst.msk [vmem:[#allocation4 + $0xf8] sm:$0xff] %vm3031, %v2902
    %3064 = vst.msk [vmem:[#allocation4 + $0x100] sm:$0xff] %vm3031, %v2904
    %3065 = vst.msk [vmem:[#allocation4 + $0x108] sm:$0xff] %vm3031, %v2906
    %3066 = vst.msk [vmem:[#allocation4 + $0x110] sm:$0xff] %vm3031, %v2908
    %3067 = vst.msk [vmem:[#allocation4 + $0x118] sm:$0xff] %vm3031, %v2910
    %3068 = vst.msk [vmem:[#allocation4 + $0x120] sm:$0xff] %vm3031, %v2912
    %3069 = vst.msk [vmem:[#allocation4 + $0x128] sm:$0xff] %vm3031, %v2914
    %3070 = vst.msk [vmem:[#allocation4 + $0x130] sm:$0xff] %vm3031, %v2916
    %3071 = vst.msk [vmem:[#allocation4 + $0x138] sm:$0xff] %vm3031, %v2918
    %3072 = vst.msk [vmem:[#allocation4 + $0x140] sm:$0xff] %vm3031, %v2920
    %3073 = vst.msk [vmem:[#allocation4 + $0x148] sm:$0xff] %vm3031, %v2922
    %3074 = vst.msk [vmem:[#allocation4 + $0x150] sm:$0xff] %vm3031, %v2924
    %3075 = vst.msk [vmem:[#allocation4 + $0x158] sm:$0xff] %vm3031, %v2926
    %3076 = vst.msk [vmem:[#allocation4 + $0x160] sm:$0xff] %vm3031, %v2928
    %3077 = vst.msk [vmem:[#allocation4 + $0x168] sm:$0xff] %vm3031, %v2930
    %3078 = vst.msk [vmem:[#allocation4 + $0x170] sm:$0xff] %vm3031, %v2932
    %3079 = vst.msk [vmem:[#allocation4 + $0x178] sm:$0xff] %vm3031, %v2934
    %3080 = vst.msk [vmem:[#allocation4 + $0x180] sm:$0xff] %vm3031, %v2936
    %3081 = vst.msk [vmem:[#allocation4 + $0x188] sm:$0xff] %vm3031, %v2938
    %3082 = vst.msk [vmem:[#allocation4 + $0x190] sm:$0xff] %vm3031, %v2940
    %3083 = vst.msk [vmem:[#allocation4 + $0x198] sm:$0xff] %vm3031, %v2942
    %3084 = vst.msk [vmem:[#allocation4 + $0x1a0] sm:$0xff] %vm3031, %v2944
    %3085 = vst.msk [vmem:[#allocation4 + $0x1a8] sm:$0xff] %vm3031, %v2946
    %3086 = vst.msk [vmem:[#allocation4 + $0x1b0] sm:$0xff] %vm3031, %v2948
    %3087 = vst.msk [vmem:[#allocation4 + $0x1b8] sm:$0xff] %vm3031, %v2950
    %3088 = vst.msk [vmem:[#allocation4 + $0x1c0] sm:$0xff] %vm3031, %v2952
    %3089 = vst.msk [vmem:[#allocation4 + $0x1c8] sm:$0xff] %vm3031, %v2954
    %3090 = vst.msk [vmem:[#allocation4 + $0x1d0] sm:$0xff] %vm3031, %v2956
    %3091 = vst.msk [vmem:[#allocation4 + $0x1d8] sm:$0xff] %vm3031, %v2958
    %3092 = vst.msk [vmem:[#allocation4 + $0x1e0] sm:$0xff] %vm3031, %v2960
    %3093 = vst.msk [vmem:[#allocation4 + $0x1e8] sm:$0xff] %vm3031, %v2962
    %3094 = vst.msk [vmem:[#allocation4 + $0x1f0] sm:$0xff] %vm3031, %v2964
    %3095 = vst.msk [vmem:[#allocation4 + $0x1f8] sm:$0xff] %vm3031, %v2966
    %v3096 = vld [vmem:[%s2325 + $0x2] sm:$0xff]
    %v3097 = vld [vmem:[%s2325 + $0xa] sm:$0xff]
    %v3098 = vld [vmem:[%s2325 + $0x1a] sm:$0xff]
    %v3099 = vld [vmem:[%s2325 + $0x22] sm:$0xff]
    %v3100 = vld [vmem:[%s2325 + $0x32] sm:$0xff]
    %v3101 = vld [vmem:[%s2325 + $0x3a] sm:$0xff]
    %v3102 = vld [vmem:[%s2325 + $0x4a] sm:$0xff]
    %v3103 = vld [vmem:[%s2325 + $0x52] sm:$0xff]
    %v3104 = vld [vmem:[%s2325 + $0x62] sm:$0xff]
    %v3105 = vld [vmem:[%s2325 + $0x6a] sm:$0xff]
    %v3106 = vld [vmem:[%s2325 + $0x7a] sm:$0xff]
    %v3107 = vld [vmem:[%s2325 + $0x82] sm:$0xff]
    %v3108 = vld [vmem:[%s2325 + $0x92] sm:$0xff]
    %v3109 = vld [vmem:[%s2325 + $0x9a] sm:$0xff]
    %v3110 = vld [vmem:[%s2325 + $0xaa] sm:$0xff]
    %v3111 = vld [vmem:[%s2325 + $0xb2] sm:$0xff]
    %v3112 = vld [vmem:[%s2325 + $0xc2] sm:$0xff]
    %v3113 = vld [vmem:[%s2325 + $0xca] sm:$0xff]
    %v3114 = vld [vmem:[%s2325 + $0xda] sm:$0xff]
    %v3115 = vld [vmem:[%s2325 + $0xe2] sm:$0xff]
    %v3116 = vld [vmem:[%s2325 + $0xf2] sm:$0xff]
    %v3117 = vld [vmem:[%s2325 + $0xfa] sm:$0xff]
    %v3118 = vld [vmem:[%s2325 + $0x10a] sm:$0xff]
    %v3119 = vld [vmem:[%s2325 + $0x112] sm:$0xff]
    %v3120 = vld [vmem:[%s2325 + $0x122] sm:$0xff]
    %v3121 = vld [vmem:[%s2325 + $0x12a] sm:$0xff]
    %v3122 = vld [vmem:[%s2325 + $0x13a] sm:$0xff]
    %v3123 = vld [vmem:[%s2325 + $0x142] sm:$0xff]
    %v3124 = vld [vmem:[%s2325 + $0x152] sm:$0xff]
    %v3125 = vld [vmem:[%s2325 + $0x15a] sm:$0xff]
    %v3126 = vld [vmem:[%s2325 + $0x16a] sm:$0xff]
    %v3127 = vld [vmem:[%s2325 + $0x172] sm:$0xff]
    %v3128 = vld [vmem:[%s2325 + $0x1b2] sm:$0xff]
    %v3129 = vld [vmem:[%s2325 + $0x1ba] sm:$0xff]
    %v3130 = vld [vmem:[%s2325 + $0x1ca] sm:$0xff]
    %v3131 = vld [vmem:[%s2325 + $0x1d2] sm:$0xff]
    %v3132 = vld [vmem:[%s2325 + $0x1e2] sm:$0xff]
    %v3133 = vld [vmem:[%s2325 + $0x1ea] sm:$0xff]
    %v3134 = vld [vmem:[%s2325 + $0x1fa] sm:$0xff]
    %v3135 = vld [vmem:[%s2325 + $0x202] sm:$0xff]
    %v3136 = vld [vmem:[%s2325 + $0x212] sm:$0xff]
    %v3137 = vld [vmem:[%s2325 + $0x21a] sm:$0xff]
    %v3138 = vld [vmem:[%s2325 + $0x22a] sm:$0xff]
    %v3139 = vld [vmem:[%s2325 + $0x232] sm:$0xff]
    %v3140 = vld [vmem:[%s2325 + $0x242] sm:$0xff]
    %v3141 = vld [vmem:[%s2325 + $0x24a] sm:$0xff]
    %v3142 = vld [vmem:[%s2325 + $0x25a] sm:$0xff]
    %v3143 = vld [vmem:[%s2325 + $0x262] sm:$0xff]
    %v3144 = vld [vmem:[%s2325 + $0x272] sm:$0xff]
    %v3145 = vld [vmem:[%s2325 + $0x27a] sm:$0xff]
    %v3146 = vld [vmem:[%s2325 + $0x28a] sm:$0xff]
    %v3147 = vld [vmem:[%s2325 + $0x292] sm:$0xff]
    %v3148 = vld [vmem:[%s2325 + $0x2a2] sm:$0xff]
    %v3149 = vld [vmem:[%s2325 + $0x2aa] sm:$0xff]
    %v3150 = vld [vmem:[%s2325 + $0x2ba] sm:$0xff]
    %v3151 = vld [vmem:[%s2325 + $0x2c2] sm:$0xff]
    %v3152 = vld [vmem:[%s2325 + $0x2d2] sm:$0xff]
    %v3153 = vld [vmem:[%s2325 + $0x2da] sm:$0xff]
    %v3154 = vld [vmem:[%s2325 + $0x2ea] sm:$0xff]
    %v3155 = vld [vmem:[%s2325 + $0x2f2] sm:$0xff]
    %v3156 = vld [vmem:[%s2325 + $0x302] sm:$0xff]
    %v3157 = vld [vmem:[%s2325 + $0x30a] sm:$0xff]
    %v3158 = vld [vmem:[%s2325 + $0x31a] sm:$0xff]
    %v3159 = vld [vmem:[%s2325 + $0x322] sm:$0xff]
    %3224 = vrot.lane.b32.xlu0 %v3096, 32
    %v3225 = vpop.permute.xlu0 %3224
    %3226 = vrot.lane.b32.xlu0 %v3097, 32
    %v3227 = vpop.permute.xlu0 %3226
    %3228 = vrot.lane.b32.xlu0 %v3098, 32
    %v3229 = vpop.permute.xlu0 %3228
    %3230 = vrot.lane.b32.xlu0 %v3099, 32
    %v3231 = vpop.permute.xlu0 %3230
    %3232 = vrot.lane.b32.xlu0 %v3100, 32
    %v3233 = vpop.permute.xlu0 %3232
    %3234 = vrot.lane.b32.xlu0 %v3101, 32
    %v3235 = vpop.permute.xlu0 %3234
    %3236 = vrot.lane.b32.xlu0 %v3102, 32
    %v3237 = vpop.permute.xlu0 %3236
    %3238 = vrot.lane.b32.xlu0 %v3103, 32
    %v3239 = vpop.permute.xlu0 %3238
    %3240 = vrot.lane.b32.xlu0 %v3104, 32
    %v3241 = vpop.permute.xlu0 %3240
    %3242 = vrot.lane.b32.xlu0 %v3105, 32
    %v3243 = vpop.permute.xlu0 %3242
    %3244 = vrot.lane.b32.xlu0 %v3106, 32
    %v3245 = vpop.permute.xlu0 %3244
    %3246 = vrot.lane.b32.xlu0 %v3107, 32
    %v3247 = vpop.permute.xlu0 %3246
    %3248 = vrot.lane.b32.xlu0 %v3108, 32
    %v3249 = vpop.permute.xlu0 %3248
    %3250 = vrot.lane.b32.xlu0 %v3109, 32
    %v3251 = vpop.permute.xlu0 %3250
    %3252 = vrot.lane.b32.xlu0 %v3110, 32
    %v3253 = vpop.permute.xlu0 %3252
    %3254 = vrot.lane.b32.xlu0 %v3111, 32
    %v3255 = vpop.permute.xlu0 %3254
    %3256 = vrot.lane.b32.xlu0 %v3112, 32
    %v3257 = vpop.permute.xlu0 %3256
    %3258 = vrot.lane.b32.xlu0 %v3113, 32
    %v3259 = vpop.permute.xlu0 %3258
    %3260 = vrot.lane.b32.xlu0 %v3114, 32
    %v3261 = vpop.permute.xlu0 %3260
    %3262 = vrot.lane.b32.xlu0 %v3115, 32
    %v3263 = vpop.permute.xlu0 %3262
    %3264 = vrot.lane.b32.xlu0 %v3116, 32
    %v3265 = vpop.permute.xlu0 %3264
    %3266 = vrot.lane.b32.xlu0 %v3117, 32
    %v3267 = vpop.permute.xlu0 %3266
    %3268 = vrot.lane.b32.xlu0 %v3118, 32
    %v3269 = vpop.permute.xlu0 %3268
    %3270 = vrot.lane.b32.xlu0 %v3119, 32
    %v3271 = vpop.permute.xlu0 %3270
    %3272 = vrot.lane.b32.xlu0 %v3120, 32
    %v3273 = vpop.permute.xlu0 %3272
    %3274 = vrot.lane.b32.xlu0 %v3121, 32
    %v3275 = vpop.permute.xlu0 %3274
    %3276 = vrot.lane.b32.xlu0 %v3122, 32
    %v3277 = vpop.permute.xlu0 %3276
    %3278 = vrot.lane.b32.xlu0 %v3123, 32
    %v3279 = vpop.permute.xlu0 %3278
    %3280 = vrot.lane.b32.xlu0 %v3124, 32
    %v3281 = vpop.permute.xlu0 %3280
    %3282 = vrot.lane.b32.xlu0 %v3125, 32
    %v3283 = vpop.permute.xlu0 %3282
    %3284 = vrot.lane.b32.xlu0 %v3126, 32
    %v3285 = vpop.permute.xlu0 %3284
    %3286 = vrot.lane.b32.xlu0 %v3127, 32
    %v3287 = vpop.permute.xlu0 %3286
    %3288 = vrot.lane.b32.xlu0 %v3128, 32
    %v3289 = vpop.permute.xlu0 %3288
    %3290 = vrot.lane.b32.xlu0 %v3129, 32
    %v3291 = vpop.permute.xlu0 %3290
    %3292 = vrot.lane.b32.xlu0 %v3130, 32
    %v3293 = vpop.permute.xlu0 %3292
    %3294 = vrot.lane.b32.xlu0 %v3131, 32
    %v3295 = vpop.permute.xlu0 %3294
    %3296 = vrot.lane.b32.xlu0 %v3132, 32
    %v3297 = vpop.permute.xlu0 %3296
    %3298 = vrot.lane.b32.xlu0 %v3133, 32
    %v3299 = vpop.permute.xlu0 %3298
    %3300 = vrot.lane.b32.xlu0 %v3134, 32
    %v3301 = vpop.permute.xlu0 %3300
    %3302 = vrot.lane.b32.xlu0 %v3135, 32
    %v3303 = vpop.permute.xlu0 %3302
    %3304 = vrot.lane.b32.xlu0 %v3136, 32
    %v3305 = vpop.permute.xlu0 %3304
    %3306 = vrot.lane.b32.xlu0 %v3137, 32
    %v3307 = vpop.permute.xlu0 %3306
    %3308 = vrot.lane.b32.xlu0 %v3138, 32
    %v3309 = vpop.permute.xlu0 %3308
    %3310 = vrot.lane.b32.xlu0 %v3139, 32
    %v3311 = vpop.permute.xlu0 %3310
    %3312 = vrot.lane.b32.xlu0 %v3140, 32
    %v3313 = vpop.permute.xlu0 %3312
    %3314 = vrot.lane.b32.xlu0 %v3141, 32
    %v3315 = vpop.permute.xlu0 %3314
    %3316 = vrot.lane.b32.xlu0 %v3142, 32
    %v3317 = vpop.permute.xlu0 %3316
    %3318 = vrot.lane.b32.xlu0 %v3143, 32
    %v3319 = vpop.permute.xlu0 %3318
    %3320 = vrot.lane.b32.xlu0 %v3144, 32
    %v3321 = vpop.permute.xlu0 %3320
    %3322 = vrot.lane.b32.xlu0 %v3145, 32
    %v3323 = vpop.permute.xlu0 %3322
    %3324 = vrot.lane.b32.xlu0 %v3146, 32
    %v3325 = vpop.permute.xlu0 %3324
    %3326 = vrot.lane.b32.xlu0 %v3147, 32
    %v3327 = vpop.permute.xlu0 %3326
    %3328 = vrot.lane.b32.xlu0 %v3148, 32
    %v3329 = vpop.permute.xlu0 %3328
    %3330 = vrot.lane.b32.xlu0 %v3149, 32
    %v3331 = vpop.permute.xlu0 %3330
    %3332 = vrot.lane.b32.xlu0 %v3150, 32
    %v3333 = vpop.permute.xlu0 %3332
    %3334 = vrot.lane.b32.xlu0 %v3151, 32
    %v3335 = vpop.permute.xlu0 %3334
    %3336 = vrot.lane.b32.xlu0 %v3152, 32
    %v3337 = vpop.permute.xlu0 %3336
    %3338 = vrot.lane.b32.xlu0 %v3153, 32
    %v3339 = vpop.permute.xlu0 %3338
    %3340 = vrot.lane.b32.xlu0 %v3154, 32
    %v3341 = vpop.permute.xlu0 %3340
    %3342 = vrot.lane.b32.xlu0 %v3155, 32
    %v3343 = vpop.permute.xlu0 %3342
    %3344 = vrot.lane.b32.xlu0 %v3156, 32
    %v3345 = vpop.permute.xlu0 %3344
    %3346 = vrot.lane.b32.xlu0 %v3157, 32
    %v3347 = vpop.permute.xlu0 %3346
    %3348 = vrot.lane.b32.xlu0 %v3158, 32
    %v3349 = vpop.permute.xlu0 %3348
    %3350 = vrot.lane.b32.xlu0 %v3159, 32
    %v3351 = vpop.permute.xlu0 %3350
    %vm3416 = vcmask 294144
    %3417 = vst.msk [vmem:[#allocation4] sm:$0xff] %vm3416, %v3225
    %3418 = vst.msk [vmem:[#allocation4 + $0x8] sm:$0xff] %vm3416, %v3227
    %3419 = vst.msk [vmem:[#allocation4 + $0x10] sm:$0xff] %vm3416, %v3229
    %3420 = vst.msk [vmem:[#allocation4 + $0x18] sm:$0xff] %vm3416, %v3231
    %3421 = vst.msk [vmem:[#allocation4 + $0x20] sm:$0xff] %vm3416, %v3233
    %3422 = vst.msk [vmem:[#allocation4 + $0x28] sm:$0xff] %vm3416, %v3235
    %3423 = vst.msk [vmem:[#allocation4 + $0x30] sm:$0xff] %vm3416, %v3237
    %3424 = vst.msk [vmem:[#allocation4 + $0x38] sm:$0xff] %vm3416, %v3239
    %3425 = vst.msk [vmem:[#allocation4 + $0x40] sm:$0xff] %vm3416, %v3241
    %3426 = vst.msk [vmem:[#allocation4 + $0x48] sm:$0xff] %vm3416, %v3243
    %3427 = vst.msk [vmem:[#allocation4 + $0x50] sm:$0xff] %vm3416, %v3245
    %3428 = vst.msk [vmem:[#allocation4 + $0x58] sm:$0xff] %vm3416, %v3247
    %3429 = vst.msk [vmem:[#allocation4 + $0x60] sm:$0xff] %vm3416, %v3249
    %3430 = vst.msk [vmem:[#allocation4 + $0x68] sm:$0xff] %vm3416, %v3251
    %3431 = vst.msk [vmem:[#allocation4 + $0x70] sm:$0xff] %vm3416, %v3253
    %3432 = vst.msk [vmem:[#allocation4 + $0x78] sm:$0xff] %vm3416, %v3255
    %3433 = vst.msk [vmem:[#allocation4 + $0x80] sm:$0xff] %vm3416, %v3257
    %3434 = vst.msk [vmem:[#allocation4 + $0x88] sm:$0xff] %vm3416, %v3259
    %3435 = vst.msk [vmem:[#allocation4 + $0x90] sm:$0xff] %vm3416, %v3261
    %3436 = vst.msk [vmem:[#allocation4 + $0x98] sm:$0xff] %vm3416, %v3263
    %3437 = vst.msk [vmem:[#allocation4 + $0xa0] sm:$0xff] %vm3416, %v3265
    %3438 = vst.msk [vmem:[#allocation4 + $0xa8] sm:$0xff] %vm3416, %v3267
    %3439 = vst.msk [vmem:[#allocation4 + $0xb0] sm:$0xff] %vm3416, %v3269
    %3440 = vst.msk [vmem:[#allocation4 + $0xb8] sm:$0xff] %vm3416, %v3271
    %3441 = vst.msk [vmem:[#allocation4 + $0xc0] sm:$0xff] %vm3416, %v3273
    %3442 = vst.msk [vmem:[#allocation4 + $0xc8] sm:$0xff] %vm3416, %v3275
    %3443 = vst.msk [vmem:[#allocation4 + $0xd0] sm:$0xff] %vm3416, %v3277
    %3444 = vst.msk [vmem:[#allocation4 + $0xd8] sm:$0xff] %vm3416, %v3279
    %3445 = vst.msk [vmem:[#allocation4 + $0xe0] sm:$0xff] %vm3416, %v3281
    %3446 = vst.msk [vmem:[#allocation4 + $0xe8] sm:$0xff] %vm3416, %v3283
    %3447 = vst.msk [vmem:[#allocation4 + $0xf0] sm:$0xff] %vm3416, %v3285
    %3448 = vst.msk [vmem:[#allocation4 + $0xf8] sm:$0xff] %vm3416, %v3287
    %3449 = vst.msk [vmem:[#allocation4 + $0x100] sm:$0xff] %vm3416, %v3289
    %3450 = vst.msk [vmem:[#allocation4 + $0x108] sm:$0xff] %vm3416, %v3291
    %3451 = vst.msk [vmem:[#allocation4 + $0x110] sm:$0xff] %vm3416, %v3293
    %3452 = vst.msk [vmem:[#allocation4 + $0x118] sm:$0xff] %vm3416, %v3295
    %3453 = vst.msk [vmem:[#allocation4 + $0x120] sm:$0xff] %vm3416, %v3297
    %3454 = vst.msk [vmem:[#allocation4 + $0x128] sm:$0xff] %vm3416, %v3299
    %3455 = vst.msk [vmem:[#allocation4 + $0x130] sm:$0xff] %vm3416, %v3301
    %3456 = vst.msk [vmem:[#allocation4 + $0x138] sm:$0xff] %vm3416, %v3303
    %3457 = vst.msk [vmem:[#allocation4 + $0x140] sm:$0xff] %vm3416, %v3305
    %3458 = vst.msk [vmem:[#allocation4 + $0x148] sm:$0xff] %vm3416, %v3307
    %3459 = vst.msk [vmem:[#allocation4 + $0x150] sm:$0xff] %vm3416, %v3309
    %3460 = vst.msk [vmem:[#allocation4 + $0x158] sm:$0xff] %vm3416, %v3311
    %3461 = vst.msk [vmem:[#allocation4 + $0x160] sm:$0xff] %vm3416, %v3313
    %3462 = vst.msk [vmem:[#allocation4 + $0x168] sm:$0xff] %vm3416, %v3315
    %3463 = vst.msk [vmem:[#allocation4 + $0x170] sm:$0xff] %vm3416, %v3317
    %3464 = vst.msk [vmem:[#allocation4 + $0x178] sm:$0xff] %vm3416, %v3319
    %3465 = vst.msk [vmem:[#allocation4 + $0x180] sm:$0xff] %vm3416, %v3321
    %3466 = vst.msk [vmem:[#allocation4 + $0x188] sm:$0xff] %vm3416, %v3323
    %3467 = vst.msk [vmem:[#allocation4 + $0x190] sm:$0xff] %vm3416, %v3325
    %3468 = vst.msk [vmem:[#allocation4 + $0x198] sm:$0xff] %vm3416, %v3327
    %3469 = vst.msk [vmem:[#allocation4 + $0x1a0] sm:$0xff] %vm3416, %v3329
    %3470 = vst.msk [vmem:[#allocation4 + $0x1a8] sm:$0xff] %vm3416, %v3331
    %3471 = vst.msk [vmem:[#allocation4 + $0x1b0] sm:$0xff] %vm3416, %v3333
    %3472 = vst.msk [vmem:[#allocation4 + $0x1b8] sm:$0xff] %vm3416, %v3335
    %3473 = vst.msk [vmem:[#allocation4 + $0x1c0] sm:$0xff] %vm3416, %v3337
    %3474 = vst.msk [vmem:[#allocation4 + $0x1c8] sm:$0xff] %vm3416, %v3339
    %3475 = vst.msk [vmem:[#allocation4 + $0x1d0] sm:$0xff] %vm3416, %v3341
    %3476 = vst.msk [vmem:[#allocation4 + $0x1d8] sm:$0xff] %vm3416, %v3343
    %3477 = vst.msk [vmem:[#allocation4 + $0x1e0] sm:$0xff] %vm3416, %v3345
    %3478 = vst.msk [vmem:[#allocation4 + $0x1e8] sm:$0xff] %vm3416, %v3347
    %3479 = vst.msk [vmem:[#allocation4 + $0x1f0] sm:$0xff] %vm3416, %v3349
    %3480 = vst.msk [vmem:[#allocation4 + $0x1f8] sm:$0xff] %vm3416, %v3351
    %v3481 = vld [vmem:[#allocation4] sm:$0xff]
    %v3482 = vld [vmem:[#allocation4 + $0x8] sm:$0xff]
    %v3483 = vld [vmem:[#allocation4 + $0x10] sm:$0xff]
    %v3484 = vld [vmem:[#allocation4 + $0x18] sm:$0xff]
    %v3485 = vld [vmem:[#allocation4 + $0x20] sm:$0xff]
    %v3486 = vld [vmem:[#allocation4 + $0x28] sm:$0xff]
    %v3487 = vld [vmem:[#allocation4 + $0x30] sm:$0xff]
    %v3488 = vld [vmem:[#allocation4 + $0x38] sm:$0xff]
    %v3489 = vld [vmem:[#allocation4 + $0x40] sm:$0xff]
    %v3490 = vld [vmem:[#allocation4 + $0x48] sm:$0xff]
    %v3491 = vld [vmem:[#allocation4 + $0x50] sm:$0xff]
    %v3492 = vld [vmem:[#allocation4 + $0x58] sm:$0xff]
    %v3493 = vld [vmem:[#allocation4 + $0x60] sm:$0xff]
    %v3494 = vld [vmem:[#allocation4 + $0x68] sm:$0xff]
    %v3495 = vld [vmem:[#allocation4 + $0x70] sm:$0xff]
    %v3496 = vld [vmem:[#allocation4 + $0x78] sm:$0xff]
    %v3497 = vld [vmem:[#allocation4 + $0x80] sm:$0xff]
    %v3498 = vld [vmem:[#allocation4 + $0x88] sm:$0xff]
    %v3499 = vld [vmem:[#allocation4 + $0x90] sm:$0xff]
    %v3500 = vld [vmem:[#allocation4 + $0x98] sm:$0xff]
    %v3501 = vld [vmem:[#allocation4 + $0xa0] sm:$0xff]
    %v3502 = vld [vmem:[#allocation4 + $0xa8] sm:$0xff]
    %v3503 = vld [vmem:[#allocation4 + $0xb0] sm:$0xff]
    %v3504 = vld [vmem:[#allocation4 + $0xb8] sm:$0xff]
    %v3505 = vld [vmem:[#allocation4 + $0xc0] sm:$0xff]
    %v3506 = vld [vmem:[#allocation4 + $0xc8] sm:$0xff]
    %v3507 = vld [vmem:[#allocation4 + $0xd0] sm:$0xff]
    %v3508 = vld [vmem:[#allocation4 + $0xd8] sm:$0xff]
    %v3509 = vld [vmem:[#allocation4 + $0xe0] sm:$0xff]
    %v3510 = vld [vmem:[#allocation4 + $0xe8] sm:$0xff]
    %v3511 = vld [vmem:[#allocation4 + $0xf0] sm:$0xff]
    %v3512 = vld [vmem:[#allocation4 + $0xf8] sm:$0xff]
    %v3513 = vld [vmem:[#allocation4 + $0x100] sm:$0xff]
    %v3514 = vld [vmem:[#allocation4 + $0x108] sm:$0xff]
    %v3515 = vld [vmem:[#allocation4 + $0x110] sm:$0xff]
    %v3516 = vld [vmem:[#allocation4 + $0x118] sm:$0xff]
    %v3517 = vld [vmem:[#allocation4 + $0x120] sm:$0xff]
    %v3518 = vld [vmem:[#allocation4 + $0x128] sm:$0xff]
    %v3519 = vld [vmem:[#allocation4 + $0x130] sm:$0xff]
    %v3520 = vld [vmem:[#allocation4 + $0x138] sm:$0xff]
    %v3521 = vld [vmem:[#allocation4 + $0x140] sm:$0xff]
    %v3522 = vld [vmem:[#allocation4 + $0x148] sm:$0xff]
    %v3523 = vld [vmem:[#allocation4 + $0x150] sm:$0xff]
    %v3524 = vld [vmem:[#allocation4 + $0x158] sm:$0xff]
    %v3525 = vld [vmem:[#allocation4 + $0x160] sm:$0xff]
    %v3526 = vld [vmem:[#allocation4 + $0x168] sm:$0xff]
    %v3527 = vld [vmem:[#allocation4 + $0x170] sm:$0xff]
    %v3528 = vld [vmem:[#allocation4 + $0x178] sm:$0xff]
    %v3529 = vld [vmem:[#allocation4 + $0x180] sm:$0xff]
    %v3530 = vld [vmem:[#allocation4 + $0x188] sm:$0xff]
    %v3531 = vld [vmem:[#allocation4 + $0x190] sm:$0xff]
    %v3532 = vld [vmem:[#allocation4 + $0x198] sm:$0xff]
    %v3533 = vld [vmem:[#allocation4 + $0x1a0] sm:$0xff]
    %v3534 = vld [vmem:[#allocation4 + $0x1a8] sm:$0xff]
    %v3535 = vld [vmem:[#allocation4 + $0x1b0] sm:$0xff]
    %v3536 = vld [vmem:[#allocation4 + $0x1b8] sm:$0xff]
    %v3537 = vld [vmem:[#allocation4 + $0x1c0] sm:$0xff]
    %v3538 = vld [vmem:[#allocation4 + $0x1c8] sm:$0xff]
    %v3539 = vld [vmem:[#allocation4 + $0x1d0] sm:$0xff]
    %v3540 = vld [vmem:[#allocation4 + $0x1d8] sm:$0xff]
    %v3541 = vld [vmem:[#allocation4 + $0x1e0] sm:$0xff]
    %v3542 = vld [vmem:[#allocation4 + $0x1e8] sm:$0xff]
    %v3543 = vld [vmem:[#allocation4 + $0x1f0] sm:$0xff]
    %v3544 = vld [vmem:[#allocation4 + $0x1f8] sm:$0xff]
    %v3545 = vld [vmem:[%s1] sm:$0xff]
    %v3546 = vld [vmem:[%s1 + $0x8] sm:$0xff]
    %v3547 = vld [vmem:[%s1 + $0x10] sm:$0xff]
    %v3548 = vld [vmem:[%s1 + $0x18] sm:$0xff]
    %v3549 = vld [vmem:[%s1 + $0x20] sm:$0xf]
    %v3550 = vld [vmem:[%s2] sm:$0x1]
    %v3552 = vperm.slane %v3550, 0
    %vm3554 = vcmask 293888
    %v3556 = vsel %vm3554, %v3481, 0
    %v3559 = vsel %vm3554, %v3482, 0
    %v3562 = vsel %vm3554, %v3483, 0
    %v3565 = vsel %vm3554, %v3484, 0
    %v3568 = vsel %vm3554, %v3485, 0
    %v3571 = vsel %vm3554, %v3486, 0
    %v3574 = vsel %vm3554, %v3487, 0
    %v3577 = vsel %vm3554, %v3488, 0
    %v3580 = vsel %vm3554, %v3489, 0
    %v3583 = vsel %vm3554, %v3490, 0
    %v3586 = vsel %vm3554, %v3491, 0
    %v3589 = vsel %vm3554, %v3492, 0
    %v3592 = vsel %vm3554, %v3493, 0
    %v3595 = vsel %vm3554, %v3494, 0
    %v3598 = vsel %vm3554, %v3495, 0
    %v3601 = vsel %vm3554, %v3496, 0
    %v3604 = vsel %vm3554, %v3497, 0
    %v3607 = vsel %vm3554, %v3498, 0
    %v3610 = vsel %vm3554, %v3499, 0
    %v3613 = vsel %vm3554, %v3500, 0
    %v3616 = vsel %vm3554, %v3501, 0
    %v3619 = vsel %vm3554, %v3502, 0
    %v3622 = vsel %vm3554, %v3503, 0
    %v3625 = vsel %vm3554, %v3504, 0
    %v3628 = vsel %vm3554, %v3505, 0
    %v3631 = vsel %vm3554, %v3506, 0
    %v3634 = vsel %vm3554, %v3507, 0
    %v3637 = vsel %vm3554, %v3508, 0
    %v3640 = vsel %vm3554, %v3509, 0
    %v3643 = vsel %vm3554, %v3510, 0
    %v3646 = vsel %vm3554, %v3511, 0
    %v3649 = vsel %vm3554, %v3512, 0
    %v3652 = vsel %vm3554, %v3513, 0
    %v3655 = vsel %vm3554, %v3514, 0
    %v3658 = vsel %vm3554, %v3515, 0
    %v3661 = vsel %vm3554, %v3516, 0
    %v3664 = vsel %vm3554, %v3517, 0
    %v3667 = vsel %vm3554, %v3518, 0
    %v3670 = vsel %vm3554, %v3519, 0
    %v3673 = vsel %vm3554, %v3520, 0
    %v3676 = vsel %vm3554, %v3521, 0
    %v3679 = vsel %vm3554, %v3522, 0
    %v3682 = vsel %vm3554, %v3523, 0
    %v3685 = vsel %vm3554, %v3524, 0
    %v3688 = vsel %vm3554, %v3525, 0
    %v3691 = vsel %vm3554, %v3526, 0
    %v3694 = vsel %vm3554, %v3527, 0
    %v3697 = vsel %vm3554, %v3528, 0
    %v3700 = vsel %vm3554, %v3529, 0
    %v3703 = vsel %vm3554, %v3530, 0
    %v3706 = vsel %vm3554, %v3531, 0
    %v3709 = vsel %vm3554, %v3532, 0
    %v3712 = vsel %vm3554, %v3533, 0
    %v3715 = vsel %vm3554, %v3534, 0
    %v3718 = vsel %vm3554, %v3535, 0
    %v3721 = vsel %vm3554, %v3536, 0
    %v3724 = vsel %vm3554, %v3537, 0
    %v3727 = vsel %vm3554, %v3538, 0
    %v3730 = vsel %vm3554, %v3539, 0
    %v3733 = vsel %vm3554, %v3540, 0
    %v3736 = vsel %vm3554, %v3541, 0
    %v3739 = vsel %vm3554, %v3542, 0
    %v3742 = vsel %vm3554, %v3543, 0
    %v3745 = vsel %vm3554, %v3544, 0
    %vm3747 = vcmask 1043456
    %v3749 = vsel %vm3747, %v3549, 0
    %3751 = vmatpush.msra.mxu0 0.0
    %3752 = vmatpush.msra.mxu0 0.0
    %3753 = vmatpush.msra.mxu0 0.0
    %3754 = vmatpush.msra.mxu0 0.0
    %3755 = vmatpush.msra.mxu0 0.0
    %3756 = vmatpush.msra.mxu0 0.0
    %3757 = vmatpush.msra.mxu0 0.0
    %3758 = vmatpush.msra.mxu0 0.0
    %3759 = vmatpush.msra.mxu0 0.0
    %3760 = vmatpush.msra.mxu0 0.0
    %3761 = vmatpush.msra.mxu0 0.0
    %3762 = vmatpush.msra.mxu0 %v3749
    %3763 = vmatpush.msra.mxu0 %v3548
    %3764 = vmatpush.msra.mxu0 %v3547
    %3765 = vmatpush.msra.mxu0 %v3546
    %3766 = vmatpush.msra.mxu0 %v3545
    %3767 = vmatmul.f32.gmra.mxu0 %v3556
    %v3768 = vpop.f32.mrf.mxu0
    %v3769 = vadd.f32 %v3552, %v3768
    %3770 = vmatmul.f32.gmra.mxu0 %v3559
    %v3771 = vpop.f32.mrf.mxu0
    %v3772 = vadd.f32 %v3552, %v3771
    %3773 = vmatmul.f32.gmra.mxu0 %v3562
    %v3774 = vpop.f32.mrf.mxu0
    %v3775 = vadd.f32 %v3552, %v3774
    %3776 = vmatmul.f32.gmra.mxu0 %v3565
    %v3777 = vpop.f32.mrf.mxu0
    %v3778 = vadd.f32 %v3552, %v3777
    %3779 = vmatmul.f32.gmra.mxu0 %v3568
    %v3780 = vpop.f32.mrf.mxu0
    %v3781 = vadd.f32 %v3552, %v3780
    %3782 = vmatmul.f32.gmra.mxu0 %v3571
    %v3783 = vpop.f32.mrf.mxu0
    %v3784 = vadd.f32 %v3552, %v3783
    %3785 = vmatmul.f32.gmra.mxu0 %v3574
    %v3786 = vpop.f32.mrf.mxu0
    %v3787 = vadd.f32 %v3552, %v3786
    %3788 = vmatmul.f32.gmra.mxu0 %v3577
    %v3789 = vpop.f32.mrf.mxu0
    %v3790 = vadd.f32 %v3552, %v3789
    %3791 = vmatmul.f32.gmra.mxu0 %v3580
    %v3792 = vpop.f32.mrf.mxu0
    %v3793 = vadd.f32 %v3552, %v3792
    %3794 = vmatmul.f32.gmra.mxu0 %v3583
    %v3795 = vpop.f32.mrf.mxu0
    %v3796 = vadd.f32 %v3552, %v3795
    %3797 = vmatmul.f32.gmra.mxu0 %v3586
    %v3798 = vpop.f32.mrf.mxu0
    %v3799 = vadd.f32 %v3552, %v3798
    %3800 = vmatmul.f32.gmra.mxu0 %v3589
    %v3801 = vpop.f32.mrf.mxu0
    %v3802 = vadd.f32 %v3552, %v3801
    %3803 = vmatmul.f32.gmra.mxu0 %v3592
    %v3804 = vpop.f32.mrf.mxu0
    %v3805 = vadd.f32 %v3552, %v3804
    %3806 = vmatmul.f32.gmra.mxu0 %v3595
    %v3807 = vpop.f32.mrf.mxu0
    %v3808 = vadd.f32 %v3552, %v3807
    %3809 = vmatmul.f32.gmra.mxu0 %v3598
    %v3810 = vpop.f32.mrf.mxu0
    %v3811 = vadd.f32 %v3552, %v3810
    %3812 = vmatmul.f32.gmra.mxu0 %v3601
    %v3813 = vpop.f32.mrf.mxu0
    %v3814 = vadd.f32 %v3552, %v3813
    %3815 = vmatmul.f32.gmra.mxu0 %v3604
    %v3816 = vpop.f32.mrf.mxu0
    %v3817 = vadd.f32 %v3552, %v3816
    %3818 = vmatmul.f32.gmra.mxu0 %v3607
    %v3819 = vpop.f32.mrf.mxu0
    %v3820 = vadd.f32 %v3552, %v3819
    %3821 = vmatmul.f32.gmra.mxu0 %v3610
    %v3822 = vpop.f32.mrf.mxu0
    %v3823 = vadd.f32 %v3552, %v3822
    %3824 = vmatmul.f32.gmra.mxu0 %v3613
    %v3825 = vpop.f32.mrf.mxu0
    %v3826 = vadd.f32 %v3552, %v3825
    %3827 = vmatmul.f32.gmra.mxu0 %v3616
    %v3828 = vpop.f32.mrf.mxu0
    %v3829 = vadd.f32 %v3552, %v3828
    %3830 = vmatmul.f32.gmra.mxu0 %v3619
    %v3831 = vpop.f32.mrf.mxu0
    %v3832 = vadd.f32 %v3552, %v3831
    %3833 = vmatmul.f32.gmra.mxu0 %v3622
    %v3834 = vpop.f32.mrf.mxu0
    %v3835 = vadd.f32 %v3552, %v3834
    %3836 = vmatmul.f32.gmra.mxu0 %v3625
    %v3837 = vpop.f32.mrf.mxu0
    %v3838 = vadd.f32 %v3552, %v3837
    %3839 = vmatmul.f32.gmra.mxu0 %v3628
    %v3840 = vpop.f32.mrf.mxu0
    %v3841 = vadd.f32 %v3552, %v3840
    %3842 = vmatmul.f32.gmra.mxu0 %v3631
    %v3843 = vpop.f32.mrf.mxu0
    %v3844 = vadd.f32 %v3552, %v3843
    %3845 = vmatmul.f32.gmra.mxu0 %v3634
    %v3846 = vpop.f32.mrf.mxu0
    %v3847 = vadd.f32 %v3552, %v3846
    %3848 = vmatmul.f32.gmra.mxu0 %v3637
    %v3849 = vpop.f32.mrf.mxu0
    %v3850 = vadd.f32 %v3552, %v3849
    %3851 = vmatmul.f32.gmra.mxu0 %v3640
    %v3852 = vpop.f32.mrf.mxu0
    %v3853 = vadd.f32 %v3552, %v3852
    %3854 = vmatmul.f32.gmra.mxu0 %v3643
    %v3855 = vpop.f32.mrf.mxu0
    %v3856 = vadd.f32 %v3552, %v3855
    %3857 = vmatmul.f32.gmra.mxu0 %v3646
    %v3858 = vpop.f32.mrf.mxu0
    %v3859 = vadd.f32 %v3552, %v3858
    %3860 = vmatmul.f32.gmra.mxu0 %v3649
    %v3861 = vpop.f32.mrf.mxu0
    %v3862 = vadd.f32 %v3552, %v3861
    %3863 = vmatmul.f32.gmra.mxu0 %v3652
    %v3864 = vpop.f32.mrf.mxu0
    %v3865 = vadd.f32 %v3552, %v3864
    %3866 = vmatmul.f32.gmra.mxu0 %v3655
    %v3867 = vpop.f32.mrf.mxu0
    %v3868 = vadd.f32 %v3552, %v3867
    %3869 = vmatmul.f32.gmra.mxu0 %v3658
    %v3870 = vpop.f32.mrf.mxu0
    %v3871 = vadd.f32 %v3552, %v3870
    %3872 = vmatmul.f32.gmra.mxu0 %v3661
    %v3873 = vpop.f32.mrf.mxu0
    %v3874 = vadd.f32 %v3552, %v3873
    %3875 = vmatmul.f32.gmra.mxu0 %v3664
    %v3876 = vpop.f32.mrf.mxu0
    %v3877 = vadd.f32 %v3552, %v3876
    %3878 = vmatmul.f32.gmra.mxu0 %v3667
    %v3879 = vpop.f32.mrf.mxu0
    %v3880 = vadd.f32 %v3552, %v3879
    %3881 = vmatmul.f32.gmra.mxu0 %v3670
    %v3882 = vpop.f32.mrf.mxu0
    %v3883 = vadd.f32 %v3552, %v3882
    %3884 = vmatmul.f32.gmra.mxu0 %v3673
    %v3885 = vpop.f32.mrf.mxu0
    %v3886 = vadd.f32 %v3552, %v3885
    %3887 = vmatmul.f32.gmra.mxu0 %v3676
    %v3888 = vpop.f32.mrf.mxu0
    %v3889 = vadd.f32 %v3552, %v3888
    %3890 = vmatmul.f32.gmra.mxu0 %v3679
    %v3891 = vpop.f32.mrf.mxu0
    %v3892 = vadd.f32 %v3552, %v3891
    %3893 = vmatmul.f32.gmra.mxu0 %v3682
    %v3894 = vpop.f32.mrf.mxu0
    %v3895 = vadd.f32 %v3552, %v3894
    %3896 = vmatmul.f32.gmra.mxu0 %v3685
    %v3897 = vpop.f32.mrf.mxu0
    %v3898 = vadd.f32 %v3552, %v3897
    %3899 = vmatmul.f32.gmra.mxu0 %v3688
    %v3900 = vpop.f32.mrf.mxu0
    %v3901 = vadd.f32 %v3552, %v3900
    %3902 = vmatmul.f32.gmra.mxu0 %v3691
    %v3903 = vpop.f32.mrf.mxu0
    %v3904 = vadd.f32 %v3552, %v3903
    %3905 = vmatmul.f32.gmra.mxu0 %v3694
    %v3906 = vpop.f32.mrf.mxu0
    %v3907 = vadd.f32 %v3552, %v3906
    %3908 = vmatmul.f32.gmra.mxu0 %v3697
    %v3909 = vpop.f32.mrf.mxu0
    %v3910 = vadd.f32 %v3552, %v3909
    %3911 = vmatmul.f32.gmra.mxu0 %v3700
    %v3912 = vpop.f32.mrf.mxu0
    %v3913 = vadd.f32 %v3552, %v3912
    %3914 = vmatmul.f32.gmra.mxu0 %v3703
    %v3915 = vpop.f32.mrf.mxu0
    %v3916 = vadd.f32 %v3552, %v3915
    %3917 = vmatmul.f32.gmra.mxu0 %v3706
    %v3918 = vpop.f32.mrf.mxu0
    %v3919 = vadd.f32 %v3552, %v3918
    %3920 = vmatmul.f32.gmra.mxu0 %v3709
    %v3921 = vpop.f32.mrf.mxu0
    %v3922 = vadd.f32 %v3552, %v3921
    %3923 = vmatmul.f32.gmra.mxu0 %v3712
    %v3924 = vpop.f32.mrf.mxu0
    %v3925 = vadd.f32 %v3552, %v3924
    %3926 = vmatmul.f32.gmra.mxu0 %v3715
    %v3927 = vpop.f32.mrf.mxu0
    %v3928 = vadd.f32 %v3552, %v3927
    %3929 = vmatmul.f32.gmra.mxu0 %v3718
    %v3930 = vpop.f32.mrf.mxu0
    %v3931 = vadd.f32 %v3552, %v3930
    %3932 = vmatmul.f32.gmra.mxu0 %v3721
    %v3933 = vpop.f32.mrf.mxu0
    %v3934 = vadd.f32 %v3552, %v3933
    %3935 = vmatmul.f32.gmra.mxu0 %v3724
    %v3936 = vpop.f32.mrf.mxu0
    %v3937 = vadd.f32 %v3552, %v3936
    %3938 = vmatmul.f32.gmra.mxu0 %v3727
    %v3939 = vpop.f32.mrf.mxu0
    %v3940 = vadd.f32 %v3552, %v3939
    %3941 = vmatmul.f32.gmra.mxu0 %v3730
    %v3942 = vpop.f32.mrf.mxu0
    %v3943 = vadd.f32 %v3552, %v3942
    %3944 = vmatmul.f32.gmra.mxu0 %v3733
    %v3945 = vpop.f32.mrf.mxu0
    %v3946 = vadd.f32 %v3552, %v3945
    %3947 = vmatmul.f32.gmra.mxu0 %v3736
    %v3948 = vpop.f32.mrf.mxu0
    %v3949 = vadd.f32 %v3552, %v3948
    %3950 = vmatmul.f32.gmra.mxu0 %v3739
    %v3951 = vpop.f32.mrf.mxu0
    %v3952 = vadd.f32 %v3552, %v3951
    %3953 = vmatmul.f32.gmra.mxu0 %v3742
    %v3954 = vpop.f32.mrf.mxu0
    %v3955 = vadd.f32 %v3552, %v3954
    %3956 = vmatmul.f32.gmra.mxu0 %v3745
    %v3957 = vpop.f32.mrf.mxu0
    %v3958 = vadd.f32 %v3552, %v3957
    %3959 = vdwg.mxu0
    %v3960 = vld [vmem:[%s3] sm:$0x1]
    %v3961 = vld [vmem:[%s4] sm:$0x1]
    %vm3962 = vcmask 64512
    %v3963 = vsel %vm3962, %v3769, 0.0
    %v3964 = vsel %vm3962, %v3772, 0.0
    %v3965 = vadd.f32 %v3963, %v3964
    %v3966 = vsel %vm3962, %v3775, 0.0
    %v3967 = vadd.f32 %v3965, %v3966
    %v3968 = vsel %vm3962, %v3778, 0.0
    %v3969 = vadd.f32 %v3967, %v3968
    %v3970 = vsel %vm3962, %v3781, 0.0
    %v3971 = vadd.f32 %v3969, %v3970
    %v3972 = vsel %vm3962, %v3784, 0.0
    %v3973 = vadd.f32 %v3971, %v3972
    %v3974 = vsel %vm3962, %v3787, 0.0
    %v3975 = vadd.f32 %v3973, %v3974
    %v3976 = vsel %vm3962, %v3790, 0.0
    %v3977 = vadd.f32 %v3975, %v3976
    %v3978 = vsel %vm3962, %v3793, 0.0
    %v3979 = vadd.f32 %v3977, %v3978
    %v3980 = vsel %vm3962, %v3796, 0.0
    %v3981 = vadd.f32 %v3979, %v3980
    %v3982 = vsel %vm3962, %v3799, 0.0
    %v3983 = vadd.f32 %v3981, %v3982
    %v3984 = vsel %vm3962, %v3802, 0.0
    %v3985 = vadd.f32 %v3983, %v3984
    %v3986 = vsel %vm3962, %v3805, 0.0
    %v3987 = vadd.f32 %v3985, %v3986
    %v3988 = vsel %vm3962, %v3808, 0.0
    %v3989 = vadd.f32 %v3987, %v3988
    %v3990 = vsel %vm3962, %v3811, 0.0
    %v3991 = vadd.f32 %v3989, %v3990
    %v3992 = vsel %vm3962, %v3814, 0.0
    %v3993 = vadd.f32 %v3991, %v3992
    %v3994 = vsel %vm3962, %v3817, 0.0
    %v3995 = vadd.f32 %v3993, %v3994
    %v3996 = vsel %vm3962, %v3820, 0.0
    %v3997 = vadd.f32 %v3995, %v3996
    %v3998 = vsel %vm3962, %v3823, 0.0
    %v3999 = vadd.f32 %v3997, %v3998
    %v4000 = vsel %vm3962, %v3826, 0.0
    %v4001 = vadd.f32 %v3999, %v4000
    %v4002 = vsel %vm3962, %v3829, 0.0
    %v4003 = vadd.f32 %v4001, %v4002
    %v4004 = vsel %vm3962, %v3832, 0.0
    %v4005 = vadd.f32 %v4003, %v4004
    %v4006 = vsel %vm3962, %v3835, 0.0
    %v4007 = vadd.f32 %v4005, %v4006
    %v4008 = vsel %vm3962, %v3838, 0.0
    %v4009 = vadd.f32 %v4007, %v4008
    %v4010 = vsel %vm3962, %v3841, 0.0
    %v4011 = vadd.f32 %v4009, %v4010
    %v4012 = vsel %vm3962, %v3844, 0.0
    %v4013 = vadd.f32 %v4011, %v4012
    %v4014 = vsel %vm3962, %v3847, 0.0
    %v4015 = vadd.f32 %v4013, %v4014
    %v4016 = vsel %vm3962, %v3850, 0.0
    %v4017 = vadd.f32 %v4015, %v4016
    %v4018 = vsel %vm3962, %v3853, 0.0
    %v4019 = vadd.f32 %v4017, %v4018
    %v4020 = vsel %vm3962, %v3856, 0.0
    %v4021 = vadd.f32 %v4019, %v4020
    %v4022 = vsel %vm3962, %v3859, 0.0
    %v4023 = vadd.f32 %v4021, %v4022
    %v4024 = vsel %vm3962, %v3862, 0.0
    %v4025 = vadd.f32 %v4023, %v4024
    %v4026 = vsel %vm3962, %v3865, 0.0
    %v4027 = vadd.f32 %v4025, %v4026
    %v4028 = vsel %vm3962, %v3868, 0.0
    %v4029 = vadd.f32 %v4027, %v4028
    %v4030 = vsel %vm3962, %v3871, 0.0
    %v4031 = vadd.f32 %v4029, %v4030
    %v4032 = vsel %vm3962, %v3874, 0.0
    %v4033 = vadd.f32 %v4031, %v4032
    %v4034 = vsel %vm3962, %v3877, 0.0
    %v4035 = vadd.f32 %v4033, %v4034
    %v4036 = vsel %vm3962, %v3880, 0.0
    %v4037 = vadd.f32 %v4035, %v4036
    %v4038 = vsel %vm3962, %v3883, 0.0
    %v4039 = vadd.f32 %v4037, %v4038
    %v4040 = vsel %vm3962, %v3886, 0.0
    %v4041 = vadd.f32 %v4039, %v4040
    %v4042 = vsel %vm3962, %v3889, 0.0
    %v4043 = vadd.f32 %v4041, %v4042
    %v4044 = vsel %vm3962, %v3892, 0.0
    %v4045 = vadd.f32 %v4043, %v4044
    %v4046 = vsel %vm3962, %v3895, 0.0
    %v4047 = vadd.f32 %v4045, %v4046
    %v4048 = vsel %vm3962, %v3898, 0.0
    %v4049 = vadd.f32 %v4047, %v4048
    %v4050 = vsel %vm3962, %v3901, 0.0
    %v4051 = vadd.f32 %v4049, %v4050
    %v4052 = vsel %vm3962, %v3904, 0.0
    %v4053 = vadd.f32 %v4051, %v4052
    %v4054 = vsel %vm3962, %v3907, 0.0
    %v4055 = vadd.f32 %v4053, %v4054
    %v4056 = vsel %vm3962, %v3910, 0.0
    %v4057 = vadd.f32 %v4055, %v4056
    %v4058 = vsel %vm3962, %v3913, 0.0
    %v4059 = vadd.f32 %v4057, %v4058
    %v4060 = vsel %vm3962, %v3916, 0.0
    %v4061 = vadd.f32 %v4059, %v4060
    %v4062 = vsel %vm3962, %v3919, 0.0
    %v4063 = vadd.f32 %v4061, %v4062
    %v4064 = vsel %vm3962, %v3922, 0.0
    %v4065 = vadd.f32 %v4063, %v4064
    %v4066 = vsel %vm3962, %v3925, 0.0
    %v4067 = vadd.f32 %v4065, %v4066
    %v4068 = vsel %vm3962, %v3928, 0.0
    %v4069 = vadd.f32 %v4067, %v4068
    %v4070 = vsel %vm3962, %v3931, 0.0
    %v4071 = vadd.f32 %v4069, %v4070
    %v4072 = vsel %vm3962, %v3934, 0.0
    %v4073 = vadd.f32 %v4071, %v4072
    %v4074 = vsel %vm3962, %v3937, 0.0
    %v4075 = vadd.f32 %v4073, %v4074
    %v4076 = vsel %vm3962, %v3940, 0.0
    %v4077 = vadd.f32 %v4075, %v4076
    %v4078 = vsel %vm3962, %v3943, 0.0
    %v4079 = vadd.f32 %v4077, %v4078
    %v4080 = vsel %vm3962, %v3946, 0.0
    %v4081 = vadd.f32 %v4079, %v4080
    %v4082 = vsel %vm3962, %v3949, 0.0
    %v4083 = vadd.f32 %v4081, %v4082
    %v4084 = vsel %vm3962, %v3952, 0.0
    %v4085 = vadd.f32 %v4083, %v4084
    %v4086 = vsel %vm3962, %v3955, 0.0
    %v4087 = vadd.f32 %v4085, %v4086
    %v4088 = vsel %vm3962, %v3958, 0.0
    %v4089 = vadd.f32 %v4087, %v4088
    %v4090 = vrot.slane %v4089, 4
    %v4091 = vadd.f32 %v4089, %v4090
    %v4092 = vrot.slane %v4091, 2
    %v4093 = vadd.f32 %v4091, %v4092
    %v4094 = vrot.slane %v4093, 1
    %v4095 = vadd.f32 %v4093, %v4094
    %v4096 = vmul.f32 %v3769, %v3769
    %v4097 = vmul.f32 %v3772, %v3772
    %v4098 = vmul.f32 %v3775, %v3775
    %v4099 = vmul.f32 %v3778, %v3778
    %v4100 = vmul.f32 %v3781, %v3781
    %v4101 = vmul.f32 %v3784, %v3784
    %v4102 = vmul.f32 %v3787, %v3787
    %v4103 = vmul.f32 %v3790, %v3790
    %v4104 = vmul.f32 %v3793, %v3793
    %v4105 = vmul.f32 %v3796, %v3796
    %v4106 = vmul.f32 %v3799, %v3799
    %v4107 = vmul.f32 %v3802, %v3802
    %v4108 = vmul.f32 %v3805, %v3805
    %v4109 = vmul.f32 %v3808, %v3808
    %v4110 = vmul.f32 %v3811, %v3811
    %v4111 = vmul.f32 %v3814, %v3814
    %v4112 = vmul.f32 %v3817, %v3817
    %v4113 = vmul.f32 %v3820, %v3820
    %v4114 = vmul.f32 %v3823, %v3823
    %v4115 = vmul.f32 %v3826, %v3826
    %v4116 = vmul.f32 %v3829, %v3829
    %v4117 = vmul.f32 %v3832, %v3832
    %v4118 = vmul.f32 %v3835, %v3835
    %v4119 = vmul.f32 %v3838, %v3838
    %v4120 = vmul.f32 %v3841, %v3841
    %v4121 = vmul.f32 %v3844, %v3844
    %v4122 = vmul.f32 %v3847, %v3847
    %v4123 = vmul.f32 %v3850, %v3850
    %v4124 = vmul.f32 %v3853, %v3853
    %v4125 = vmul.f32 %v3856, %v3856
    %v4126 = vmul.f32 %v3859, %v3859
    %v4127 = vmul.f32 %v3862, %v3862
    %v4128 = vmul.f32 %v3865, %v3865
    %v4129 = vmul.f32 %v3868, %v3868
    %v4130 = vmul.f32 %v3871, %v3871
    %v4131 = vmul.f32 %v3874, %v3874
    %v4132 = vmul.f32 %v3877, %v3877
    %v4133 = vmul.f32 %v3880, %v3880
    %v4134 = vmul.f32 %v3883, %v3883
    %v4135 = vmul.f32 %v3886, %v3886
    %v4136 = vmul.f32 %v3889, %v3889
    %v4137 = vmul.f32 %v3892, %v3892
    %v4138 = vmul.f32 %v3895, %v3895
    %v4139 = vmul.f32 %v3898, %v3898
    %v4140 = vmul.f32 %v3901, %v3901
    %v4141 = vmul.f32 %v3904, %v3904
    %v4142 = vmul.f32 %v3907, %v3907
    %v4143 = vmul.f32 %v3910, %v3910
    %v4144 = vmul.f32 %v3913, %v3913
    %v4145 = vmul.f32 %v3916, %v3916
    %v4146 = vmul.f32 %v3919, %v3919
    %v4147 = vmul.f32 %v3922, %v3922
    %v4148 = vmul.f32 %v3925, %v3925
    %v4149 = vmul.f32 %v3928, %v3928
    %v4150 = vmul.f32 %v3931, %v3931
    %v4151 = vmul.f32 %v3934, %v3934
    %v4152 = vmul.f32 %v3937, %v3937
    %v4153 = vmul.f32 %v3940, %v3940
    %v4154 = vmul.f32 %v3943, %v3943
    %v4155 = vmul.f32 %v3946, %v3946
    %v4156 = vmul.f32 %v3949, %v3949
    %v4157 = vmul.f32 %v3952, %v3952
    %v4158 = vmul.f32 %v3955, %v3955
    %v4159 = vmul.f32 %v3958, %v3958
    %v4160 = vsel %vm3962, %v4096, 0.0
    %v4161 = vsel %vm3962, %v4097, 0.0
    %v4162 = vadd.f32 %v4160, %v4161
    %v4163 = vsel %vm3962, %v4098, 0.0
    %v4164 = vadd.f32 %v4162, %v4163
    %v4165 = vsel %vm3962, %v4099, 0.0
    %v4166 = vadd.f32 %v4164, %v4165
    %v4167 = vsel %vm3962, %v4100, 0.0
    %v4168 = vadd.f32 %v4166, %v4167
    %v4169 = vsel %vm3962, %v4101, 0.0
    %v4170 = vadd.f32 %v4168, %v4169
    %v4171 = vsel %vm3962, %v4102, 0.0
    %v4172 = vadd.f32 %v4170, %v4171
    %v4173 = vsel %vm3962, %v4103, 0.0
    %v4174 = vadd.f32 %v4172, %v4173
    %v4175 = vsel %vm3962, %v4104, 0.0
    %v4176 = vadd.f32 %v4174, %v4175
    %v4177 = vsel %vm3962, %v4105, 0.0
    %v4178 = vadd.f32 %v4176, %v4177
    %v4179 = vsel %vm3962, %v4106, 0.0
    %v4180 = vadd.f32 %v4178, %v4179
    %v4181 = vsel %vm3962, %v4107, 0.0
    %v4182 = vadd.f32 %v4180, %v4181
    %v4183 = vsel %vm3962, %v4108, 0.0
    %v4184 = vadd.f32 %v4182, %v4183
    %v4185 = vsel %vm3962, %v4109, 0.0
    %v4186 = vadd.f32 %v4184, %v4185
    %v4187 = vsel %vm3962, %v4110, 0.0
    %v4188 = vadd.f32 %v4186, %v4187
    %v4189 = vsel %vm3962, %v4111, 0.0
    %v4190 = vadd.f32 %v4188, %v4189
    %v4191 = vsel %vm3962, %v4112, 0.0
    %v4192 = vadd.f32 %v4190, %v4191
    %v4193 = vsel %vm3962, %v4113, 0.0
    %v4194 = vadd.f32 %v4192, %v4193
    %v4195 = vsel %vm3962, %v4114, 0.0
    %v4196 = vadd.f32 %v4194, %v4195
    %v4197 = vsel %vm3962, %v4115, 0.0
    %v4198 = vadd.f32 %v4196, %v4197
    %v4199 = vsel %vm3962, %v4116, 0.0
    %v4200 = vadd.f32 %v4198, %v4199
    %v4201 = vsel %vm3962, %v4117, 0.0
    %v4202 = vadd.f32 %v4200, %v4201
    %v4203 = vsel %vm3962, %v4118, 0.0
    %v4204 = vadd.f32 %v4202, %v4203
    %v4205 = vsel %vm3962, %v4119, 0.0
    %v4206 = vadd.f32 %v4204, %v4205
    %v4207 = vsel %vm3962, %v4120, 0.0
    %v4208 = vadd.f32 %v4206, %v4207
    %v4209 = vsel %vm3962, %v4121, 0.0
    %v4210 = vadd.f32 %v4208, %v4209
    %v4211 = vsel %vm3962, %v4122, 0.0
    %v4212 = vadd.f32 %v4210, %v4211
    %v4213 = vsel %vm3962, %v4123, 0.0
    %v4214 = vadd.f32 %v4212, %v4213
    %v4215 = vsel %vm3962, %v4124, 0.0
    %v4216 = vadd.f32 %v4214, %v4215
    %v4217 = vsel %vm3962, %v4125, 0.0
    %v4218 = vadd.f32 %v4216, %v4217
    %v4219 = vsel %vm3962, %v4126, 0.0
    %v4220 = vadd.f32 %v4218, %v4219
    %v4221 = vsel %vm3962, %v4127, 0.0
    %v4222 = vadd.f32 %v4220, %v4221
    %v4223 = vsel %vm3962, %v4128, 0.0
    %v4224 = vadd.f32 %v4222, %v4223
    %v4225 = vsel %vm3962, %v4129, 0.0
    %v4226 = vadd.f32 %v4224, %v4225
    %v4227 = vsel %vm3962, %v4130, 0.0
    %v4228 = vadd.f32 %v4226, %v4227
    %v4229 = vsel %vm3962, %v4131, 0.0
    %v4230 = vadd.f32 %v4228, %v4229
    %v4231 = vsel %vm3962, %v4132, 0.0
    %v4232 = vadd.f32 %v4230, %v4231
    %v4233 = vsel %vm3962, %v4133, 0.0
    %v4234 = vadd.f32 %v4232, %v4233
    %v4235 = vsel %vm3962, %v4134, 0.0
    %v4236 = vadd.f32 %v4234, %v4235
    %v4237 = vsel %vm3962, %v4135, 0.0
    %v4238 = vadd.f32 %v4236, %v4237
    %v4239 = vsel %vm3962, %v4136, 0.0
    %v4240 = vadd.f32 %v4238, %v4239
    %v4241 = vsel %vm3962, %v4137, 0.0
    %v4242 = vadd.f32 %v4240, %v4241
    %v4243 = vsel %vm3962, %v4138, 0.0
    %v4244 = vadd.f32 %v4242, %v4243
    %v4245 = vsel %vm3962, %v4139, 0.0
    %v4246 = vadd.f32 %v4244, %v4245
    %v4247 = vsel %vm3962, %v4140, 0.0
    %v4248 = vadd.f32 %v4246, %v4247
    %v4249 = vsel %vm3962, %v4141, 0.0
    %v4250 = vadd.f32 %v4248, %v4249
    %v4251 = vsel %vm3962, %v4142, 0.0
    %v4252 = vadd.f32 %v4250, %v4251
    %v4253 = vsel %vm3962, %v4143, 0.0
    %v4254 = vadd.f32 %v4252, %v4253
    %v4255 = vsel %vm3962, %v4144, 0.0
    %v4256 = vadd.f32 %v4254, %v4255
    %v4257 = vsel %vm3962, %v4145, 0.0
    %v4258 = vadd.f32 %v4256, %v4257
    %v4259 = vsel %vm3962, %v4146, 0.0
    %v4260 = vadd.f32 %v4258, %v4259
    %v4261 = vsel %vm3962, %v4147, 0.0
    %v4262 = vadd.f32 %v4260, %v4261
    %v4263 = vsel %vm3962, %v4148, 0.0
    %v4264 = vadd.f32 %v4262, %v4263
    %v4265 = vsel %vm3962, %v4149, 0.0
    %v4266 = vadd.f32 %v4264, %v4265
    %v4267 = vsel %vm3962, %v4150, 0.0
    %v4268 = vadd.f32 %v4266, %v4267
    %v4269 = vsel %vm3962, %v4151, 0.0
    %v4270 = vadd.f32 %v4268, %v4269
    %v4271 = vsel %vm3962, %v4152, 0.0
    %v4272 = vadd.f32 %v4270, %v4271
    %v4273 = vsel %vm3962, %v4153, 0.0
    %v4274 = vadd.f32 %v4272, %v4273
    %v4275 = vsel %vm3962, %v4154, 0.0
    %v4276 = vadd.f32 %v4274, %v4275
    %v4277 = vsel %vm3962, %v4155, 0.0
    %v4278 = vadd.f32 %v4276, %v4277
    %v4279 = vsel %vm3962, %v4156, 0.0
    %v4280 = vadd.f32 %v4278, %v4279
    %v4281 = vsel %vm3962, %v4157, 0.0
    %v4282 = vadd.f32 %v4280, %v4281
    %v4283 = vsel %vm3962, %v4158, 0.0
    %v4284 = vadd.f32 %v4282, %v4283
    %v4285 = vsel %vm3962, %v4159, 0.0
    %v4286 = vadd.f32 %v4284, %v4285
    %v4287 = vrot.slane %v4286, 4
    %v4288 = vadd.f32 %v4286, %v4287
    %v4289 = vrot.slane %v4288, 2
    %v4290 = vadd.f32 %v4288, %v4289
    %v4291 = vrot.slane %v4290, 1
    %v4292 = vadd.f32 %v4290, %v4291
    %v4293 = vmul.f32 %v4095, 0.001953125
    %v4294 = vmul.f32 %v4292, 0.001953125
    %v4295 = vmul.f32 %v4293, %v4293
    %v4296 = vsub.f32 %v4294, %v4295
    %v4297 = vadd.f32 %v4296, 1e-05
    %v4298 = vrsqrt.pop %v4297
    %v4299 = vmul.f32 %v4298, %v4297
    %v4300 = vmul.f32 %v4299, %v4298
    %v4301 = vmul.f32 0.5, %v4300
    %v4302 = vsub.f32 1.5, %v4301
    %v4303 = vmul.f32 %v4298, %v4302
    %vm4304 = vweird.f32 %v4297
    %vm4305 = vweird.f32 %v4298
    %vm4306 = vmor %vm4304, %vm4305
    %v4307 = vsel %vm4306, %v4298, %v4303
    %v4308 = vmul.f32 %v3960, %v4307
    %v4309 = vmul.f32 %v4293, %v4308
    %v4310 = vsub.f32 %v3961, %v4309
    %v4312 = vperm.slane %v4308, 0
    %v4314 = vmul.f32 %v3769, %v4312
    %v4315 = vmul.f32 %v3772, %v4312
    %v4316 = vmul.f32 %v3775, %v4312
    %v4317 = vmul.f32 %v3778, %v4312
    %v4318 = vmul.f32 %v3781, %v4312
    %v4319 = vmul.f32 %v3784, %v4312
    %v4320 = vmul.f32 %v3787, %v4312
    %v4321 = vmul.f32 %v3790, %v4312
    %v4322 = vmul.f32 %v3793, %v4312
    %v4323 = vmul.f32 %v3796, %v4312
    %v4324 = vmul.f32 %v3799, %v4312
    %v4325 = vmul.f32 %v3802, %v4312
    %v4326 = vmul.f32 %v3805, %v4312
    %v4327 = vmul.f32 %v3808, %v4312
    %v4328 = vmul.f32 %v3811, %v4312
    %v4329 = vmul.f32 %v3814, %v4312
    %v4330 = vmul.f32 %v3817, %v4312
    %v4331 = vmul.f32 %v3820, %v4312
    %v4332 = vmul.f32 %v3823, %v4312
    %v4333 = vmul.f32 %v3826, %v4312
    %v4334 = vmul.f32 %v3829, %v4312
    %v4335 = vmul.f32 %v3832, %v4312
    %v4336 = vmul.f32 %v3835, %v4312
    %v4337 = vmul.f32 %v3838, %v4312
    %v4338 = vmul.f32 %v3841, %v4312
    %v4339 = vmul.f32 %v3844, %v4312
    %v4340 = vmul.f32 %v3847, %v4312
    %v4341 = vmul.f32 %v3850, %v4312
    %v4342 = vmul.f32 %v3853, %v4312
    %v4343 = vmul.f32 %v3856, %v4312
    %v4344 = vmul.f32 %v3859, %v4312
    %v4345 = vmul.f32 %v3862, %v4312
    %v4346 = vmul.f32 %v3865, %v4312
    %v4347 = vmul.f32 %v3868, %v4312
    %v4348 = vmul.f32 %v3871, %v4312
    %v4349 = vmul.f32 %v3874, %v4312
    %v4350 = vmul.f32 %v3877, %v4312
    %v4351 = vmul.f32 %v3880, %v4312
    %v4352 = vmul.f32 %v3883, %v4312
    %v4353 = vmul.f32 %v3886, %v4312
    %v4354 = vmul.f32 %v3889, %v4312
    %v4355 = vmul.f32 %v3892, %v4312
    %v4356 = vmul.f32 %v3895, %v4312
    %v4357 = vmul.f32 %v3898, %v4312
    %v4358 = vmul.f32 %v3901, %v4312
    %v4359 = vmul.f32 %v3904, %v4312
    %v4360 = vmul.f32 %v3907, %v4312
    %v4361 = vmul.f32 %v3910, %v4312
    %v4362 = vmul.f32 %v3913, %v4312
    %v4363 = vmul.f32 %v3916, %v4312
    %v4364 = vmul.f32 %v3919, %v4312
    %v4365 = vmul.f32 %v3922, %v4312
    %v4366 = vmul.f32 %v3925, %v4312
    %v4367 = vmul.f32 %v3928, %v4312
    %v4368 = vmul.f32 %v3931, %v4312
    %v4369 = vmul.f32 %v3934, %v4312
    %v4370 = vmul.f32 %v3937, %v4312
    %v4371 = vmul.f32 %v3940, %v4312
    %v4372 = vmul.f32 %v3943, %v4312
    %v4373 = vmul.f32 %v3946, %v4312
    %v4374 = vmul.f32 %v3949, %v4312
    %v4375 = vmul.f32 %v3952, %v4312
    %v4376 = vmul.f32 %v3955, %v4312
    %v4377 = vmul.f32 %v3958, %v4312
    %v4379 = vperm.slane %v4310, 0
    %v4381 = vadd.f32 %v4314, %v4379
    %v4382 = vadd.f32 %v4315, %v4379
    %v4383 = vadd.f32 %v4316, %v4379
    %v4384 = vadd.f32 %v4317, %v4379
    %v4385 = vadd.f32 %v4318, %v4379
    %v4386 = vadd.f32 %v4319, %v4379
    %v4387 = vadd.f32 %v4320, %v4379
    %v4388 = vadd.f32 %v4321, %v4379
    %v4389 = vadd.f32 %v4322, %v4379
    %v4390 = vadd.f32 %v4323, %v4379
    %v4391 = vadd.f32 %v4324, %v4379
    %v4392 = vadd.f32 %v4325, %v4379
    %v4393 = vadd.f32 %v4326, %v4379
    %v4394 = vadd.f32 %v4327, %v4379
    %v4395 = vadd.f32 %v4328, %v4379
    %v4396 = vadd.f32 %v4329, %v4379
    %v4397 = vadd.f32 %v4330, %v4379
    %v4398 = vadd.f32 %v4331, %v4379
    %v4399 = vadd.f32 %v4332, %v4379
    %v4400 = vadd.f32 %v4333, %v4379
    %v4401 = vadd.f32 %v4334, %v4379
    %v4402 = vadd.f32 %v4335, %v4379
    %v4403 = vadd.f32 %v4336, %v4379
    %v4404 = vadd.f32 %v4337, %v4379
    %v4405 = vadd.f32 %v4338, %v4379
    %v4406 = vadd.f32 %v4339, %v4379
    %v4407 = vadd.f32 %v4340, %v4379
    %v4408 = vadd.f32 %v4341, %v4379
    %v4409 = vadd.f32 %v4342, %v4379
    %v4410 = vadd.f32 %v4343, %v4379
    %v4411 = vadd.f32 %v4344, %v4379
    %v4412 = vadd.f32 %v4345, %v4379
    %v4413 = vadd.f32 %v4346, %v4379
    %v4414 = vadd.f32 %v4347, %v4379
    %v4415 = vadd.f32 %v4348, %v4379
    %v4416 = vadd.f32 %v4349, %v4379
    %v4417 = vadd.f32 %v4350, %v4379
    %v4418 = vadd.f32 %v4351, %v4379
    %v4419 = vadd.f32 %v4352, %v4379
    %v4420 = vadd.f32 %v4353, %v4379
    %v4421 = vadd.f32 %v4354, %v4379
    %v4422 = vadd.f32 %v4355, %v4379
    %v4423 = vadd.f32 %v4356, %v4379
    %v4424 = vadd.f32 %v4357, %v4379
    %v4425 = vadd.f32 %v4358, %v4379
    %v4426 = vadd.f32 %v4359, %v4379
    %v4427 = vadd.f32 %v4360, %v4379
    %v4428 = vadd.f32 %v4361, %v4379
    %v4429 = vadd.f32 %v4362, %v4379
    %v4430 = vadd.f32 %v4363, %v4379
    %v4431 = vadd.f32 %v4364, %v4379
    %v4432 = vadd.f32 %v4365, %v4379
    %v4433 = vadd.f32 %v4366, %v4379
    %v4434 = vadd.f32 %v4367, %v4379
    %v4435 = vadd.f32 %v4368, %v4379
    %v4436 = vadd.f32 %v4369, %v4379
    %v4437 = vadd.f32 %v4370, %v4379
    %v4438 = vadd.f32 %v4371, %v4379
    %v4439 = vadd.f32 %v4372, %v4379
    %v4440 = vadd.f32 %v4373, %v4379
    %v4441 = vadd.f32 %v4374, %v4379
    %v4442 = vadd.f32 %v4375, %v4379
    %v4443 = vadd.f32 %v4376, %v4379
    %v4444 = vadd.f32 %v4377, %v4379
    %v4445 = vmax.f32 %v4381, 0.0
    %v4446 = vmax.f32 %v4382, 0.0
    %v4447 = vmax.f32 %v4383, 0.0
    %v4448 = vmax.f32 %v4384, 0.0
    %v4449 = vmax.f32 %v4385, 0.0
    %v4450 = vmax.f32 %v4386, 0.0
    %v4451 = vmax.f32 %v4387, 0.0
    %v4452 = vmax.f32 %v4388, 0.0
    %v4453 = vmax.f32 %v4389, 0.0
    %v4454 = vmax.f32 %v4390, 0.0
    %v4455 = vmax.f32 %v4391, 0.0
    %v4456 = vmax.f32 %v4392, 0.0
    %v4457 = vmax.f32 %v4393, 0.0
    %v4458 = vmax.f32 %v4394, 0.0
    %v4459 = vmax.f32 %v4395, 0.0
    %v4460 = vmax.f32 %v4396, 0.0
    %v4461 = vmax.f32 %v4397, 0.0
    %v4462 = vmax.f32 %v4398, 0.0
    %v4463 = vmax.f32 %v4399, 0.0
    %v4464 = vmax.f32 %v4400, 0.0
    %v4465 = vmax.f32 %v4401, 0.0
    %v4466 = vmax.f32 %v4402, 0.0
    %v4467 = vmax.f32 %v4403, 0.0
    %v4468 = vmax.f32 %v4404, 0.0
    %v4469 = vmax.f32 %v4405, 0.0
    %v4470 = vmax.f32 %v4406, 0.0
    %v4471 = vmax.f32 %v4407, 0.0
    %v4472 = vmax.f32 %v4408, 0.0
    %v4473 = vmax.f32 %v4409, 0.0
    %v4474 = vmax.f32 %v4410, 0.0
    %v4475 = vmax.f32 %v4411, 0.0
    %v4476 = vmax.f32 %v4412, 0.0
    %v4477 = vmax.f32 %v4413, 0.0
    %v4478 = vmax.f32 %v4414, 0.0
    %v4479 = vmax.f32 %v4415, 0.0
    %v4480 = vmax.f32 %v4416, 0.0
    %v4481 = vmax.f32 %v4417, 0.0
    %v4482 = vmax.f32 %v4418, 0.0
    %v4483 = vmax.f32 %v4419, 0.0
    %v4484 = vmax.f32 %v4420, 0.0
    %v4485 = vmax.f32 %v4421, 0.0
    %v4486 = vmax.f32 %v4422, 0.0
    %v4487 = vmax.f32 %v4423, 0.0
    %v4488 = vmax.f32 %v4424, 0.0
    %v4489 = vmax.f32 %v4425, 0.0
    %v4490 = vmax.f32 %v4426, 0.0
    %v4491 = vmax.f32 %v4427, 0.0
    %v4492 = vmax.f32 %v4428, 0.0
    %v4493 = vmax.f32 %v4429, 0.0
    %v4494 = vmax.f32 %v4430, 0.0
    %v4495 = vmax.f32 %v4431, 0.0
    %v4496 = vmax.f32 %v4432, 0.0
    %v4497 = vmax.f32 %v4433, 0.0
    %v4498 = vmax.f32 %v4434, 0.0
    %v4499 = vmax.f32 %v4435, 0.0
    %v4500 = vmax.f32 %v4436, 0.0
    %v4501 = vmax.f32 %v4437, 0.0
    %v4502 = vmax.f32 %v4438, 0.0
    %v4503 = vmax.f32 %v4439, 0.0
    %v4504 = vmax.f32 %v4440, 0.0
    %v4505 = vmax.f32 %v4441, 0.0
    %v4506 = vmax.f32 %v4442, 0.0
    %v4507 = vmax.f32 %v4443, 0.0
    %v4508 = vmax.f32 %v4444, 0.0
    %4509 = vst.msk [vmem:[#allocation3] sm:$0xff] %vm3962, 0.0
    %4510 = vst.msk [vmem:[#allocation3 + $0x8] sm:$0xff] %vm3962, 0.0
    %vm4511 = vcmask 58368
    %4512 = vst.msk [vmem:[#allocation3 + $0x10] sm:$0x3] %vm4511, 0.0
    %4513 = vst.msk [vmem:[#allocation3 + $0x18] sm:$0xff] %vm3962, 0.0
    %4514 = vst.msk [vmem:[#allocation3 + $0x20] sm:$0xff] %vm3962, 0.0
    %4515 = vst.msk [vmem:[#allocation3 + $0x28] sm:$0x3] %vm4511, 0.0
    %4516 = vst.msk [vmem:[#allocation3 + $0x30] sm:$0xff] %vm3962, 0.0
    %4517 = vst.msk [vmem:[#allocation3 + $0x38] sm:$0xff] %vm3962, 0.0
    %4518 = vst.msk [vmem:[#allocation3 + $0x40] sm:$0x3] %vm4511, 0.0
    %4519 = vst.msk [vmem:[#allocation3 + $0x48] sm:$0xff] %vm3962, 0.0
    %4520 = vst.msk [vmem:[#allocation3 + $0x50] sm:$0xff] %vm3962, 0.0
    %4521 = vst.msk [vmem:[#allocation3 + $0x58] sm:$0x3] %vm4511, 0.0
    %4522 = vst.msk [vmem:[#allocation3 + $0x60] sm:$0xff] %vm3962, 0.0
    %4523 = vst.msk [vmem:[#allocation3 + $0x68] sm:$0xff] %vm3962, 0.0
    %4524 = vst.msk [vmem:[#allocation3 + $0x70] sm:$0x3] %vm4511, 0.0
    %4525 = vst.msk [vmem:[#allocation3 + $0x78] sm:$0xff] %vm3962, 0.0
    %4526 = vst.msk [vmem:[#allocation3 + $0x80] sm:$0xff] %vm3962, 0.0
    %4527 = vst.msk [vmem:[#allocation3 + $0x88] sm:$0x3] %vm4511, 0.0
    %4528 = vst.msk [vmem:[#allocation3 + $0x90] sm:$0xff] %vm3962, 0.0
    %4529 = vst.msk [vmem:[#allocation3 + $0x98] sm:$0xff] %vm3962, 0.0
    %4530 = vst.msk [vmem:[#allocation3 + $0xa0] sm:$0x3] %vm4511, 0.0
    %4531 = vst.msk [vmem:[#allocation3 + $0xa8] sm:$0xff] %vm3962, 0.0
    %4532 = vst.msk [vmem:[#allocation3 + $0xb0] sm:$0xff] %vm3962, 0.0
    %4533 = vst.msk [vmem:[#allocation3 + $0xb8] sm:$0x3] %vm4511, 0.0
    %4534 = vst.msk [vmem:[#allocation3 + $0xc0] sm:$0xff] %vm3962, 0.0
    %4535 = vst.msk [vmem:[#allocation3 + $0xc8] sm:$0xff] %vm3962, 0.0
    %4536 = vst.msk [vmem:[#allocation3 + $0xd0] sm:$0x3] %vm4511, 0.0
    %4537 = vst.msk [vmem:[#allocation3 + $0xd8] sm:$0xff] %vm3962, 0.0
    %4538 = vst.msk [vmem:[#allocation3 + $0xe0] sm:$0xff] %vm3962, 0.0
    %4539 = vst.msk [vmem:[#allocation3 + $0xe8] sm:$0x3] %vm4511, 0.0
    %4540 = vst.msk [vmem:[#allocation3 + $0xf0] sm:$0xff] %vm3962, 0.0
    %4541 = vst.msk [vmem:[#allocation3 + $0xf8] sm:$0xff] %vm3962, 0.0
    %4542 = vst.msk [vmem:[#allocation3 + $0x100] sm:$0x3] %vm4511, 0.0
    %4543 = vst.msk [vmem:[#allocation3 + $0x108] sm:$0xff] %vm3962, 0.0
    %4544 = vst.msk [vmem:[#allocation3 + $0x110] sm:$0xff] %vm3962, 0.0
    %4545 = vst.msk [vmem:[#allocation3 + $0x118] sm:$0x3] %vm4511, 0.0
    %4546 = vst.msk [vmem:[#allocation3 + $0x120] sm:$0xff] %vm3962, 0.0
    %4547 = vst.msk [vmem:[#allocation3 + $0x128] sm:$0xff] %vm3962, 0.0
    %4548 = vst.msk [vmem:[#allocation3 + $0x130] sm:$0x3] %vm4511, 0.0
    %4549 = vst.msk [vmem:[#allocation3 + $0x138] sm:$0xff] %vm3962, 0.0
    %4550 = vst.msk [vmem:[#allocation3 + $0x140] sm:$0xff] %vm3962, 0.0
    %4551 = vst.msk [vmem:[#allocation3 + $0x148] sm:$0x3] %vm4511, 0.0
    %4552 = vst.msk [vmem:[#allocation3 + $0x150] sm:$0xff] %vm3962, 0.0
    %4553 = vst.msk [vmem:[#allocation3 + $0x158] sm:$0xff] %vm3962, 0.0
    %4554 = vst.msk [vmem:[#allocation3 + $0x160] sm:$0x3] %vm4511, 0.0
    %4555 = vst.msk [vmem:[#allocation3 + $0x168] sm:$0xff] %vm3962, 0.0
    %4556 = vst.msk [vmem:[#allocation3 + $0x170] sm:$0xff] %vm3962, 0.0
    %4557 = vst.msk [vmem:[#allocation3 + $0x178] sm:$0x3] %vm4511, 0.0
    %4558 = vst.msk [vmem:[#allocation3 + $0x180] sm:$0xff] %vm3962, 0.0
    %4559 = vst.msk [vmem:[#allocation3 + $0x188] sm:$0xff] %vm3962, 0.0
    %4560 = vst.msk [vmem:[#allocation3 + $0x190] sm:$0x3] %vm4511, 0.0
    %4561 = vst.msk [vmem:[#allocation3 + $0x198] sm:$0xff] %vm3962, 0.0
    %4562 = vst.msk [vmem:[#allocation3 + $0x1a0] sm:$0xff] %vm3962, 0.0
    %4563 = vst.msk [vmem:[#allocation3 + $0x1a8] sm:$0x3] %vm4511, 0.0
    %4564 = vst.msk [vmem:[#allocation3 + $0x1b0] sm:$0xff] %vm3962, 0.0
    %4565 = vst.msk [vmem:[#allocation3 + $0x1b8] sm:$0xff] %vm3962, 0.0
    %4566 = vst.msk [vmem:[#allocation3 + $0x1c0] sm:$0x3] %vm4511, 0.0
    %4567 = vst.msk [vmem:[#allocation3 + $0x1c8] sm:$0xff] %vm3962, 0.0
    %4568 = vst.msk [vmem:[#allocation3 + $0x1d0] sm:$0xff] %vm3962, 0.0
    %4569 = vst.msk [vmem:[#allocation3 + $0x1d8] sm:$0x3] %vm4511, 0.0
    %4570 = vst.msk [vmem:[#allocation3 + $0x1e0] sm:$0xff] %vm3962, 0.0
    %4571 = vst.msk [vmem:[#allocation3 + $0x1e8] sm:$0xff] %vm3962, 0.0
    %4572 = vst.msk [vmem:[#allocation3 + $0x1f0] sm:$0x3] %vm4511, 0.0
    %4573 = vst.msk [vmem:[#allocation3 + $0x1f8] sm:$0xff] %vm3962, 0.0
    %4574 = vst.msk [vmem:[#allocation3 + $0x200] sm:$0xff] %vm3962, 0.0
    %4575 = vst.msk [vmem:[#allocation3 + $0x208] sm:$0x3] %vm4511, 0.0
    %4576 = vst.msk [vmem:[#allocation3 + $0x210] sm:$0xff] %vm3962, 0.0
    %4577 = vst.msk [vmem:[#allocation3 + $0x218] sm:$0xff] %vm3962, 0.0
    %4578 = vst.msk [vmem:[#allocation3 + $0x220] sm:$0x3] %vm4511, 0.0
    %4579 = vst.msk [vmem:[#allocation3 + $0x228] sm:$0xff] %vm3962, 0.0
    %4580 = vst.msk [vmem:[#allocation3 + $0x230] sm:$0xff] %vm3962, 0.0
    %4581 = vst.msk [vmem:[#allocation3 + $0x238] sm:$0x3] %vm4511, 0.0
    %4582 = vst.msk [vmem:[#allocation3 + $0x240] sm:$0xff] %vm3962, 0.0
    %4583 = vst.msk [vmem:[#allocation3 + $0x248] sm:$0xff] %vm3962, 0.0
    %4584 = vst.msk [vmem:[#allocation3 + $0x250] sm:$0x3] %vm4511, 0.0
    %4585 = vst.msk [vmem:[#allocation3 + $0x258] sm:$0xff] %vm3962, 0.0
    %4586 = vst.msk [vmem:[#allocation3 + $0x260] sm:$0xff] %vm3962, 0.0
    %4587 = vst.msk [vmem:[#allocation3 + $0x268] sm:$0x3] %vm4511, 0.0
    %4588 = vst.msk [vmem:[#allocation3 + $0x270] sm:$0xff] %vm3962, 0.0
    %4589 = vst.msk [vmem:[#allocation3 + $0x278] sm:$0xff] %vm3962, 0.0
    %4590 = vst.msk [vmem:[#allocation3 + $0x280] sm:$0x3] %vm4511, 0.0
    %4591 = vst.msk [vmem:[#allocation3 + $0x288] sm:$0xff] %vm3962, 0.0
    %4592 = vst.msk [vmem:[#allocation3 + $0x290] sm:$0xff] %vm3962, 0.0
    %4593 = vst.msk [vmem:[#allocation3 + $0x298] sm:$0x3] %vm4511, 0.0
    %4594 = vst.msk [vmem:[#allocation3 + $0x2a0] sm:$0xff] %vm3962, 0.0
    %4595 = vst.msk [vmem:[#allocation3 + $0x2a8] sm:$0xff] %vm3962, 0.0
    %4596 = vst.msk [vmem:[#allocation3 + $0x2b0] sm:$0x3] %vm4511, 0.0
    %4597 = vst.msk [vmem:[#allocation3 + $0x2b8] sm:$0xff] %vm3962, 0.0
    %4598 = vst.msk [vmem:[#allocation3 + $0x2c0] sm:$0xff] %vm3962, 0.0
    %4599 = vst.msk [vmem:[#allocation3 + $0x2c8] sm:$0x3] %vm4511, 0.0
    %4600 = vst.msk [vmem:[#allocation3 + $0x2d0] sm:$0xff] %vm3962, 0.0
    %4601 = vst.msk [vmem:[#allocation3 + $0x2d8] sm:$0xff] %vm3962, 0.0
    %4602 = vst.msk [vmem:[#allocation3 + $0x2e0] sm:$0x3] %vm4511, 0.0
    %4603 = vst.msk [vmem:[#allocation3 + $0x2e8] sm:$0xff] %vm3962, 0.0
    %4604 = vst.msk [vmem:[#allocation3 + $0x2f0] sm:$0xff] %vm3962, 0.0
    %4605 = vst.msk [vmem:[#allocation3 + $0x2f8] sm:$0x3] %vm4511, 0.0
    %4606 = vst.msk [vmem:[#allocation3 + $0x300] sm:$0xff] %vm3962, 0.0
    %4607 = vst.msk [vmem:[#allocation3 + $0x308] sm:$0xff] %vm3962, 0.0
    %4608 = vst.msk [vmem:[#allocation3 + $0x310] sm:$0x3] %vm4511, 0.0
    %4609 = vst.msk [vmem:[#allocation3 + $0x318] sm:$0xff] %vm3962, 0.0
    %4610 = vst.msk [vmem:[#allocation3 + $0x320] sm:$0xff] %vm3962, 0.0
    %4611 = vst.msk [vmem:[#allocation3 + $0x328] sm:$0x3] %vm4511, 0.0
    %4612 = vst.msk [vmem:[#allocation3 + $0x330] sm:$0xff] %vm3962, 0.0
    %4613 = vst.msk [vmem:[#allocation3 + $0x338] sm:$0xff] %vm3962, 0.0
    %4614 = vst.msk [vmem:[#allocation3 + $0x340] sm:$0x3] %vm4511, 0.0
    %4615 = vst.msk [vmem:[#allocation3 + $0x348] sm:$0xff] %vm3962, 0.0
    %4616 = vst.msk [vmem:[#allocation3 + $0x350] sm:$0xff] %vm3962, 0.0
    %4617 = vst.msk [vmem:[#allocation3 + $0x358] sm:$0x3] %vm4511, 0.0
    %s4618 = scalar_lea.vmem [#allocation3], 24
    %4619 = vst.msk [vmem:[%s4618 + $0x1] sm:$0xff] %vm3962, %v4445
    %4620 = vst.msk [vmem:[%s4618 + $0x9] sm:$0xff] %vm3962, %v4446
    %4621 = vst.msk [vmem:[%s4618 + $0x19] sm:$0xff] %vm3962, %v4447
    %4622 = vst.msk [vmem:[%s4618 + $0x21] sm:$0xff] %vm3962, %v4448
    %4623 = vst.msk [vmem:[%s4618 + $0x31] sm:$0xff] %vm3962, %v4449
    %4624 = vst.msk [vmem:[%s4618 + $0x39] sm:$0xff] %vm3962, %v4450
    %4625 = vst.msk [vmem:[%s4618 + $0x49] sm:$0xff] %vm3962, %v4451
    %4626 = vst.msk [vmem:[%s4618 + $0x51] sm:$0xff] %vm3962, %v4452
    %4627 = vst.msk [vmem:[%s4618 + $0x61] sm:$0xff] %vm3962, %v4453
    %4628 = vst.msk [vmem:[%s4618 + $0x69] sm:$0xff] %vm3962, %v4454
    %4629 = vst.msk [vmem:[%s4618 + $0x79] sm:$0xff] %vm3962, %v4455
    %4630 = vst.msk [vmem:[%s4618 + $0x81] sm:$0xff] %vm3962, %v4456
    %4631 = vst.msk [vmem:[%s4618 + $0x91] sm:$0xff] %vm3962, %v4457
    %4632 = vst.msk [vmem:[%s4618 + $0x99] sm:$0xff] %vm3962, %v4458
    %4633 = vst.msk [vmem:[%s4618 + $0xa9] sm:$0xff] %vm3962, %v4459
    %4634 = vst.msk [vmem:[%s4618 + $0xb1] sm:$0xff] %vm3962, %v4460
    %4635 = vst.msk [vmem:[%s4618 + $0xc1] sm:$0xff] %vm3962, %v4461
    %4636 = vst.msk [vmem:[%s4618 + $0xc9] sm:$0xff] %vm3962, %v4462
    %4637 = vst.msk [vmem:[%s4618 + $0xd9] sm:$0xff] %vm3962, %v4463
    %4638 = vst.msk [vmem:[%s4618 + $0xe1] sm:$0xff] %vm3962, %v4464
    %4639 = vst.msk [vmem:[%s4618 + $0xf1] sm:$0xff] %vm3962, %v4465
    %4640 = vst.msk [vmem:[%s4618 + $0xf9] sm:$0xff] %vm3962, %v4466
    %4641 = vst.msk [vmem:[%s4618 + $0x109] sm:$0xff] %vm3962, %v4467
    %4642 = vst.msk [vmem:[%s4618 + $0x111] sm:$0xff] %vm3962, %v4468
    %4643 = vst.msk [vmem:[%s4618 + $0x121] sm:$0xff] %vm3962, %v4469
    %4644 = vst.msk [vmem:[%s4618 + $0x129] sm:$0xff] %vm3962, %v4470
    %4645 = vst.msk [vmem:[%s4618 + $0x139] sm:$0xff] %vm3962, %v4471
    %4646 = vst.msk [vmem:[%s4618 + $0x141] sm:$0xff] %vm3962, %v4472
    %4647 = vst.msk [vmem:[%s4618 + $0x151] sm:$0xff] %vm3962, %v4473
    %4648 = vst.msk [vmem:[%s4618 + $0x159] sm:$0xff] %vm3962, %v4474
    %4649 = vst.msk [vmem:[%s4618 + $0x169] sm:$0xff] %vm3962, %v4475
    %4650 = vst.msk [vmem:[%s4618 + $0x171] sm:$0xff] %vm3962, %v4476
    %4651 = vst.msk [vmem:[%s4618 + $0x1b1] sm:$0xff] %vm3962, %v4477
    %4652 = vst.msk [vmem:[%s4618 + $0x1b9] sm:$0xff] %vm3962, %v4478
    %4653 = vst.msk [vmem:[%s4618 + $0x1c9] sm:$0xff] %vm3962, %v4479
    %4654 = vst.msk [vmem:[%s4618 + $0x1d1] sm:$0xff] %vm3962, %v4480
    %4655 = vst.msk [vmem:[%s4618 + $0x1e1] sm:$0xff] %vm3962, %v4481
    %4656 = vst.msk [vmem:[%s4618 + $0x1e9] sm:$0xff] %vm3962, %v4482
    %4657 = vst.msk [vmem:[%s4618 + $0x1f9] sm:$0xff] %vm3962, %v4483
    %4658 = vst.msk [vmem:[%s4618 + $0x201] sm:$0xff] %vm3962, %v4484
    %4659 = vst.msk [vmem:[%s4618 + $0x211] sm:$0xff] %vm3962, %v4485
    %4660 = vst.msk [vmem:[%s4618 + $0x219] sm:$0xff] %vm3962, %v4486
    %4661 = vst.msk [vmem:[%s4618 + $0x229] sm:$0xff] %vm3962, %v4487
    %4662 = vst.msk [vmem:[%s4618 + $0x231] sm:$0xff] %vm3962, %v4488
    %4663 = vst.msk [vmem:[%s4618 + $0x241] sm:$0xff] %vm3962, %v4489
    %4664 = vst.msk [vmem:[%s4618 + $0x249] sm:$0xff] %vm3962, %v4490
    %4665 = vst.msk [vmem:[%s4618 + $0x259] sm:$0xff] %vm3962, %v4491
    %4666 = vst.msk [vmem:[%s4618 + $0x261] sm:$0xff] %vm3962, %v4492
    %4667 = vst.msk [vmem:[%s4618 + $0x271] sm:$0xff] %vm3962, %v4493
    %4668 = vst.msk [vmem:[%s4618 + $0x279] sm:$0xff] %vm3962, %v4494
    %4669 = vst.msk [vmem:[%s4618 + $0x289] sm:$0xff] %vm3962, %v4495
    %4670 = vst.msk [vmem:[%s4618 + $0x291] sm:$0xff] %vm3962, %v4496
    %4671 = vst.msk [vmem:[%s4618 + $0x2a1] sm:$0xff] %vm3962, %v4497
    %4672 = vst.msk [vmem:[%s4618 + $0x2a9] sm:$0xff] %vm3962, %v4498
    %4673 = vst.msk [vmem:[%s4618 + $0x2b9] sm:$0xff] %vm3962, %v4499
    %4674 = vst.msk [vmem:[%s4618 + $0x2c1] sm:$0xff] %vm3962, %v4500
    %4675 = vst.msk [vmem:[%s4618 + $0x2d1] sm:$0xff] %vm3962, %v4501
    %4676 = vst.msk [vmem:[%s4618 + $0x2d9] sm:$0xff] %vm3962, %v4502
    %4677 = vst.msk [vmem:[%s4618 + $0x2e9] sm:$0xff] %vm3962, %v4503
    %4678 = vst.msk [vmem:[%s4618 + $0x2f1] sm:$0xff] %vm3962, %v4504
    %4679 = vst.msk [vmem:[%s4618 + $0x301] sm:$0xff] %vm3962, %v4505
    %4680 = vst.msk [vmem:[%s4618 + $0x309] sm:$0xff] %vm3962, %v4506
    %4681 = vst.msk [vmem:[%s4618 + $0x319] sm:$0xff] %vm3962, %v4507
    %4682 = vst.msk [vmem:[%s4618 + $0x321] sm:$0xff] %vm3962, %v4508
    %v4683 = vld [vmem:[#allocation3] sm:$0xff]
    %v4684 = vld [vmem:[#allocation3 + $0x8] sm:$0xff]
    %v4685 = vld [vmem:[#allocation3 + $0x18] sm:$0xff]
    %v4686 = vld [vmem:[#allocation3 + $0x20] sm:$0xff]
    %v4687 = vld [vmem:[#allocation3 + $0x30] sm:$0xff]
    %v4688 = vld [vmem:[#allocation3 + $0x38] sm:$0xff]
    %v4689 = vld [vmem:[#allocation3 + $0x48] sm:$0xff]
    %v4690 = vld [vmem:[#allocation3 + $0x50] sm:$0xff]
    %v4691 = vld [vmem:[#allocation3 + $0x60] sm:$0xff]
    %v4692 = vld [vmem:[#allocation3 + $0x68] sm:$0xff]
    %v4693 = vld [vmem:[#allocation3 + $0x78] sm:$0xff]
    %v4694 = vld [vmem:[#allocation3 + $0x80] sm:$0xff]
    %v4695 = vld [vmem:[#allocation3 + $0x90] sm:$0xff]
    %v4696 = vld [vmem:[#allocation3 + $0x98] sm:$0xff]
    %v4697 = vld [vmem:[#allocation3 + $0xa8] sm:$0xff]
    %v4698 = vld [vmem:[#allocation3 + $0xb0] sm:$0xff]
    %v4699 = vld [vmem:[#allocation3 + $0xc0] sm:$0xff]
    %v4700 = vld [vmem:[#allocation3 + $0xc8] sm:$0xff]
    %v4701 = vld [vmem:[#allocation3 + $0xd8] sm:$0xff]
    %v4702 = vld [vmem:[#allocation3 + $0xe0] sm:$0xff]
    %v4703 = vld [vmem:[#allocation3 + $0xf0] sm:$0xff]
    %v4704 = vld [vmem:[#allocation3 + $0xf8] sm:$0xff]
    %v4705 = vld [vmem:[#allocation3 + $0x108] sm:$0xff]
    %v4706 = vld [vmem:[#allocation3 + $0x110] sm:$0xff]
    %v4707 = vld [vmem:[#allocation3 + $0x120] sm:$0xff]
    %v4708 = vld [vmem:[#allocation3 + $0x128] sm:$0xff]
    %v4709 = vld [vmem:[#allocation3 + $0x138] sm:$0xff]
    %v4710 = vld [vmem:[#allocation3 + $0x140] sm:$0xff]
    %v4711 = vld [vmem:[#allocation3 + $0x150] sm:$0xff]
    %v4712 = vld [vmem:[#allocation3 + $0x158] sm:$0xff]
    %v4713 = vld [vmem:[#allocation3 + $0x168] sm:$0xff]
    %v4714 = vld [vmem:[#allocation3 + $0x170] sm:$0xff]
    %v4715 = vld [vmem:[#allocation3 + $0x1b0] sm:$0xff]
    %v4716 = vld [vmem:[#allocation3 + $0x1b8] sm:$0xff]
    %v4717 = vld [vmem:[#allocation3 + $0x1c8] sm:$0xff]
    %v4718 = vld [vmem:[#allocation3 + $0x1d0] sm:$0xff]
    %v4719 = vld [vmem:[#allocation3 + $0x1e0] sm:$0xff]
    %v4720 = vld [vmem:[#allocation3 + $0x1e8] sm:$0xff]
    %v4721 = vld [vmem:[#allocation3 + $0x1f8] sm:$0xff]
    %v4722 = vld [vmem:[#allocation3 + $0x200] sm:$0xff]
    %v4723 = vld [vmem:[#allocation3 + $0x210] sm:$0xff]
    %v4724 = vld [vmem:[#allocation3 + $0x218] sm:$0xff]
    %v4725 = vld [vmem:[#allocation3 + $0x228] sm:$0xff]
    %v4726 = vld [vmem:[#allocation3 + $0x230] sm:$0xff]
    %v4727 = vld [vmem:[#allocation3 + $0x240] sm:$0xff]
    %v4728 = vld [vmem:[#allocation3 + $0x248] sm:$0xff]
    %v4729 = vld [vmem:[#allocation3 + $0x258] sm:$0xff]
    %v4730 = vld [vmem:[#allocation3 + $0x260] sm:$0xff]
    %v4731 = vld [vmem:[#allocation3 + $0x270] sm:$0xff]
    %v4732 = vld [vmem:[#allocation3 + $0x278] sm:$0xff]
    %v4733 = vld [vmem:[#allocation3 + $0x288] sm:$0xff]
    %v4734 = vld [vmem:[#allocation3 + $0x290] sm:$0xff]
    %v4735 = vld [vmem:[#allocation3 + $0x2a0] sm:$0xff]
    %v4736 = vld [vmem:[#allocation3 + $0x2a8] sm:$0xff]
    %v4737 = vld [vmem:[#allocation3 + $0x2b8] sm:$0xff]
    %v4738 = vld [vmem:[#allocation3 + $0x2c0] sm:$0xff]
    %v4739 = vld [vmem:[#allocation3 + $0x2d0] sm:$0xff]
    %v4740 = vld [vmem:[#allocation3 + $0x2d8] sm:$0xff]
    %v4741 = vld [vmem:[#allocation3 + $0x2e8] sm:$0xff]
    %v4742 = vld [vmem:[#allocation3 + $0x2f0] sm:$0xff]
    %v4743 = vld [vmem:[#allocation3 + $0x300] sm:$0xff]
    %v4744 = vld [vmem:[#allocation3 + $0x308] sm:$0xff]
    %v4745 = vld [vmem:[#allocation3 + $0x318] sm:$0xff]
    %v4746 = vld [vmem:[#allocation3 + $0x320] sm:$0xff]
    %4747 = vst.msk [vmem:[#allocation5] sm:$0xff] %vm3962, %v4683
    %4748 = vst.msk [vmem:[#allocation5 + $0x8] sm:$0xff] %vm3962, %v4684
    %4749 = vst.msk [vmem:[#allocation5 + $0x10] sm:$0xff] %vm3962, %v4685
    %4750 = vst.msk [vmem:[#allocation5 + $0x18] sm:$0xff] %vm3962, %v4686
    %4751 = vst.msk [vmem:[#allocation5 + $0x20] sm:$0xff] %vm3962, %v4687
    %4752 = vst.msk [vmem:[#allocation5 + $0x28] sm:$0xff] %vm3962, %v4688
    %4753 = vst.msk [vmem:[#allocation5 + $0x30] sm:$0xff] %vm3962, %v4689
    %4754 = vst.msk [vmem:[#allocation5 + $0x38] sm:$0xff] %vm3962, %v4690
    %4755 = vst.msk [vmem:[#allocation5 + $0x40] sm:$0xff] %vm3962, %v4691
    %4756 = vst.msk [vmem:[#allocation5 + $0x48] sm:$0xff] %vm3962, %v4692
    %4757 = vst.msk [vmem:[#allocation5 + $0x50] sm:$0xff] %vm3962, %v4693
    %4758 = vst.msk [vmem:[#allocation5 + $0x58] sm:$0xff] %vm3962, %v4694
    %4759 = vst.msk [vmem:[#allocation5 + $0x60] sm:$0xff] %vm3962, %v4695
    %4760 = vst.msk [vmem:[#allocation5 + $0x68] sm:$0xff] %vm3962, %v4696
    %4761 = vst.msk [vmem:[#allocation5 + $0x70] sm:$0xff] %vm3962, %v4697
    %4762 = vst.msk [vmem:[#allocation5 + $0x78] sm:$0xff] %vm3962, %v4698
    %4763 = vst.msk [vmem:[#allocation5 + $0x80] sm:$0xff] %vm3962, %v4699
    %4764 = vst.msk [vmem:[#allocation5 + $0x88] sm:$0xff] %vm3962, %v4700
    %4765 = vst.msk [vmem:[#allocation5 + $0x90] sm:$0xff] %vm3962, %v4701
    %4766 = vst.msk [vmem:[#allocation5 + $0x98] sm:$0xff] %vm3962, %v4702
    %4767 = vst.msk [vmem:[#allocation5 + $0xa0] sm:$0xff] %vm3962, %v4703
    %4768 = vst.msk [vmem:[#allocation5 + $0xa8] sm:$0xff] %vm3962, %v4704
    %4769 = vst.msk [vmem:[#allocation5 + $0xb0] sm:$0xff] %vm3962, %v4705
    %4770 = vst.msk [vmem:[#allocation5 + $0xb8] sm:$0xff] %vm3962, %v4706
    %4771 = vst.msk [vmem:[#allocation5 + $0xc0] sm:$0xff] %vm3962, %v4707
    %4772 = vst.msk [vmem:[#allocation5 + $0xc8] sm:$0xff] %vm3962, %v4708
    %4773 = vst.msk [vmem:[#allocation5 + $0xd0] sm:$0xff] %vm3962, %v4709
    %4774 = vst.msk [vmem:[#allocation5 + $0xd8] sm:$0xff] %vm3962, %v4710
    %4775 = vst.msk [vmem:[#allocation5 + $0xe0] sm:$0xff] %vm3962, %v4711
    %4776 = vst.msk [vmem:[#allocation5 + $0xe8] sm:$0xff] %vm3962, %v4712
    %4777 = vst.msk [vmem:[#allocation5 + $0xf0] sm:$0xff] %vm3962, %v4713
    %4778 = vst.msk [vmem:[#allocation5 + $0xf8] sm:$0xff] %vm3962, %v4714
    %4779 = vst.msk [vmem:[#allocation5 + $0x100] sm:$0xff] %vm3962, %v4715
    %4780 = vst.msk [vmem:[#allocation5 + $0x108] sm:$0xff] %vm3962, %v4716
    %4781 = vst.msk [vmem:[#allocation5 + $0x110] sm:$0xff] %vm3962, %v4717
    %4782 = vst.msk [vmem:[#allocation5 + $0x118] sm:$0xff] %vm3962, %v4718
    %4783 = vst.msk [vmem:[#allocation5 + $0x120] sm:$0xff] %vm3962, %v4719
    %4784 = vst.msk [vmem:[#allocation5 + $0x128] sm:$0xff] %vm3962, %v4720
    %4785 = vst.msk [vmem:[#allocation5 + $0x130] sm:$0xff] %vm3962, %v4721
    %4786 = vst.msk [vmem:[#allocation5 + $0x138] sm:$0xff] %vm3962, %v4722
    %4787 = vst.msk [vmem:[#allocation5 + $0x140] sm:$0xff] %vm3962, %v4723
    %4788 = vst.msk [vmem:[#allocation5 + $0x148] sm:$0xff] %vm3962, %v4724
    %4789 = vst.msk [vmem:[#allocation5 + $0x150] sm:$0xff] %vm3962, %v4725
    %4790 = vst.msk [vmem:[#allocation5 + $0x158] sm:$0xff] %vm3962, %v4726
    %4791 = vst.msk [vmem:[#allocation5 + $0x160] sm:$0xff] %vm3962, %v4727
    %4792 = vst.msk [vmem:[#allocation5 + $0x168] sm:$0xff] %vm3962, %v4728
    %4793 = vst.msk [vmem:[#allocation5 + $0x170] sm:$0xff] %vm3962, %v4729
    %4794 = vst.msk [vmem:[#allocation5 + $0x178] sm:$0xff] %vm3962, %v4730
    %4795 = vst.msk [vmem:[#allocation5 + $0x180] sm:$0xff] %vm3962, %v4731
    %4796 = vst.msk [vmem:[#allocation5 + $0x188] sm:$0xff] %vm3962, %v4732
    %4797 = vst.msk [vmem:[#allocation5 + $0x190] sm:$0xff] %vm3962, %v4733
    %4798 = vst.msk [vmem:[#allocation5 + $0x198] sm:$0xff] %vm3962, %v4734
    %4799 = vst.msk [vmem:[#allocation5 + $0x1a0] sm:$0xff] %vm3962, %v4735
    %4800 = vst.msk [vmem:[#allocation5 + $0x1a8] sm:$0xff] %vm3962, %v4736
    %4801 = vst.msk [vmem:[#allocation5 + $0x1b0] sm:$0xff] %vm3962, %v4737
    %4802 = vst.msk [vmem:[#allocation5 + $0x1b8] sm:$0xff] %vm3962, %v4738
    %4803 = vst.msk [vmem:[#allocation5 + $0x1c0] sm:$0xff] %vm3962, %v4739
    %4804 = vst.msk [vmem:[#allocation5 + $0x1c8] sm:$0xff] %vm3962, %v4740
    %4805 = vst.msk [vmem:[#allocation5 + $0x1d0] sm:$0xff] %vm3962, %v4741
    %4806 = vst.msk [vmem:[#allocation5 + $0x1d8] sm:$0xff] %vm3962, %v4742
    %4807 = vst.msk [vmem:[#allocation5 + $0x1e0] sm:$0xff] %vm3962, %v4743
    %4808 = vst.msk [vmem:[#allocation5 + $0x1e8] sm:$0xff] %vm3962, %v4744
    %4809 = vst.msk [vmem:[#allocation5 + $0x1f0] sm:$0xff] %vm3962, %v4745
    %4810 = vst.msk [vmem:[#allocation5 + $0x1f8] sm:$0xff] %vm3962, %v4746
    %v4811 = vld [vmem:[#allocation3 + $0x1] sm:$0xff]
    %v4812 = vld [vmem:[#allocation3 + $0x9] sm:$0xff]
    %v4813 = vld [vmem:[#allocation3 + $0x19] sm:$0xff]
    %v4814 = vld [vmem:[#allocation3 + $0x21] sm:$0xff]
    %v4815 = vld [vmem:[#allocation3 + $0x31] sm:$0xff]
    %v4816 = vld [vmem:[#allocation3 + $0x39] sm:$0xff]
    %v4817 = vld [vmem:[#allocation3 + $0x49] sm:$0xff]
    %v4818 = vld [vmem:[#allocation3 + $0x51] sm:$0xff]
    %v4819 = vld [vmem:[#allocation3 + $0x61] sm:$0xff]
    %v4820 = vld [vmem:[#allocation3 + $0x69] sm:$0xff]
    %v4821 = vld [vmem:[#allocation3 + $0x79] sm:$0xff]
    %v4822 = vld [vmem:[#allocation3 + $0x81] sm:$0xff]
    %v4823 = vld [vmem:[#allocation3 + $0x91] sm:$0xff]
    %v4824 = vld [vmem:[#allocation3 + $0x99] sm:$0xff]
    %v4825 = vld [vmem:[#allocation3 + $0xa9] sm:$0xff]
    %v4826 = vld [vmem:[#allocation3 + $0xb1] sm:$0xff]
    %v4827 = vld [vmem:[#allocation3 + $0xc1] sm:$0xff]
    %v4828 = vld [vmem:[#allocation3 + $0xc9] sm:$0xff]
    %v4829 = vld [vmem:[#allocation3 + $0xd9] sm:$0xff]
    %v4830 = vld [vmem:[#allocation3 + $0xe1] sm:$0xff]
    %v4831 = vld [vmem:[#allocation3 + $0xf1] sm:$0xff]
    %v4832 = vld [vmem:[#allocation3 + $0xf9] sm:$0xff]
    %v4833 = vld [vmem:[#allocation3 + $0x109] sm:$0xff]
    %v4834 = vld [vmem:[#allocation3 + $0x111] sm:$0xff]
    %v4835 = vld [vmem:[#allocation3 + $0x121] sm:$0xff]
    %v4836 = vld [vmem:[#allocation3 + $0x129] sm:$0xff]
    %v4837 = vld [vmem:[#allocation3 + $0x139] sm:$0xff]
    %v4838 = vld [vmem:[#allocation3 + $0x141] sm:$0xff]
    %v4839 = vld [vmem:[#allocation3 + $0x151] sm:$0xff]
    %v4840 = vld [vmem:[#allocation3 + $0x159] sm:$0xff]
    %v4841 = vld [vmem:[#allocation3 + $0x169] sm:$0xff]
    %v4842 = vld [vmem:[#allocation3 + $0x171] sm:$0xff]
    %v4843 = vld [vmem:[#allocation3 + $0x1b1] sm:$0xff]
    %v4844 = vld [vmem:[#allocation3 + $0x1b9] sm:$0xff]
    %v4845 = vld [vmem:[#allocation3 + $0x1c9] sm:$0xff]
    %v4846 = vld [vmem:[#allocation3 + $0x1d1] sm:$0xff]
    %v4847 = vld [vmem:[#allocation3 + $0x1e1] sm:$0xff]
    %v4848 = vld [vmem:[#allocation3 + $0x1e9] sm:$0xff]
    %v4849 = vld [vmem:[#allocation3 + $0x1f9] sm:$0xff]
    %v4850 = vld [vmem:[#allocation3 + $0x201] sm:$0xff]
    %v4851 = vld [vmem:[#allocation3 + $0x211] sm:$0xff]
    %v4852 = vld [vmem:[#allocation3 + $0x219] sm:$0xff]
    %v4853 = vld [vmem:[#allocation3 + $0x229] sm:$0xff]
    %v4854 = vld [vmem:[#allocation3 + $0x231] sm:$0xff]
    %v4855 = vld [vmem:[#allocation3 + $0x241] sm:$0xff]
    %v4856 = vld [vmem:[#allocation3 + $0x249] sm:$0xff]
    %v4857 = vld [vmem:[#allocation3 + $0x259] sm:$0xff]
    %v4858 = vld [vmem:[#allocation3 + $0x261] sm:$0xff]
    %v4859 = vld [vmem:[#allocation3 + $0x271] sm:$0xff]
    %v4860 = vld [vmem:[#allocation3 + $0x279] sm:$0xff]
    %v4861 = vld [vmem:[#allocation3 + $0x289] sm:$0xff]
    %v4862 = vld [vmem:[#allocation3 + $0x291] sm:$0xff]
    %v4863 = vld [vmem:[#allocation3 + $0x2a1] sm:$0xff]
    %v4864 = vld [vmem:[#allocation3 + $0x2a9] sm:$0xff]
    %v4865 = vld [vmem:[#allocation3 + $0x2b9] sm:$0xff]
    %v4866 = vld [vmem:[#allocation3 + $0x2c1] sm:$0xff]
    %v4867 = vld [vmem:[#allocation3 + $0x2d1] sm:$0xff]
    %v4868 = vld [vmem:[#allocation3 + $0x2d9] sm:$0xff]
    %v4869 = vld [vmem:[#allocation3 + $0x2e9] sm:$0xff]
    %v4870 = vld [vmem:[#allocation3 + $0x2f1] sm:$0xff]
    %v4871 = vld [vmem:[#allocation3 + $0x301] sm:$0xff]
    %v4872 = vld [vmem:[#allocation3 + $0x309] sm:$0xff]
    %v4873 = vld [vmem:[#allocation3 + $0x319] sm:$0xff]
    %v4874 = vld [vmem:[#allocation3 + $0x321] sm:$0xff]
    %4939 = vrot.lane.b32.xlu0 %v4811, 8
    %v4940 = vpop.permute.xlu0 %4939
    %4941 = vrot.lane.b32.xlu0 %v4812, 8
    %v4942 = vpop.permute.xlu0 %4941
    %4943 = vrot.lane.b32.xlu0 %v4813, 8
    %v4944 = vpop.permute.xlu0 %4943
    %4945 = vrot.lane.b32.xlu0 %v4814, 8
    %v4946 = vpop.permute.xlu0 %4945
    %4947 = vrot.lane.b32.xlu0 %v4815, 8
    %v4948 = vpop.permute.xlu0 %4947
    %4949 = vrot.lane.b32.xlu0 %v4816, 8
    %v4950 = vpop.permute.xlu0 %4949
    %4951 = vrot.lane.b32.xlu0 %v4817, 8
    %v4952 = vpop.permute.xlu0 %4951
    %4953 = vrot.lane.b32.xlu0 %v4818, 8
    %v4954 = vpop.permute.xlu0 %4953
    %4955 = vrot.lane.b32.xlu0 %v4819, 8
    %v4956 = vpop.permute.xlu0 %4955
    %4957 = vrot.lane.b32.xlu0 %v4820, 8
    %v4958 = vpop.permute.xlu0 %4957
    %4959 = vrot.lane.b32.xlu0 %v4821, 8
    %v4960 = vpop.permute.xlu0 %4959
    %4961 = vrot.lane.b32.xlu0 %v4822, 8
    %v4962 = vpop.permute.xlu0 %4961
    %4963 = vrot.lane.b32.xlu0 %v4823, 8
    %v4964 = vpop.permute.xlu0 %4963
    %4965 = vrot.lane.b32.xlu0 %v4824, 8
    %v4966 = vpop.permute.xlu0 %4965
    %4967 = vrot.lane.b32.xlu0 %v4825, 8
    %v4968 = vpop.permute.xlu0 %4967
    %4969 = vrot.lane.b32.xlu0 %v4826, 8
    %v4970 = vpop.permute.xlu0 %4969
    %4971 = vrot.lane.b32.xlu0 %v4827, 8
    %v4972 = vpop.permute.xlu0 %4971
    %4973 = vrot.lane.b32.xlu0 %v4828, 8
    %v4974 = vpop.permute.xlu0 %4973
    %4975 = vrot.lane.b32.xlu0 %v4829, 8
    %v4976 = vpop.permute.xlu0 %4975
    %4977 = vrot.lane.b32.xlu0 %v4830, 8
    %v4978 = vpop.permute.xlu0 %4977
    %4979 = vrot.lane.b32.xlu0 %v4831, 8
    %v4980 = vpop.permute.xlu0 %4979
    %4981 = vrot.lane.b32.xlu0 %v4832, 8
    %v4982 = vpop.permute.xlu0 %4981
    %4983 = vrot.lane.b32.xlu0 %v4833, 8
    %v4984 = vpop.permute.xlu0 %4983
    %4985 = vrot.lane.b32.xlu0 %v4834, 8
    %v4986 = vpop.permute.xlu0 %4985
    %4987 = vrot.lane.b32.xlu0 %v4835, 8
    %v4988 = vpop.permute.xlu0 %4987
    %4989 = vrot.lane.b32.xlu0 %v4836, 8
    %v4990 = vpop.permute.xlu0 %4989
    %4991 = vrot.lane.b32.xlu0 %v4837, 8
    %v4992 = vpop.permute.xlu0 %4991
    %4993 = vrot.lane.b32.xlu0 %v4838, 8
    %v4994 = vpop.permute.xlu0 %4993
    %4995 = vrot.lane.b32.xlu0 %v4839, 8
    %v4996 = vpop.permute.xlu0 %4995
    %4997 = vrot.lane.b32.xlu0 %v4840, 8
    %v4998 = vpop.permute.xlu0 %4997
    %4999 = vrot.lane.b32.xlu0 %v4841, 8
    %v5000 = vpop.permute.xlu0 %4999
    %5001 = vrot.lane.b32.xlu0 %v4842, 8
    %v5002 = vpop.permute.xlu0 %5001
    %5003 = vrot.lane.b32.xlu0 %v4843, 8
    %v5004 = vpop.permute.xlu0 %5003
    %5005 = vrot.lane.b32.xlu0 %v4844, 8
    %v5006 = vpop.permute.xlu0 %5005
    %5007 = vrot.lane.b32.xlu0 %v4845, 8
    %v5008 = vpop.permute.xlu0 %5007
    %5009 = vrot.lane.b32.xlu0 %v4846, 8
    %v5010 = vpop.permute.xlu0 %5009
    %5011 = vrot.lane.b32.xlu0 %v4847, 8
    %v5012 = vpop.permute.xlu0 %5011
    %5013 = vrot.lane.b32.xlu0 %v4848, 8
    %v5014 = vpop.permute.xlu0 %5013
    %5015 = vrot.lane.b32.xlu0 %v4849, 8
    %v5016 = vpop.permute.xlu0 %5015
    %5017 = vrot.lane.b32.xlu0 %v4850, 8
    %v5018 = vpop.permute.xlu0 %5017
    %5019 = vrot.lane.b32.xlu0 %v4851, 8
    %v5020 = vpop.permute.xlu0 %5019
    %5021 = vrot.lane.b32.xlu0 %v4852, 8
    %v5022 = vpop.permute.xlu0 %5021
    %5023 = vrot.lane.b32.xlu0 %v4853, 8
    %v5024 = vpop.permute.xlu0 %5023
    %5025 = vrot.lane.b32.xlu0 %v4854, 8
    %v5026 = vpop.permute.xlu0 %5025
    %5027 = vrot.lane.b32.xlu0 %v4855, 8
    %v5028 = vpop.permute.xlu0 %5027
    %5029 = vrot.lane.b32.xlu0 %v4856, 8
    %v5030 = vpop.permute.xlu0 %5029
    %5031 = vrot.lane.b32.xlu0 %v4857, 8
    %v5032 = vpop.permute.xlu0 %5031
    %5033 = vrot.lane.b32.xlu0 %v4858, 8
    %v5034 = vpop.permute.xlu0 %5033
    %5035 = vrot.lane.b32.xlu0 %v4859, 8
    %v5036 = vpop.permute.xlu0 %5035
    %5037 = vrot.lane.b32.xlu0 %v4860, 8
    %v5038 = vpop.permute.xlu0 %5037
    %5039 = vrot.lane.b32.xlu0 %v4861, 8
    %v5040 = vpop.permute.xlu0 %5039
    %5041 = vrot.lane.b32.xlu0 %v4862, 8
    %v5042 = vpop.permute.xlu0 %5041
    %5043 = vrot.lane.b32.xlu0 %v4863, 8
    %v5044 = vpop.permute.xlu0 %5043
    %5045 = vrot.lane.b32.xlu0 %v4864, 8
    %v5046 = vpop.permute.xlu0 %5045
    %5047 = vrot.lane.b32.xlu0 %v4865, 8
    %v5048 = vpop.permute.xlu0 %5047
    %5049 = vrot.lane.b32.xlu0 %v4866, 8
    %v5050 = vpop.permute.xlu0 %5049
    %5051 = vrot.lane.b32.xlu0 %v4867, 8
    %v5052 = vpop.permute.xlu0 %5051
    %5053 = vrot.lane.b32.xlu0 %v4868, 8
    %v5054 = vpop.permute.xlu0 %5053
    %5055 = vrot.lane.b32.xlu0 %v4869, 8
    %v5056 = vpop.permute.xlu0 %5055
    %5057 = vrot.lane.b32.xlu0 %v4870, 8
    %v5058 = vpop.permute.xlu0 %5057
    %5059 = vrot.lane.b32.xlu0 %v4871, 8
    %v5060 = vpop.permute.xlu0 %5059
    %5061 = vrot.lane.b32.xlu0 %v4872, 8
    %v5062 = vpop.permute.xlu0 %5061
    %5063 = vrot.lane.b32.xlu0 %v4873, 8
    %v5064 = vpop.permute.xlu0 %5063
    %5065 = vrot.lane.b32.xlu0 %v4874, 8
    %v5066 = vpop.permute.xlu0 %5065
    %vm5131 = vcmask 130112
    %5132 = vst.msk [vmem:[#allocation5] sm:$0xff] %vm5131, %v4940
    %5133 = vst.msk [vmem:[#allocation5 + $0x8] sm:$0xff] %vm5131, %v4942
    %5134 = vst.msk [vmem:[#allocation5 + $0x10] sm:$0xff] %vm5131, %v4944
    %5135 = vst.msk [vmem:[#allocation5 + $0x18] sm:$0xff] %vm5131, %v4946
    %5136 = vst.msk [vmem:[#allocation5 + $0x20] sm:$0xff] %vm5131, %v4948
    %5137 = vst.msk [vmem:[#allocation5 + $0x28] sm:$0xff] %vm5131, %v4950
    %5138 = vst.msk [vmem:[#allocation5 + $0x30] sm:$0xff] %vm5131, %v4952
    %5139 = vst.msk [vmem:[#allocation5 + $0x38] sm:$0xff] %vm5131, %v4954
    %5140 = vst.msk [vmem:[#allocation5 + $0x40] sm:$0xff] %vm5131, %v4956
    %5141 = vst.msk [vmem:[#allocation5 + $0x48] sm:$0xff] %vm5131, %v4958
    %5142 = vst.msk [vmem:[#allocation5 + $0x50] sm:$0xff] %vm5131, %v4960
    %5143 = vst.msk [vmem:[#allocation5 + $0x58] sm:$0xff] %vm5131, %v4962
    %5144 = vst.msk [vmem:[#allocation5 + $0x60] sm:$0xff] %vm5131, %v4964
    %5145 = vst.msk [vmem:[#allocation5 + $0x68] sm:$0xff] %vm5131, %v4966
    %5146 = vst.msk [vmem:[#allocation5 + $0x70] sm:$0xff] %vm5131, %v4968
    %5147 = vst.msk [vmem:[#allocation5 + $0x78] sm:$0xff] %vm5131, %v4970
    %5148 = vst.msk [vmem:[#allocation5 + $0x80] sm:$0xff] %vm5131, %v4972
    %5149 = vst.msk [vmem:[#allocation5 + $0x88] sm:$0xff] %vm5131, %v4974
    %5150 = vst.msk [vmem:[#allocation5 + $0x90] sm:$0xff] %vm5131, %v4976
    %5151 = vst.msk [vmem:[#allocation5 + $0x98] sm:$0xff] %vm5131, %v4978
    %5152 = vst.msk [vmem:[#allocation5 + $0xa0] sm:$0xff] %vm5131, %v4980
    %5153 = vst.msk [vmem:[#allocation5 + $0xa8] sm:$0xff] %vm5131, %v4982
    %5154 = vst.msk [vmem:[#allocation5 + $0xb0] sm:$0xff] %vm5131, %v4984
    %5155 = vst.msk [vmem:[#allocation5 + $0xb8] sm:$0xff] %vm5131, %v4986
    %5156 = vst.msk [vmem:[#allocation5 + $0xc0] sm:$0xff] %vm5131, %v4988
    %5157 = vst.msk [vmem:[#allocation5 + $0xc8] sm:$0xff] %vm5131, %v4990
    %5158 = vst.msk [vmem:[#allocation5 + $0xd0] sm:$0xff] %vm5131, %v4992
    %5159 = vst.msk [vmem:[#allocation5 + $0xd8] sm:$0xff] %vm5131, %v4994
    %5160 = vst.msk [vmem:[#allocation5 + $0xe0] sm:$0xff] %vm5131, %v4996
    %5161 = vst.msk [vmem:[#allocation5 + $0xe8] sm:$0xff] %vm5131, %v4998
    %5162 = vst.msk [vmem:[#allocation5 + $0xf0] sm:$0xff] %vm5131, %v5000
    %5163 = vst.msk [vmem:[#allocation5 + $0xf8] sm:$0xff] %vm5131, %v5002
    %5164 = vst.msk [vmem:[#allocation5 + $0x100] sm:$0xff] %vm5131, %v5004
    %5165 = vst.msk [vmem:[#allocation5 + $0x108] sm:$0xff] %vm5131, %v5006
    %5166 = vst.msk [vmem:[#allocation5 + $0x110] sm:$0xff] %vm5131, %v5008
    %5167 = vst.msk [vmem:[#allocation5 + $0x118] sm:$0xff] %vm5131, %v5010
    %5168 = vst.msk [vmem:[#allocation5 + $0x120] sm:$0xff] %vm5131, %v5012
    %5169 = vst.msk [vmem:[#allocation5 + $0x128] sm:$0xff] %vm5131, %v5014
    %5170 = vst.msk [vmem:[#allocation5 + $0x130] sm:$0xff] %vm5131, %v5016
    %5171 = vst.msk [vmem:[#allocation5 + $0x138] sm:$0xff] %vm5131, %v5018
    %5172 = vst.msk [vmem:[#allocation5 + $0x140] sm:$0xff] %vm5131, %v5020
    %5173 = vst.msk [vmem:[#allocation5 + $0x148] sm:$0xff] %vm5131, %v5022
    %5174 = vst.msk [vmem:[#allocation5 + $0x150] sm:$0xff] %vm5131, %v5024
    %5175 = vst.msk [vmem:[#allocation5 + $0x158] sm:$0xff] %vm5131, %v5026
    %5176 = vst.msk [vmem:[#allocation5 + $0x160] sm:$0xff] %vm5131, %v5028
    %5177 = vst.msk [vmem:[#allocation5 + $0x168] sm:$0xff] %vm5131, %v5030
    %5178 = vst.msk [vmem:[#allocation5 + $0x170] sm:$0xff] %vm5131, %v5032
    %5179 = vst.msk [vmem:[#allocation5 + $0x178] sm:$0xff] %vm5131, %v5034
    %5180 = vst.msk [vmem:[#allocation5 + $0x180] sm:$0xff] %vm5131, %v5036
    %5181 = vst.msk [vmem:[#allocation5 + $0x188] sm:$0xff] %vm5131, %v5038
    %5182 = vst.msk [vmem:[#allocation5 + $0x190] sm:$0xff] %vm5131, %v5040
    %5183 = vst.msk [vmem:[#allocation5 + $0x198] sm:$0xff] %vm5131, %v5042
    %5184 = vst.msk [vmem:[#allocation5 + $0x1a0] sm:$0xff] %vm5131, %v5044
    %5185 = vst.msk [vmem:[#allocation5 + $0x1a8] sm:$0xff] %vm5131, %v5046
    %5186 = vst.msk [vmem:[#allocation5 + $0x1b0] sm:$0xff] %vm5131, %v5048
    %5187 = vst.msk [vmem:[#allocation5 + $0x1b8] sm:$0xff] %vm5131, %v5050
    %5188 = vst.msk [vmem:[#allocation5 + $0x1c0] sm:$0xff] %vm5131, %v5052
    %5189 = vst.msk [vmem:[#allocation5 + $0x1c8] sm:$0xff] %vm5131, %v5054
    %5190 = vst.msk [vmem:[#allocation5 + $0x1d0] sm:$0xff] %vm5131, %v5056
    %5191 = vst.msk [vmem:[#allocation5 + $0x1d8] sm:$0xff] %vm5131, %v5058
    %5192 = vst.msk [vmem:[#allocation5 + $0x1e0] sm:$0xff] %vm5131, %v5060
    %5193 = vst.msk [vmem:[#allocation5 + $0x1e8] sm:$0xff] %vm5131, %v5062
    %5194 = vst.msk [vmem:[#allocation5 + $0x1f0] sm:$0xff] %vm5131, %v5064
    %5195 = vst.msk [vmem:[#allocation5 + $0x1f8] sm:$0xff] %vm5131, %v5066
    %v5196 = vld [vmem:[#allocation3 + $0x2] sm:$0xff]
    %v5197 = vld [vmem:[#allocation3 + $0xa] sm:$0xff]
    %v5198 = vld [vmem:[#allocation3 + $0x1a] sm:$0xff]
    %v5199 = vld [vmem:[#allocation3 + $0x22] sm:$0xff]
    %v5200 = vld [vmem:[#allocation3 + $0x32] sm:$0xff]
    %v5201 = vld [vmem:[#allocation3 + $0x3a] sm:$0xff]
    %v5202 = vld [vmem:[#allocation3 + $0x4a] sm:$0xff]
    %v5203 = vld [vmem:[#allocation3 + $0x52] sm:$0xff]
    %v5204 = vld [vmem:[#allocation3 + $0x62] sm:$0xff]
    %v5205 = vld [vmem:[#allocation3 + $0x6a] sm:$0xff]
    %v5206 = vld [vmem:[#allocation3 + $0x7a] sm:$0xff]
    %v5207 = vld [vmem:[#allocation3 + $0x82] sm:$0xff]
    %v5208 = vld [vmem:[#allocation3 + $0x92] sm:$0xff]
    %v5209 = vld [vmem:[#allocation3 + $0x9a] sm:$0xff]
    %v5210 = vld [vmem:[#allocation3 + $0xaa] sm:$0xff]
    %v5211 = vld [vmem:[#allocation3 + $0xb2] sm:$0xff]
    %v5212 = vld [vmem:[#allocation3 + $0xc2] sm:$0xff]
    %v5213 = vld [vmem:[#allocation3 + $0xca] sm:$0xff]
    %v5214 = vld [vmem:[#allocation3 + $0xda] sm:$0xff]
    %v5215 = vld [vmem:[#allocation3 + $0xe2] sm:$0xff]
    %v5216 = vld [vmem:[#allocation3 + $0xf2] sm:$0xff]
    %v5217 = vld [vmem:[#allocation3 + $0xfa] sm:$0xff]
    %v5218 = vld [vmem:[#allocation3 + $0x10a] sm:$0xff]
    %v5219 = vld [vmem:[#allocation3 + $0x112] sm:$0xff]
    %v5220 = vld [vmem:[#allocation3 + $0x122] sm:$0xff]
    %v5221 = vld [vmem:[#allocation3 + $0x12a] sm:$0xff]
    %v5222 = vld [vmem:[#allocation3 + $0x13a] sm:$0xff]
    %v5223 = vld [vmem:[#allocation3 + $0x142] sm:$0xff]
    %v5224 = vld [vmem:[#allocation3 + $0x152] sm:$0xff]
    %v5225 = vld [vmem:[#allocation3 + $0x15a] sm:$0xff]
    %v5226 = vld [vmem:[#allocation3 + $0x16a] sm:$0xff]
    %v5227 = vld [vmem:[#allocation3 + $0x172] sm:$0xff]
    %v5228 = vld [vmem:[#allocation3 + $0x1b2] sm:$0xff]
    %v5229 = vld [vmem:[#allocation3 + $0x1ba] sm:$0xff]
    %v5230 = vld [vmem:[#allocation3 + $0x1ca] sm:$0xff]
    %v5231 = vld [vmem:[#allocation3 + $0x1d2] sm:$0xff]
    %v5232 = vld [vmem:[#allocation3 + $0x1e2] sm:$0xff]
    %v5233 = vld [vmem:[#allocation3 + $0x1ea] sm:$0xff]
    %v5234 = vld [vmem:[#allocation3 + $0x1fa] sm:$0xff]
    %v5235 = vld [vmem:[#allocation3 + $0x202] sm:$0xff]
    %v5236 = vld [vmem:[#allocation3 + $0x212] sm:$0xff]
    %v5237 = vld [vmem:[#allocation3 + $0x21a] sm:$0xff]
    %v5238 = vld [vmem:[#allocation3 + $0x22a] sm:$0xff]
    %v5239 = vld [vmem:[#allocation3 + $0x232] sm:$0xff]
    %v5240 = vld [vmem:[#allocation3 + $0x242] sm:$0xff]
    %v5241 = vld [vmem:[#allocation3 + $0x24a] sm:$0xff]
    %v5242 = vld [vmem:[#allocation3 + $0x25a] sm:$0xff]
    %v5243 = vld [vmem:[#allocation3 + $0x262] sm:$0xff]
    %v5244 = vld [vmem:[#allocation3 + $0x272] sm:$0xff]
    %v5245 = vld [vmem:[#allocation3 + $0x27a] sm:$0xff]
    %v5246 = vld [vmem:[#allocation3 + $0x28a] sm:$0xff]
    %v5247 = vld [vmem:[#allocation3 + $0x292] sm:$0xff]
    %v5248 = vld [vmem:[#allocation3 + $0x2a2] sm:$0xff]
    %v5249 = vld [vmem:[#allocation3 + $0x2aa] sm:$0xff]
    %v5250 = vld [vmem:[#allocation3 + $0x2ba] sm:$0xff]
    %v5251 = vld [vmem:[#allocation3 + $0x2c2] sm:$0xff]
    %v5252 = vld [vmem:[#allocation3 + $0x2d2] sm:$0xff]
    %v5253 = vld [vmem:[#allocation3 + $0x2da] sm:$0xff]
    %v5254 = vld [vmem:[#allocation3 + $0x2ea] sm:$0xff]
    %v5255 = vld [vmem:[#allocation3 + $0x2f2] sm:$0xff]
    %v5256 = vld [vmem:[#allocation3 + $0x302] sm:$0xff]
    %v5257 = vld [vmem:[#allocation3 + $0x30a] sm:$0xff]
    %v5258 = vld [vmem:[#allocation3 + $0x31a] sm:$0xff]
    %v5259 = vld [vmem:[#allocation3 + $0x322] sm:$0xff]
    %5324 = vrot.lane.b32.xlu0 %v5196, 16
    %v5325 = vpop.permute.xlu0 %5324
    %5326 = vrot.lane.b32.xlu0 %v5197, 16
    %v5327 = vpop.permute.xlu0 %5326
    %5328 = vrot.lane.b32.xlu0 %v5198, 16
    %v5329 = vpop.permute.xlu0 %5328
    %5330 = vrot.lane.b32.xlu0 %v5199, 16
    %v5331 = vpop.permute.xlu0 %5330
    %5332 = vrot.lane.b32.xlu0 %v5200, 16
    %v5333 = vpop.permute.xlu0 %5332
    %5334 = vrot.lane.b32.xlu0 %v5201, 16
    %v5335 = vpop.permute.xlu0 %5334
    %5336 = vrot.lane.b32.xlu0 %v5202, 16
    %v5337 = vpop.permute.xlu0 %5336
    %5338 = vrot.lane.b32.xlu0 %v5203, 16
    %v5339 = vpop.permute.xlu0 %5338
    %5340 = vrot.lane.b32.xlu0 %v5204, 16
    %v5341 = vpop.permute.xlu0 %5340
    %5342 = vrot.lane.b32.xlu0 %v5205, 16
    %v5343 = vpop.permute.xlu0 %5342
    %5344 = vrot.lane.b32.xlu0 %v5206, 16
    %v5345 = vpop.permute.xlu0 %5344
    %5346 = vrot.lane.b32.xlu0 %v5207, 16
    %v5347 = vpop.permute.xlu0 %5346
    %5348 = vrot.lane.b32.xlu0 %v5208, 16
    %v5349 = vpop.permute.xlu0 %5348
    %5350 = vrot.lane.b32.xlu0 %v5209, 16
    %v5351 = vpop.permute.xlu0 %5350
    %5352 = vrot.lane.b32.xlu0 %v5210, 16
    %v5353 = vpop.permute.xlu0 %5352
    %5354 = vrot.lane.b32.xlu0 %v5211, 16
    %v5355 = vpop.permute.xlu0 %5354
    %5356 = vrot.lane.b32.xlu0 %v5212, 16
    %v5357 = vpop.permute.xlu0 %5356
    %5358 = vrot.lane.b32.xlu0 %v5213, 16
    %v5359 = vpop.permute.xlu0 %5358
    %5360 = vrot.lane.b32.xlu0 %v5214, 16
    %v5361 = vpop.permute.xlu0 %5360
    %5362 = vrot.lane.b32.xlu0 %v5215, 16
    %v5363 = vpop.permute.xlu0 %5362
    %5364 = vrot.lane.b32.xlu0 %v5216, 16
    %v5365 = vpop.permute.xlu0 %5364
    %5366 = vrot.lane.b32.xlu0 %v5217, 16
    %v5367 = vpop.permute.xlu0 %5366
    %5368 = vrot.lane.b32.xlu0 %v5218, 16
    %v5369 = vpop.permute.xlu0 %5368
    %5370 = vrot.lane.b32.xlu0 %v5219, 16
    %v5371 = vpop.permute.xlu0 %5370
    %5372 = vrot.lane.b32.xlu0 %v5220, 16
    %v5373 = vpop.permute.xlu0 %5372
    %5374 = vrot.lane.b32.xlu0 %v5221, 16
    %v5375 = vpop.permute.xlu0 %5374
    %5376 = vrot.lane.b32.xlu0 %v5222, 16
    %v5377 = vpop.permute.xlu0 %5376
    %5378 = vrot.lane.b32.xlu0 %v5223, 16
    %v5379 = vpop.permute.xlu0 %5378
    %5380 = vrot.lane.b32.xlu0 %v5224, 16
    %v5381 = vpop.permute.xlu0 %5380
    %5382 = vrot.lane.b32.xlu0 %v5225, 16
    %v5383 = vpop.permute.xlu0 %5382
    %5384 = vrot.lane.b32.xlu0 %v5226, 16
    %v5385 = vpop.permute.xlu0 %5384
    %5386 = vrot.lane.b32.xlu0 %v5227, 16
    %v5387 = vpop.permute.xlu0 %5386
    %5388 = vrot.lane.b32.xlu0 %v5228, 16
    %v5389 = vpop.permute.xlu0 %5388
    %5390 = vrot.lane.b32.xlu0 %v5229, 16
    %v5391 = vpop.permute.xlu0 %5390
    %5392 = vrot.lane.b32.xlu0 %v5230, 16
    %v5393 = vpop.permute.xlu0 %5392
    %5394 = vrot.lane.b32.xlu0 %v5231, 16
    %v5395 = vpop.permute.xlu0 %5394
    %5396 = vrot.lane.b32.xlu0 %v5232, 16
    %v5397 = vpop.permute.xlu0 %5396
    %5398 = vrot.lane.b32.xlu0 %v5233, 16
    %v5399 = vpop.permute.xlu0 %5398
    %5400 = vrot.lane.b32.xlu0 %v5234, 16
    %v5401 = vpop.permute.xlu0 %5400
    %5402 = vrot.lane.b32.xlu0 %v5235, 16
    %v5403 = vpop.permute.xlu0 %5402
    %5404 = vrot.lane.b32.xlu0 %v5236, 16
    %v5405 = vpop.permute.xlu0 %5404
    %5406 = vrot.lane.b32.xlu0 %v5237, 16
    %v5407 = vpop.permute.xlu0 %5406
    %5408 = vrot.lane.b32.xlu0 %v5238, 16
    %v5409 = vpop.permute.xlu0 %5408
    %5410 = vrot.lane.b32.xlu0 %v5239, 16
    %v5411 = vpop.permute.xlu0 %5410
    %5412 = vrot.lane.b32.xlu0 %v5240, 16
    %v5413 = vpop.permute.xlu0 %5412
    %5414 = vrot.lane.b32.xlu0 %v5241, 16
    %v5415 = vpop.permute.xlu0 %5414
    %5416 = vrot.lane.b32.xlu0 %v5242, 16
    %v5417 = vpop.permute.xlu0 %5416
    %5418 = vrot.lane.b32.xlu0 %v5243, 16
    %v5419 = vpop.permute.xlu0 %5418
    %5420 = vrot.lane.b32.xlu0 %v5244, 16
    %v5421 = vpop.permute.xlu0 %5420
    %5422 = vrot.lane.b32.xlu0 %v5245, 16
    %v5423 = vpop.permute.xlu0 %5422
    %5424 = vrot.lane.b32.xlu0 %v5246, 16
    %v5425 = vpop.permute.xlu0 %5424
    %5426 = vrot.lane.b32.xlu0 %v5247, 16
    %v5427 = vpop.permute.xlu0 %5426
    %5428 = vrot.lane.b32.xlu0 %v5248, 16
    %v5429 = vpop.permute.xlu0 %5428
    %5430 = vrot.lane.b32.xlu0 %v5249, 16
    %v5431 = vpop.permute.xlu0 %5430
    %5432 = vrot.lane.b32.xlu0 %v5250, 16
    %v5433 = vpop.permute.xlu0 %5432
    %5434 = vrot.lane.b32.xlu0 %v5251, 16
    %v5435 = vpop.permute.xlu0 %5434
    %5436 = vrot.lane.b32.xlu0 %v5252, 16
    %v5437 = vpop.permute.xlu0 %5436
    %5438 = vrot.lane.b32.xlu0 %v5253, 16
    %v5439 = vpop.permute.xlu0 %5438
    %5440 = vrot.lane.b32.xlu0 %v5254, 16
    %v5441 = vpop.permute.xlu0 %5440
    %5442 = vrot.lane.b32.xlu0 %v5255, 16
    %v5443 = vpop.permute.xlu0 %5442
    %5444 = vrot.lane.b32.xlu0 %v5256, 16
    %v5445 = vpop.permute.xlu0 %5444
    %5446 = vrot.lane.b32.xlu0 %v5257, 16
    %v5447 = vpop.permute.xlu0 %5446
    %5448 = vrot.lane.b32.xlu0 %v5258, 16
    %v5449 = vpop.permute.xlu0 %5448
    %5450 = vrot.lane.b32.xlu0 %v5259, 16
    %v5451 = vpop.permute.xlu0 %5450
    %vm5516 = vcmask 195712
    %5517 = vst.msk [vmem:[#allocation5] sm:$0xff] %vm5516, %v5325
    %5518 = vst.msk [vmem:[#allocation5 + $0x8] sm:$0xff] %vm5516, %v5327
    %5519 = vst.msk [vmem:[#allocation5 + $0x10] sm:$0xff] %vm5516, %v5329
    %5520 = vst.msk [vmem:[#allocation5 + $0x18] sm:$0xff] %vm5516, %v5331
    %5521 = vst.msk [vmem:[#allocation5 + $0x20] sm:$0xff] %vm5516, %v5333
    %5522 = vst.msk [vmem:[#allocation5 + $0x28] sm:$0xff] %vm5516, %v5335
    %5523 = vst.msk [vmem:[#allocation5 + $0x30] sm:$0xff] %vm5516, %v5337
    %5524 = vst.msk [vmem:[#allocation5 + $0x38] sm:$0xff] %vm5516, %v5339
    %5525 = vst.msk [vmem:[#allocation5 + $0x40] sm:$0xff] %vm5516, %v5341
    %5526 = vst.msk [vmem:[#allocation5 + $0x48] sm:$0xff] %vm5516, %v5343
    %5527 = vst.msk [vmem:[#allocation5 + $0x50] sm:$0xff] %vm5516, %v5345
    %5528 = vst.msk [vmem:[#allocation5 + $0x58] sm:$0xff] %vm5516, %v5347
    %5529 = vst.msk [vmem:[#allocation5 + $0x60] sm:$0xff] %vm5516, %v5349
    %5530 = vst.msk [vmem:[#allocation5 + $0x68] sm:$0xff] %vm5516, %v5351
    %5531 = vst.msk [vmem:[#allocation5 + $0x70] sm:$0xff] %vm5516, %v5353
    %5532 = vst.msk [vmem:[#allocation5 + $0x78] sm:$0xff] %vm5516, %v5355
    %5533 = vst.msk [vmem:[#allocation5 + $0x80] sm:$0xff] %vm5516, %v5357
    %5534 = vst.msk [vmem:[#allocation5 + $0x88] sm:$0xff] %vm5516, %v5359
    %5535 = vst.msk [vmem:[#allocation5 + $0x90] sm:$0xff] %vm5516, %v5361
    %5536 = vst.msk [vmem:[#allocation5 + $0x98] sm:$0xff] %vm5516, %v5363
    %5537 = vst.msk [vmem:[#allocation5 + $0xa0] sm:$0xff] %vm5516, %v5365
    %5538 = vst.msk [vmem:[#allocation5 + $0xa8] sm:$0xff] %vm5516, %v5367
    %5539 = vst.msk [vmem:[#allocation5 + $0xb0] sm:$0xff] %vm5516, %v5369
    %5540 = vst.msk [vmem:[#allocation5 + $0xb8] sm:$0xff] %vm5516, %v5371
    %5541 = vst.msk [vmem:[#allocation5 + $0xc0] sm:$0xff] %vm5516, %v5373
    %5542 = vst.msk [vmem:[#allocation5 + $0xc8] sm:$0xff] %vm5516, %v5375
    %5543 = vst.msk [vmem:[#allocation5 + $0xd0] sm:$0xff] %vm5516, %v5377
    %5544 = vst.msk [vmem:[#allocation5 + $0xd8] sm:$0xff] %vm5516, %v5379
    %5545 = vst.msk [vmem:[#allocation5 + $0xe0] sm:$0xff] %vm5516, %v5381
    %5546 = vst.msk [vmem:[#allocation5 + $0xe8] sm:$0xff] %vm5516, %v5383
    %5547 = vst.msk [vmem:[#allocation5 + $0xf0] sm:$0xff] %vm5516, %v5385
    %5548 = vst.msk [vmem:[#allocation5 + $0xf8] sm:$0xff] %vm5516, %v5387
    %5549 = vst.msk [vmem:[#allocation5 + $0x100] sm:$0xff] %vm5516, %v5389
    %5550 = vst.msk [vmem:[#allocation5 + $0x108] sm:$0xff] %vm5516, %v5391
    %5551 = vst.msk [vmem:[#allocation5 + $0x110] sm:$0xff] %vm5516, %v5393
    %5552 = vst.msk [vmem:[#allocation5 + $0x118] sm:$0xff] %vm5516, %v5395
    %5553 = vst.msk [vmem:[#allocation5 + $0x120] sm:$0xff] %vm5516, %v5397
    %5554 = vst.msk [vmem:[#allocation5 + $0x128] sm:$0xff] %vm5516, %v5399
    %5555 = vst.msk [vmem:[#allocation5 + $0x130] sm:$0xff] %vm5516, %v5401
    %5556 = vst.msk [vmem:[#allocation5 + $0x138] sm:$0xff] %vm5516, %v5403
    %5557 = vst.msk [vmem:[#allocation5 + $0x140] sm:$0xff] %vm5516, %v5405
    %5558 = vst.msk [vmem:[#allocation5 + $0x148] sm:$0xff] %vm5516, %v5407
    %5559 = vst.msk [vmem:[#allocation5 + $0x150] sm:$0xff] %vm5516, %v5409
    %5560 = vst.msk [vmem:[#allocation5 + $0x158] sm:$0xff] %vm5516, %v5411
    %5561 = vst.msk [vmem:[#allocation5 + $0x160] sm:$0xff] %vm5516, %v5413
    %5562 = vst.msk [vmem:[#allocation5 + $0x168] sm:$0xff] %vm5516, %v5415
    %5563 = vst.msk [vmem:[#allocation5 + $0x170] sm:$0xff] %vm5516, %v5417
    %5564 = vst.msk [vmem:[#allocation5 + $0x178] sm:$0xff] %vm5516, %v5419
    %5565 = vst.msk [vmem:[#allocation5 + $0x180] sm:$0xff] %vm5516, %v5421
    %5566 = vst.msk [vmem:[#allocation5 + $0x188] sm:$0xff] %vm5516, %v5423
    %5567 = vst.msk [vmem:[#allocation5 + $0x190] sm:$0xff] %vm5516, %v5425
    %5568 = vst.msk [vmem:[#allocation5 + $0x198] sm:$0xff] %vm5516, %v5427
    %5569 = vst.msk [vmem:[#allocation5 + $0x1a0] sm:$0xff] %vm5516, %v5429
    %5570 = vst.msk [vmem:[#allocation5 + $0x1a8] sm:$0xff] %vm5516, %v5431
    %5571 = vst.msk [vmem:[#allocation5 + $0x1b0] sm:$0xff] %vm5516, %v5433
    %5572 = vst.msk [vmem:[#allocation5 + $0x1b8] sm:$0xff] %vm5516, %v5435
    %5573 = vst.msk [vmem:[#allocation5 + $0x1c0] sm:$0xff] %vm5516, %v5437
    %5574 = vst.msk [vmem:[#allocation5 + $0x1c8] sm:$0xff] %vm5516, %v5439
    %5575 = vst.msk [vmem:[#allocation5 + $0x1d0] sm:$0xff] %vm5516, %v5441
    %5576 = vst.msk [vmem:[#allocation5 + $0x1d8] sm:$0xff] %vm5516, %v5443
    %5577 = vst.msk [vmem:[#allocation5 + $0x1e0] sm:$0xff] %vm5516, %v5445
    %5578 = vst.msk [vmem:[#allocation5 + $0x1e8] sm:$0xff] %vm5516, %v5447
    %5579 = vst.msk [vmem:[#allocation5 + $0x1f0] sm:$0xff] %vm5516, %v5449
    %5580 = vst.msk [vmem:[#allocation5 + $0x1f8] sm:$0xff] %vm5516, %v5451
    %v5581 = vld [vmem:[%s4618] sm:$0xff]
    %v5582 = vld [vmem:[%s4618 + $0x8] sm:$0xff]
    %v5583 = vld [vmem:[%s4618 + $0x18] sm:$0xff]
    %v5584 = vld [vmem:[%s4618 + $0x20] sm:$0xff]
    %v5585 = vld [vmem:[%s4618 + $0x30] sm:$0xff]
    %v5586 = vld [vmem:[%s4618 + $0x38] sm:$0xff]
    %v5587 = vld [vmem:[%s4618 + $0x48] sm:$0xff]
    %v5588 = vld [vmem:[%s4618 + $0x50] sm:$0xff]
    %v5589 = vld [vmem:[%s4618 + $0x60] sm:$0xff]
    %v5590 = vld [vmem:[%s4618 + $0x68] sm:$0xff]
    %v5591 = vld [vmem:[%s4618 + $0x78] sm:$0xff]
    %v5592 = vld [vmem:[%s4618 + $0x80] sm:$0xff]
    %v5593 = vld [vmem:[%s4618 + $0x90] sm:$0xff]
    %v5594 = vld [vmem:[%s4618 + $0x98] sm:$0xff]
    %v5595 = vld [vmem:[%s4618 + $0xa8] sm:$0xff]
    %v5596 = vld [vmem:[%s4618 + $0xb0] sm:$0xff]
    %v5597 = vld [vmem:[%s4618 + $0xc0] sm:$0xff]
    %v5598 = vld [vmem:[%s4618 + $0xc8] sm:$0xff]
    %v5599 = vld [vmem:[%s4618 + $0xd8] sm:$0xff]
    %v5600 = vld [vmem:[%s4618 + $0xe0] sm:$0xff]
    %v5601 = vld [vmem:[%s4618 + $0xf0] sm:$0xff]
    %v5602 = vld [vmem:[%s4618 + $0xf8] sm:$0xff]
    %v5603 = vld [vmem:[%s4618 + $0x108] sm:$0xff]
    %v5604 = vld [vmem:[%s4618 + $0x110] sm:$0xff]
    %v5605 = vld [vmem:[%s4618 + $0x120] sm:$0xff]
    %v5606 = vld [vmem:[%s4618 + $0x128] sm:$0xff]
    %v5607 = vld [vmem:[%s4618 + $0x138] sm:$0xff]
    %v5608 = vld [vmem:[%s4618 + $0x140] sm:$0xff]
    %v5609 = vld [vmem:[%s4618 + $0x150] sm:$0xff]
    %v5610 = vld [vmem:[%s4618 + $0x158] sm:$0xff]
    %v5611 = vld [vmem:[%s4618 + $0x168] sm:$0xff]
    %v5612 = vld [vmem:[%s4618 + $0x170] sm:$0xff]
    %v5613 = vld [vmem:[%s4618 + $0x1b0] sm:$0xff]
    %v5614 = vld [vmem:[%s4618 + $0x1b8] sm:$0xff]
    %v5615 = vld [vmem:[%s4618 + $0x1c8] sm:$0xff]
    %v5616 = vld [vmem:[%s4618 + $0x1d0] sm:$0xff]
    %v5617 = vld [vmem:[%s4618 + $0x1e0] sm:$0xff]
    %v5618 = vld [vmem:[%s4618 + $0x1e8] sm:$0xff]
    %v5619 = vld [vmem:[%s4618 + $0x1f8] sm:$0xff]
    %v5620 = vld [vmem:[%s4618 + $0x200] sm:$0xff]
    %v5621 = vld [vmem:[%s4618 + $0x210] sm:$0xff]
    %v5622 = vld [vmem:[%s4618 + $0x218] sm:$0xff]
    %v5623 = vld [vmem:[%s4618 + $0x228] sm:$0xff]
    %v5624 = vld [vmem:[%s4618 + $0x230] sm:$0xff]
    %v5625 = vld [vmem:[%s4618 + $0x240] sm:$0xff]
    %v5626 = vld [vmem:[%s4618 + $0x248] sm:$0xff]
    %v5627 = vld [vmem:[%s4618 + $0x258] sm:$0xff]
    %v5628 = vld [vmem:[%s4618 + $0x260] sm:$0xff]
    %v5629 = vld [vmem:[%s4618 + $0x270] sm:$0xff]
    %v5630 = vld [vmem:[%s4618 + $0x278] sm:$0xff]
    %v5631 = vld [vmem:[%s4618 + $0x288] sm:$0xff]
    %v5632 = vld [vmem:[%s4618 + $0x290] sm:$0xff]
    %v5633 = vld [vmem:[%s4618 + $0x2a0] sm:$0xff]
    %v5634 = vld [vmem:[%s4618 + $0x2a8] sm:$0xff]
    %v5635 = vld [vmem:[%s4618 + $0x2b8] sm:$0xff]
    %v5636 = vld [vmem:[%s4618 + $0x2c0] sm:$0xff]
    %v5637 = vld [vmem:[%s4618 + $0x2d0] sm:$0xff]
    %v5638 = vld [vmem:[%s4618 + $0x2d8] sm:$0xff]
    %v5639 = vld [vmem:[%s4618 + $0x2e8] sm:$0xff]
    %v5640 = vld [vmem:[%s4618 + $0x2f0] sm:$0xff]
    %v5641 = vld [vmem:[%s4618 + $0x300] sm:$0xff]
    %v5642 = vld [vmem:[%s4618 + $0x308] sm:$0xff]
    %v5643 = vld [vmem:[%s4618 + $0x318] sm:$0xff]
    %v5644 = vld [vmem:[%s4618 + $0x320] sm:$0xff]
    %5709 = vrot.lane.b32.xlu0 %v5581, 24
    %v5710 = vpop.permute.xlu0 %5709
    %5711 = vrot.lane.b32.xlu0 %v5582, 24
    %v5712 = vpop.permute.xlu0 %5711
    %5713 = vrot.lane.b32.xlu0 %v5583, 24
    %v5714 = vpop.permute.xlu0 %5713
    %5715 = vrot.lane.b32.xlu0 %v5584, 24
    %v5716 = vpop.permute.xlu0 %5715
    %5717 = vrot.lane.b32.xlu0 %v5585, 24
    %v5718 = vpop.permute.xlu0 %5717
    %5719 = vrot.lane.b32.xlu0 %v5586, 24
    %v5720 = vpop.permute.xlu0 %5719
    %5721 = vrot.lane.b32.xlu0 %v5587, 24
    %v5722 = vpop.permute.xlu0 %5721
    %5723 = vrot.lane.b32.xlu0 %v5588, 24
    %v5724 = vpop.permute.xlu0 %5723
    %5725 = vrot.lane.b32.xlu0 %v5589, 24
    %v5726 = vpop.permute.xlu0 %5725
    %5727 = vrot.lane.b32.xlu0 %v5590, 24
    %v5728 = vpop.permute.xlu0 %5727
    %5729 = vrot.lane.b32.xlu0 %v5591, 24
    %v5730 = vpop.permute.xlu0 %5729
    %5731 = vrot.lane.b32.xlu0 %v5592, 24
    %v5732 = vpop.permute.xlu0 %5731
    %5733 = vrot.lane.b32.xlu0 %v5593, 24
    %v5734 = vpop.permute.xlu0 %5733
    %5735 = vrot.lane.b32.xlu0 %v5594, 24
    %v5736 = vpop.permute.xlu0 %5735
    %5737 = vrot.lane.b32.xlu0 %v5595, 24
    %v5738 = vpop.permute.xlu0 %5737
    %5739 = vrot.lane.b32.xlu0 %v5596, 24
    %v5740 = vpop.permute.xlu0 %5739
    %5741 = vrot.lane.b32.xlu0 %v5597, 24
    %v5742 = vpop.permute.xlu0 %5741
    %5743 = vrot.lane.b32.xlu0 %v5598, 24
    %v5744 = vpop.permute.xlu0 %5743
    %5745 = vrot.lane.b32.xlu0 %v5599, 24
    %v5746 = vpop.permute.xlu0 %5745
    %5747 = vrot.lane.b32.xlu0 %v5600, 24
    %v5748 = vpop.permute.xlu0 %5747
    %5749 = vrot.lane.b32.xlu0 %v5601, 24
    %v5750 = vpop.permute.xlu0 %5749
    %5751 = vrot.lane.b32.xlu0 %v5602, 24
    %v5752 = vpop.permute.xlu0 %5751
    %5753 = vrot.lane.b32.xlu0 %v5603, 24
    %v5754 = vpop.permute.xlu0 %5753
    %5755 = vrot.lane.b32.xlu0 %v5604, 24
    %v5756 = vpop.permute.xlu0 %5755
    %5757 = vrot.lane.b32.xlu0 %v5605, 24
    %v5758 = vpop.permute.xlu0 %5757
    %5759 = vrot.lane.b32.xlu0 %v5606, 24
    %v5760 = vpop.permute.xlu0 %5759
    %5761 = vrot.lane.b32.xlu0 %v5607, 24
    %v5762 = vpop.permute.xlu0 %5761
    %5763 = vrot.lane.b32.xlu0 %v5608, 24
    %v5764 = vpop.permute.xlu0 %5763
    %5765 = vrot.lane.b32.xlu0 %v5609, 24
    %v5766 = vpop.permute.xlu0 %5765
    %5767 = vrot.lane.b32.xlu0 %v5610, 24
    %v5768 = vpop.permute.xlu0 %5767
    %5769 = vrot.lane.b32.xlu0 %v5611, 24
    %v5770 = vpop.permute.xlu0 %5769
    %5771 = vrot.lane.b32.xlu0 %v5612, 24
    %v5772 = vpop.permute.xlu0 %5771
    %5773 = vrot.lane.b32.xlu0 %v5613, 24
    %v5774 = vpop.permute.xlu0 %5773
    %5775 = vrot.lane.b32.xlu0 %v5614, 24
    %v5776 = vpop.permute.xlu0 %5775
    %5777 = vrot.lane.b32.xlu0 %v5615, 24
    %v5778 = vpop.permute.xlu0 %5777
    %5779 = vrot.lane.b32.xlu0 %v5616, 24
    %v5780 = vpop.permute.xlu0 %5779
    %5781 = vrot.lane.b32.xlu0 %v5617, 24
    %v5782 = vpop.permute.xlu0 %5781
    %5783 = vrot.lane.b32.xlu0 %v5618, 24
    %v5784 = vpop.permute.xlu0 %5783
    %5785 = vrot.lane.b32.xlu0 %v5619, 24
    %v5786 = vpop.permute.xlu0 %5785
    %5787 = vrot.lane.b32.xlu0 %v5620, 24
    %v5788 = vpop.permute.xlu0 %5787
    %5789 = vrot.lane.b32.xlu0 %v5621, 24
    %v5790 = vpop.permute.xlu0 %5789
    %5791 = vrot.lane.b32.xlu0 %v5622, 24
    %v5792 = vpop.permute.xlu0 %5791
    %5793 = vrot.lane.b32.xlu0 %v5623, 24
    %v5794 = vpop.permute.xlu0 %5793
    %5795 = vrot.lane.b32.xlu0 %v5624, 24
    %v5796 = vpop.permute.xlu0 %5795
    %5797 = vrot.lane.b32.xlu0 %v5625, 24
    %v5798 = vpop.permute.xlu0 %5797
    %5799 = vrot.lane.b32.xlu0 %v5626, 24
    %v5800 = vpop.permute.xlu0 %5799
    %5801 = vrot.lane.b32.xlu0 %v5627, 24
    %v5802 = vpop.permute.xlu0 %5801
    %5803 = vrot.lane.b32.xlu0 %v5628, 24
    %v5804 = vpop.permute.xlu0 %5803
    %5805 = vrot.lane.b32.xlu0 %v5629, 24
    %v5806 = vpop.permute.xlu0 %5805
    %5807 = vrot.lane.b32.xlu0 %v5630, 24
    %v5808 = vpop.permute.xlu0 %5807
    %5809 = vrot.lane.b32.xlu0 %v5631, 24
    %v5810 = vpop.permute.xlu0 %5809
    %5811 = vrot.lane.b32.xlu0 %v5632, 24
    %v5812 = vpop.permute.xlu0 %5811
    %5813 = vrot.lane.b32.xlu0 %v5633, 24
    %v5814 = vpop.permute.xlu0 %5813
    %5815 = vrot.lane.b32.xlu0 %v5634, 24
    %v5816 = vpop.permute.xlu0 %5815
    %5817 = vrot.lane.b32.xlu0 %v5635, 24
    %v5818 = vpop.permute.xlu0 %5817
    %5819 = vrot.lane.b32.xlu0 %v5636, 24
    %v5820 = vpop.permute.xlu0 %5819
    %5821 = vrot.lane.b32.xlu0 %v5637, 24
    %v5822 = vpop.permute.xlu0 %5821
    %5823 = vrot.lane.b32.xlu0 %v5638, 24
    %v5824 = vpop.permute.xlu0 %5823
    %5825 = vrot.lane.b32.xlu0 %v5639, 24
    %v5826 = vpop.permute.xlu0 %5825
    %5827 = vrot.lane.b32.xlu0 %v5640, 24
    %v5828 = vpop.permute.xlu0 %5827
    %5829 = vrot.lane.b32.xlu0 %v5641, 24
    %v5830 = vpop.permute.xlu0 %5829
    %5831 = vrot.lane.b32.xlu0 %v5642, 24
    %v5832 = vpop.permute.xlu0 %5831
    %5833 = vrot.lane.b32.xlu0 %v5643, 24
    %v5834 = vpop.permute.xlu0 %5833
    %5835 = vrot.lane.b32.xlu0 %v5644, 24
    %v5836 = vpop.permute.xlu0 %5835
    %vm5901 = vcmask 261312
    %5902 = vst.msk [vmem:[#allocation5] sm:$0xff] %vm5901, %v5710
    %5903 = vst.msk [vmem:[#allocation5 + $0x8] sm:$0xff] %vm5901, %v5712
    %5904 = vst.msk [vmem:[#allocation5 + $0x10] sm:$0xff] %vm5901, %v5714
    %5905 = vst.msk [vmem:[#allocation5 + $0x18] sm:$0xff] %vm5901, %v5716
    %5906 = vst.msk [vmem:[#allocation5 + $0x20] sm:$0xff] %vm5901, %v5718
    %5907 = vst.msk [vmem:[#allocation5 + $0x28] sm:$0xff] %vm5901, %v5720
    %5908 = vst.msk [vmem:[#allocation5 + $0x30] sm:$0xff] %vm5901, %v5722
    %5909 = vst.msk [vmem:[#allocation5 + $0x38] sm:$0xff] %vm5901, %v5724
    %5910 = vst.msk [vmem:[#allocation5 + $0x40] sm:$0xff] %vm5901, %v5726
    %5911 = vst.msk [vmem:[#allocation5 + $0x48] sm:$0xff] %vm5901, %v5728
    %5912 = vst.msk [vmem:[#allocation5 + $0x50] sm:$0xff] %vm5901, %v5730
    %5913 = vst.msk [vmem:[#allocation5 + $0x58] sm:$0xff] %vm5901, %v5732
    %5914 = vst.msk [vmem:[#allocation5 + $0x60] sm:$0xff] %vm5901, %v5734
    %5915 = vst.msk [vmem:[#allocation5 + $0x68] sm:$0xff] %vm5901, %v5736
    %5916 = vst.msk [vmem:[#allocation5 + $0x70] sm:$0xff] %vm5901, %v5738
    %5917 = vst.msk [vmem:[#allocation5 + $0x78] sm:$0xff] %vm5901, %v5740
    %5918 = vst.msk [vmem:[#allocation5 + $0x80] sm:$0xff] %vm5901, %v5742
    %5919 = vst.msk [vmem:[#allocation5 + $0x88] sm:$0xff] %vm5901, %v5744
    %5920 = vst.msk [vmem:[#allocation5 + $0x90] sm:$0xff] %vm5901, %v5746
    %5921 = vst.msk [vmem:[#allocation5 + $0x98] sm:$0xff] %vm5901, %v5748
    %5922 = vst.msk [vmem:[#allocation5 + $0xa0] sm:$0xff] %vm5901, %v5750
    %5923 = vst.msk [vmem:[#allocation5 + $0xa8] sm:$0xff] %vm5901, %v5752
    %5924 = vst.msk [vmem:[#allocation5 + $0xb0] sm:$0xff] %vm5901, %v5754
    %5925 = vst.msk [vmem:[#allocation5 + $0xb8] sm:$0xff] %vm5901, %v5756
    %5926 = vst.msk [vmem:[#allocation5 + $0xc0] sm:$0xff] %vm5901, %v5758
    %5927 = vst.msk [vmem:[#allocation5 + $0xc8] sm:$0xff] %vm5901, %v5760
    %5928 = vst.msk [vmem:[#allocation5 + $0xd0] sm:$0xff] %vm5901, %v5762
    %5929 = vst.msk [vmem:[#allocation5 + $0xd8] sm:$0xff] %vm5901, %v5764
    %5930 = vst.msk [vmem:[#allocation5 + $0xe0] sm:$0xff] %vm5901, %v5766
    %5931 = vst.msk [vmem:[#allocation5 + $0xe8] sm:$0xff] %vm5901, %v5768
    %5932 = vst.msk [vmem:[#allocation5 + $0xf0] sm:$0xff] %vm5901, %v5770
    %5933 = vst.msk [vmem:[#allocation5 + $0xf8] sm:$0xff] %vm5901, %v5772
    %5934 = vst.msk [vmem:[#allocation5 + $0x100] sm:$0xff] %vm5901, %v5774
    %5935 = vst.msk [vmem:[#allocation5 + $0x108] sm:$0xff] %vm5901, %v5776
    %5936 = vst.msk [vmem:[#allocation5 + $0x110] sm:$0xff] %vm5901, %v5778
    %5937 = vst.msk [vmem:[#allocation5 + $0x118] sm:$0xff] %vm5901, %v5780
    %5938 = vst.msk [vmem:[#allocation5 + $0x120] sm:$0xff] %vm5901, %v5782
    %5939 = vst.msk [vmem:[#allocation5 + $0x128] sm:$0xff] %vm5901, %v5784
    %5940 = vst.msk [vmem:[#allocation5 + $0x130] sm:$0xff] %vm5901, %v5786
    %5941 = vst.msk [vmem:[#allocation5 + $0x138] sm:$0xff] %vm5901, %v5788
    %5942 = vst.msk [vmem:[#allocation5 + $0x140] sm:$0xff] %vm5901, %v5790
    %5943 = vst.msk [vmem:[#allocation5 + $0x148] sm:$0xff] %vm5901, %v5792
    %5944 = vst.msk [vmem:[#allocation5 + $0x150] sm:$0xff] %vm5901, %v5794
    %5945 = vst.msk [vmem:[#allocation5 + $0x158] sm:$0xff] %vm5901, %v5796
    %5946 = vst.msk [vmem:[#allocation5 + $0x160] sm:$0xff] %vm5901, %v5798
    %5947 = vst.msk [vmem:[#allocation5 + $0x168] sm:$0xff] %vm5901, %v5800
    %5948 = vst.msk [vmem:[#allocation5 + $0x170] sm:$0xff] %vm5901, %v5802
    %5949 = vst.msk [vmem:[#allocation5 + $0x178] sm:$0xff] %vm5901, %v5804
    %5950 = vst.msk [vmem:[#allocation5 + $0x180] sm:$0xff] %vm5901, %v5806
    %5951 = vst.msk [vmem:[#allocation5 + $0x188] sm:$0xff] %vm5901, %v5808
    %5952 = vst.msk [vmem:[#allocation5 + $0x190] sm:$0xff] %vm5901, %v5810
    %5953 = vst.msk [vmem:[#allocation5 + $0x198] sm:$0xff] %vm5901, %v5812
    %5954 = vst.msk [vmem:[#allocation5 + $0x1a0] sm:$0xff] %vm5901, %v5814
    %5955 = vst.msk [vmem:[#allocation5 + $0x1a8] sm:$0xff] %vm5901, %v5816
    %5956 = vst.msk [vmem:[#allocation5 + $0x1b0] sm:$0xff] %vm5901, %v5818
    %5957 = vst.msk [vmem:[#allocation5 + $0x1b8] sm:$0xff] %vm5901, %v5820
    %5958 = vst.msk [vmem:[#allocation5 + $0x1c0] sm:$0xff] %vm5901, %v5822
    %5959 = vst.msk [vmem:[#allocation5 + $0x1c8] sm:$0xff] %vm5901, %v5824
    %5960 = vst.msk [vmem:[#allocation5 + $0x1d0] sm:$0xff] %vm5901, %v5826
    %5961 = vst.msk [vmem:[#allocation5 + $0x1d8] sm:$0xff] %vm5901, %v5828
    %5962 = vst.msk [vmem:[#allocation5 + $0x1e0] sm:$0xff] %vm5901, %v5830
    %5963 = vst.msk [vmem:[#allocation5 + $0x1e8] sm:$0xff] %vm5901, %v5832
    %5964 = vst.msk [vmem:[#allocation5 + $0x1f0] sm:$0xff] %vm5901, %v5834
    %5965 = vst.msk [vmem:[#allocation5 + $0x1f8] sm:$0xff] %vm5901, %v5836
    %v5966 = vld [vmem:[%s4618 + $0x1] sm:$0xff]
    %v5967 = vld [vmem:[%s4618 + $0x9] sm:$0xff]
    %v5968 = vld [vmem:[%s4618 + $0x19] sm:$0xff]
    %v5969 = vld [vmem:[%s4618 + $0x21] sm:$0xff]
    %v5970 = vld [vmem:[%s4618 + $0x31] sm:$0xff]
    %v5971 = vld [vmem:[%s4618 + $0x39] sm:$0xff]
    %v5972 = vld [vmem:[%s4618 + $0x49] sm:$0xff]
    %v5973 = vld [vmem:[%s4618 + $0x51] sm:$0xff]
    %v5974 = vld [vmem:[%s4618 + $0x61] sm:$0xff]
    %v5975 = vld [vmem:[%s4618 + $0x69] sm:$0xff]
    %v5976 = vld [vmem:[%s4618 + $0x79] sm:$0xff]
    %v5977 = vld [vmem:[%s4618 + $0x81] sm:$0xff]
    %v5978 = vld [vmem:[%s4618 + $0x91] sm:$0xff]
    %v5979 = vld [vmem:[%s4618 + $0x99] sm:$0xff]
    %v5980 = vld [vmem:[%s4618 + $0xa9] sm:$0xff]
    %v5981 = vld [vmem:[%s4618 + $0xb1] sm:$0xff]
    %v5982 = vld [vmem:[%s4618 + $0xc1] sm:$0xff]
    %v5983 = vld [vmem:[%s4618 + $0xc9] sm:$0xff]
    %v5984 = vld [vmem:[%s4618 + $0xd9] sm:$0xff]
    %v5985 = vld [vmem:[%s4618 + $0xe1] sm:$0xff]
    %v5986 = vld [vmem:[%s4618 + $0xf1] sm:$0xff]
    %v5987 = vld [vmem:[%s4618 + $0xf9] sm:$0xff]
    %v5988 = vld [vmem:[%s4618 + $0x109] sm:$0xff]
    %v5989 = vld [vmem:[%s4618 + $0x111] sm:$0xff]
    %v5990 = vld [vmem:[%s4618 + $0x121] sm:$0xff]
    %v5991 = vld [vmem:[%s4618 + $0x129] sm:$0xff]
    %v5992 = vld [vmem:[%s4618 + $0x139] sm:$0xff]
    %v5993 = vld [vmem:[%s4618 + $0x141] sm:$0xff]
    %v5994 = vld [vmem:[%s4618 + $0x151] sm:$0xff]
    %v5995 = vld [vmem:[%s4618 + $0x159] sm:$0xff]
    %v5996 = vld [vmem:[%s4618 + $0x169] sm:$0xff]
    %v5997 = vld [vmem:[%s4618 + $0x171] sm:$0xff]
    %v5998 = vld [vmem:[%s4618 + $0x1b1] sm:$0xff]
    %v5999 = vld [vmem:[%s4618 + $0x1b9] sm:$0xff]
    %v6000 = vld [vmem:[%s4618 + $0x1c9] sm:$0xff]
    %v6001 = vld [vmem:[%s4618 + $0x1d1] sm:$0xff]
    %v6002 = vld [vmem:[%s4618 + $0x1e1] sm:$0xff]
    %v6003 = vld [vmem:[%s4618 + $0x1e9] sm:$0xff]
    %v6004 = vld [vmem:[%s4618 + $0x1f9] sm:$0xff]
    %v6005 = vld [vmem:[%s4618 + $0x201] sm:$0xff]
    %v6006 = vld [vmem:[%s4618 + $0x211] sm:$0xff]
    %v6007 = vld [vmem:[%s4618 + $0x219] sm:$0xff]
    %v6008 = vld [vmem:[%s4618 + $0x229] sm:$0xff]
    %v6009 = vld [vmem:[%s4618 + $0x231] sm:$0xff]
    %v6010 = vld [vmem:[%s4618 + $0x241] sm:$0xff]
    %v6011 = vld [vmem:[%s4618 + $0x249] sm:$0xff]
    %v6012 = vld [vmem:[%s4618 + $0x259] sm:$0xff]
    %v6013 = vld [vmem:[%s4618 + $0x261] sm:$0xff]
    %v6014 = vld [vmem:[%s4618 + $0x271] sm:$0xff]
    %v6015 = vld [vmem:[%s4618 + $0x279] sm:$0xff]
    %v6016 = vld [vmem:[%s4618 + $0x289] sm:$0xff]
    %v6017 = vld [vmem:[%s4618 + $0x291] sm:$0xff]
    %v6018 = vld [vmem:[%s4618 + $0x2a1] sm:$0xff]
    %v6019 = vld [vmem:[%s4618 + $0x2a9] sm:$0xff]
    %v6020 = vld [vmem:[%s4618 + $0x2b9] sm:$0xff]
    %v6021 = vld [vmem:[%s4618 + $0x2c1] sm:$0xff]
    %v6022 = vld [vmem:[%s4618 + $0x2d1] sm:$0xff]
    %v6023 = vld [vmem:[%s4618 + $0x2d9] sm:$0xff]
    %v6024 = vld [vmem:[%s4618 + $0x2e9] sm:$0xff]
    %v6025 = vld [vmem:[%s4618 + $0x2f1] sm:$0xff]
    %v6026 = vld [vmem:[%s4618 + $0x301] sm:$0xff]
    %v6027 = vld [vmem:[%s4618 + $0x309] sm:$0xff]
    %v6028 = vld [vmem:[%s4618 + $0x319] sm:$0xff]
    %v6029 = vld [vmem:[%s4618 + $0x321] sm:$0xff]
    %6094 = vrot.lane.b32.xlu0 %v5966, 32
    %v6095 = vpop.permute.xlu0 %6094
    %6096 = vrot.lane.b32.xlu0 %v5967, 32
    %v6097 = vpop.permute.xlu0 %6096
    %6098 = vrot.lane.b32.xlu0 %v5968, 32
    %v6099 = vpop.permute.xlu0 %6098
    %6100 = vrot.lane.b32.xlu0 %v5969, 32
    %v6101 = vpop.permute.xlu0 %6100
    %6102 = vrot.lane.b32.xlu0 %v5970, 32
    %v6103 = vpop.permute.xlu0 %6102
    %6104 = vrot.lane.b32.xlu0 %v5971, 32
    %v6105 = vpop.permute.xlu0 %6104
    %6106 = vrot.lane.b32.xlu0 %v5972, 32
    %v6107 = vpop.permute.xlu0 %6106
    %6108 = vrot.lane.b32.xlu0 %v5973, 32
    %v6109 = vpop.permute.xlu0 %6108
    %6110 = vrot.lane.b32.xlu0 %v5974, 32
    %v6111 = vpop.permute.xlu0 %6110
    %6112 = vrot.lane.b32.xlu0 %v5975, 32
    %v6113 = vpop.permute.xlu0 %6112
    %6114 = vrot.lane.b32.xlu0 %v5976, 32
    %v6115 = vpop.permute.xlu0 %6114
    %6116 = vrot.lane.b32.xlu0 %v5977, 32
    %v6117 = vpop.permute.xlu0 %6116
    %6118 = vrot.lane.b32.xlu0 %v5978, 32
    %v6119 = vpop.permute.xlu0 %6118
    %6120 = vrot.lane.b32.xlu0 %v5979, 32
    %v6121 = vpop.permute.xlu0 %6120
    %6122 = vrot.lane.b32.xlu0 %v5980, 32
    %v6123 = vpop.permute.xlu0 %6122
    %6124 = vrot.lane.b32.xlu0 %v5981, 32
    %v6125 = vpop.permute.xlu0 %6124
    %6126 = vrot.lane.b32.xlu0 %v5982, 32
    %v6127 = vpop.permute.xlu0 %6126
    %6128 = vrot.lane.b32.xlu0 %v5983, 32
    %v6129 = vpop.permute.xlu0 %6128
    %6130 = vrot.lane.b32.xlu0 %v5984, 32
    %v6131 = vpop.permute.xlu0 %6130
    %6132 = vrot.lane.b32.xlu0 %v5985, 32
    %v6133 = vpop.permute.xlu0 %6132
    %6134 = vrot.lane.b32.xlu0 %v5986, 32
    %v6135 = vpop.permute.xlu0 %6134
    %6136 = vrot.lane.b32.xlu0 %v5987, 32
    %v6137 = vpop.permute.xlu0 %6136
    %6138 = vrot.lane.b32.xlu0 %v5988, 32
    %v6139 = vpop.permute.xlu0 %6138
    %6140 = vrot.lane.b32.xlu0 %v5989, 32
    %v6141 = vpop.permute.xlu0 %6140
    %6142 = vrot.lane.b32.xlu0 %v5990, 32
    %v6143 = vpop.permute.xlu0 %6142
    %6144 = vrot.lane.b32.xlu0 %v5991, 32
    %v6145 = vpop.permute.xlu0 %6144
    %6146 = vrot.lane.b32.xlu0 %v5992, 32
    %v6147 = vpop.permute.xlu0 %6146
    %6148 = vrot.lane.b32.xlu0 %v5993, 32
    %v6149 = vpop.permute.xlu0 %6148
    %6150 = vrot.lane.b32.xlu0 %v5994, 32
    %v6151 = vpop.permute.xlu0 %6150
    %6152 = vrot.lane.b32.xlu0 %v5995, 32
    %v6153 = vpop.permute.xlu0 %6152
    %6154 = vrot.lane.b32.xlu0 %v5996, 32
    %v6155 = vpop.permute.xlu0 %6154
    %6156 = vrot.lane.b32.xlu0 %v5997, 32
    %v6157 = vpop.permute.xlu0 %6156
    %6158 = vrot.lane.b32.xlu0 %v5998, 32
    %v6159 = vpop.permute.xlu0 %6158
    %6160 = vrot.lane.b32.xlu0 %v5999, 32
    %v6161 = vpop.permute.xlu0 %6160
    %6162 = vrot.lane.b32.xlu0 %v6000, 32
    %v6163 = vpop.permute.xlu0 %6162
    %6164 = vrot.lane.b32.xlu0 %v6001, 32
    %v6165 = vpop.permute.xlu0 %6164
    %6166 = vrot.lane.b32.xlu0 %v6002, 32
    %v6167 = vpop.permute.xlu0 %6166
    %6168 = vrot.lane.b32.xlu0 %v6003, 32
    %v6169 = vpop.permute.xlu0 %6168
    %6170 = vrot.lane.b32.xlu0 %v6004, 32
    %v6171 = vpop.permute.xlu0 %6170
    %6172 = vrot.lane.b32.xlu0 %v6005, 32
    %v6173 = vpop.permute.xlu0 %6172
    %6174 = vrot.lane.b32.xlu0 %v6006, 32
    %v6175 = vpop.permute.xlu0 %6174
    %6176 = vrot.lane.b32.xlu0 %v6007, 32
    %v6177 = vpop.permute.xlu0 %6176
    %6178 = vrot.lane.b32.xlu0 %v6008, 32
    %v6179 = vpop.permute.xlu0 %6178
    %6180 = vrot.lane.b32.xlu0 %v6009, 32
    %v6181 = vpop.permute.xlu0 %6180
    %6182 = vrot.lane.b32.xlu0 %v6010, 32
    %v6183 = vpop.permute.xlu0 %6182
    %6184 = vrot.lane.b32.xlu0 %v6011, 32
    %v6185 = vpop.permute.xlu0 %6184
    %6186 = vrot.lane.b32.xlu0 %v6012, 32
    %v6187 = vpop.permute.xlu0 %6186
    %6188 = vrot.lane.b32.xlu0 %v6013, 32
    %v6189 = vpop.permute.xlu0 %6188
    %6190 = vrot.lane.b32.xlu0 %v6014, 32
    %v6191 = vpop.permute.xlu0 %6190
    %6192 = vrot.lane.b32.xlu0 %v6015, 32
    %v6193 = vpop.permute.xlu0 %6192
    %6194 = vrot.lane.b32.xlu0 %v6016, 32
    %v6195 = vpop.permute.xlu0 %6194
    %6196 = vrot.lane.b32.xlu0 %v6017, 32
    %v6197 = vpop.permute.xlu0 %6196
    %6198 = vrot.lane.b32.xlu0 %v6018, 32
    %v6199 = vpop.permute.xlu0 %6198
    %6200 = vrot.lane.b32.xlu0 %v6019, 32
    %v6201 = vpop.permute.xlu0 %6200
    %6202 = vrot.lane.b32.xlu0 %v6020, 32
    %v6203 = vpop.permute.xlu0 %6202
    %6204 = vrot.lane.b32.xlu0 %v6021, 32
    %v6205 = vpop.permute.xlu0 %6204
    %6206 = vrot.lane.b32.xlu0 %v6022, 32
    %v6207 = vpop.permute.xlu0 %6206
    %6208 = vrot.lane.b32.xlu0 %v6023, 32
    %v6209 = vpop.permute.xlu0 %6208
    %6210 = vrot.lane.b32.xlu0 %v6024, 32
    %v6211 = vpop.permute.xlu0 %6210
    %6212 = vrot.lane.b32.xlu0 %v6025, 32
    %v6213 = vpop.permute.xlu0 %6212
    %6214 = vrot.lane.b32.xlu0 %v6026, 32
    %v6215 = vpop.permute.xlu0 %6214
    %6216 = vrot.lane.b32.xlu0 %v6027, 32
    %v6217 = vpop.permute.xlu0 %6216
    %6218 = vrot.lane.b32.xlu0 %v6028, 32
    %v6219 = vpop.permute.xlu0 %6218
    %6220 = vrot.lane.b32.xlu0 %v6029, 32
    %v6221 = vpop.permute.xlu0 %6220
    %vm6286 = vcmask 326912
    %6287 = vst.msk [vmem:[#allocation5] sm:$0xff] %vm6286, %v6095
    %6288 = vst.msk [vmem:[#allocation5 + $0x8] sm:$0xff] %vm6286, %v6097
    %6289 = vst.msk [vmem:[#allocation5 + $0x10] sm:$0xff] %vm6286, %v6099
    %6290 = vst.msk [vmem:[#allocation5 + $0x18] sm:$0xff] %vm6286, %v6101
    %6291 = vst.msk [vmem:[#allocation5 + $0x20] sm:$0xff] %vm6286, %v6103
    %6292 = vst.msk [vmem:[#allocation5 + $0x28] sm:$0xff] %vm6286, %v6105
    %6293 = vst.msk [vmem:[#allocation5 + $0x30] sm:$0xff] %vm6286, %v6107
    %6294 = vst.msk [vmem:[#allocation5 + $0x38] sm:$0xff] %vm6286, %v6109
    %6295 = vst.msk [vmem:[#allocation5 + $0x40] sm:$0xff] %vm6286, %v6111
    %6296 = vst.msk [vmem:[#allocation5 + $0x48] sm:$0xff] %vm6286, %v6113
    %6297 = vst.msk [vmem:[#allocation5 + $0x50] sm:$0xff] %vm6286, %v6115
    %6298 = vst.msk [vmem:[#allocation5 + $0x58] sm:$0xff] %vm6286, %v6117
    %6299 = vst.msk [vmem:[#allocation5 + $0x60] sm:$0xff] %vm6286, %v6119
    %6300 = vst.msk [vmem:[#allocation5 + $0x68] sm:$0xff] %vm6286, %v6121
    %6301 = vst.msk [vmem:[#allocation5 + $0x70] sm:$0xff] %vm6286, %v6123
    %6302 = vst.msk [vmem:[#allocation5 + $0x78] sm:$0xff] %vm6286, %v6125
    %6303 = vst.msk [vmem:[#allocation5 + $0x80] sm:$0xff] %vm6286, %v6127
    %6304 = vst.msk [vmem:[#allocation5 + $0x88] sm:$0xff] %vm6286, %v6129
    %6305 = vst.msk [vmem:[#allocation5 + $0x90] sm:$0xff] %vm6286, %v6131
    %6306 = vst.msk [vmem:[#allocation5 + $0x98] sm:$0xff] %vm6286, %v6133
    %6307 = vst.msk [vmem:[#allocation5 + $0xa0] sm:$0xff] %vm6286, %v6135
    %6308 = vst.msk [vmem:[#allocation5 + $0xa8] sm:$0xff] %vm6286, %v6137
    %6309 = vst.msk [vmem:[#allocation5 + $0xb0] sm:$0xff] %vm6286, %v6139
    %6310 = vst.msk [vmem:[#allocation5 + $0xb8] sm:$0xff] %vm6286, %v6141
    %6311 = vst.msk [vmem:[#allocation5 + $0xc0] sm:$0xff] %vm6286, %v6143
    %6312 = vst.msk [vmem:[#allocation5 + $0xc8] sm:$0xff] %vm6286, %v6145
    %6313 = vst.msk [vmem:[#allocation5 + $0xd0] sm:$0xff] %vm6286, %v6147
    %6314 = vst.msk [vmem:[#allocation5 + $0xd8] sm:$0xff] %vm6286, %v6149
    %6315 = vst.msk [vmem:[#allocation5 + $0xe0] sm:$0xff] %vm6286, %v6151
    %6316 = vst.msk [vmem:[#allocation5 + $0xe8] sm:$0xff] %vm6286, %v6153
    %6317 = vst.msk [vmem:[#allocation5 + $0xf0] sm:$0xff] %vm6286, %v6155
    %6318 = vst.msk [vmem:[#allocation5 + $0xf8] sm:$0xff] %vm6286, %v6157
    %6319 = vst.msk [vmem:[#allocation5 + $0x100] sm:$0xff] %vm6286, %v6159
    %6320 = vst.msk [vmem:[#allocation5 + $0x108] sm:$0xff] %vm6286, %v6161
    %6321 = vst.msk [vmem:[#allocation5 + $0x110] sm:$0xff] %vm6286, %v6163
    %6322 = vst.msk [vmem:[#allocation5 + $0x118] sm:$0xff] %vm6286, %v6165
    %6323 = vst.msk [vmem:[#allocation5 + $0x120] sm:$0xff] %vm6286, %v6167
    %6324 = vst.msk [vmem:[#allocation5 + $0x128] sm:$0xff] %vm6286, %v6169
    %6325 = vst.msk [vmem:[#allocation5 + $0x130] sm:$0xff] %vm6286, %v6171
    %6326 = vst.msk [vmem:[#allocation5 + $0x138] sm:$0xff] %vm6286, %v6173
    %6327 = vst.msk [vmem:[#allocation5 + $0x140] sm:$0xff] %vm6286, %v6175
    %6328 = vst.msk [vmem:[#allocation5 + $0x148] sm:$0xff] %vm6286, %v6177
    %6329 = vst.msk [vmem:[#allocation5 + $0x150] sm:$0xff] %vm6286, %v6179
    %6330 = vst.msk [vmem:[#allocation5 + $0x158] sm:$0xff] %vm6286, %v6181
    %6331 = vst.msk [vmem:[#allocation5 + $0x160] sm:$0xff] %vm6286, %v6183
    %6332 = vst.msk [vmem:[#allocation5 + $0x168] sm:$0xff] %vm6286, %v6185
    %6333 = vst.msk [vmem:[#allocation5 + $0x170] sm:$0xff] %vm6286, %v6187
    %6334 = vst.msk [vmem:[#allocation5 + $0x178] sm:$0xff] %vm6286, %v6189
    %6335 = vst.msk [vmem:[#allocation5 + $0x180] sm:$0xff] %vm6286, %v6191
    %6336 = vst.msk [vmem:[#allocation5 + $0x188] sm:$0xff] %vm6286, %v6193
    %6337 = vst.msk [vmem:[#allocation5 + $0x190] sm:$0xff] %vm6286, %v6195
    %6338 = vst.msk [vmem:[#allocation5 + $0x198] sm:$0xff] %vm6286, %v6197
    %6339 = vst.msk [vmem:[#allocation5 + $0x1a0] sm:$0xff] %vm6286, %v6199
    %6340 = vst.msk [vmem:[#allocation5 + $0x1a8] sm:$0xff] %vm6286, %v6201
    %6341 = vst.msk [vmem:[#allocation5 + $0x1b0] sm:$0xff] %vm6286, %v6203
    %6342 = vst.msk [vmem:[#allocation5 + $0x1b8] sm:$0xff] %vm6286, %v6205
    %6343 = vst.msk [vmem:[#allocation5 + $0x1c0] sm:$0xff] %vm6286, %v6207
    %6344 = vst.msk [vmem:[#allocation5 + $0x1c8] sm:$0xff] %vm6286, %v6209
    %6345 = vst.msk [vmem:[#allocation5 + $0x1d0] sm:$0xff] %vm6286, %v6211
    %6346 = vst.msk [vmem:[#allocation5 + $0x1d8] sm:$0xff] %vm6286, %v6213
    %6347 = vst.msk [vmem:[#allocation5 + $0x1e0] sm:$0xff] %vm6286, %v6215
    %6348 = vst.msk [vmem:[#allocation5 + $0x1e8] sm:$0xff] %vm6286, %v6217
    %6349 = vst.msk [vmem:[#allocation5 + $0x1f0] sm:$0xff] %vm6286, %v6219
    %6350 = vst.msk [vmem:[#allocation5 + $0x1f8] sm:$0xff] %vm6286, %v6221
    %v6351 = vld [vmem:[%s4618 + $0x2] sm:$0xff]
    %v6352 = vld [vmem:[%s4618 + $0xa] sm:$0xff]
    %v6353 = vld [vmem:[%s4618 + $0x1a] sm:$0xff]
    %v6354 = vld [vmem:[%s4618 + $0x22] sm:$0xff]
    %v6355 = vld [vmem:[%s4618 + $0x32] sm:$0xff]
    %v6356 = vld [vmem:[%s4618 + $0x3a] sm:$0xff]
    %v6357 = vld [vmem:[%s4618 + $0x4a] sm:$0xff]
    %v6358 = vld [vmem:[%s4618 + $0x52] sm:$0xff]
    %v6359 = vld [vmem:[%s4618 + $0x62] sm:$0xff]
    %v6360 = vld [vmem:[%s4618 + $0x6a] sm:$0xff]
    %v6361 = vld [vmem:[%s4618 + $0x7a] sm:$0xff]
    %v6362 = vld [vmem:[%s4618 + $0x82] sm:$0xff]
    %v6363 = vld [vmem:[%s4618 + $0x92] sm:$0xff]
    %v6364 = vld [vmem:[%s4618 + $0x9a] sm:$0xff]
    %v6365 = vld [vmem:[%s4618 + $0xaa] sm:$0xff]
    %v6366 = vld [vmem:[%s4618 + $0xb2] sm:$0xff]
    %v6367 = vld [vmem:[%s4618 + $0xc2] sm:$0xff]
    %v6368 = vld [vmem:[%s4618 + $0xca] sm:$0xff]
    %v6369 = vld [vmem:[%s4618 + $0xda] sm:$0xff]
    %v6370 = vld [vmem:[%s4618 + $0xe2] sm:$0xff]
    %v6371 = vld [vmem:[%s4618 + $0xf2] sm:$0xff]
    %v6372 = vld [vmem:[%s4618 + $0xfa] sm:$0xff]
    %v6373 = vld [vmem:[%s4618 + $0x10a] sm:$0xff]
    %v6374 = vld [vmem:[%s4618 + $0x112] sm:$0xff]
    %v6375 = vld [vmem:[%s4618 + $0x122] sm:$0xff]
    %v6376 = vld [vmem:[%s4618 + $0x12a] sm:$0xff]
    %v6377 = vld [vmem:[%s4618 + $0x13a] sm:$0xff]
    %v6378 = vld [vmem:[%s4618 + $0x142] sm:$0xff]
    %v6379 = vld [vmem:[%s4618 + $0x152] sm:$0xff]
    %v6380 = vld [vmem:[%s4618 + $0x15a] sm:$0xff]
    %v6381 = vld [vmem:[%s4618 + $0x16a] sm:$0xff]
    %v6382 = vld [vmem:[%s4618 + $0x172] sm:$0xff]
    %v6383 = vld [vmem:[%s4618 + $0x1b2] sm:$0xff]
    %v6384 = vld [vmem:[%s4618 + $0x1ba] sm:$0xff]
    %v6385 = vld [vmem:[%s4618 + $0x1ca] sm:$0xff]
    %v6386 = vld [vmem:[%s4618 + $0x1d2] sm:$0xff]
    %v6387 = vld [vmem:[%s4618 + $0x1e2] sm:$0xff]
    %v6388 = vld [vmem:[%s4618 + $0x1ea] sm:$0xff]
    %v6389 = vld [vmem:[%s4618 + $0x1fa] sm:$0xff]
    %v6390 = vld [vmem:[%s4618 + $0x202] sm:$0xff]
    %v6391 = vld [vmem:[%s4618 + $0x212] sm:$0xff]
    %v6392 = vld [vmem:[%s4618 + $0x21a] sm:$0xff]
    %v6393 = vld [vmem:[%s4618 + $0x22a] sm:$0xff]
    %v6394 = vld [vmem:[%s4618 + $0x232] sm:$0xff]
    %v6395 = vld [vmem:[%s4618 + $0x242] sm:$0xff]
    %v6396 = vld [vmem:[%s4618 + $0x24a] sm:$0xff]
    %v6397 = vld [vmem:[%s4618 + $0x25a] sm:$0xff]
    %v6398 = vld [vmem:[%s4618 + $0x262] sm:$0xff]
    %v6399 = vld [vmem:[%s4618 + $0x272] sm:$0xff]
    %v6400 = vld [vmem:[%s4618 + $0x27a] sm:$0xff]
    %v6401 = vld [vmem:[%s4618 + $0x28a] sm:$0xff]
    %v6402 = vld [vmem:[%s4618 + $0x292] sm:$0xff]
    %v6403 = vld [vmem:[%s4618 + $0x2a2] sm:$0xff]
    %v6404 = vld [vmem:[%s4618 + $0x2aa] sm:$0xff]
    %v6405 = vld [vmem:[%s4618 + $0x2ba] sm:$0xff]
    %v6406 = vld [vmem:[%s4618 + $0x2c2] sm:$0xff]
    %v6407 = vld [vmem:[%s4618 + $0x2d2] sm:$0xff]
    %v6408 = vld [vmem:[%s4618 + $0x2da] sm:$0xff]
    %v6409 = vld [vmem:[%s4618 + $0x2ea] sm:$0xff]
    %v6410 = vld [vmem:[%s4618 + $0x2f2] sm:$0xff]
    %v6411 = vld [vmem:[%s4618 + $0x302] sm:$0xff]
    %v6412 = vld [vmem:[%s4618 + $0x30a] sm:$0xff]
    %v6413 = vld [vmem:[%s4618 + $0x31a] sm:$0xff]
    %v6414 = vld [vmem:[%s4618 + $0x322] sm:$0xff]
    %6479 = vrot.lane.b32.xlu0 %v6351, 40
    %v6480 = vpop.permute.xlu0 %6479
    %6481 = vrot.lane.b32.xlu0 %v6352, 40
    %v6482 = vpop.permute.xlu0 %6481
    %6483 = vrot.lane.b32.xlu0 %v6353, 40
    %v6484 = vpop.permute.xlu0 %6483
    %6485 = vrot.lane.b32.xlu0 %v6354, 40
    %v6486 = vpop.permute.xlu0 %6485
    %6487 = vrot.lane.b32.xlu0 %v6355, 40
    %v6488 = vpop.permute.xlu0 %6487
    %6489 = vrot.lane.b32.xlu0 %v6356, 40
    %v6490 = vpop.permute.xlu0 %6489
    %6491 = vrot.lane.b32.xlu0 %v6357, 40
    %v6492 = vpop.permute.xlu0 %6491
    %6493 = vrot.lane.b32.xlu0 %v6358, 40
    %v6494 = vpop.permute.xlu0 %6493
    %6495 = vrot.lane.b32.xlu0 %v6359, 40
    %v6496 = vpop.permute.xlu0 %6495
    %6497 = vrot.lane.b32.xlu0 %v6360, 40
    %v6498 = vpop.permute.xlu0 %6497
    %6499 = vrot.lane.b32.xlu0 %v6361, 40
    %v6500 = vpop.permute.xlu0 %6499
    %6501 = vrot.lane.b32.xlu0 %v6362, 40
    %v6502 = vpop.permute.xlu0 %6501
    %6503 = vrot.lane.b32.xlu0 %v6363, 40
    %v6504 = vpop.permute.xlu0 %6503
    %6505 = vrot.lane.b32.xlu0 %v6364, 40
    %v6506 = vpop.permute.xlu0 %6505
    %6507 = vrot.lane.b32.xlu0 %v6365, 40
    %v6508 = vpop.permute.xlu0 %6507
    %6509 = vrot.lane.b32.xlu0 %v6366, 40
    %v6510 = vpop.permute.xlu0 %6509
    %6511 = vrot.lane.b32.xlu0 %v6367, 40
    %v6512 = vpop.permute.xlu0 %6511
    %6513 = vrot.lane.b32.xlu0 %v6368, 40
    %v6514 = vpop.permute.xlu0 %6513
    %6515 = vrot.lane.b32.xlu0 %v6369, 40
    %v6516 = vpop.permute.xlu0 %6515
    %6517 = vrot.lane.b32.xlu0 %v6370, 40
    %v6518 = vpop.permute.xlu0 %6517
    %6519 = vrot.lane.b32.xlu0 %v6371, 40
    %v6520 = vpop.permute.xlu0 %6519
    %6521 = vrot.lane.b32.xlu0 %v6372, 40
    %v6522 = vpop.permute.xlu0 %6521
    %6523 = vrot.lane.b32.xlu0 %v6373, 40
    %v6524 = vpop.permute.xlu0 %6523
    %6525 = vrot.lane.b32.xlu0 %v6374, 40
    %v6526 = vpop.permute.xlu0 %6525
    %6527 = vrot.lane.b32.xlu0 %v6375, 40
    %v6528 = vpop.permute.xlu0 %6527
    %6529 = vrot.lane.b32.xlu0 %v6376, 40
    %v6530 = vpop.permute.xlu0 %6529
    %6531 = vrot.lane.b32.xlu0 %v6377, 40
    %v6532 = vpop.permute.xlu0 %6531
    %6533 = vrot.lane.b32.xlu0 %v6378, 40
    %v6534 = vpop.permute.xlu0 %6533
    %6535 = vrot.lane.b32.xlu0 %v6379, 40
    %v6536 = vpop.permute.xlu0 %6535
    %6537 = vrot.lane.b32.xlu0 %v6380, 40
    %v6538 = vpop.permute.xlu0 %6537
    %6539 = vrot.lane.b32.xlu0 %v6381, 40
    %v6540 = vpop.permute.xlu0 %6539
    %6541 = vrot.lane.b32.xlu0 %v6382, 40
    %v6542 = vpop.permute.xlu0 %6541
    %6543 = vrot.lane.b32.xlu0 %v6383, 40
    %v6544 = vpop.permute.xlu0 %6543
    %6545 = vrot.lane.b32.xlu0 %v6384, 40
    %v6546 = vpop.permute.xlu0 %6545
    %6547 = vrot.lane.b32.xlu0 %v6385, 40
    %v6548 = vpop.permute.xlu0 %6547
    %6549 = vrot.lane.b32.xlu0 %v6386, 40
    %v6550 = vpop.permute.xlu0 %6549
    %6551 = vrot.lane.b32.xlu0 %v6387, 40
    %v6552 = vpop.permute.xlu0 %6551
    %6553 = vrot.lane.b32.xlu0 %v6388, 40
    %v6554 = vpop.permute.xlu0 %6553
    %6555 = vrot.lane.b32.xlu0 %v6389, 40
    %v6556 = vpop.permute.xlu0 %6555
    %6557 = vrot.lane.b32.xlu0 %v6390, 40
    %v6558 = vpop.permute.xlu0 %6557
    %6559 = vrot.lane.b32.xlu0 %v6391, 40
    %v6560 = vpop.permute.xlu0 %6559
    %6561 = vrot.lane.b32.xlu0 %v6392, 40
    %v6562 = vpop.permute.xlu0 %6561
    %6563 = vrot.lane.b32.xlu0 %v6393, 40
    %v6564 = vpop.permute.xlu0 %6563
    %6565 = vrot.lane.b32.xlu0 %v6394, 40
    %v6566 = vpop.permute.xlu0 %6565
    %6567 = vrot.lane.b32.xlu0 %v6395, 40
    %v6568 = vpop.permute.xlu0 %6567
    %6569 = vrot.lane.b32.xlu0 %v6396, 40
    %v6570 = vpop.permute.xlu0 %6569
    %6571 = vrot.lane.b32.xlu0 %v6397, 40
    %v6572 = vpop.permute.xlu0 %6571
    %6573 = vrot.lane.b32.xlu0 %v6398, 40
    %v6574 = vpop.permute.xlu0 %6573
    %6575 = vrot.lane.b32.xlu0 %v6399, 40
    %v6576 = vpop.permute.xlu0 %6575
    %6577 = vrot.lane.b32.xlu0 %v6400, 40
    %v6578 = vpop.permute.xlu0 %6577
    %6579 = vrot.lane.b32.xlu0 %v6401, 40
    %v6580 = vpop.permute.xlu0 %6579
    %6581 = vrot.lane.b32.xlu0 %v6402, 40
    %v6582 = vpop.permute.xlu0 %6581
    %6583 = vrot.lane.b32.xlu0 %v6403, 40
    %v6584 = vpop.permute.xlu0 %6583
    %6585 = vrot.lane.b32.xlu0 %v6404, 40
    %v6586 = vpop.permute.xlu0 %6585
    %6587 = vrot.lane.b32.xlu0 %v6405, 40
    %v6588 = vpop.permute.xlu0 %6587
    %6589 = vrot.lane.b32.xlu0 %v6406, 40
    %v6590 = vpop.permute.xlu0 %6589
    %6591 = vrot.lane.b32.xlu0 %v6407, 40
    %v6592 = vpop.permute.xlu0 %6591
    %6593 = vrot.lane.b32.xlu0 %v6408, 40
    %v6594 = vpop.permute.xlu0 %6593
    %6595 = vrot.lane.b32.xlu0 %v6409, 40
    %v6596 = vpop.permute.xlu0 %6595
    %6597 = vrot.lane.b32.xlu0 %v6410, 40
    %v6598 = vpop.permute.xlu0 %6597
    %6599 = vrot.lane.b32.xlu0 %v6411, 40
    %v6600 = vpop.permute.xlu0 %6599
    %6601 = vrot.lane.b32.xlu0 %v6412, 40
    %v6602 = vpop.permute.xlu0 %6601
    %6603 = vrot.lane.b32.xlu0 %v6413, 40
    %v6604 = vpop.permute.xlu0 %6603
    %6605 = vrot.lane.b32.xlu0 %v6414, 40
    %v6606 = vpop.permute.xlu0 %6605
    %vm6671 = vcmask 392512
    %6672 = vst.msk [vmem:[#allocation5] sm:$0xff] %vm6671, %v6480
    %6673 = vst.msk [vmem:[#allocation5 + $0x8] sm:$0xff] %vm6671, %v6482
    %6674 = vst.msk [vmem:[#allocation5 + $0x10] sm:$0xff] %vm6671, %v6484
    %6675 = vst.msk [vmem:[#allocation5 + $0x18] sm:$0xff] %vm6671, %v6486
    %6676 = vst.msk [vmem:[#allocation5 + $0x20] sm:$0xff] %vm6671, %v6488
    %6677 = vst.msk [vmem:[#allocation5 + $0x28] sm:$0xff] %vm6671, %v6490
    %6678 = vst.msk [vmem:[#allocation5 + $0x30] sm:$0xff] %vm6671, %v6492
    %6679 = vst.msk [vmem:[#allocation5 + $0x38] sm:$0xff] %vm6671, %v6494
    %6680 = vst.msk [vmem:[#allocation5 + $0x40] sm:$0xff] %vm6671, %v6496
    %6681 = vst.msk [vmem:[#allocation5 + $0x48] sm:$0xff] %vm6671, %v6498
    %6682 = vst.msk [vmem:[#allocation5 + $0x50] sm:$0xff] %vm6671, %v6500
    %6683 = vst.msk [vmem:[#allocation5 + $0x58] sm:$0xff] %vm6671, %v6502
    %6684 = vst.msk [vmem:[#allocation5 + $0x60] sm:$0xff] %vm6671, %v6504
    %6685 = vst.msk [vmem:[#allocation5 + $0x68] sm:$0xff] %vm6671, %v6506
    %6686 = vst.msk [vmem:[#allocation5 + $0x70] sm:$0xff] %vm6671, %v6508
    %6687 = vst.msk [vmem:[#allocation5 + $0x78] sm:$0xff] %vm6671, %v6510
    %6688 = vst.msk [vmem:[#allocation5 + $0x80] sm:$0xff] %vm6671, %v6512
    %6689 = vst.msk [vmem:[#allocation5 + $0x88] sm:$0xff] %vm6671, %v6514
    %6690 = vst.msk [vmem:[#allocation5 + $0x90] sm:$0xff] %vm6671, %v6516
    %6691 = vst.msk [vmem:[#allocation5 + $0x98] sm:$0xff] %vm6671, %v6518
    %6692 = vst.msk [vmem:[#allocation5 + $0xa0] sm:$0xff] %vm6671, %v6520
    %6693 = vst.msk [vmem:[#allocation5 + $0xa8] sm:$0xff] %vm6671, %v6522
    %6694 = vst.msk [vmem:[#allocation5 + $0xb0] sm:$0xff] %vm6671, %v6524
    %6695 = vst.msk [vmem:[#allocation5 + $0xb8] sm:$0xff] %vm6671, %v6526
    %6696 = vst.msk [vmem:[#allocation5 + $0xc0] sm:$0xff] %vm6671, %v6528
    %6697 = vst.msk [vmem:[#allocation5 + $0xc8] sm:$0xff] %vm6671, %v6530
    %6698 = vst.msk [vmem:[#allocation5 + $0xd0] sm:$0xff] %vm6671, %v6532
    %6699 = vst.msk [vmem:[#allocation5 + $0xd8] sm:$0xff] %vm6671, %v6534
    %6700 = vst.msk [vmem:[#allocation5 + $0xe0] sm:$0xff] %vm6671, %v6536
    %6701 = vst.msk [vmem:[#allocation5 + $0xe8] sm:$0xff] %vm6671, %v6538
    %6702 = vst.msk [vmem:[#allocation5 + $0xf0] sm:$0xff] %vm6671, %v6540
    %6703 = vst.msk [vmem:[#allocation5 + $0xf8] sm:$0xff] %vm6671, %v6542
    %6704 = vst.msk [vmem:[#allocation5 + $0x100] sm:$0xff] %vm6671, %v6544
    %6705 = vst.msk [vmem:[#allocation5 + $0x108] sm:$0xff] %vm6671, %v6546
    %6706 = vst.msk [vmem:[#allocation5 + $0x110] sm:$0xff] %vm6671, %v6548
    %6707 = vst.msk [vmem:[#allocation5 + $0x118] sm:$0xff] %vm6671, %v6550
    %6708 = vst.msk [vmem:[#allocation5 + $0x120] sm:$0xff] %vm6671, %v6552
    %6709 = vst.msk [vmem:[#allocation5 + $0x128] sm:$0xff] %vm6671, %v6554
    %6710 = vst.msk [vmem:[#allocation5 + $0x130] sm:$0xff] %vm6671, %v6556
    %6711 = vst.msk [vmem:[#allocation5 + $0x138] sm:$0xff] %vm6671, %v6558
    %6712 = vst.msk [vmem:[#allocation5 + $0x140] sm:$0xff] %vm6671, %v6560
    %6713 = vst.msk [vmem:[#allocation5 + $0x148] sm:$0xff] %vm6671, %v6562
    %6714 = vst.msk [vmem:[#allocation5 + $0x150] sm:$0xff] %vm6671, %v6564
    %6715 = vst.msk [vmem:[#allocation5 + $0x158] sm:$0xff] %vm6671, %v6566
    %6716 = vst.msk [vmem:[#allocation5 + $0x160] sm:$0xff] %vm6671, %v6568
    %6717 = vst.msk [vmem:[#allocation5 + $0x168] sm:$0xff] %vm6671, %v6570
    %6718 = vst.msk [vmem:[#allocation5 + $0x170] sm:$0xff] %vm6671, %v6572
    %6719 = vst.msk [vmem:[#allocation5 + $0x178] sm:$0xff] %vm6671, %v6574
    %6720 = vst.msk [vmem:[#allocation5 + $0x180] sm:$0xff] %vm6671, %v6576
    %6721 = vst.msk [vmem:[#allocation5 + $0x188] sm:$0xff] %vm6671, %v6578
    %6722 = vst.msk [vmem:[#allocation5 + $0x190] sm:$0xff] %vm6671, %v6580
    %6723 = vst.msk [vmem:[#allocation5 + $0x198] sm:$0xff] %vm6671, %v6582
    %6724 = vst.msk [vmem:[#allocation5 + $0x1a0] sm:$0xff] %vm6671, %v6584
    %6725 = vst.msk [vmem:[#allocation5 + $0x1a8] sm:$0xff] %vm6671, %v6586
    %6726 = vst.msk [vmem:[#allocation5 + $0x1b0] sm:$0xff] %vm6671, %v6588
    %6727 = vst.msk [vmem:[#allocation5 + $0x1b8] sm:$0xff] %vm6671, %v6590
    %6728 = vst.msk [vmem:[#allocation5 + $0x1c0] sm:$0xff] %vm6671, %v6592
    %6729 = vst.msk [vmem:[#allocation5 + $0x1c8] sm:$0xff] %vm6671, %v6594
    %6730 = vst.msk [vmem:[#allocation5 + $0x1d0] sm:$0xff] %vm6671, %v6596
    %6731 = vst.msk [vmem:[#allocation5 + $0x1d8] sm:$0xff] %vm6671, %v6598
    %6732 = vst.msk [vmem:[#allocation5 + $0x1e0] sm:$0xff] %vm6671, %v6600
    %6733 = vst.msk [vmem:[#allocation5 + $0x1e8] sm:$0xff] %vm6671, %v6602
    %6734 = vst.msk [vmem:[#allocation5 + $0x1f0] sm:$0xff] %vm6671, %v6604
    %6735 = vst.msk [vmem:[#allocation5 + $0x1f8] sm:$0xff] %vm6671, %v6606
    %s6736 = scalar_lea.vmem [#allocation3], 48
    %v6737 = vld [vmem:[%s6736] sm:$0xff]
    %v6738 = vld [vmem:[%s6736 + $0x8] sm:$0xff]
    %v6739 = vld [vmem:[%s6736 + $0x18] sm:$0xff]
    %v6740 = vld [vmem:[%s6736 + $0x20] sm:$0xff]
    %v6741 = vld [vmem:[%s6736 + $0x30] sm:$0xff]
    %v6742 = vld [vmem:[%s6736 + $0x38] sm:$0xff]
    %v6743 = vld [vmem:[%s6736 + $0x48] sm:$0xff]
    %v6744 = vld [vmem:[%s6736 + $0x50] sm:$0xff]
    %v6745 = vld [vmem:[%s6736 + $0x60] sm:$0xff]
    %v6746 = vld [vmem:[%s6736 + $0x68] sm:$0xff]
    %v6747 = vld [vmem:[%s6736 + $0x78] sm:$0xff]
    %v6748 = vld [vmem:[%s6736 + $0x80] sm:$0xff]
    %v6749 = vld [vmem:[%s6736 + $0x90] sm:$0xff]
    %v6750 = vld [vmem:[%s6736 + $0x98] sm:$0xff]
    %v6751 = vld [vmem:[%s6736 + $0xa8] sm:$0xff]
    %v6752 = vld [vmem:[%s6736 + $0xb0] sm:$0xff]
    %v6753 = vld [vmem:[%s6736 + $0xc0] sm:$0xff]
    %v6754 = vld [vmem:[%s6736 + $0xc8] sm:$0xff]
    %v6755 = vld [vmem:[%s6736 + $0xd8] sm:$0xff]
    %v6756 = vld [vmem:[%s6736 + $0xe0] sm:$0xff]
    %v6757 = vld [vmem:[%s6736 + $0xf0] sm:$0xff]
    %v6758 = vld [vmem:[%s6736 + $0xf8] sm:$0xff]
    %v6759 = vld [vmem:[%s6736 + $0x108] sm:$0xff]
    %v6760 = vld [vmem:[%s6736 + $0x110] sm:$0xff]
    %v6761 = vld [vmem:[%s6736 + $0x120] sm:$0xff]
    %v6762 = vld [vmem:[%s6736 + $0x128] sm:$0xff]
    %v6763 = vld [vmem:[%s6736 + $0x138] sm:$0xff]
    %v6764 = vld [vmem:[%s6736 + $0x140] sm:$0xff]
    %v6765 = vld [vmem:[%s6736 + $0x150] sm:$0xff]
    %v6766 = vld [vmem:[%s6736 + $0x158] sm:$0xff]
    %v6767 = vld [vmem:[%s6736 + $0x168] sm:$0xff]
    %v6768 = vld [vmem:[%s6736 + $0x170] sm:$0xff]
    %v6769 = vld [vmem:[%s6736 + $0x1b0] sm:$0xff]
    %v6770 = vld [vmem:[%s6736 + $0x1b8] sm:$0xff]
    %v6771 = vld [vmem:[%s6736 + $0x1c8] sm:$0xff]
    %v6772 = vld [vmem:[%s6736 + $0x1d0] sm:$0xff]
    %v6773 = vld [vmem:[%s6736 + $0x1e0] sm:$0xff]
    %v6774 = vld [vmem:[%s6736 + $0x1e8] sm:$0xff]
    %v6775 = vld [vmem:[%s6736 + $0x1f8] sm:$0xff]
    %v6776 = vld [vmem:[%s6736 + $0x200] sm:$0xff]
    %v6777 = vld [vmem:[%s6736 + $0x210] sm:$0xff]
    %v6778 = vld [vmem:[%s6736 + $0x218] sm:$0xff]
    %v6779 = vld [vmem:[%s6736 + $0x228] sm:$0xff]
    %v6780 = vld [vmem:[%s6736 + $0x230] sm:$0xff]
    %v6781 = vld [vmem:[%s6736 + $0x240] sm:$0xff]
    %v6782 = vld [vmem:[%s6736 + $0x248] sm:$0xff]
    %v6783 = vld [vmem:[%s6736 + $0x258] sm:$0xff]
    %v6784 = vld [vmem:[%s6736 + $0x260] sm:$0xff]
    %v6785 = vld [vmem:[%s6736 + $0x270] sm:$0xff]
    %v6786 = vld [vmem:[%s6736 + $0x278] sm:$0xff]
    %v6787 = vld [vmem:[%s6736 + $0x288] sm:$0xff]
    %v6788 = vld [vmem:[%s6736 + $0x290] sm:$0xff]
    %v6789 = vld [vmem:[%s6736 + $0x2a0] sm:$0xff]
    %v6790 = vld [vmem:[%s6736 + $0x2a8] sm:$0xff]
    %v6791 = vld [vmem:[%s6736 + $0x2b8] sm:$0xff]
    %v6792 = vld [vmem:[%s6736 + $0x2c0] sm:$0xff]
    %v6793 = vld [vmem:[%s6736 + $0x2d0] sm:$0xff]
    %v6794 = vld [vmem:[%s6736 + $0x2d8] sm:$0xff]
    %v6795 = vld [vmem:[%s6736 + $0x2e8] sm:$0xff]
    %v6796 = vld [vmem:[%s6736 + $0x2f0] sm:$0xff]
    %v6797 = vld [vmem:[%s6736 + $0x300] sm:$0xff]
    %v6798 = vld [vmem:[%s6736 + $0x308] sm:$0xff]
    %v6799 = vld [vmem:[%s6736 + $0x318] sm:$0xff]
    %v6800 = vld [vmem:[%s6736 + $0x320] sm:$0xff]
    %6865 = vrot.lane.b32.xlu0 %v6737, 48
    %v6866 = vpop.permute.xlu0 %6865
    %6867 = vrot.lane.b32.xlu0 %v6738, 48
    %v6868 = vpop.permute.xlu0 %6867
    %6869 = vrot.lane.b32.xlu0 %v6739, 48
    %v6870 = vpop.permute.xlu0 %6869
    %6871 = vrot.lane.b32.xlu0 %v6740, 48
    %v6872 = vpop.permute.xlu0 %6871
    %6873 = vrot.lane.b32.xlu0 %v6741, 48
    %v6874 = vpop.permute.xlu0 %6873
    %6875 = vrot.lane.b32.xlu0 %v6742, 48
    %v6876 = vpop.permute.xlu0 %6875
    %6877 = vrot.lane.b32.xlu0 %v6743, 48
    %v6878 = vpop.permute.xlu0 %6877
    %6879 = vrot.lane.b32.xlu0 %v6744, 48
    %v6880 = vpop.permute.xlu0 %6879
    %6881 = vrot.lane.b32.xlu0 %v6745, 48
    %v6882 = vpop.permute.xlu0 %6881
    %6883 = vrot.lane.b32.xlu0 %v6746, 48
    %v6884 = vpop.permute.xlu0 %6883
    %6885 = vrot.lane.b32.xlu0 %v6747, 48
    %v6886 = vpop.permute.xlu0 %6885
    %6887 = vrot.lane.b32.xlu0 %v6748, 48
    %v6888 = vpop.permute.xlu0 %6887
    %6889 = vrot.lane.b32.xlu0 %v6749, 48
    %v6890 = vpop.permute.xlu0 %6889
    %6891 = vrot.lane.b32.xlu0 %v6750, 48
    %v6892 = vpop.permute.xlu0 %6891
    %6893 = vrot.lane.b32.xlu0 %v6751, 48
    %v6894 = vpop.permute.xlu0 %6893
    %6895 = vrot.lane.b32.xlu0 %v6752, 48
    %v6896 = vpop.permute.xlu0 %6895
    %6897 = vrot.lane.b32.xlu0 %v6753, 48
    %v6898 = vpop.permute.xlu0 %6897
    %6899 = vrot.lane.b32.xlu0 %v6754, 48
    %v6900 = vpop.permute.xlu0 %6899
    %6901 = vrot.lane.b32.xlu0 %v6755, 48
    %v6902 = vpop.permute.xlu0 %6901
    %6903 = vrot.lane.b32.xlu0 %v6756, 48
    %v6904 = vpop.permute.xlu0 %6903
    %6905 = vrot.lane.b32.xlu0 %v6757, 48
    %v6906 = vpop.permute.xlu0 %6905
    %6907 = vrot.lane.b32.xlu0 %v6758, 48
    %v6908 = vpop.permute.xlu0 %6907
    %6909 = vrot.lane.b32.xlu0 %v6759, 48
    %v6910 = vpop.permute.xlu0 %6909
    %6911 = vrot.lane.b32.xlu0 %v6760, 48
    %v6912 = vpop.permute.xlu0 %6911
    %6913 = vrot.lane.b32.xlu0 %v6761, 48
    %v6914 = vpop.permute.xlu0 %6913
    %6915 = vrot.lane.b32.xlu0 %v6762, 48
    %v6916 = vpop.permute.xlu0 %6915
    %6917 = vrot.lane.b32.xlu0 %v6763, 48
    %v6918 = vpop.permute.xlu0 %6917
    %6919 = vrot.lane.b32.xlu0 %v6764, 48
    %v6920 = vpop.permute.xlu0 %6919
    %6921 = vrot.lane.b32.xlu0 %v6765, 48
    %v6922 = vpop.permute.xlu0 %6921
    %6923 = vrot.lane.b32.xlu0 %v6766, 48
    %v6924 = vpop.permute.xlu0 %6923
    %6925 = vrot.lane.b32.xlu0 %v6767, 48
    %v6926 = vpop.permute.xlu0 %6925
    %6927 = vrot.lane.b32.xlu0 %v6768, 48
    %v6928 = vpop.permute.xlu0 %6927
    %6929 = vrot.lane.b32.xlu0 %v6769, 48
    %v6930 = vpop.permute.xlu0 %6929
    %6931 = vrot.lane.b32.xlu0 %v6770, 48
    %v6932 = vpop.permute.xlu0 %6931
    %6933 = vrot.lane.b32.xlu0 %v6771, 48
    %v6934 = vpop.permute.xlu0 %6933
    %6935 = vrot.lane.b32.xlu0 %v6772, 48
    %v6936 = vpop.permute.xlu0 %6935
    %6937 = vrot.lane.b32.xlu0 %v6773, 48
    %v6938 = vpop.permute.xlu0 %6937
    %6939 = vrot.lane.b32.xlu0 %v6774, 48
    %v6940 = vpop.permute.xlu0 %6939
    %6941 = vrot.lane.b32.xlu0 %v6775, 48
    %v6942 = vpop.permute.xlu0 %6941
    %6943 = vrot.lane.b32.xlu0 %v6776, 48
    %v6944 = vpop.permute.xlu0 %6943
    %6945 = vrot.lane.b32.xlu0 %v6777, 48
    %v6946 = vpop.permute.xlu0 %6945
    %6947 = vrot.lane.b32.xlu0 %v6778, 48
    %v6948 = vpop.permute.xlu0 %6947
    %6949 = vrot.lane.b32.xlu0 %v6779, 48
    %v6950 = vpop.permute.xlu0 %6949
    %6951 = vrot.lane.b32.xlu0 %v6780, 48
    %v6952 = vpop.permute.xlu0 %6951
    %6953 = vrot.lane.b32.xlu0 %v6781, 48
    %v6954 = vpop.permute.xlu0 %6953
    %6955 = vrot.lane.b32.xlu0 %v6782, 48
    %v6956 = vpop.permute.xlu0 %6955
    %6957 = vrot.lane.b32.xlu0 %v6783, 48
    %v6958 = vpop.permute.xlu0 %6957
    %6959 = vrot.lane.b32.xlu0 %v6784, 48
    %v6960 = vpop.permute.xlu0 %6959
    %6961 = vrot.lane.b32.xlu0 %v6785, 48
    %v6962 = vpop.permute.xlu0 %6961
    %6963 = vrot.lane.b32.xlu0 %v6786, 48
    %v6964 = vpop.permute.xlu0 %6963
    %6965 = vrot.lane.b32.xlu0 %v6787, 48
    %v6966 = vpop.permute.xlu0 %6965
    %6967 = vrot.lane.b32.xlu0 %v6788, 48
    %v6968 = vpop.permute.xlu0 %6967
    %6969 = vrot.lane.b32.xlu0 %v6789, 48
    %v6970 = vpop.permute.xlu0 %6969
    %6971 = vrot.lane.b32.xlu0 %v6790, 48
    %v6972 = vpop.permute.xlu0 %6971
    %6973 = vrot.lane.b32.xlu0 %v6791, 48
    %v6974 = vpop.permute.xlu0 %6973
    %6975 = vrot.lane.b32.xlu0 %v6792, 48
    %v6976 = vpop.permute.xlu0 %6975
    %6977 = vrot.lane.b32.xlu0 %v6793, 48
    %v6978 = vpop.permute.xlu0 %6977
    %6979 = vrot.lane.b32.xlu0 %v6794, 48
    %v6980 = vpop.permute.xlu0 %6979
    %6981 = vrot.lane.b32.xlu0 %v6795, 48
    %v6982 = vpop.permute.xlu0 %6981
    %6983 = vrot.lane.b32.xlu0 %v6796, 48
    %v6984 = vpop.permute.xlu0 %6983
    %6985 = vrot.lane.b32.xlu0 %v6797, 48
    %v6986 = vpop.permute.xlu0 %6985
    %6987 = vrot.lane.b32.xlu0 %v6798, 48
    %v6988 = vpop.permute.xlu0 %6987
    %6989 = vrot.lane.b32.xlu0 %v6799, 48
    %v6990 = vpop.permute.xlu0 %6989
    %6991 = vrot.lane.b32.xlu0 %v6800, 48
    %v6992 = vpop.permute.xlu0 %6991
    %vm7057 = vcmask 458112
    %7058 = vst.msk [vmem:[#allocation5] sm:$0xff] %vm7057, %v6866
    %7059 = vst.msk [vmem:[#allocation5 + $0x8] sm:$0xff] %vm7057, %v6868
    %7060 = vst.msk [vmem:[#allocation5 + $0x10] sm:$0xff] %vm7057, %v6870
    %7061 = vst.msk [vmem:[#allocation5 + $0x18] sm:$0xff] %vm7057, %v6872
    %7062 = vst.msk [vmem:[#allocation5 + $0x20] sm:$0xff] %vm7057, %v6874
    %7063 = vst.msk [vmem:[#allocation5 + $0x28] sm:$0xff] %vm7057, %v6876
    %7064 = vst.msk [vmem:[#allocation5 + $0x30] sm:$0xff] %vm7057, %v6878
    %7065 = vst.msk [vmem:[#allocation5 + $0x38] sm:$0xff] %vm7057, %v6880
    %7066 = vst.msk [vmem:[#allocation5 + $0x40] sm:$0xff] %vm7057, %v6882
    %7067 = vst.msk [vmem:[#allocation5 + $0x48] sm:$0xff] %vm7057, %v6884
    %7068 = vst.msk [vmem:[#allocation5 + $0x50] sm:$0xff] %vm7057, %v6886
    %7069 = vst.msk [vmem:[#allocation5 + $0x58] sm:$0xff] %vm7057, %v6888
    %7070 = vst.msk [vmem:[#allocation5 + $0x60] sm:$0xff] %vm7057, %v6890
    %7071 = vst.msk [vmem:[#allocation5 + $0x68] sm:$0xff] %vm7057, %v6892
    %7072 = vst.msk [vmem:[#allocation5 + $0x70] sm:$0xff] %vm7057, %v6894
    %7073 = vst.msk [vmem:[#allocation5 + $0x78] sm:$0xff] %vm7057, %v6896
    %7074 = vst.msk [vmem:[#allocation5 + $0x80] sm:$0xff] %vm7057, %v6898
    %7075 = vst.msk [vmem:[#allocation5 + $0x88] sm:$0xff] %vm7057, %v6900
    %7076 = vst.msk [vmem:[#allocation5 + $0x90] sm:$0xff] %vm7057, %v6902
    %7077 = vst.msk [vmem:[#allocation5 + $0x98] sm:$0xff] %vm7057, %v6904
    %7078 = vst.msk [vmem:[#allocation5 + $0xa0] sm:$0xff] %vm7057, %v6906
    %7079 = vst.msk [vmem:[#allocation5 + $0xa8] sm:$0xff] %vm7057, %v6908
    %7080 = vst.msk [vmem:[#allocation5 + $0xb0] sm:$0xff] %vm7057, %v6910
    %7081 = vst.msk [vmem:[#allocation5 + $0xb8] sm:$0xff] %vm7057, %v6912
    %7082 = vst.msk [vmem:[#allocation5 + $0xc0] sm:$0xff] %vm7057, %v6914
    %7083 = vst.msk [vmem:[#allocation5 + $0xc8] sm:$0xff] %vm7057, %v6916
    %7084 = vst.msk [vmem:[#allocation5 + $0xd0] sm:$0xff] %vm7057, %v6918
    %7085 = vst.msk [vmem:[#allocation5 + $0xd8] sm:$0xff] %vm7057, %v6920
    %7086 = vst.msk [vmem:[#allocation5 + $0xe0] sm:$0xff] %vm7057, %v6922
    %7087 = vst.msk [vmem:[#allocation5 + $0xe8] sm:$0xff] %vm7057, %v6924
    %7088 = vst.msk [vmem:[#allocation5 + $0xf0] sm:$0xff] %vm7057, %v6926
    %7089 = vst.msk [vmem:[#allocation5 + $0xf8] sm:$0xff] %vm7057, %v6928
    %7090 = vst.msk [vmem:[#allocation5 + $0x100] sm:$0xff] %vm7057, %v6930
    %7091 = vst.msk [vmem:[#allocation5 + $0x108] sm:$0xff] %vm7057, %v6932
    %7092 = vst.msk [vmem:[#allocation5 + $0x110] sm:$0xff] %vm7057, %v6934
    %7093 = vst.msk [vmem:[#allocation5 + $0x118] sm:$0xff] %vm7057, %v6936
    %7094 = vst.msk [vmem:[#allocation5 + $0x120] sm:$0xff] %vm7057, %v6938
    %7095 = vst.msk [vmem:[#allocation5 + $0x128] sm:$0xff] %vm7057, %v6940
    %7096 = vst.msk [vmem:[#allocation5 + $0x130] sm:$0xff] %vm7057, %v6942
    %7097 = vst.msk [vmem:[#allocation5 + $0x138] sm:$0xff] %vm7057, %v6944
    %7098 = vst.msk [vmem:[#allocation5 + $0x140] sm:$0xff] %vm7057, %v6946
    %7099 = vst.msk [vmem:[#allocation5 + $0x148] sm:$0xff] %vm7057, %v6948
    %7100 = vst.msk [vmem:[#allocation5 + $0x150] sm:$0xff] %vm7057, %v6950
    %7101 = vst.msk [vmem:[#allocation5 + $0x158] sm:$0xff] %vm7057, %v6952
    %7102 = vst.msk [vmem:[#allocation5 + $0x160] sm:$0xff] %vm7057, %v6954
    %7103 = vst.msk [vmem:[#allocation5 + $0x168] sm:$0xff] %vm7057, %v6956
    %7104 = vst.msk [vmem:[#allocation5 + $0x170] sm:$0xff] %vm7057, %v6958
    %7105 = vst.msk [vmem:[#allocation5 + $0x178] sm:$0xff] %vm7057, %v6960
    %7106 = vst.msk [vmem:[#allocation5 + $0x180] sm:$0xff] %vm7057, %v6962
    %7107 = vst.msk [vmem:[#allocation5 + $0x188] sm:$0xff] %vm7057, %v6964
    %7108 = vst.msk [vmem:[#allocation5 + $0x190] sm:$0xff] %vm7057, %v6966
    %7109 = vst.msk [vmem:[#allocation5 + $0x198] sm:$0xff] %vm7057, %v6968
    %7110 = vst.msk [vmem:[#allocation5 + $0x1a0] sm:$0xff] %vm7057, %v6970
    %7111 = vst.msk [vmem:[#allocation5 + $0x1a8] sm:$0xff] %vm7057, %v6972
    %7112 = vst.msk [vmem:[#allocation5 + $0x1b0] sm:$0xff] %vm7057, %v6974
    %7113 = vst.msk [vmem:[#allocation5 + $0x1b8] sm:$0xff] %vm7057, %v6976
    %7114 = vst.msk [vmem:[#allocation5 + $0x1c0] sm:$0xff] %vm7057, %v6978
    %7115 = vst.msk [vmem:[#allocation5 + $0x1c8] sm:$0xff] %vm7057, %v6980
    %7116 = vst.msk [vmem:[#allocation5 + $0x1d0] sm:$0xff] %vm7057, %v6982
    %7117 = vst.msk [vmem:[#allocation5 + $0x1d8] sm:$0xff] %vm7057, %v6984
    %7118 = vst.msk [vmem:[#allocation5 + $0x1e0] sm:$0xff] %vm7057, %v6986
    %7119 = vst.msk [vmem:[#allocation5 + $0x1e8] sm:$0xff] %vm7057, %v6988
    %7120 = vst.msk [vmem:[#allocation5 + $0x1f0] sm:$0xff] %vm7057, %v6990
    %7121 = vst.msk [vmem:[#allocation5 + $0x1f8] sm:$0xff] %vm7057, %v6992
    %v7122 = vld [vmem:[%s6736 + $0x1] sm:$0xff]
    %v7123 = vld [vmem:[%s6736 + $0x9] sm:$0xff]
    %v7124 = vld [vmem:[%s6736 + $0x19] sm:$0xff]
    %v7125 = vld [vmem:[%s6736 + $0x21] sm:$0xff]
    %v7126 = vld [vmem:[%s6736 + $0x31] sm:$0xff]
    %v7127 = vld [vmem:[%s6736 + $0x39] sm:$0xff]
    %v7128 = vld [vmem:[%s6736 + $0x49] sm:$0xff]
    %v7129 = vld [vmem:[%s6736 + $0x51] sm:$0xff]
    %v7130 = vld [vmem:[%s6736 + $0x61] sm:$0xff]
    %v7131 = vld [vmem:[%s6736 + $0x69] sm:$0xff]
    %v7132 = vld [vmem:[%s6736 + $0x79] sm:$0xff]
    %v7133 = vld [vmem:[%s6736 + $0x81] sm:$0xff]
    %v7134 = vld [vmem:[%s6736 + $0x91] sm:$0xff]
    %v7135 = vld [vmem:[%s6736 + $0x99] sm:$0xff]
    %v7136 = vld [vmem:[%s6736 + $0xa9] sm:$0xff]
    %v7137 = vld [vmem:[%s6736 + $0xb1] sm:$0xff]
    %v7138 = vld [vmem:[%s6736 + $0xc1] sm:$0xff]
    %v7139 = vld [vmem:[%s6736 + $0xc9] sm:$0xff]
    %v7140 = vld [vmem:[%s6736 + $0xd9] sm:$0xff]
    %v7141 = vld [vmem:[%s6736 + $0xe1] sm:$0xff]
    %v7142 = vld [vmem:[%s6736 + $0xf1] sm:$0xff]
    %v7143 = vld [vmem:[%s6736 + $0xf9] sm:$0xff]
    %v7144 = vld [vmem:[%s6736 + $0x109] sm:$0xff]
    %v7145 = vld [vmem:[%s6736 + $0x111] sm:$0xff]
    %v7146 = vld [vmem:[%s6736 + $0x121] sm:$0xff]
    %v7147 = vld [vmem:[%s6736 + $0x129] sm:$0xff]
    %v7148 = vld [vmem:[%s6736 + $0x139] sm:$0xff]
    %v7149 = vld [vmem:[%s6736 + $0x141] sm:$0xff]
    %v7150 = vld [vmem:[%s6736 + $0x151] sm:$0xff]
    %v7151 = vld [vmem:[%s6736 + $0x159] sm:$0xff]
    %v7152 = vld [vmem:[%s6736 + $0x169] sm:$0xff]
    %v7153 = vld [vmem:[%s6736 + $0x171] sm:$0xff]
    %v7154 = vld [vmem:[%s6736 + $0x1b1] sm:$0xff]
    %v7155 = vld [vmem:[%s6736 + $0x1b9] sm:$0xff]
    %v7156 = vld [vmem:[%s6736 + $0x1c9] sm:$0xff]
    %v7157 = vld [vmem:[%s6736 + $0x1d1] sm:$0xff]
    %v7158 = vld [vmem:[%s6736 + $0x1e1] sm:$0xff]
    %v7159 = vld [vmem:[%s6736 + $0x1e9] sm:$0xff]
    %v7160 = vld [vmem:[%s6736 + $0x1f9] sm:$0xff]
    %v7161 = vld [vmem:[%s6736 + $0x201] sm:$0xff]
    %v7162 = vld [vmem:[%s6736 + $0x211] sm:$0xff]
    %v7163 = vld [vmem:[%s6736 + $0x219] sm:$0xff]
    %v7164 = vld [vmem:[%s6736 + $0x229] sm:$0xff]
    %v7165 = vld [vmem:[%s6736 + $0x231] sm:$0xff]
    %v7166 = vld [vmem:[%s6736 + $0x241] sm:$0xff]
    %v7167 = vld [vmem:[%s6736 + $0x249] sm:$0xff]
    %v7168 = vld [vmem:[%s6736 + $0x259] sm:$0xff]
    %v7169 = vld [vmem:[%s6736 + $0x261] sm:$0xff]
    %v7170 = vld [vmem:[%s6736 + $0x271] sm:$0xff]
    %v7171 = vld [vmem:[%s6736 + $0x279] sm:$0xff]
    %v7172 = vld [vmem:[%s6736 + $0x289] sm:$0xff]
    %v7173 = vld [vmem:[%s6736 + $0x291] sm:$0xff]
    %v7174 = vld [vmem:[%s6736 + $0x2a1] sm:$0xff]
    %v7175 = vld [vmem:[%s6736 + $0x2a9] sm:$0xff]
    %v7176 = vld [vmem:[%s6736 + $0x2b9] sm:$0xff]
    %v7177 = vld [vmem:[%s6736 + $0x2c1] sm:$0xff]
    %v7178 = vld [vmem:[%s6736 + $0x2d1] sm:$0xff]
    %v7179 = vld [vmem:[%s6736 + $0x2d9] sm:$0xff]
    %v7180 = vld [vmem:[%s6736 + $0x2e9] sm:$0xff]
    %v7181 = vld [vmem:[%s6736 + $0x2f1] sm:$0xff]
    %v7182 = vld [vmem:[%s6736 + $0x301] sm:$0xff]
    %v7183 = vld [vmem:[%s6736 + $0x309] sm:$0xff]
    %v7184 = vld [vmem:[%s6736 + $0x319] sm:$0xff]
    %v7185 = vld [vmem:[%s6736 + $0x321] sm:$0xff]
    %7250 = vrot.lane.b32.xlu0 %v7122, 56
    %v7251 = vpop.permute.xlu0 %7250
    %7252 = vrot.lane.b32.xlu0 %v7123, 56
    %v7253 = vpop.permute.xlu0 %7252
    %7254 = vrot.lane.b32.xlu0 %v7124, 56
    %v7255 = vpop.permute.xlu0 %7254
    %7256 = vrot.lane.b32.xlu0 %v7125, 56
    %v7257 = vpop.permute.xlu0 %7256
    %7258 = vrot.lane.b32.xlu0 %v7126, 56
    %v7259 = vpop.permute.xlu0 %7258
    %7260 = vrot.lane.b32.xlu0 %v7127, 56
    %v7261 = vpop.permute.xlu0 %7260
    %7262 = vrot.lane.b32.xlu0 %v7128, 56
    %v7263 = vpop.permute.xlu0 %7262
    %7264 = vrot.lane.b32.xlu0 %v7129, 56
    %v7265 = vpop.permute.xlu0 %7264
    %7266 = vrot.lane.b32.xlu0 %v7130, 56
    %v7267 = vpop.permute.xlu0 %7266
    %7268 = vrot.lane.b32.xlu0 %v7131, 56
    %v7269 = vpop.permute.xlu0 %7268
    %7270 = vrot.lane.b32.xlu0 %v7132, 56
    %v7271 = vpop.permute.xlu0 %7270
    %7272 = vrot.lane.b32.xlu0 %v7133, 56
    %v7273 = vpop.permute.xlu0 %7272
    %7274 = vrot.lane.b32.xlu0 %v7134, 56
    %v7275 = vpop.permute.xlu0 %7274
    %7276 = vrot.lane.b32.xlu0 %v7135, 56
    %v7277 = vpop.permute.xlu0 %7276
    %7278 = vrot.lane.b32.xlu0 %v7136, 56
    %v7279 = vpop.permute.xlu0 %7278
    %7280 = vrot.lane.b32.xlu0 %v7137, 56
    %v7281 = vpop.permute.xlu0 %7280
    %7282 = vrot.lane.b32.xlu0 %v7138, 56
    %v7283 = vpop.permute.xlu0 %7282
    %7284 = vrot.lane.b32.xlu0 %v7139, 56
    %v7285 = vpop.permute.xlu0 %7284
    %7286 = vrot.lane.b32.xlu0 %v7140, 56
    %v7287 = vpop.permute.xlu0 %7286
    %7288 = vrot.lane.b32.xlu0 %v7141, 56
    %v7289 = vpop.permute.xlu0 %7288
    %7290 = vrot.lane.b32.xlu0 %v7142, 56
    %v7291 = vpop.permute.xlu0 %7290
    %7292 = vrot.lane.b32.xlu0 %v7143, 56
    %v7293 = vpop.permute.xlu0 %7292
    %7294 = vrot.lane.b32.xlu0 %v7144, 56
    %v7295 = vpop.permute.xlu0 %7294
    %7296 = vrot.lane.b32.xlu0 %v7145, 56
    %v7297 = vpop.permute.xlu0 %7296
    %7298 = vrot.lane.b32.xlu0 %v7146, 56
    %v7299 = vpop.permute.xlu0 %7298
    %7300 = vrot.lane.b32.xlu0 %v7147, 56
    %v7301 = vpop.permute.xlu0 %7300
    %7302 = vrot.lane.b32.xlu0 %v7148, 56
    %v7303 = vpop.permute.xlu0 %7302
    %7304 = vrot.lane.b32.xlu0 %v7149, 56
    %v7305 = vpop.permute.xlu0 %7304
    %7306 = vrot.lane.b32.xlu0 %v7150, 56
    %v7307 = vpop.permute.xlu0 %7306
    %7308 = vrot.lane.b32.xlu0 %v7151, 56
    %v7309 = vpop.permute.xlu0 %7308
    %7310 = vrot.lane.b32.xlu0 %v7152, 56
    %v7311 = vpop.permute.xlu0 %7310
    %7312 = vrot.lane.b32.xlu0 %v7153, 56
    %v7313 = vpop.permute.xlu0 %7312
    %7314 = vrot.lane.b32.xlu0 %v7154, 56
    %v7315 = vpop.permute.xlu0 %7314
    %7316 = vrot.lane.b32.xlu0 %v7155, 56
    %v7317 = vpop.permute.xlu0 %7316
    %7318 = vrot.lane.b32.xlu0 %v7156, 56
    %v7319 = vpop.permute.xlu0 %7318
    %7320 = vrot.lane.b32.xlu0 %v7157, 56
    %v7321 = vpop.permute.xlu0 %7320
    %7322 = vrot.lane.b32.xlu0 %v7158, 56
    %v7323 = vpop.permute.xlu0 %7322
    %7324 = vrot.lane.b32.xlu0 %v7159, 56
    %v7325 = vpop.permute.xlu0 %7324
    %7326 = vrot.lane.b32.xlu0 %v7160, 56
    %v7327 = vpop.permute.xlu0 %7326
    %7328 = vrot.lane.b32.xlu0 %v7161, 56
    %v7329 = vpop.permute.xlu0 %7328
    %7330 = vrot.lane.b32.xlu0 %v7162, 56
    %v7331 = vpop.permute.xlu0 %7330
    %7332 = vrot.lane.b32.xlu0 %v7163, 56
    %v7333 = vpop.permute.xlu0 %7332
    %7334 = vrot.lane.b32.xlu0 %v7164, 56
    %v7335 = vpop.permute.xlu0 %7334
    %7336 = vrot.lane.b32.xlu0 %v7165, 56
    %v7337 = vpop.permute.xlu0 %7336
    %7338 = vrot.lane.b32.xlu0 %v7166, 56
    %v7339 = vpop.permute.xlu0 %7338
    %7340 = vrot.lane.b32.xlu0 %v7167, 56
    %v7341 = vpop.permute.xlu0 %7340
    %7342 = vrot.lane.b32.xlu0 %v7168, 56
    %v7343 = vpop.permute.xlu0 %7342
    %7344 = vrot.lane.b32.xlu0 %v7169, 56
    %v7345 = vpop.permute.xlu0 %7344
    %7346 = vrot.lane.b32.xlu0 %v7170, 56
    %v7347 = vpop.permute.xlu0 %7346
    %7348 = vrot.lane.b32.xlu0 %v7171, 56
    %v7349 = vpop.permute.xlu0 %7348
    %7350 = vrot.lane.b32.xlu0 %v7172, 56
    %v7351 = vpop.permute.xlu0 %7350
    %7352 = vrot.lane.b32.xlu0 %v7173, 56
    %v7353 = vpop.permute.xlu0 %7352
    %7354 = vrot.lane.b32.xlu0 %v7174, 56
    %v7355 = vpop.permute.xlu0 %7354
    %7356 = vrot.lane.b32.xlu0 %v7175, 56
    %v7357 = vpop.permute.xlu0 %7356
    %7358 = vrot.lane.b32.xlu0 %v7176, 56
    %v7359 = vpop.permute.xlu0 %7358
    %7360 = vrot.lane.b32.xlu0 %v7177, 56
    %v7361 = vpop.permute.xlu0 %7360
    %7362 = vrot.lane.b32.xlu0 %v7178, 56
    %v7363 = vpop.permute.xlu0 %7362
    %7364 = vrot.lane.b32.xlu0 %v7179, 56
    %v7365 = vpop.permute.xlu0 %7364
    %7366 = vrot.lane.b32.xlu0 %v7180, 56
    %v7367 = vpop.permute.xlu0 %7366
    %7368 = vrot.lane.b32.xlu0 %v7181, 56
    %v7369 = vpop.permute.xlu0 %7368
    %7370 = vrot.lane.b32.xlu0 %v7182, 56
    %v7371 = vpop.permute.xlu0 %7370
    %7372 = vrot.lane.b32.xlu0 %v7183, 56
    %v7373 = vpop.permute.xlu0 %7372
    %7374 = vrot.lane.b32.xlu0 %v7184, 56
    %v7375 = vpop.permute.xlu0 %7374
    %7376 = vrot.lane.b32.xlu0 %v7185, 56
    %v7377 = vpop.permute.xlu0 %7376
    %vm7442 = vcmask 523712
    %7443 = vst.msk [vmem:[#allocation5] sm:$0xff] %vm7442, %v7251
    %7444 = vst.msk [vmem:[#allocation5 + $0x8] sm:$0xff] %vm7442, %v7253
    %7445 = vst.msk [vmem:[#allocation5 + $0x10] sm:$0xff] %vm7442, %v7255
    %7446 = vst.msk [vmem:[#allocation5 + $0x18] sm:$0xff] %vm7442, %v7257
    %7447 = vst.msk [vmem:[#allocation5 + $0x20] sm:$0xff] %vm7442, %v7259
    %7448 = vst.msk [vmem:[#allocation5 + $0x28] sm:$0xff] %vm7442, %v7261
    %7449 = vst.msk [vmem:[#allocation5 + $0x30] sm:$0xff] %vm7442, %v7263
    %7450 = vst.msk [vmem:[#allocation5 + $0x38] sm:$0xff] %vm7442, %v7265
    %7451 = vst.msk [vmem:[#allocation5 + $0x40] sm:$0xff] %vm7442, %v7267
    %7452 = vst.msk [vmem:[#allocation5 + $0x48] sm:$0xff] %vm7442, %v7269
    %7453 = vst.msk [vmem:[#allocation5 + $0x50] sm:$0xff] %vm7442, %v7271
    %7454 = vst.msk [vmem:[#allocation5 + $0x58] sm:$0xff] %vm7442, %v7273
    %7455 = vst.msk [vmem:[#allocation5 + $0x60] sm:$0xff] %vm7442, %v7275
    %7456 = vst.msk [vmem:[#allocation5 + $0x68] sm:$0xff] %vm7442, %v7277
    %7457 = vst.msk [vmem:[#allocation5 + $0x70] sm:$0xff] %vm7442, %v7279
    %7458 = vst.msk [vmem:[#allocation5 + $0x78] sm:$0xff] %vm7442, %v7281
    %7459 = vst.msk [vmem:[#allocation5 + $0x80] sm:$0xff] %vm7442, %v7283
    %7460 = vst.msk [vmem:[#allocation5 + $0x88] sm:$0xff] %vm7442, %v7285
    %7461 = vst.msk [vmem:[#allocation5 + $0x90] sm:$0xff] %vm7442, %v7287
    %7462 = vst.msk [vmem:[#allocation5 + $0x98] sm:$0xff] %vm7442, %v7289
    %7463 = vst.msk [vmem:[#allocation5 + $0xa0] sm:$0xff] %vm7442, %v7291
    %7464 = vst.msk [vmem:[#allocation5 + $0xa8] sm:$0xff] %vm7442, %v7293
    %7465 = vst.msk [vmem:[#allocation5 + $0xb0] sm:$0xff] %vm7442, %v7295
    %7466 = vst.msk [vmem:[#allocation5 + $0xb8] sm:$0xff] %vm7442, %v7297
    %7467 = vst.msk [vmem:[#allocation5 + $0xc0] sm:$0xff] %vm7442, %v7299
    %7468 = vst.msk [vmem:[#allocation5 + $0xc8] sm:$0xff] %vm7442, %v7301
    %7469 = vst.msk [vmem:[#allocation5 + $0xd0] sm:$0xff] %vm7442, %v7303
    %7470 = vst.msk [vmem:[#allocation5 + $0xd8] sm:$0xff] %vm7442, %v7305
    %7471 = vst.msk [vmem:[#allocation5 + $0xe0] sm:$0xff] %vm7442, %v7307
    %7472 = vst.msk [vmem:[#allocation5 + $0xe8] sm:$0xff] %vm7442, %v7309
    %7473 = vst.msk [vmem:[#allocation5 + $0xf0] sm:$0xff] %vm7442, %v7311
    %7474 = vst.msk [vmem:[#allocation5 + $0xf8] sm:$0xff] %vm7442, %v7313
    %7475 = vst.msk [vmem:[#allocation5 + $0x100] sm:$0xff] %vm7442, %v7315
    %7476 = vst.msk [vmem:[#allocation5 + $0x108] sm:$0xff] %vm7442, %v7317
    %7477 = vst.msk [vmem:[#allocation5 + $0x110] sm:$0xff] %vm7442, %v7319
    %7478 = vst.msk [vmem:[#allocation5 + $0x118] sm:$0xff] %vm7442, %v7321
    %7479 = vst.msk [vmem:[#allocation5 + $0x120] sm:$0xff] %vm7442, %v7323
    %7480 = vst.msk [vmem:[#allocation5 + $0x128] sm:$0xff] %vm7442, %v7325
    %7481 = vst.msk [vmem:[#allocation5 + $0x130] sm:$0xff] %vm7442, %v7327
    %7482 = vst.msk [vmem:[#allocation5 + $0x138] sm:$0xff] %vm7442, %v7329
    %7483 = vst.msk [vmem:[#allocation5 + $0x140] sm:$0xff] %vm7442, %v7331
    %7484 = vst.msk [vmem:[#allocation5 + $0x148] sm:$0xff] %vm7442, %v7333
    %7485 = vst.msk [vmem:[#allocation5 + $0x150] sm:$0xff] %vm7442, %v7335
    %7486 = vst.msk [vmem:[#allocation5 + $0x158] sm:$0xff] %vm7442, %v7337
    %7487 = vst.msk [vmem:[#allocation5 + $0x160] sm:$0xff] %vm7442, %v7339
    %7488 = vst.msk [vmem:[#allocation5 + $0x168] sm:$0xff] %vm7442, %v7341
    %7489 = vst.msk [vmem:[#allocation5 + $0x170] sm:$0xff] %vm7442, %v7343
    %7490 = vst.msk [vmem:[#allocation5 + $0x178] sm:$0xff] %vm7442, %v7345
    %7491 = vst.msk [vmem:[#allocation5 + $0x180] sm:$0xff] %vm7442, %v7347
    %7492 = vst.msk [vmem:[#allocation5 + $0x188] sm:$0xff] %vm7442, %v7349
    %7493 = vst.msk [vmem:[#allocation5 + $0x190] sm:$0xff] %vm7442, %v7351
    %7494 = vst.msk [vmem:[#allocation5 + $0x198] sm:$0xff] %vm7442, %v7353
    %7495 = vst.msk [vmem:[#allocation5 + $0x1a0] sm:$0xff] %vm7442, %v7355
    %7496 = vst.msk [vmem:[#allocation5 + $0x1a8] sm:$0xff] %vm7442, %v7357
    %7497 = vst.msk [vmem:[#allocation5 + $0x1b0] sm:$0xff] %vm7442, %v7359
    %7498 = vst.msk [vmem:[#allocation5 + $0x1b8] sm:$0xff] %vm7442, %v7361
    %7499 = vst.msk [vmem:[#allocation5 + $0x1c0] sm:$0xff] %vm7442, %v7363
    %7500 = vst.msk [vmem:[#allocation5 + $0x1c8] sm:$0xff] %vm7442, %v7365
    %7501 = vst.msk [vmem:[#allocation5 + $0x1d0] sm:$0xff] %vm7442, %v7367
    %7502 = vst.msk [vmem:[#allocation5 + $0x1d8] sm:$0xff] %vm7442, %v7369
    %7503 = vst.msk [vmem:[#allocation5 + $0x1e0] sm:$0xff] %vm7442, %v7371
    %7504 = vst.msk [vmem:[#allocation5 + $0x1e8] sm:$0xff] %vm7442, %v7373
    %7505 = vst.msk [vmem:[#allocation5 + $0x1f0] sm:$0xff] %vm7442, %v7375
    %7506 = vst.msk [vmem:[#allocation5 + $0x1f8] sm:$0xff] %vm7442, %v7377
    %v7507 = vld [vmem:[%s6736 + $0x2] sm:$0xff]
    %v7508 = vld [vmem:[%s6736 + $0xa] sm:$0xff]
    %v7509 = vld [vmem:[%s6736 + $0x1a] sm:$0xff]
    %v7510 = vld [vmem:[%s6736 + $0x22] sm:$0xff]
    %v7511 = vld [vmem:[%s6736 + $0x32] sm:$0xff]
    %v7512 = vld [vmem:[%s6736 + $0x3a] sm:$0xff]
    %v7513 = vld [vmem:[%s6736 + $0x4a] sm:$0xff]
    %v7514 = vld [vmem:[%s6736 + $0x52] sm:$0xff]
    %v7515 = vld [vmem:[%s6736 + $0x62] sm:$0xff]
    %v7516 = vld [vmem:[%s6736 + $0x6a] sm:$0xff]
    %v7517 = vld [vmem:[%s6736 + $0x7a] sm:$0xff]
    %v7518 = vld [vmem:[%s6736 + $0x82] sm:$0xff]
    %v7519 = vld [vmem:[%s6736 + $0x92] sm:$0xff]
    %v7520 = vld [vmem:[%s6736 + $0x9a] sm:$0xff]
    %v7521 = vld [vmem:[%s6736 + $0xaa] sm:$0xff]
    %v7522 = vld [vmem:[%s6736 + $0xb2] sm:$0xff]
    %v7523 = vld [vmem:[%s6736 + $0xc2] sm:$0xff]
    %v7524 = vld [vmem:[%s6736 + $0xca] sm:$0xff]
    %v7525 = vld [vmem:[%s6736 + $0xda] sm:$0xff]
    %v7526 = vld [vmem:[%s6736 + $0xe2] sm:$0xff]
    %v7527 = vld [vmem:[%s6736 + $0xf2] sm:$0xff]
    %v7528 = vld [vmem:[%s6736 + $0xfa] sm:$0xff]
    %v7529 = vld [vmem:[%s6736 + $0x10a] sm:$0xff]
    %v7530 = vld [vmem:[%s6736 + $0x112] sm:$0xff]
    %v7531 = vld [vmem:[%s6736 + $0x122] sm:$0xff]
    %v7532 = vld [vmem:[%s6736 + $0x12a] sm:$0xff]
    %v7533 = vld [vmem:[%s6736 + $0x13a] sm:$0xff]
    %v7534 = vld [vmem:[%s6736 + $0x142] sm:$0xff]
    %v7535 = vld [vmem:[%s6736 + $0x152] sm:$0xff]
    %v7536 = vld [vmem:[%s6736 + $0x15a] sm:$0xff]
    %v7537 = vld [vmem:[%s6736 + $0x16a] sm:$0xff]
    %v7538 = vld [vmem:[%s6736 + $0x172] sm:$0xff]
    %v7539 = vld [vmem:[%s6736 + $0x1b2] sm:$0xff]
    %v7540 = vld [vmem:[%s6736 + $0x1ba] sm:$0xff]
    %v7541 = vld [vmem:[%s6736 + $0x1ca] sm:$0xff]
    %v7542 = vld [vmem:[%s6736 + $0x1d2] sm:$0xff]
    %v7543 = vld [vmem:[%s6736 + $0x1e2] sm:$0xff]
    %v7544 = vld [vmem:[%s6736 + $0x1ea] sm:$0xff]
    %v7545 = vld [vmem:[%s6736 + $0x1fa] sm:$0xff]
    %v7546 = vld [vmem:[%s6736 + $0x202] sm:$0xff]
    %v7547 = vld [vmem:[%s6736 + $0x212] sm:$0xff]
    %v7548 = vld [vmem:[%s6736 + $0x21a] sm:$0xff]
    %v7549 = vld [vmem:[%s6736 + $0x22a] sm:$0xff]
    %v7550 = vld [vmem:[%s6736 + $0x232] sm:$0xff]
    %v7551 = vld [vmem:[%s6736 + $0x242] sm:$0xff]
    %v7552 = vld [vmem:[%s6736 + $0x24a] sm:$0xff]
    %v7553 = vld [vmem:[%s6736 + $0x25a] sm:$0xff]
    %v7554 = vld [vmem:[%s6736 + $0x262] sm:$0xff]
    %v7555 = vld [vmem:[%s6736 + $0x272] sm:$0xff]
    %v7556 = vld [vmem:[%s6736 + $0x27a] sm:$0xff]
    %v7557 = vld [vmem:[%s6736 + $0x28a] sm:$0xff]
    %v7558 = vld [vmem:[%s6736 + $0x292] sm:$0xff]
    %v7559 = vld [vmem:[%s6736 + $0x2a2] sm:$0xff]
    %v7560 = vld [vmem:[%s6736 + $0x2aa] sm:$0xff]
    %v7561 = vld [vmem:[%s6736 + $0x2ba] sm:$0xff]
    %v7562 = vld [vmem:[%s6736 + $0x2c2] sm:$0xff]
    %v7563 = vld [vmem:[%s6736 + $0x2d2] sm:$0xff]
    %v7564 = vld [vmem:[%s6736 + $0x2da] sm:$0xff]
    %v7565 = vld [vmem:[%s6736 + $0x2ea] sm:$0xff]
    %v7566 = vld [vmem:[%s6736 + $0x2f2] sm:$0xff]
    %v7567 = vld [vmem:[%s6736 + $0x302] sm:$0xff]
    %v7568 = vld [vmem:[%s6736 + $0x30a] sm:$0xff]
    %v7569 = vld [vmem:[%s6736 + $0x31a] sm:$0xff]
    %v7570 = vld [vmem:[%s6736 + $0x322] sm:$0xff]
    %7635 = vrot.lane.b32.xlu0 %v7507, 64
    %v7636 = vpop.permute.xlu0 %7635
    %7637 = vrot.lane.b32.xlu0 %v7508, 64
    %v7638 = vpop.permute.xlu0 %7637
    %7639 = vrot.lane.b32.xlu0 %v7509, 64
    %v7640 = vpop.permute.xlu0 %7639
    %7641 = vrot.lane.b32.xlu0 %v7510, 64
    %v7642 = vpop.permute.xlu0 %7641
    %7643 = vrot.lane.b32.xlu0 %v7511, 64
    %v7644 = vpop.permute.xlu0 %7643
    %7645 = vrot.lane.b32.xlu0 %v7512, 64
    %v7646 = vpop.permute.xlu0 %7645
    %7647 = vrot.lane.b32.xlu0 %v7513, 64
    %v7648 = vpop.permute.xlu0 %7647
    %7649 = vrot.lane.b32.xlu0 %v7514, 64
    %v7650 = vpop.permute.xlu0 %7649
    %7651 = vrot.lane.b32.xlu0 %v7515, 64
    %v7652 = vpop.permute.xlu0 %7651
    %7653 = vrot.lane.b32.xlu0 %v7516, 64
    %v7654 = vpop.permute.xlu0 %7653
    %7655 = vrot.lane.b32.xlu0 %v7517, 64
    %v7656 = vpop.permute.xlu0 %7655
    %7657 = vrot.lane.b32.xlu0 %v7518, 64
    %v7658 = vpop.permute.xlu0 %7657
    %7659 = vrot.lane.b32.xlu0 %v7519, 64
    %v7660 = vpop.permute.xlu0 %7659
    %7661 = vrot.lane.b32.xlu0 %v7520, 64
    %v7662 = vpop.permute.xlu0 %7661
    %7663 = vrot.lane.b32.xlu0 %v7521, 64
    %v7664 = vpop.permute.xlu0 %7663
    %7665 = vrot.lane.b32.xlu0 %v7522, 64
    %v7666 = vpop.permute.xlu0 %7665
    %7667 = vrot.lane.b32.xlu0 %v7523, 64
    %v7668 = vpop.permute.xlu0 %7667
    %7669 = vrot.lane.b32.xlu0 %v7524, 64
    %v7670 = vpop.permute.xlu0 %7669
    %7671 = vrot.lane.b32.xlu0 %v7525, 64
    %v7672 = vpop.permute.xlu0 %7671
    %7673 = vrot.lane.b32.xlu0 %v7526, 64
    %v7674 = vpop.permute.xlu0 %7673
    %7675 = vrot.lane.b32.xlu0 %v7527, 64
    %v7676 = vpop.permute.xlu0 %7675
    %7677 = vrot.lane.b32.xlu0 %v7528, 64
    %v7678 = vpop.permute.xlu0 %7677
    %7679 = vrot.lane.b32.xlu0 %v7529, 64
    %v7680 = vpop.permute.xlu0 %7679
    %7681 = vrot.lane.b32.xlu0 %v7530, 64
    %v7682 = vpop.permute.xlu0 %7681
    %7683 = vrot.lane.b32.xlu0 %v7531, 64
    %v7684 = vpop.permute.xlu0 %7683
    %7685 = vrot.lane.b32.xlu0 %v7532, 64
    %v7686 = vpop.permute.xlu0 %7685
    %7687 = vrot.lane.b32.xlu0 %v7533, 64
    %v7688 = vpop.permute.xlu0 %7687
    %7689 = vrot.lane.b32.xlu0 %v7534, 64
    %v7690 = vpop.permute.xlu0 %7689
    %7691 = vrot.lane.b32.xlu0 %v7535, 64
    %v7692 = vpop.permute.xlu0 %7691
    %7693 = vrot.lane.b32.xlu0 %v7536, 64
    %v7694 = vpop.permute.xlu0 %7693
    %7695 = vrot.lane.b32.xlu0 %v7537, 64
    %v7696 = vpop.permute.xlu0 %7695
    %7697 = vrot.lane.b32.xlu0 %v7538, 64
    %v7698 = vpop.permute.xlu0 %7697
    %7699 = vrot.lane.b32.xlu0 %v7539, 64
    %v7700 = vpop.permute.xlu0 %7699
    %7701 = vrot.lane.b32.xlu0 %v7540, 64
    %v7702 = vpop.permute.xlu0 %7701
    %7703 = vrot.lane.b32.xlu0 %v7541, 64
    %v7704 = vpop.permute.xlu0 %7703
    %7705 = vrot.lane.b32.xlu0 %v7542, 64
    %v7706 = vpop.permute.xlu0 %7705
    %7707 = vrot.lane.b32.xlu0 %v7543, 64
    %v7708 = vpop.permute.xlu0 %7707
    %7709 = vrot.lane.b32.xlu0 %v7544, 64
    %v7710 = vpop.permute.xlu0 %7709
    %7711 = vrot.lane.b32.xlu0 %v7545, 64
    %v7712 = vpop.permute.xlu0 %7711
    %7713 = vrot.lane.b32.xlu0 %v7546, 64
    %v7714 = vpop.permute.xlu0 %7713
    %7715 = vrot.lane.b32.xlu0 %v7547, 64
    %v7716 = vpop.permute.xlu0 %7715
    %7717 = vrot.lane.b32.xlu0 %v7548, 64
    %v7718 = vpop.permute.xlu0 %7717
    %7719 = vrot.lane.b32.xlu0 %v7549, 64
    %v7720 = vpop.permute.xlu0 %7719
    %7721 = vrot.lane.b32.xlu0 %v7550, 64
    %v7722 = vpop.permute.xlu0 %7721
    %7723 = vrot.lane.b32.xlu0 %v7551, 64
    %v7724 = vpop.permute.xlu0 %7723
    %7725 = vrot.lane.b32.xlu0 %v7552, 64
    %v7726 = vpop.permute.xlu0 %7725
    %7727 = vrot.lane.b32.xlu0 %v7553, 64
    %v7728 = vpop.permute.xlu0 %7727
    %7729 = vrot.lane.b32.xlu0 %v7554, 64
    %v7730 = vpop.permute.xlu0 %7729
    %7731 = vrot.lane.b32.xlu0 %v7555, 64
    %v7732 = vpop.permute.xlu0 %7731
    %7733 = vrot.lane.b32.xlu0 %v7556, 64
    %v7734 = vpop.permute.xlu0 %7733
    %7735 = vrot.lane.b32.xlu0 %v7557, 64
    %v7736 = vpop.permute.xlu0 %7735
    %7737 = vrot.lane.b32.xlu0 %v7558, 64
    %v7738 = vpop.permute.xlu0 %7737
    %7739 = vrot.lane.b32.xlu0 %v7559, 64
    %v7740 = vpop.permute.xlu0 %7739
    %7741 = vrot.lane.b32.xlu0 %v7560, 64
    %v7742 = vpop.permute.xlu0 %7741
    %7743 = vrot.lane.b32.xlu0 %v7561, 64
    %v7744 = vpop.permute.xlu0 %7743
    %7745 = vrot.lane.b32.xlu0 %v7562, 64
    %v7746 = vpop.permute.xlu0 %7745
    %7747 = vrot.lane.b32.xlu0 %v7563, 64
    %v7748 = vpop.permute.xlu0 %7747
    %7749 = vrot.lane.b32.xlu0 %v7564, 64
    %v7750 = vpop.permute.xlu0 %7749
    %7751 = vrot.lane.b32.xlu0 %v7565, 64
    %v7752 = vpop.permute.xlu0 %7751
    %7753 = vrot.lane.b32.xlu0 %v7566, 64
    %v7754 = vpop.permute.xlu0 %7753
    %7755 = vrot.lane.b32.xlu0 %v7567, 64
    %v7756 = vpop.permute.xlu0 %7755
    %7757 = vrot.lane.b32.xlu0 %v7568, 64
    %v7758 = vpop.permute.xlu0 %7757
    %7759 = vrot.lane.b32.xlu0 %v7569, 64
    %v7760 = vpop.permute.xlu0 %7759
    %7761 = vrot.lane.b32.xlu0 %v7570, 64
    %v7762 = vpop.permute.xlu0 %7761
    %vm7827 = vcmask 589312
    %7828 = vst.msk [vmem:[#allocation5] sm:$0xff] %vm7827, %v7636
    %7829 = vst.msk [vmem:[#allocation5 + $0x8] sm:$0xff] %vm7827, %v7638
    %7830 = vst.msk [vmem:[#allocation5 + $0x10] sm:$0xff] %vm7827, %v7640
    %7831 = vst.msk [vmem:[#allocation5 + $0x18] sm:$0xff] %vm7827, %v7642
    %7832 = vst.msk [vmem:[#allocation5 + $0x20] sm:$0xff] %vm7827, %v7644
    %7833 = vst.msk [vmem:[#allocation5 + $0x28] sm:$0xff] %vm7827, %v7646
    %7834 = vst.msk [vmem:[#allocation5 + $0x30] sm:$0xff] %vm7827, %v7648
    %7835 = vst.msk [vmem:[#allocation5 + $0x38] sm:$0xff] %vm7827, %v7650
    %7836 = vst.msk [vmem:[#allocation5 + $0x40] sm:$0xff] %vm7827, %v7652
    %7837 = vst.msk [vmem:[#allocation5 + $0x48] sm:$0xff] %vm7827, %v7654
    %7838 = vst.msk [vmem:[#allocation5 + $0x50] sm:$0xff] %vm7827, %v7656
    %7839 = vst.msk [vmem:[#allocation5 + $0x58] sm:$0xff] %vm7827, %v7658
    %7840 = vst.msk [vmem:[#allocation5 + $0x60] sm:$0xff] %vm7827, %v7660
    %7841 = vst.msk [vmem:[#allocation5 + $0x68] sm:$0xff] %vm7827, %v7662
    %7842 = vst.msk [vmem:[#allocation5 + $0x70] sm:$0xff] %vm7827, %v7664
    %7843 = vst.msk [vmem:[#allocation5 + $0x78] sm:$0xff] %vm7827, %v7666
    %7844 = vst.msk [vmem:[#allocation5 + $0x80] sm:$0xff] %vm7827, %v7668
    %7845 = vst.msk [vmem:[#allocation5 + $0x88] sm:$0xff] %vm7827, %v7670
    %7846 = vst.msk [vmem:[#allocation5 + $0x90] sm:$0xff] %vm7827, %v7672
    %7847 = vst.msk [vmem:[#allocation5 + $0x98] sm:$0xff] %vm7827, %v7674
    %7848 = vst.msk [vmem:[#allocation5 + $0xa0] sm:$0xff] %vm7827, %v7676
    %7849 = vst.msk [vmem:[#allocation5 + $0xa8] sm:$0xff] %vm7827, %v7678
    %7850 = vst.msk [vmem:[#allocation5 + $0xb0] sm:$0xff] %vm7827, %v7680
    %7851 = vst.msk [vmem:[#allocation5 + $0xb8] sm:$0xff] %vm7827, %v7682
    %7852 = vst.msk [vmem:[#allocation5 + $0xc0] sm:$0xff] %vm7827, %v7684
    %7853 = vst.msk [vmem:[#allocation5 + $0xc8] sm:$0xff] %vm7827, %v7686
    %7854 = vst.msk [vmem:[#allocation5 + $0xd0] sm:$0xff] %vm7827, %v7688
    %7855 = vst.msk [vmem:[#allocation5 + $0xd8] sm:$0xff] %vm7827, %v7690
    %7856 = vst.msk [vmem:[#allocation5 + $0xe0] sm:$0xff] %vm7827, %v7692
    %7857 = vst.msk [vmem:[#allocation5 + $0xe8] sm:$0xff] %vm7827, %v7694
    %7858 = vst.msk [vmem:[#allocation5 + $0xf0] sm:$0xff] %vm7827, %v7696
    %7859 = vst.msk [vmem:[#allocation5 + $0xf8] sm:$0xff] %vm7827, %v7698
    %7860 = vst.msk [vmem:[#allocation5 + $0x100] sm:$0xff] %vm7827, %v7700
    %7861 = vst.msk [vmem:[#allocation5 + $0x108] sm:$0xff] %vm7827, %v7702
    %7862 = vst.msk [vmem:[#allocation5 + $0x110] sm:$0xff] %vm7827, %v7704
    %7863 = vst.msk [vmem:[#allocation5 + $0x118] sm:$0xff] %vm7827, %v7706
    %7864 = vst.msk [vmem:[#allocation5 + $0x120] sm:$0xff] %vm7827, %v7708
    %7865 = vst.msk [vmem:[#allocation5 + $0x128] sm:$0xff] %vm7827, %v7710
    %7866 = vst.msk [vmem:[#allocation5 + $0x130] sm:$0xff] %vm7827, %v7712
    %7867 = vst.msk [vmem:[#allocation5 + $0x138] sm:$0xff] %vm7827, %v7714
    %7868 = vst.msk [vmem:[#allocation5 + $0x140] sm:$0xff] %vm7827, %v7716
    %7869 = vst.msk [vmem:[#allocation5 + $0x148] sm:$0xff] %vm7827, %v7718
    %7870 = vst.msk [vmem:[#allocation5 + $0x150] sm:$0xff] %vm7827, %v7720
    %7871 = vst.msk [vmem:[#allocation5 + $0x158] sm:$0xff] %vm7827, %v7722
    %7872 = vst.msk [vmem:[#allocation5 + $0x160] sm:$0xff] %vm7827, %v7724
    %7873 = vst.msk [vmem:[#allocation5 + $0x168] sm:$0xff] %vm7827, %v7726
    %7874 = vst.msk [vmem:[#allocation5 + $0x170] sm:$0xff] %vm7827, %v7728
    %7875 = vst.msk [vmem:[#allocation5 + $0x178] sm:$0xff] %vm7827, %v7730
    %7876 = vst.msk [vmem:[#allocation5 + $0x180] sm:$0xff] %vm7827, %v7732
    %7877 = vst.msk [vmem:[#allocation5 + $0x188] sm:$0xff] %vm7827, %v7734
    %7878 = vst.msk [vmem:[#allocation5 + $0x190] sm:$0xff] %vm7827, %v7736
    %7879 = vst.msk [vmem:[#allocation5 + $0x198] sm:$0xff] %vm7827, %v7738
    %7880 = vst.msk [vmem:[#allocation5 + $0x1a0] sm:$0xff] %vm7827, %v7740
    %7881 = vst.msk [vmem:[#allocation5 + $0x1a8] sm:$0xff] %vm7827, %v7742
    %7882 = vst.msk [vmem:[#allocation5 + $0x1b0] sm:$0xff] %vm7827, %v7744
    %7883 = vst.msk [vmem:[#allocation5 + $0x1b8] sm:$0xff] %vm7827, %v7746
    %7884 = vst.msk [vmem:[#allocation5 + $0x1c0] sm:$0xff] %vm7827, %v7748
    %7885 = vst.msk [vmem:[#allocation5 + $0x1c8] sm:$0xff] %vm7827, %v7750
    %7886 = vst.msk [vmem:[#allocation5 + $0x1d0] sm:$0xff] %vm7827, %v7752
    %7887 = vst.msk [vmem:[#allocation5 + $0x1d8] sm:$0xff] %vm7827, %v7754
    %7888 = vst.msk [vmem:[#allocation5 + $0x1e0] sm:$0xff] %vm7827, %v7756
    %7889 = vst.msk [vmem:[#allocation5 + $0x1e8] sm:$0xff] %vm7827, %v7758
    %7890 = vst.msk [vmem:[#allocation5 + $0x1f0] sm:$0xff] %vm7827, %v7760
    %7891 = vst.msk [vmem:[#allocation5 + $0x1f8] sm:$0xff] %vm7827, %v7762
    %v7892 = vld [vmem:[#allocation5] sm:$0xff]
    %v7893 = vld [vmem:[#allocation5 + $0x8] sm:$0xff]
    %v7894 = vld [vmem:[#allocation5 + $0x10] sm:$0xff]
    %v7895 = vld [vmem:[#allocation5 + $0x18] sm:$0xff]
    %v7896 = vld [vmem:[#allocation5 + $0x20] sm:$0xff]
    %v7897 = vld [vmem:[#allocation5 + $0x28] sm:$0xff]
    %v7898 = vld [vmem:[#allocation5 + $0x30] sm:$0xff]
    %v7899 = vld [vmem:[#allocation5 + $0x38] sm:$0xff]
    %v7900 = vld [vmem:[#allocation5 + $0x40] sm:$0xff]
    %v7901 = vld [vmem:[#allocation5 + $0x48] sm:$0xff]
    %v7902 = vld [vmem:[#allocation5 + $0x50] sm:$0xff]
    %v7903 = vld [vmem:[#allocation5 + $0x58] sm:$0xff]
    %v7904 = vld [vmem:[#allocation5 + $0x60] sm:$0xff]
    %v7905 = vld [vmem:[#allocation5 + $0x68] sm:$0xff]
    %v7906 = vld [vmem:[#allocation5 + $0x70] sm:$0xff]
    %v7907 = vld [vmem:[#allocation5 + $0x78] sm:$0xff]
    %v7908 = vld [vmem:[#allocation5 + $0x80] sm:$0xff]
    %v7909 = vld [vmem:[#allocation5 + $0x88] sm:$0xff]
    %v7910 = vld [vmem:[#allocation5 + $0x90] sm:$0xff]
    %v7911 = vld [vmem:[#allocation5 + $0x98] sm:$0xff]
    %v7912 = vld [vmem:[#allocation5 + $0xa0] sm:$0xff]
    %v7913 = vld [vmem:[#allocation5 + $0xa8] sm:$0xff]
    %v7914 = vld [vmem:[#allocation5 + $0xb0] sm:$0xff]
    %v7915 = vld [vmem:[#allocation5 + $0xb8] sm:$0xff]
    %v7916 = vld [vmem:[#allocation5 + $0xc0] sm:$0xff]
    %v7917 = vld [vmem:[#allocation5 + $0xc8] sm:$0xff]
    %v7918 = vld [vmem:[#allocation5 + $0xd0] sm:$0xff]
    %v7919 = vld [vmem:[#allocation5 + $0xd8] sm:$0xff]
    %v7920 = vld [vmem:[#allocation5 + $0xe0] sm:$0xff]
    %v7921 = vld [vmem:[#allocation5 + $0xe8] sm:$0xff]
    %v7922 = vld [vmem:[#allocation5 + $0xf0] sm:$0xff]
    %v7923 = vld [vmem:[#allocation5 + $0xf8] sm:$0xff]
    %v7924 = vld [vmem:[#allocation5 + $0x100] sm:$0xff]
    %v7925 = vld [vmem:[#allocation5 + $0x108] sm:$0xff]
    %v7926 = vld [vmem:[#allocation5 + $0x110] sm:$0xff]
    %v7927 = vld [vmem:[#allocation5 + $0x118] sm:$0xff]
    %v7928 = vld [vmem:[#allocation5 + $0x120] sm:$0xff]
    %v7929 = vld [vmem:[#allocation5 + $0x128] sm:$0xff]
    %v7930 = vld [vmem:[#allocation5 + $0x130] sm:$0xff]
    %v7931 = vld [vmem:[#allocation5 + $0x138] sm:$0xff]
    %v7932 = vld [vmem:[#allocation5 + $0x140] sm:$0xff]
    %v7933 = vld [vmem:[#allocation5 + $0x148] sm:$0xff]
    %v7934 = vld [vmem:[#allocation5 + $0x150] sm:$0xff]
    %v7935 = vld [vmem:[#allocation5 + $0x158] sm:$0xff]
    %v7936 = vld [vmem:[#allocation5 + $0x160] sm:$0xff]
    %v7937 = vld [vmem:[#allocation5 + $0x168] sm:$0xff]
    %v7938 = vld [vmem:[#allocation5 + $0x170] sm:$0xff]
    %v7939 = vld [vmem:[#allocation5 + $0x178] sm:$0xff]
    %v7940 = vld [vmem:[#allocation5 + $0x180] sm:$0xff]
    %v7941 = vld [vmem:[#allocation5 + $0x188] sm:$0xff]
    %v7942 = vld [vmem:[#allocation5 + $0x190] sm:$0xff]
    %v7943 = vld [vmem:[#allocation5 + $0x198] sm:$0xff]
    %v7944 = vld [vmem:[#allocation5 + $0x1a0] sm:$0xff]
    %v7945 = vld [vmem:[#allocation5 + $0x1a8] sm:$0xff]
    %v7946 = vld [vmem:[#allocation5 + $0x1b0] sm:$0xff]
    %v7947 = vld [vmem:[#allocation5 + $0x1b8] sm:$0xff]
    %v7948 = vld [vmem:[#allocation5 + $0x1c0] sm:$0xff]
    %v7949 = vld [vmem:[#allocation5 + $0x1c8] sm:$0xff]
    %v7950 = vld [vmem:[#allocation5 + $0x1d0] sm:$0xff]
    %v7951 = vld [vmem:[#allocation5 + $0x1d8] sm:$0xff]
    %v7952 = vld [vmem:[#allocation5 + $0x1e0] sm:$0xff]
    %v7953 = vld [vmem:[#allocation5 + $0x1e8] sm:$0xff]
    %v7954 = vld [vmem:[#allocation5 + $0x1f0] sm:$0xff]
    %v7955 = vld [vmem:[#allocation5 + $0x1f8] sm:$0xff]
    %v7956 = vld [vmem:[%s5] sm:$0xff]
    %v7957 = vld [vmem:[%s5 + $0x8] sm:$0xff]
    %v7958 = vld [vmem:[%s5 + $0x10] sm:$0xff]
    %v7959 = vld [vmem:[%s5 + $0x18] sm:$0xff]
    %v7960 = vld [vmem:[%s5 + $0x20] sm:$0xff]
    %v7961 = vld [vmem:[%s5 + $0x28] sm:$0xff]
    %v7962 = vld [vmem:[%s5 + $0x30] sm:$0xff]
    %v7963 = vld [vmem:[%s5 + $0x38] sm:$0xff]
    %v7964 = vld [vmem:[%s5 + $0x40] sm:$0xff]
    %v7965 = vld [vmem:[%s6] sm:$0x1]
    %v7967 = vperm.slane %v7965, 0
    %vm7969 = vcmask 588800
    %v7971 = vsel %vm7969, %v7892, 0
    %v7974 = vsel %vm7969, %v7893, 0
    %v7977 = vsel %vm7969, %v7894, 0
    %v7980 = vsel %vm7969, %v7895, 0
    %v7983 = vsel %vm7969, %v7896, 0
    %v7986 = vsel %vm7969, %v7897, 0
    %v7989 = vsel %vm7969, %v7898, 0
    %v7992 = vsel %vm7969, %v7899, 0
    %v7995 = vsel %vm7969, %v7900, 0
    %v7998 = vsel %vm7969, %v7901, 0
    %v8001 = vsel %vm7969, %v7902, 0
    %v8004 = vsel %vm7969, %v7903, 0
    %v8007 = vsel %vm7969, %v7904, 0
    %v8010 = vsel %vm7969, %v7905, 0
    %v8013 = vsel %vm7969, %v7906, 0
    %v8016 = vsel %vm7969, %v7907, 0
    %v8019 = vsel %vm7969, %v7908, 0
    %v8022 = vsel %vm7969, %v7909, 0
    %v8025 = vsel %vm7969, %v7910, 0
    %v8028 = vsel %vm7969, %v7911, 0
    %v8031 = vsel %vm7969, %v7912, 0
    %v8034 = vsel %vm7969, %v7913, 0
    %v8037 = vsel %vm7969, %v7914, 0
    %v8040 = vsel %vm7969, %v7915, 0
    %v8043 = vsel %vm7969, %v7916, 0
    %v8046 = vsel %vm7969, %v7917, 0
    %v8049 = vsel %vm7969, %v7918, 0
    %v8052 = vsel %vm7969, %v7919, 0
    %v8055 = vsel %vm7969, %v7920, 0
    %v8058 = vsel %vm7969, %v7921, 0
    %v8061 = vsel %vm7969, %v7922, 0
    %v8064 = vsel %vm7969, %v7923, 0
    %v8067 = vsel %vm7969, %v7924, 0
    %v8070 = vsel %vm7969, %v7925, 0
    %v8073 = vsel %vm7969, %v7926, 0
    %v8076 = vsel %vm7969, %v7927, 0
    %v8079 = vsel %vm7969, %v7928, 0
    %v8082 = vsel %vm7969, %v7929, 0
    %v8085 = vsel %vm7969, %v7930, 0
    %v8088 = vsel %vm7969, %v7931, 0
    %v8091 = vsel %vm7969, %v7932, 0
    %v8094 = vsel %vm7969, %v7933, 0
    %v8097 = vsel %vm7969, %v7934, 0
    %v8100 = vsel %vm7969, %v7935, 0
    %v8103 = vsel %vm7969, %v7936, 0
    %v8106 = vsel %vm7969, %v7937, 0
    %v8109 = vsel %vm7969, %v7938, 0
    %v8112 = vsel %vm7969, %v7939, 0
    %v8115 = vsel %vm7969, %v7940, 0
    %v8118 = vsel %vm7969, %v7941, 0
    %v8121 = vsel %vm7969, %v7942, 0
    %v8124 = vsel %vm7969, %v7943, 0
    %v8127 = vsel %vm7969, %v7944, 0
    %v8130 = vsel %vm7969, %v7945, 0
    %v8133 = vsel %vm7969, %v7946, 0
    %v8136 = vsel %vm7969, %v7947, 0
    %v8139 = vsel %vm7969, %v7948, 0
    %v8142 = vsel %vm7969, %v7949, 0
    %v8145 = vsel %vm7969, %v7950, 0
    %v8148 = vsel %vm7969, %v7951, 0
    %v8151 = vsel %vm7969, %v7952, 0
    %v8154 = vsel %vm7969, %v7953, 0
    %v8157 = vsel %vm7969, %v7954, 0
    %v8160 = vsel %vm7969, %v7955, 0
    %8162 = vmatpush.msra.mxu0 0.0
    %8163 = vmatpush.msra.mxu0 0.0
    %8164 = vmatpush.msra.mxu0 0.0
    %8165 = vmatpush.msra.mxu0 0.0
    %8166 = vmatpush.msra.mxu0 0.0
    %8167 = vmatpush.msra.mxu0 0.0
    %8168 = vmatpush.msra.mxu0 0.0
    %8169 = vmatpush.msra.mxu0 %v7964
    %8170 = vmatpush.msra.mxu0 %v7963
    %8171 = vmatpush.msra.mxu0 %v7962
    %8172 = vmatpush.msra.mxu0 %v7961
    %8173 = vmatpush.msra.mxu0 %v7960
    %8174 = vmatpush.msra.mxu0 %v7959
    %8175 = vmatpush.msra.mxu0 %v7958
    %8176 = vmatpush.msra.mxu0 %v7957
    %8177 = vmatpush.msra.mxu0 %v7956
    %8178 = vmatmul.f32.gmra.mxu0 %v7971
    %v8179 = vpop.f32.mrf.mxu0
    %v8180 = vadd.f32 %v7967, %v8179
    %8181 = vmatmul.f32.gmra.mxu0 %v7974
    %v8182 = vpop.f32.mrf.mxu0
    %v8183 = vadd.f32 %v7967, %v8182
    %8184 = vmatmul.f32.gmra.mxu0 %v7977
    %v8185 = vpop.f32.mrf.mxu0
    %v8186 = vadd.f32 %v7967, %v8185
    %8187 = vmatmul.f32.gmra.mxu0 %v7980
    %v8188 = vpop.f32.mrf.mxu0
    %v8189 = vadd.f32 %v7967, %v8188
    %8190 = vmatmul.f32.gmra.mxu0 %v7983
    %v8191 = vpop.f32.mrf.mxu0
    %v8192 = vadd.f32 %v7967, %v8191
    %8193 = vmatmul.f32.gmra.mxu0 %v7986
    %v8194 = vpop.f32.mrf.mxu0
    %v8195 = vadd.f32 %v7967, %v8194
    %8196 = vmatmul.f32.gmra.mxu0 %v7989
    %v8197 = vpop.f32.mrf.mxu0
    %v8198 = vadd.f32 %v7967, %v8197
    %8199 = vmatmul.f32.gmra.mxu0 %v7992
    %v8200 = vpop.f32.mrf.mxu0
    %v8201 = vadd.f32 %v7967, %v8200
    %8202 = vmatmul.f32.gmra.mxu0 %v7995
    %v8203 = vpop.f32.mrf.mxu0
    %v8204 = vadd.f32 %v7967, %v8203
    %8205 = vmatmul.f32.gmra.mxu0 %v7998
    %v8206 = vpop.f32.mrf.mxu0
    %v8207 = vadd.f32 %v7967, %v8206
    %8208 = vmatmul.f32.gmra.mxu0 %v8001
    %v8209 = vpop.f32.mrf.mxu0
    %v8210 = vadd.f32 %v7967, %v8209
    %8211 = vmatmul.f32.gmra.mxu0 %v8004
    %v8212 = vpop.f32.mrf.mxu0
    %v8213 = vadd.f32 %v7967, %v8212
    %8214 = vmatmul.f32.gmra.mxu0 %v8007
    %v8215 = vpop.f32.mrf.mxu0
    %v8216 = vadd.f32 %v7967, %v8215
    %8217 = vmatmul.f32.gmra.mxu0 %v8010
    %v8218 = vpop.f32.mrf.mxu0
    %v8219 = vadd.f32 %v7967, %v8218
    %8220 = vmatmul.f32.gmra.mxu0 %v8013
    %v8221 = vpop.f32.mrf.mxu0
    %v8222 = vadd.f32 %v7967, %v8221
    %8223 = vmatmul.f32.gmra.mxu0 %v8016
    %v8224 = vpop.f32.mrf.mxu0
    %v8225 = vadd.f32 %v7967, %v8224
    %8226 = vmatmul.f32.gmra.mxu0 %v8019
    %v8227 = vpop.f32.mrf.mxu0
    %v8228 = vadd.f32 %v7967, %v8227
    %8229 = vmatmul.f32.gmra.mxu0 %v8022
    %v8230 = vpop.f32.mrf.mxu0
    %v8231 = vadd.f32 %v7967, %v8230
    %8232 = vmatmul.f32.gmra.mxu0 %v8025
    %v8233 = vpop.f32.mrf.mxu0
    %v8234 = vadd.f32 %v7967, %v8233
    %8235 = vmatmul.f32.gmra.mxu0 %v8028
    %v8236 = vpop.f32.mrf.mxu0
    %v8237 = vadd.f32 %v7967, %v8236
    %8238 = vmatmul.f32.gmra.mxu0 %v8031
    %v8239 = vpop.f32.mrf.mxu0
    %v8240 = vadd.f32 %v7967, %v8239
    %8241 = vmatmul.f32.gmra.mxu0 %v8034
    %v8242 = vpop.f32.mrf.mxu0
    %v8243 = vadd.f32 %v7967, %v8242
    %8244 = vmatmul.f32.gmra.mxu0 %v8037
    %v8245 = vpop.f32.mrf.mxu0
    %v8246 = vadd.f32 %v7967, %v8245
    %8247 = vmatmul.f32.gmra.mxu0 %v8040
    %v8248 = vpop.f32.mrf.mxu0
    %v8249 = vadd.f32 %v7967, %v8248
    %8250 = vmatmul.f32.gmra.mxu0 %v8043
    %v8251 = vpop.f32.mrf.mxu0
    %v8252 = vadd.f32 %v7967, %v8251
    %8253 = vmatmul.f32.gmra.mxu0 %v8046
    %v8254 = vpop.f32.mrf.mxu0
    %v8255 = vadd.f32 %v7967, %v8254
    %8256 = vmatmul.f32.gmra.mxu0 %v8049
    %v8257 = vpop.f32.mrf.mxu0
    %v8258 = vadd.f32 %v7967, %v8257
    %8259 = vmatmul.f32.gmra.mxu0 %v8052
    %v8260 = vpop.f32.mrf.mxu0
    %v8261 = vadd.f32 %v7967, %v8260
    %8262 = vmatmul.f32.gmra.mxu0 %v8055
    %v8263 = vpop.f32.mrf.mxu0
    %v8264 = vadd.f32 %v7967, %v8263
    %8265 = vmatmul.f32.gmra.mxu0 %v8058
    %v8266 = vpop.f32.mrf.mxu0
    %v8267 = vadd.f32 %v7967, %v8266
    %8268 = vmatmul.f32.gmra.mxu0 %v8061
    %v8269 = vpop.f32.mrf.mxu0
    %v8270 = vadd.f32 %v7967, %v8269
    %8271 = vmatmul.f32.gmra.mxu0 %v8064
    %v8272 = vpop.f32.mrf.mxu0
    %v8273 = vadd.f32 %v7967, %v8272
    %8274 = vmatmul.f32.gmra.mxu0 %v8067
    %v8275 = vpop.f32.mrf.mxu0
    %v8276 = vadd.f32 %v7967, %v8275
    %8277 = vmatmul.f32.gmra.mxu0 %v8070
    %v8278 = vpop.f32.mrf.mxu0
    %v8279 = vadd.f32 %v7967, %v8278
    %8280 = vmatmul.f32.gmra.mxu0 %v8073
    %v8281 = vpop.f32.mrf.mxu0
    %v8282 = vadd.f32 %v7967, %v8281
    %8283 = vmatmul.f32.gmra.mxu0 %v8076
    %v8284 = vpop.f32.mrf.mxu0
    %v8285 = vadd.f32 %v7967, %v8284
    %8286 = vmatmul.f32.gmra.mxu0 %v8079
    %v8287 = vpop.f32.mrf.mxu0
    %v8288 = vadd.f32 %v7967, %v8287
    %8289 = vmatmul.f32.gmra.mxu0 %v8082
    %v8290 = vpop.f32.mrf.mxu0
    %v8291 = vadd.f32 %v7967, %v8290
    %8292 = vmatmul.f32.gmra.mxu0 %v8085
    %v8293 = vpop.f32.mrf.mxu0
    %v8294 = vadd.f32 %v7967, %v8293
    %8295 = vmatmul.f32.gmra.mxu0 %v8088
    %v8296 = vpop.f32.mrf.mxu0
    %v8297 = vadd.f32 %v7967, %v8296
    %8298 = vmatmul.f32.gmra.mxu0 %v8091
    %v8299 = vpop.f32.mrf.mxu0
    %v8300 = vadd.f32 %v7967, %v8299
    %8301 = vmatmul.f32.gmra.mxu0 %v8094
    %v8302 = vpop.f32.mrf.mxu0
    %v8303 = vadd.f32 %v7967, %v8302
    %8304 = vmatmul.f32.gmra.mxu0 %v8097
    %v8305 = vpop.f32.mrf.mxu0
    %v8306 = vadd.f32 %v7967, %v8305
    %8307 = vmatmul.f32.gmra.mxu0 %v8100
    %v8308 = vpop.f32.mrf.mxu0
    %v8309 = vadd.f32 %v7967, %v8308
    %8310 = vmatmul.f32.gmra.mxu0 %v8103
    %v8311 = vpop.f32.mrf.mxu0
    %v8312 = vadd.f32 %v7967, %v8311
    %8313 = vmatmul.f32.gmra.mxu0 %v8106
    %v8314 = vpop.f32.mrf.mxu0
    %v8315 = vadd.f32 %v7967, %v8314
    %8316 = vmatmul.f32.gmra.mxu0 %v8109
    %v8317 = vpop.f32.mrf.mxu0
    %v8318 = vadd.f32 %v7967, %v8317
    %8319 = vmatmul.f32.gmra.mxu0 %v8112
    %v8320 = vpop.f32.mrf.mxu0
    %v8321 = vadd.f32 %v7967, %v8320
    %8322 = vmatmul.f32.gmra.mxu0 %v8115
    %v8323 = vpop.f32.mrf.mxu0
    %v8324 = vadd.f32 %v7967, %v8323
    %8325 = vmatmul.f32.gmra.mxu0 %v8118
    %v8326 = vpop.f32.mrf.mxu0
    %v8327 = vadd.f32 %v7967, %v8326
    %8328 = vmatmul.f32.gmra.mxu0 %v8121
    %v8329 = vpop.f32.mrf.mxu0
    %v8330 = vadd.f32 %v7967, %v8329
    %8331 = vmatmul.f32.gmra.mxu0 %v8124
    %v8332 = vpop.f32.mrf.mxu0
    %v8333 = vadd.f32 %v7967, %v8332
    %8334 = vmatmul.f32.gmra.mxu0 %v8127
    %v8335 = vpop.f32.mrf.mxu0
    %v8336 = vadd.f32 %v7967, %v8335
    %8337 = vmatmul.f32.gmra.mxu0 %v8130
    %v8338 = vpop.f32.mrf.mxu0
    %v8339 = vadd.f32 %v7967, %v8338
    %8340 = vmatmul.f32.gmra.mxu0 %v8133
    %v8341 = vpop.f32.mrf.mxu0
    %v8342 = vadd.f32 %v7967, %v8341
    %8343 = vmatmul.f32.gmra.mxu0 %v8136
    %v8344 = vpop.f32.mrf.mxu0
    %v8345 = vadd.f32 %v7967, %v8344
    %8346 = vmatmul.f32.gmra.mxu0 %v8139
    %v8347 = vpop.f32.mrf.mxu0
    %v8348 = vadd.f32 %v7967, %v8347
    %8349 = vmatmul.f32.gmra.mxu0 %v8142
    %v8350 = vpop.f32.mrf.mxu0
    %v8351 = vadd.f32 %v7967, %v8350
    %8352 = vmatmul.f32.gmra.mxu0 %v8145
    %v8353 = vpop.f32.mrf.mxu0
    %v8354 = vadd.f32 %v7967, %v8353
    %8355 = vmatmul.f32.gmra.mxu0 %v8148
    %v8356 = vpop.f32.mrf.mxu0
    %v8357 = vadd.f32 %v7967, %v8356
    %8358 = vmatmul.f32.gmra.mxu0 %v8151
    %v8359 = vpop.f32.mrf.mxu0
    %v8360 = vadd.f32 %v7967, %v8359
    %8361 = vmatmul.f32.gmra.mxu0 %v8154
    %v8362 = vpop.f32.mrf.mxu0
    %v8363 = vadd.f32 %v7967, %v8362
    %8364 = vmatmul.f32.gmra.mxu0 %v8157
    %v8365 = vpop.f32.mrf.mxu0
    %v8366 = vadd.f32 %v7967, %v8365
    %8367 = vmatmul.f32.gmra.mxu0 %v8160
    %v8368 = vpop.f32.mrf.mxu0
    %v8369 = vadd.f32 %v7967, %v8368
    %8370 = vdwg.mxu0
    %v8371 = vld [vmem:[%s7] sm:$0x1]
    %v8372 = vld [vmem:[%s8] sm:$0x1]
    %v8373 = vsel %vm3962, %v8180, 0.0
    %v8374 = vsel %vm3962, %v8183, 0.0
    %v8375 = vadd.f32 %v8373, %v8374
    %v8376 = vsel %vm3962, %v8186, 0.0
    %v8377 = vadd.f32 %v8375, %v8376
    %v8378 = vsel %vm3962, %v8189, 0.0
    %v8379 = vadd.f32 %v8377, %v8378
    %v8380 = vsel %vm3962, %v8192, 0.0
    %v8381 = vadd.f32 %v8379, %v8380
    %v8382 = vsel %vm3962, %v8195, 0.0
    %v8383 = vadd.f32 %v8381, %v8382
    %v8384 = vsel %vm3962, %v8198, 0.0
    %v8385 = vadd.f32 %v8383, %v8384
    %v8386 = vsel %vm3962, %v8201, 0.0
    %v8387 = vadd.f32 %v8385, %v8386
    %v8388 = vsel %vm3962, %v8204, 0.0
    %v8389 = vadd.f32 %v8387, %v8388
    %v8390 = vsel %vm3962, %v8207, 0.0
    %v8391 = vadd.f32 %v8389, %v8390
    %v8392 = vsel %vm3962, %v8210, 0.0
    %v8393 = vadd.f32 %v8391, %v8392
    %v8394 = vsel %vm3962, %v8213, 0.0
    %v8395 = vadd.f32 %v8393, %v8394
    %v8396 = vsel %vm3962, %v8216, 0.0
    %v8397 = vadd.f32 %v8395, %v8396
    %v8398 = vsel %vm3962, %v8219, 0.0
    %v8399 = vadd.f32 %v8397, %v8398
    %v8400 = vsel %vm3962, %v8222, 0.0
    %v8401 = vadd.f32 %v8399, %v8400
    %v8402 = vsel %vm3962, %v8225, 0.0
    %v8403 = vadd.f32 %v8401, %v8402
    %v8404 = vsel %vm3962, %v8228, 0.0
    %v8405 = vadd.f32 %v8403, %v8404
    %v8406 = vsel %vm3962, %v8231, 0.0
    %v8407 = vadd.f32 %v8405, %v8406
    %v8408 = vsel %vm3962, %v8234, 0.0
    %v8409 = vadd.f32 %v8407, %v8408
    %v8410 = vsel %vm3962, %v8237, 0.0
    %v8411 = vadd.f32 %v8409, %v8410
    %v8412 = vsel %vm3962, %v8240, 0.0
    %v8413 = vadd.f32 %v8411, %v8412
    %v8414 = vsel %vm3962, %v8243, 0.0
    %v8415 = vadd.f32 %v8413, %v8414
    %v8416 = vsel %vm3962, %v8246, 0.0
    %v8417 = vadd.f32 %v8415, %v8416
    %v8418 = vsel %vm3962, %v8249, 0.0
    %v8419 = vadd.f32 %v8417, %v8418
    %v8420 = vsel %vm3962, %v8252, 0.0
    %v8421 = vadd.f32 %v8419, %v8420
    %v8422 = vsel %vm3962, %v8255, 0.0
    %v8423 = vadd.f32 %v8421, %v8422
    %v8424 = vsel %vm3962, %v8258, 0.0
    %v8425 = vadd.f32 %v8423, %v8424
    %v8426 = vsel %vm3962, %v8261, 0.0
    %v8427 = vadd.f32 %v8425, %v8426
    %v8428 = vsel %vm3962, %v8264, 0.0
    %v8429 = vadd.f32 %v8427, %v8428
    %v8430 = vsel %vm3962, %v8267, 0.0
    %v8431 = vadd.f32 %v8429, %v8430
    %v8432 = vsel %vm3962, %v8270, 0.0
    %v8433 = vadd.f32 %v8431, %v8432
    %v8434 = vsel %vm3962, %v8273, 0.0
    %v8435 = vadd.f32 %v8433, %v8434
    %v8436 = vsel %vm3962, %v8276, 0.0
    %v8437 = vadd.f32 %v8435, %v8436
    %v8438 = vsel %vm3962, %v8279, 0.0
    %v8439 = vadd.f32 %v8437, %v8438
    %v8440 = vsel %vm3962, %v8282, 0.0
    %v8441 = vadd.f32 %v8439, %v8440
    %v8442 = vsel %vm3962, %v8285, 0.0
    %v8443 = vadd.f32 %v8441, %v8442
    %v8444 = vsel %vm3962, %v8288, 0.0
    %v8445 = vadd.f32 %v8443, %v8444
    %v8446 = vsel %vm3962, %v8291, 0.0
    %v8447 = vadd.f32 %v8445, %v8446
    %v8448 = vsel %vm3962, %v8294, 0.0
    %v8449 = vadd.f32 %v8447, %v8448
    %v8450 = vsel %vm3962, %v8297, 0.0
    %v8451 = vadd.f32 %v8449, %v8450
    %v8452 = vsel %vm3962, %v8300, 0.0
    %v8453 = vadd.f32 %v8451, %v8452
    %v8454 = vsel %vm3962, %v8303, 0.0
    %v8455 = vadd.f32 %v8453, %v8454
    %v8456 = vsel %vm3962, %v8306, 0.0
    %v8457 = vadd.f32 %v8455, %v8456
    %v8458 = vsel %vm3962, %v8309, 0.0
    %v8459 = vadd.f32 %v8457, %v8458
    %v8460 = vsel %vm3962, %v8312, 0.0
    %v8461 = vadd.f32 %v8459, %v8460
    %v8462 = vsel %vm3962, %v8315, 0.0
    %v8463 = vadd.f32 %v8461, %v8462
    %v8464 = vsel %vm3962, %v8318, 0.0
    %v8465 = vadd.f32 %v8463, %v8464
    %v8466 = vsel %vm3962, %v8321, 0.0
    %v8467 = vadd.f32 %v8465, %v8466
    %v8468 = vsel %vm3962, %v8324, 0.0
    %v8469 = vadd.f32 %v8467, %v8468
    %v8470 = vsel %vm3962, %v8327, 0.0
    %v8471 = vadd.f32 %v8469, %v8470
    %v8472 = vsel %vm3962, %v8330, 0.0
    %v8473 = vadd.f32 %v8471, %v8472
    %v8474 = vsel %vm3962, %v8333, 0.0
    %v8475 = vadd.f32 %v8473, %v8474
    %v8476 = vsel %vm3962, %v8336, 0.0
    %v8477 = vadd.f32 %v8475, %v8476
    %v8478 = vsel %vm3962, %v8339, 0.0
    %v8479 = vadd.f32 %v8477, %v8478
    %v8480 = vsel %vm3962, %v8342, 0.0
    %v8481 = vadd.f32 %v8479, %v8480
    %v8482 = vsel %vm3962, %v8345, 0.0
    %v8483 = vadd.f32 %v8481, %v8482
    %v8484 = vsel %vm3962, %v8348, 0.0
    %v8485 = vadd.f32 %v8483, %v8484
    %v8486 = vsel %vm3962, %v8351, 0.0
    %v8487 = vadd.f32 %v8485, %v8486
    %v8488 = vsel %vm3962, %v8354, 0.0
    %v8489 = vadd.f32 %v8487, %v8488
    %v8490 = vsel %vm3962, %v8357, 0.0
    %v8491 = vadd.f32 %v8489, %v8490
    %v8492 = vsel %vm3962, %v8360, 0.0
    %v8493 = vadd.f32 %v8491, %v8492
    %v8494 = vsel %vm3962, %v8363, 0.0
    %v8495 = vadd.f32 %v8493, %v8494
    %v8496 = vsel %vm3962, %v8366, 0.0
    %v8497 = vadd.f32 %v8495, %v8496
    %v8498 = vsel %vm3962, %v8369, 0.0
    %v8499 = vadd.f32 %v8497, %v8498
    %v8500 = vrot.slane %v8499, 4
    %v8501 = vadd.f32 %v8499, %v8500
    %v8502 = vrot.slane %v8501, 2
    %v8503 = vadd.f32 %v8501, %v8502
    %v8504 = vrot.slane %v8503, 1
    %v8505 = vadd.f32 %v8503, %v8504
    %v8506 = vmul.f32 %v8180, %v8180
    %v8507 = vmul.f32 %v8183, %v8183
    %v8508 = vmul.f32 %v8186, %v8186
    %v8509 = vmul.f32 %v8189, %v8189
    %v8510 = vmul.f32 %v8192, %v8192
    %v8511 = vmul.f32 %v8195, %v8195
    %v8512 = vmul.f32 %v8198, %v8198
    %v8513 = vmul.f32 %v8201, %v8201
    %v8514 = vmul.f32 %v8204, %v8204
    %v8515 = vmul.f32 %v8207, %v8207
    %v8516 = vmul.f32 %v8210, %v8210
    %v8517 = vmul.f32 %v8213, %v8213
    %v8518 = vmul.f32 %v8216, %v8216
    %v8519 = vmul.f32 %v8219, %v8219
    %v8520 = vmul.f32 %v8222, %v8222
    %v8521 = vmul.f32 %v8225, %v8225
    %v8522 = vmul.f32 %v8228, %v8228
    %v8523 = vmul.f32 %v8231, %v8231
    %v8524 = vmul.f32 %v8234, %v8234
    %v8525 = vmul.f32 %v8237, %v8237
    %v8526 = vmul.f32 %v8240, %v8240
    %v8527 = vmul.f32 %v8243, %v8243
    %v8528 = vmul.f32 %v8246, %v8246
    %v8529 = vmul.f32 %v8249, %v8249
    %v8530 = vmul.f32 %v8252, %v8252
    %v8531 = vmul.f32 %v8255, %v8255
    %v8532 = vmul.f32 %v8258, %v8258
    %v8533 = vmul.f32 %v8261, %v8261
    %v8534 = vmul.f32 %v8264, %v8264
    %v8535 = vmul.f32 %v8267, %v8267
    %v8536 = vmul.f32 %v8270, %v8270
    %v8537 = vmul.f32 %v8273, %v8273
    %v8538 = vmul.f32 %v8276, %v8276
    %v8539 = vmul.f32 %v8279, %v8279
    %v8540 = vmul.f32 %v8282, %v8282
    %v8541 = vmul.f32 %v8285, %v8285
    %v8542 = vmul.f32 %v8288, %v8288
    %v8543 = vmul.f32 %v8291, %v8291
    %v8544 = vmul.f32 %v8294, %v8294
    %v8545 = vmul.f32 %v8297, %v8297
    %v8546 = vmul.f32 %v8300, %v8300
    %v8547 = vmul.f32 %v8303, %v8303
    %v8548 = vmul.f32 %v8306, %v8306
    %v8549 = vmul.f32 %v8309, %v8309
    %v8550 = vmul.f32 %v8312, %v8312
    %v8551 = vmul.f32 %v8315, %v8315
    %v8552 = vmul.f32 %v8318, %v8318
    %v8553 = vmul.f32 %v8321, %v8321
    %v8554 = vmul.f32 %v8324, %v8324
    %v8555 = vmul.f32 %v8327, %v8327
    %v8556 = vmul.f32 %v8330, %v8330
    %v8557 = vmul.f32 %v8333, %v8333
    %v8558 = vmul.f32 %v8336, %v8336
    %v8559 = vmul.f32 %v8339, %v8339
    %v8560 = vmul.f32 %v8342, %v8342
    %v8561 = vmul.f32 %v8345, %v8345
    %v8562 = vmul.f32 %v8348, %v8348
    %v8563 = vmul.f32 %v8351, %v8351
    %v8564 = vmul.f32 %v8354, %v8354
    %v8565 = vmul.f32 %v8357, %v8357
    %v8566 = vmul.f32 %v8360, %v8360
    %v8567 = vmul.f32 %v8363, %v8363
    %v8568 = vmul.f32 %v8366, %v8366
    %v8569 = vmul.f32 %v8369, %v8369
    %v8570 = vsel %vm3962, %v8506, 0.0
    %v8571 = vsel %vm3962, %v8507, 0.0
    %v8572 = vadd.f32 %v8570, %v8571
    %v8573 = vsel %vm3962, %v8508, 0.0
    %v8574 = vadd.f32 %v8572, %v8573
    %v8575 = vsel %vm3962, %v8509, 0.0
    %v8576 = vadd.f32 %v8574, %v8575
    %v8577 = vsel %vm3962, %v8510, 0.0
    %v8578 = vadd.f32 %v8576, %v8577
    %v8579 = vsel %vm3962, %v8511, 0.0
    %v8580 = vadd.f32 %v8578, %v8579
    %v8581 = vsel %vm3962, %v8512, 0.0
    %v8582 = vadd.f32 %v8580, %v8581
    %v8583 = vsel %vm3962, %v8513, 0.0
    %v8584 = vadd.f32 %v8582, %v8583
    %v8585 = vsel %vm3962, %v8514, 0.0
    %v8586 = vadd.f32 %v8584, %v8585
    %v8587 = vsel %vm3962, %v8515, 0.0
    %v8588 = vadd.f32 %v8586, %v8587
    %v8589 = vsel %vm3962, %v8516, 0.0
    %v8590 = vadd.f32 %v8588, %v8589
    %v8591 = vsel %vm3962, %v8517, 0.0
    %v8592 = vadd.f32 %v8590, %v8591
    %v8593 = vsel %vm3962, %v8518, 0.0
    %v8594 = vadd.f32 %v8592, %v8593
    %v8595 = vsel %vm3962, %v8519, 0.0
    %v8596 = vadd.f32 %v8594, %v8595
    %v8597 = vsel %vm3962, %v8520, 0.0
    %v8598 = vadd.f32 %v8596, %v8597
    %v8599 = vsel %vm3962, %v8521, 0.0
    %v8600 = vadd.f32 %v8598, %v8599
    %v8601 = vsel %vm3962, %v8522, 0.0
    %v8602 = vadd.f32 %v8600, %v8601
    %v8603 = vsel %vm3962, %v8523, 0.0
    %v8604 = vadd.f32 %v8602, %v8603
    %v8605 = vsel %vm3962, %v8524, 0.0
    %v8606 = vadd.f32 %v8604, %v8605
    %v8607 = vsel %vm3962, %v8525, 0.0
    %v8608 = vadd.f32 %v8606, %v8607
    %v8609 = vsel %vm3962, %v8526, 0.0
    %v8610 = vadd.f32 %v8608, %v8609
    %v8611 = vsel %vm3962, %v8527, 0.0
    %v8612 = vadd.f32 %v8610, %v8611
    %v8613 = vsel %vm3962, %v8528, 0.0
    %v8614 = vadd.f32 %v8612, %v8613
    %v8615 = vsel %vm3962, %v8529, 0.0
    %v8616 = vadd.f32 %v8614, %v8615
    %v8617 = vsel %vm3962, %v8530, 0.0
    %v8618 = vadd.f32 %v8616, %v8617
    %v8619 = vsel %vm3962, %v8531, 0.0
    %v8620 = vadd.f32 %v8618, %v8619
    %v8621 = vsel %vm3962, %v8532, 0.0
    %v8622 = vadd.f32 %v8620, %v8621
    %v8623 = vsel %vm3962, %v8533, 0.0
    %v8624 = vadd.f32 %v8622, %v8623
    %v8625 = vsel %vm3962, %v8534, 0.0
    %v8626 = vadd.f32 %v8624, %v8625
    %v8627 = vsel %vm3962, %v8535, 0.0
    %v8628 = vadd.f32 %v8626, %v8627
    %v8629 = vsel %vm3962, %v8536, 0.0
    %v8630 = vadd.f32 %v8628, %v8629
    %v8631 = vsel %vm3962, %v8537, 0.0
    %v8632 = vadd.f32 %v8630, %v8631
    %v8633 = vsel %vm3962, %v8538, 0.0
    %v8634 = vadd.f32 %v8632, %v8633
    %v8635 = vsel %vm3962, %v8539, 0.0
    %v8636 = vadd.f32 %v8634, %v8635
    %v8637 = vsel %vm3962, %v8540, 0.0
    %v8638 = vadd.f32 %v8636, %v8637
    %v8639 = vsel %vm3962, %v8541, 0.0
    %v8640 = vadd.f32 %v8638, %v8639
    %v8641 = vsel %vm3962, %v8542, 0.0
    %v8642 = vadd.f32 %v8640, %v8641
    %v8643 = vsel %vm3962, %v8543, 0.0
    %v8644 = vadd.f32 %v8642, %v8643
    %v8645 = vsel %vm3962, %v8544, 0.0
    %v8646 = vadd.f32 %v8644, %v8645
    %v8647 = vsel %vm3962, %v8545, 0.0
    %v8648 = vadd.f32 %v8646, %v8647
    %v8649 = vsel %vm3962, %v8546, 0.0
    %v8650 = vadd.f32 %v8648, %v8649
    %v8651 = vsel %vm3962, %v8547, 0.0
    %v8652 = vadd.f32 %v8650, %v8651
    %v8653 = vsel %vm3962, %v8548, 0.0
    %v8654 = vadd.f32 %v8652, %v8653
    %v8655 = vsel %vm3962, %v8549, 0.0
    %v8656 = vadd.f32 %v8654, %v8655
    %v8657 = vsel %vm3962, %v8550, 0.0
    %v8658 = vadd.f32 %v8656, %v8657
    %v8659 = vsel %vm3962, %v8551, 0.0
    %v8660 = vadd.f32 %v8658, %v8659
    %v8661 = vsel %vm3962, %v8552, 0.0
    %v8662 = vadd.f32 %v8660, %v8661
    %v8663 = vsel %vm3962, %v8553, 0.0
    %v8664 = vadd.f32 %v8662, %v8663
    %v8665 = vsel %vm3962, %v8554, 0.0
    %v8666 = vadd.f32 %v8664, %v8665
    %v8667 = vsel %vm3962, %v8555, 0.0
    %v8668 = vadd.f32 %v8666, %v8667
    %v8669 = vsel %vm3962, %v8556, 0.0
    %v8670 = vadd.f32 %v8668, %v8669
    %v8671 = vsel %vm3962, %v8557, 0.0
    %v8672 = vadd.f32 %v8670, %v8671
    %v8673 = vsel %vm3962, %v8558, 0.0
    %v8674 = vadd.f32 %v8672, %v8673
    %v8675 = vsel %vm3962, %v8559, 0.0
    %v8676 = vadd.f32 %v8674, %v8675
    %v8677 = vsel %vm3962, %v8560, 0.0
    %v8678 = vadd.f32 %v8676, %v8677
    %v8679 = vsel %vm3962, %v8561, 0.0
    %v8680 = vadd.f32 %v8678, %v8679
    %v8681 = vsel %vm3962, %v8562, 0.0
    %v8682 = vadd.f32 %v8680, %v8681
    %v8683 = vsel %vm3962, %v8563, 0.0
    %v8684 = vadd.f32 %v8682, %v8683
    %v8685 = vsel %vm3962, %v8564, 0.0
    %v8686 = vadd.f32 %v8684, %v8685
    %v8687 = vsel %vm3962, %v8565, 0.0
    %v8688 = vadd.f32 %v8686, %v8687
    %v8689 = vsel %vm3962, %v8566, 0.0
    %v8690 = vadd.f32 %v8688, %v8689
    %v8691 = vsel %vm3962, %v8567, 0.0
    %v8692 = vadd.f32 %v8690, %v8691
    %v8693 = vsel %vm3962, %v8568, 0.0
    %v8694 = vadd.f32 %v8692, %v8693
    %v8695 = vsel %vm3962, %v8569, 0.0
    %v8696 = vadd.f32 %v8694, %v8695
    %v8697 = vrot.slane %v8696, 4
    %v8698 = vadd.f32 %v8696, %v8697
    %v8699 = vrot.slane %v8698, 2
    %v8700 = vadd.f32 %v8698, %v8699
    %v8701 = vrot.slane %v8700, 1
    %v8702 = vadd.f32 %v8700, %v8701
    %v8703 = vmul.f32 %v8505, 0.001953125
    %v8704 = vmul.f32 %v8702, 0.001953125
    %v8705 = vmul.f32 %v8703, %v8703
    %v8706 = vsub.f32 %v8704, %v8705
    %v8707 = vadd.f32 %v8706, 1e-05
    %v8708 = vrsqrt.pop %v8707
    %v8709 = vmul.f32 %v8708, %v8707
    %v8710 = vmul.f32 %v8709, %v8708
    %v8711 = vmul.f32 0.5, %v8710
    %v8712 = vsub.f32 1.5, %v8711
    %v8713 = vmul.f32 %v8708, %v8712
    %vm8714 = vweird.f32 %v8707
    %vm8715 = vweird.f32 %v8708
    %vm8716 = vmor %vm8714, %vm8715
    %v8717 = vsel %vm8716, %v8708, %v8713
    %v8718 = vmul.f32 %v8371, %v8717
    %v8719 = vmul.f32 %v8703, %v8718
    %v8720 = vsub.f32 %v8372, %v8719
    %v8722 = vperm.slane %v8718, 0
    %v8724 = vmul.f32 %v8180, %v8722
    %v8725 = vmul.f32 %v8183, %v8722
    %v8726 = vmul.f32 %v8186, %v8722
    %v8727 = vmul.f32 %v8189, %v8722
    %v8728 = vmul.f32 %v8192, %v8722
    %v8729 = vmul.f32 %v8195, %v8722
    %v8730 = vmul.f32 %v8198, %v8722
    %v8731 = vmul.f32 %v8201, %v8722
    %v8732 = vmul.f32 %v8204, %v8722
    %v8733 = vmul.f32 %v8207, %v8722
    %v8734 = vmul.f32 %v8210, %v8722
    %v8735 = vmul.f32 %v8213, %v8722
    %v8736 = vmul.f32 %v8216, %v8722
    %v8737 = vmul.f32 %v8219, %v8722
    %v8738 = vmul.f32 %v8222, %v8722
    %v8739 = vmul.f32 %v8225, %v8722
    %v8740 = vmul.f32 %v8228, %v8722
    %v8741 = vmul.f32 %v8231, %v8722
    %v8742 = vmul.f32 %v8234, %v8722
    %v8743 = vmul.f32 %v8237, %v8722
    %v8744 = vmul.f32 %v8240, %v8722
    %v8745 = vmul.f32 %v8243, %v8722
    %v8746 = vmul.f32 %v8246, %v8722
    %v8747 = vmul.f32 %v8249, %v8722
    %v8748 = vmul.f32 %v8252, %v8722
    %v8749 = vmul.f32 %v8255, %v8722
    %v8750 = vmul.f32 %v8258, %v8722
    %v8751 = vmul.f32 %v8261, %v8722
    %v8752 = vmul.f32 %v8264, %v8722
    %v8753 = vmul.f32 %v8267, %v8722
    %v8754 = vmul.f32 %v8270, %v8722
    %v8755 = vmul.f32 %v8273, %v8722
    %v8756 = vmul.f32 %v8276, %v8722
    %v8757 = vmul.f32 %v8279, %v8722
    %v8758 = vmul.f32 %v8282, %v8722
    %v8759 = vmul.f32 %v8285, %v8722
    %v8760 = vmul.f32 %v8288, %v8722
    %v8761 = vmul.f32 %v8291, %v8722
    %v8762 = vmul.f32 %v8294, %v8722
    %v8763 = vmul.f32 %v8297, %v8722
    %v8764 = vmul.f32 %v8300, %v8722
    %v8765 = vmul.f32 %v8303, %v8722
    %v8766 = vmul.f32 %v8306, %v8722
    %v8767 = vmul.f32 %v8309, %v8722
    %v8768 = vmul.f32 %v8312, %v8722
    %v8769 = vmul.f32 %v8315, %v8722
    %v8770 = vmul.f32 %v8318, %v8722
    %v8771 = vmul.f32 %v8321, %v8722
    %v8772 = vmul.f32 %v8324, %v8722
    %v8773 = vmul.f32 %v8327, %v8722
    %v8774 = vmul.f32 %v8330, %v8722
    %v8775 = vmul.f32 %v8333, %v8722
    %v8776 = vmul.f32 %v8336, %v8722
    %v8777 = vmul.f32 %v8339, %v8722
    %v8778 = vmul.f32 %v8342, %v8722
    %v8779 = vmul.f32 %v8345, %v8722
    %v8780 = vmul.f32 %v8348, %v8722
    %v8781 = vmul.f32 %v8351, %v8722
    %v8782 = vmul.f32 %v8354, %v8722
    %v8783 = vmul.f32 %v8357, %v8722
    %v8784 = vmul.f32 %v8360, %v8722
    %v8785 = vmul.f32 %v8363, %v8722
    %v8786 = vmul.f32 %v8366, %v8722
    %v8787 = vmul.f32 %v8369, %v8722
    %v8789 = vperm.slane %v8720, 0
    %v8791 = vadd.f32 %v8724, %v8789
    %v8792 = vadd.f32 %v8725, %v8789
    %v8793 = vadd.f32 %v8726, %v8789
    %v8794 = vadd.f32 %v8727, %v8789
    %v8795 = vadd.f32 %v8728, %v8789
    %v8796 = vadd.f32 %v8729, %v8789
    %v8797 = vadd.f32 %v8730, %v8789
    %v8798 = vadd.f32 %v8731, %v8789
    %v8799 = vadd.f32 %v8732, %v8789
    %v8800 = vadd.f32 %v8733, %v8789
    %v8801 = vadd.f32 %v8734, %v8789
    %v8802 = vadd.f32 %v8735, %v8789
    %v8803 = vadd.f32 %v8736, %v8789
    %v8804 = vadd.f32 %v8737, %v8789
    %v8805 = vadd.f32 %v8738, %v8789
    %v8806 = vadd.f32 %v8739, %v8789
    %v8807 = vadd.f32 %v8740, %v8789
    %v8808 = vadd.f32 %v8741, %v8789
    %v8809 = vadd.f32 %v8742, %v8789
    %v8810 = vadd.f32 %v8743, %v8789
    %v8811 = vadd.f32 %v8744, %v8789
    %v8812 = vadd.f32 %v8745, %v8789
    %v8813 = vadd.f32 %v8746, %v8789
    %v8814 = vadd.f32 %v8747, %v8789
    %v8815 = vadd.f32 %v8748, %v8789
    %v8816 = vadd.f32 %v8749, %v8789
    %v8817 = vadd.f32 %v8750, %v8789
    %v8818 = vadd.f32 %v8751, %v8789
    %v8819 = vadd.f32 %v8752, %v8789
    %v8820 = vadd.f32 %v8753, %v8789
    %v8821 = vadd.f32 %v8754, %v8789
    %v8822 = vadd.f32 %v8755, %v8789
    %v8823 = vadd.f32 %v8756, %v8789
    %v8824 = vadd.f32 %v8757, %v8789
    %v8825 = vadd.f32 %v8758, %v8789
    %v8826 = vadd.f32 %v8759, %v8789
    %v8827 = vadd.f32 %v8760, %v8789
    %v8828 = vadd.f32 %v8761, %v8789
    %v8829 = vadd.f32 %v8762, %v8789
    %v8830 = vadd.f32 %v8763, %v8789
    %v8831 = vadd.f32 %v8764, %v8789
    %v8832 = vadd.f32 %v8765, %v8789
    %v8833 = vadd.f32 %v8766, %v8789
    %v8834 = vadd.f32 %v8767, %v8789
    %v8835 = vadd.f32 %v8768, %v8789
    %v8836 = vadd.f32 %v8769, %v8789
    %v8837 = vadd.f32 %v8770, %v8789
    %v8838 = vadd.f32 %v8771, %v8789
    %v8839 = vadd.f32 %v8772, %v8789
    %v8840 = vadd.f32 %v8773, %v8789
    %v8841 = vadd.f32 %v8774, %v8789
    %v8842 = vadd.f32 %v8775, %v8789
    %v8843 = vadd.f32 %v8776, %v8789
    %v8844 = vadd.f32 %v8777, %v8789
    %v8845 = vadd.f32 %v8778, %v8789
    %v8846 = vadd.f32 %v8779, %v8789
    %v8847 = vadd.f32 %v8780, %v8789
    %v8848 = vadd.f32 %v8781, %v8789
    %v8849 = vadd.f32 %v8782, %v8789
    %v8850 = vadd.f32 %v8783, %v8789
    %v8851 = vadd.f32 %v8784, %v8789
    %v8852 = vadd.f32 %v8785, %v8789
    %v8853 = vadd.f32 %v8786, %v8789
    %v8854 = vadd.f32 %v8787, %v8789
    %v8855 = vmax.f32 %v8791, 0.0
    %v8856 = vmax.f32 %v8792, 0.0
    %v8857 = vmax.f32 %v8793, 0.0
    %v8858 = vmax.f32 %v8794, 0.0
    %v8859 = vmax.f32 %v8795, 0.0
    %v8860 = vmax.f32 %v8796, 0.0
    %v8861 = vmax.f32 %v8797, 0.0
    %v8862 = vmax.f32 %v8798, 0.0
    %v8863 = vmax.f32 %v8799, 0.0
    %v8864 = vmax.f32 %v8800, 0.0
    %v8865 = vmax.f32 %v8801, 0.0
    %v8866 = vmax.f32 %v8802, 0.0
    %v8867 = vmax.f32 %v8803, 0.0
    %v8868 = vmax.f32 %v8804, 0.0
    %v8869 = vmax.f32 %v8805, 0.0
    %v8870 = vmax.f32 %v8806, 0.0
    %v8871 = vmax.f32 %v8807, 0.0
    %v8872 = vmax.f32 %v8808, 0.0
    %v8873 = vmax.f32 %v8809, 0.0
    %v8874 = vmax.f32 %v8810, 0.0
    %v8875 = vmax.f32 %v8811, 0.0
    %v8876 = vmax.f32 %v8812, 0.0
    %v8877 = vmax.f32 %v8813, 0.0
    %v8878 = vmax.f32 %v8814, 0.0
    %v8879 = vmax.f32 %v8815, 0.0
    %v8880 = vmax.f32 %v8816, 0.0
    %v8881 = vmax.f32 %v8817, 0.0
    %v8882 = vmax.f32 %v8818, 0.0
    %v8883 = vmax.f32 %v8819, 0.0
    %v8884 = vmax.f32 %v8820, 0.0
    %v8885 = vmax.f32 %v8821, 0.0
    %v8886 = vmax.f32 %v8822, 0.0
    %v8887 = vmax.f32 %v8823, 0.0
    %v8888 = vmax.f32 %v8824, 0.0
    %v8889 = vmax.f32 %v8825, 0.0
    %v8890 = vmax.f32 %v8826, 0.0
    %v8891 = vmax.f32 %v8827, 0.0
    %v8892 = vmax.f32 %v8828, 0.0
    %v8893 = vmax.f32 %v8829, 0.0
    %v8894 = vmax.f32 %v8830, 0.0
    %v8895 = vmax.f32 %v8831, 0.0
    %v8896 = vmax.f32 %v8832, 0.0
    %v8897 = vmax.f32 %v8833, 0.0
    %v8898 = vmax.f32 %v8834, 0.0
    %v8899 = vmax.f32 %v8835, 0.0
    %v8900 = vmax.f32 %v8836, 0.0
    %v8901 = vmax.f32 %v8837, 0.0
    %v8902 = vmax.f32 %v8838, 0.0
    %v8903 = vmax.f32 %v8839, 0.0
    %v8904 = vmax.f32 %v8840, 0.0
    %v8905 = vmax.f32 %v8841, 0.0
    %v8906 = vmax.f32 %v8842, 0.0
    %v8907 = vmax.f32 %v8843, 0.0
    %v8908 = vmax.f32 %v8844, 0.0
    %v8909 = vmax.f32 %v8845, 0.0
    %v8910 = vmax.f32 %v8846, 0.0
    %v8911 = vmax.f32 %v8847, 0.0
    %v8912 = vmax.f32 %v8848, 0.0
    %v8913 = vmax.f32 %v8849, 0.0
    %v8914 = vmax.f32 %v8850, 0.0
    %v8915 = vmax.f32 %v8851, 0.0
    %v8916 = vmax.f32 %v8852, 0.0
    %v8917 = vmax.f32 %v8853, 0.0
    %v8918 = vmax.f32 %v8854, 0.0
    %v8951 = vrot.slane %v8857, 7
    %vm8952 = vcmask 1041409
    %v8953 = vsel %vm8952, %v8951, %v8855
    %v8954 = vrot.slane %v8859, 6
    %vm8955 = vcmask 1042434
    %v8956 = vsel %vm8955, %v8954, %v8953
    %v8957 = vrot.slane %v8861, 5
    %vm8958 = vcmask 1043459
    %v8959 = vsel %vm8958, %v8957, %v8956
    %v8960 = vrot.slane %v8863, 4
    %vm8961 = vcmask 1044484
    %v8962 = vsel %vm8961, %v8960, %v8959
    %v8963 = vrot.slane %v8865, 3
    %vm8964 = vcmask 1045509
    %v8965 = vsel %vm8964, %v8963, %v8962
    %v8966 = vrot.slane %v8867, 2
    %vm8967 = vcmask 1046534
    %v8968 = vsel %vm8967, %v8966, %v8965
    %v8969 = vrot.slane %v8869, 1
    %vm8970 = vcmask 1047559
    %v8971 = vsel %vm8970, %v8969, %v8968
    %v8972 = vrot.slane %v8873, 7
    %v8973 = vsel %vm8952, %v8972, %v8871
    %v8974 = vrot.slane %v8875, 6
    %v8975 = vsel %vm8955, %v8974, %v8973
    %v8976 = vrot.slane %v8877, 5
    %v8977 = vsel %vm8958, %v8976, %v8975
    %v8978 = vrot.slane %v8879, 4
    %v8979 = vsel %vm8961, %v8978, %v8977
    %v8980 = vrot.slane %v8881, 3
    %v8981 = vsel %vm8964, %v8980, %v8979
    %v8982 = vrot.slane %v8883, 2
    %v8983 = vsel %vm8967, %v8982, %v8981
    %v8984 = vrot.slane %v8885, 1
    %v8985 = vsel %vm8970, %v8984, %v8983
    %v8986 = vrot.slane %v8889, 7
    %v8987 = vsel %vm8952, %v8986, %v8887
    %v8988 = vrot.slane %v8891, 6
    %v8989 = vsel %vm8955, %v8988, %v8987
    %v8990 = vrot.slane %v8893, 5
    %v8991 = vsel %vm8958, %v8990, %v8989
    %v8992 = vrot.slane %v8895, 4
    %v8993 = vsel %vm8961, %v8992, %v8991
    %v8994 = vrot.slane %v8897, 3
    %v8995 = vsel %vm8964, %v8994, %v8993
    %v8996 = vrot.slane %v8899, 2
    %v8997 = vsel %vm8967, %v8996, %v8995
    %v8998 = vrot.slane %v8901, 1
    %v8999 = vsel %vm8970, %v8998, %v8997
    %v9000 = vrot.slane %v8905, 7
    %v9001 = vsel %vm8952, %v9000, %v8903
    %v9002 = vrot.slane %v8907, 6
    %v9003 = vsel %vm8955, %v9002, %v9001
    %v9004 = vrot.slane %v8909, 5
    %v9005 = vsel %vm8958, %v9004, %v9003
    %v9006 = vrot.slane %v8911, 4
    %v9007 = vsel %vm8961, %v9006, %v9005
    %v9008 = vrot.slane %v8913, 3
    %v9009 = vsel %vm8964, %v9008, %v9007
    %v9010 = vrot.slane %v8915, 2
    %v9011 = vsel %vm8967, %v9010, %v9009
    %v9012 = vrot.slane %v8917, 1
    %v9013 = vsel %vm8970, %v9012, %v9011
    %9018 = vst.msk [vmem:[#allocation6] sm:$0xff] %vm3962, %v8971
    %9019 = vst.msk [vmem:[#allocation6 + $0x8] sm:$0xff] %vm3962, %v8985
    %9020 = vst.msk [vmem:[#allocation6 + $0x10] sm:$0xff] %vm3962, %v8999
    %9021 = vst.msk [vmem:[#allocation6 + $0x18] sm:$0xff] %vm3962, %v9013
    %v9022 = vsel %vm8955, %v8951, %v8855
    %v9023 = vsel %vm8958, %v8954, %v9022
    %v9024 = vsel %vm8961, %v8957, %v9023
    %v9025 = vsel %vm8964, %v8960, %v9024
    %v9026 = vsel %vm8967, %v8963, %v9025
    %v9027 = vsel %vm8970, %v8966, %v9026
    %v9028 = vsel %vm8952, %v8871, %v8969
    %v9029 = vsel %vm8955, %v8972, %v9028
    %v9030 = vsel %vm8958, %v8974, %v9029
    %v9031 = vsel %vm8961, %v8976, %v9030
    %v9032 = vsel %vm8964, %v8978, %v9031
    %v9033 = vsel %vm8967, %v8980, %v9032
    %v9034 = vsel %vm8970, %v8982, %v9033
    %v9035 = vsel %vm8952, %v8887, %v8984
    %v9036 = vsel %vm8955, %v8986, %v9035
    %v9037 = vsel %vm8958, %v8988, %v9036
    %v9038 = vsel %vm8961, %v8990, %v9037
    %v9039 = vsel %vm8964, %v8992, %v9038
    %v9040 = vsel %vm8967, %v8994, %v9039
    %v9041 = vsel %vm8970, %v8996, %v9040
    %v9042 = vsel %vm8952, %v8903, %v8998
    %v9043 = vsel %vm8955, %v9000, %v9042
    %v9044 = vsel %vm8958, %v9002, %v9043
    %v9045 = vsel %vm8961, %v9004, %v9044
    %v9046 = vsel %vm8964, %v9006, %v9045
    %v9047 = vsel %vm8967, %v9008, %v9046
    %v9048 = vsel %vm8970, %v9010, %v9047
    %9049 = vrot.lane.b32.xlu0 %v9027, 8
    %v9050 = vpop.permute.xlu0 %9049
    %9051 = vrot.lane.b32.xlu0 %v9034, 8
    %v9052 = vpop.permute.xlu0 %9051
    %9053 = vrot.lane.b32.xlu0 %v9041, 8
    %v9054 = vpop.permute.xlu0 %9053
    %9055 = vrot.lane.b32.xlu0 %v9048, 8
    %v9056 = vpop.permute.xlu0 %9055
    %9057 = vrot.lane.b32.xlu0 %v9012, 8
    %v9058 = vpop.permute.xlu0 %9057
    %vm9064 = vcmask 130113
    %9065 = vst.msk [vmem:[#allocation6 - $0x1] sm:$0xfe] %vm9064, %v9050
    %9066 = vst.msk [vmem:[#allocation6 + $0x7] sm:$0xff] %vm5131, %v9052
    %9067 = vst.msk [vmem:[#allocation6 + $0xf] sm:$0xff] %vm5131, %v9054
    %9068 = vst.msk [vmem:[#allocation6 + $0x17] sm:$0xff] %vm5131, %v9056
    %vm9069 = vcmask 122944
    %9070 = vst.msk [vmem:[#allocation6 + $0x1f] sm:$0x1] %vm9069, %v9058
    %v9071 = vsel %vm8958, %v8951, %v8855
    %v9072 = vsel %vm8961, %v8954, %v9071
    %v9073 = vsel %vm8964, %v8957, %v9072
    %v9074 = vsel %vm8967, %v8960, %v9073
    %v9075 = vsel %vm8970, %v8963, %v9074
    %v9076 = vsel %vm8952, %v8969, %v8966
    %v9077 = vsel %vm8955, %v8871, %v9076
    %v9078 = vsel %vm8958, %v8972, %v9077
    %v9079 = vsel %vm8961, %v8974, %v9078
    %v9080 = vsel %vm8964, %v8976, %v9079
    %v9081 = vsel %vm8967, %v8978, %v9080
    %v9082 = vsel %vm8970, %v8980, %v9081
    %v9083 = vsel %vm8952, %v8984, %v8982
    %v9084 = vsel %vm8955, %v8887, %v9083
    %v9085 = vsel %vm8958, %v8986, %v9084
    %v9086 = vsel %vm8961, %v8988, %v9085
    %v9087 = vsel %vm8964, %v8990, %v9086
    %v9088 = vsel %vm8967, %v8992, %v9087
    %v9089 = vsel %vm8970, %v8994, %v9088
    %v9090 = vsel %vm8952, %v8998, %v8996
    %v9091 = vsel %vm8955, %v8903, %v9090
    %v9092 = vsel %vm8958, %v9000, %v9091
    %v9093 = vsel %vm8961, %v9002, %v9092
    %v9094 = vsel %vm8964, %v9004, %v9093
    %v9095 = vsel %vm8967, %v9006, %v9094
    %v9096 = vsel %vm8970, %v9008, %v9095
    %v9097 = vsel %vm8952, %v9012, %v9010
    %9098 = vrot.lane.b32.xlu0 %v9075, 16
    %v9099 = vpop.permute.xlu0 %9098
    %9100 = vrot.lane.b32.xlu0 %v9082, 16
    %v9101 = vpop.permute.xlu0 %9100
    %9102 = vrot.lane.b32.xlu0 %v9089, 16
    %v9103 = vpop.permute.xlu0 %9102
    %9104 = vrot.lane.b32.xlu0 %v9096, 16
    %v9105 = vpop.permute.xlu0 %9104
    %9106 = vrot.lane.b32.xlu0 %v9097, 16
    %v9107 = vpop.permute.xlu0 %9106
    %vm9113 = vcmask 195714
    %9114 = vst.msk [vmem:[#allocation6 - $0x2] sm:$0xfc] %vm9113, %v9099
    %9115 = vst.msk [vmem:[#allocation6 + $0x6] sm:$0xff] %vm5516, %v9101
    %9116 = vst.msk [vmem:[#allocation6 + $0xe] sm:$0xff] %vm5516, %v9103
    %9117 = vst.msk [vmem:[#allocation6 + $0x16] sm:$0xff] %vm5516, %v9105
    %vm9118 = vcmask 189568
    %9119 = vst.msk [vmem:[#allocation6 + $0x1e] sm:$0x3] %vm9118, %v9107
    %v9120 = vsel %vm8961, %v8951, %v8855
    %v9121 = vsel %vm8964, %v8954, %v9120
    %v9122 = vsel %vm8967, %v8957, %v9121
    %v9123 = vsel %vm8970, %v8960, %v9122
    %v9124 = vsel %vm8952, %v8966, %v8963
    %v9125 = vsel %vm8955, %v8969, %v9124
    %v9126 = vsel %vm8958, %v8871, %v9125
    %v9127 = vsel %vm8961, %v8972, %v9126
    %v9128 = vsel %vm8964, %v8974, %v9127
    %v9129 = vsel %vm8967, %v8976, %v9128
    %v9130 = vsel %vm8970, %v8978, %v9129
    %v9131 = vsel %vm8952, %v8982, %v8980
    %v9132 = vsel %vm8955, %v8984, %v9131
    %v9133 = vsel %vm8958, %v8887, %v9132
    %v9134 = vsel %vm8961, %v8986, %v9133
    %v9135 = vsel %vm8964, %v8988, %v9134
    %v9136 = vsel %vm8967, %v8990, %v9135
    %v9137 = vsel %vm8970, %v8992, %v9136
    %v9138 = vsel %vm8952, %v8996, %v8994
    %v9139 = vsel %vm8955, %v8998, %v9138
    %v9140 = vsel %vm8958, %v8903, %v9139
    %v9141 = vsel %vm8961, %v9000, %v9140
    %v9142 = vsel %vm8964, %v9002, %v9141
    %v9143 = vsel %vm8967, %v9004, %v9142
    %v9144 = vsel %vm8970, %v9006, %v9143
    %v9145 = vsel %vm8952, %v9010, %v9008
    %v9146 = vsel %vm8955, %v9012, %v9145
    %9147 = vrot.lane.b32.xlu0 %v9123, 24
    %v9148 = vpop.permute.xlu0 %9147
    %9149 = vrot.lane.b32.xlu0 %v9130, 24
    %v9150 = vpop.permute.xlu0 %9149
    %9151 = vrot.lane.b32.xlu0 %v9137, 24
    %v9152 = vpop.permute.xlu0 %9151
    %9153 = vrot.lane.b32.xlu0 %v9144, 24
    %v9154 = vpop.permute.xlu0 %9153
    %9155 = vrot.lane.b32.xlu0 %v9146, 24
    %v9156 = vpop.permute.xlu0 %9155
    %vm9162 = vcmask 261315
    %9163 = vst.msk [vmem:[#allocation6 - $0x3] sm:$0xf8] %vm9162, %v9148
    %9164 = vst.msk [vmem:[#allocation6 + $0x5] sm:$0xff] %vm5901, %v9150
    %9165 = vst.msk [vmem:[#allocation6 + $0xd] sm:$0xff] %vm5901, %v9152
    %9166 = vst.msk [vmem:[#allocation6 + $0x15] sm:$0xff] %vm5901, %v9154
    %vm9167 = vcmask 256192
    %9168 = vst.msk [vmem:[#allocation6 + $0x1d] sm:$0x7] %vm9167, %v9156
    %v9169 = vsel %vm8964, %v8951, %v8855
    %v9170 = vsel %vm8967, %v8954, %v9169
    %v9171 = vsel %vm8970, %v8957, %v9170
    %v9172 = vsel %vm8952, %v8963, %v8960
    %v9173 = vsel %vm8955, %v8966, %v9172
    %v9174 = vsel %vm8958, %v8969, %v9173
    %v9175 = vsel %vm8961, %v8871, %v9174
    %v9176 = vsel %vm8964, %v8972, %v9175
    %v9177 = vsel %vm8967, %v8974, %v9176
    %v9178 = vsel %vm8970, %v8976, %v9177
    %v9179 = vsel %vm8952, %v8980, %v8978
    %v9180 = vsel %vm8955, %v8982, %v9179
    %v9181 = vsel %vm8958, %v8984, %v9180
    %v9182 = vsel %vm8961, %v8887, %v9181
    %v9183 = vsel %vm8964, %v8986, %v9182
    %v9184 = vsel %vm8967, %v8988, %v9183
    %v9185 = vsel %vm8970, %v8990, %v9184
    %v9186 = vsel %vm8952, %v8994, %v8992
    %v9187 = vsel %vm8955, %v8996, %v9186
    %v9188 = vsel %vm8958, %v8998, %v9187
    %v9189 = vsel %vm8961, %v8903, %v9188
    %v9190 = vsel %vm8964, %v9000, %v9189
    %v9191 = vsel %vm8967, %v9002, %v9190
    %v9192 = vsel %vm8970, %v9004, %v9191
    %v9193 = vsel %vm8952, %v9008, %v9006
    %v9194 = vsel %vm8955, %v9010, %v9193
    %v9195 = vsel %vm8958, %v9012, %v9194
    %9196 = vrot.lane.b32.xlu0 %v9171, 32
    %v9197 = vpop.permute.xlu0 %9196
    %9198 = vrot.lane.b32.xlu0 %v9178, 32
    %v9199 = vpop.permute.xlu0 %9198
    %9200 = vrot.lane.b32.xlu0 %v9185, 32
    %v9201 = vpop.permute.xlu0 %9200
    %9202 = vrot.lane.b32.xlu0 %v9192, 32
    %v9203 = vpop.permute.xlu0 %9202
    %9204 = vrot.lane.b32.xlu0 %v9195, 32
    %v9205 = vpop.permute.xlu0 %9204
    %vm9211 = vcmask 326916
    %9212 = vst.msk [vmem:[#allocation6 - $0x4] sm:$0xf0] %vm9211, %v9197
    %9213 = vst.msk [vmem:[#allocation6 + $0x4] sm:$0xff] %vm6286, %v9199
    %9214 = vst.msk [vmem:[#allocation6 + $0xc] sm:$0xff] %vm6286, %v9201
    %9215 = vst.msk [vmem:[#allocation6 + $0x14] sm:$0xff] %vm6286, %v9203
    %vm9216 = vcmask 322816
    %9217 = vst.msk [vmem:[#allocation6 + $0x1c] sm:$0xf] %vm9216, %v9205
    %v9218 = vsel %vm8967, %v8951, %v8855
    %v9219 = vsel %vm8970, %v8954, %v9218
    %v9220 = vsel %vm8952, %v8960, %v8957
    %v9221 = vsel %vm8955, %v8963, %v9220
    %v9222 = vsel %vm8958, %v8966, %v9221
    %v9223 = vsel %vm8961, %v8969, %v9222
    %v9224 = vsel %vm8964, %v8871, %v9223
    %v9225 = vsel %vm8967, %v8972, %v9224
    %v9226 = vsel %vm8970, %v8974, %v9225
    %v9227 = vsel %vm8952, %v8978, %v8976
    %v9228 = vsel %vm8955, %v8980, %v9227
    %v9229 = vsel %vm8958, %v8982, %v9228
    %v9230 = vsel %vm8961, %v8984, %v9229
    %v9231 = vsel %vm8964, %v8887, %v9230
    %v9232 = vsel %vm8967, %v8986, %v9231
    %v9233 = vsel %vm8970, %v8988, %v9232
    %v9234 = vsel %vm8952, %v8992, %v8990
    %v9235 = vsel %vm8955, %v8994, %v9234
    %v9236 = vsel %vm8958, %v8996, %v9235
    %v9237 = vsel %vm8961, %v8998, %v9236
    %v9238 = vsel %vm8964, %v8903, %v9237
    %v9239 = vsel %vm8967, %v9000, %v9238
    %v9240 = vsel %vm8970, %v9002, %v9239
    %v9241 = vsel %vm8952, %v9006, %v9004
    %v9242 = vsel %vm8955, %v9008, %v9241
    %v9243 = vsel %vm8958, %v9010, %v9242
    %v9244 = vsel %vm8961, %v9012, %v9243
    %9245 = vrot.lane.b32.xlu0 %v9219, 40
    %v9246 = vpop.permute.xlu0 %9245
    %9247 = vrot.lane.b32.xlu0 %v9226, 40
    %v9248 = vpop.permute.xlu0 %9247
    %9249 = vrot.lane.b32.xlu0 %v9233, 40
    %v9250 = vpop.permute.xlu0 %9249
    %9251 = vrot.lane.b32.xlu0 %v9240, 40
    %v9252 = vpop.permute.xlu0 %9251
    %9253 = vrot.lane.b32.xlu0 %v9244, 40
    %v9254 = vpop.permute.xlu0 %9253
    %vm9260 = vcmask 392517
    %9261 = vst.msk [vmem:[#allocation6 - $0x5] sm:$0xe0] %vm9260, %v9246
    %9262 = vst.msk [vmem:[#allocation6 + $0x3] sm:$0xff] %vm6671, %v9248
    %9263 = vst.msk [vmem:[#allocation6 + $0xb] sm:$0xff] %vm6671, %v9250
    %9264 = vst.msk [vmem:[#allocation6 + $0x13] sm:$0xff] %vm6671, %v9252
    %vm9265 = vcmask 389440
    %9266 = vst.msk [vmem:[#allocation6 + $0x1b] sm:$0x1f] %vm9265, %v9254
    %v9267 = vsel %vm8970, %v8951, %v8855
    %v9268 = vsel %vm8952, %v8957, %v8954
    %v9269 = vsel %vm8955, %v8960, %v9268
    %v9270 = vsel %vm8958, %v8963, %v9269
    %v9271 = vsel %vm8961, %v8966, %v9270
    %v9272 = vsel %vm8964, %v8969, %v9271
    %v9273 = vsel %vm8967, %v8871, %v9272
    %v9274 = vsel %vm8970, %v8972, %v9273
    %v9275 = vsel %vm8952, %v8976, %v8974
    %v9276 = vsel %vm8955, %v8978, %v9275
    %v9277 = vsel %vm8958, %v8980, %v9276
    %v9278 = vsel %vm8961, %v8982, %v9277
    %v9279 = vsel %vm8964, %v8984, %v9278
    %v9280 = vsel %vm8967, %v8887, %v9279
    %v9281 = vsel %vm8970, %v8986, %v9280
    %v9282 = vsel %vm8952, %v8990, %v8988
    %v9283 = vsel %vm8955, %v8992, %v9282
    %v9284 = vsel %vm8958, %v8994, %v9283
    %v9285 = vsel %vm8961, %v8996, %v9284
    %v9286 = vsel %vm8964, %v8998, %v9285
    %v9287 = vsel %vm8967, %v8903, %v9286
    %v9288 = vsel %vm8970, %v9000, %v9287
    %v9289 = vsel %vm8952, %v9004, %v9002
    %v9290 = vsel %vm8955, %v9006, %v9289
    %v9291 = vsel %vm8958, %v9008, %v9290
    %v9292 = vsel %vm8961, %v9010, %v9291
    %v9293 = vsel %vm8964, %v9012, %v9292
    %9294 = vrot.lane.b32.xlu0 %v9267, 48
    %v9295 = vpop.permute.xlu0 %9294
    %9296 = vrot.lane.b32.xlu0 %v9274, 48
    %v9297 = vpop.permute.xlu0 %9296
    %9298 = vrot.lane.b32.xlu0 %v9281, 48
    %v9299 = vpop.permute.xlu0 %9298
    %9300 = vrot.lane.b32.xlu0 %v9288, 48
    %v9301 = vpop.permute.xlu0 %9300
    %9302 = vrot.lane.b32.xlu0 %v9293, 48
    %v9303 = vpop.permute.xlu0 %9302
    %vm9309 = vcmask 458118
    %9310 = vst.msk [vmem:[#allocation6 - $0x6] sm:$0xc0] %vm9309, %v9295
    %9311 = vst.msk [vmem:[#allocation6 + $0x2] sm:$0xff] %vm7057, %v9297
    %9312 = vst.msk [vmem:[#allocation6 + $0xa] sm:$0xff] %vm7057, %v9299
    %9313 = vst.msk [vmem:[#allocation6 + $0x12] sm:$0xff] %vm7057, %v9301
    %vm9314 = vcmask 456064
    %9315 = vst.msk [vmem:[#allocation6 + $0x1a] sm:$0x3f] %vm9314, %v9303
    %v9316 = vsel %vm8952, %v8954, %v8951
    %v9317 = vsel %vm8955, %v8957, %v9316
    %v9318 = vsel %vm8958, %v8960, %v9317
    %v9319 = vsel %vm8961, %v8963, %v9318
    %v9320 = vsel %vm8964, %v8966, %v9319
    %v9321 = vsel %vm8967, %v8969, %v9320
    %v9322 = vsel %vm8970, %v8871, %v9321
    %v9323 = vsel %vm8952, %v8974, %v8972
    %v9324 = vsel %vm8955, %v8976, %v9323
    %v9325 = vsel %vm8958, %v8978, %v9324
    %v9326 = vsel %vm8961, %v8980, %v9325
    %v9327 = vsel %vm8964, %v8982, %v9326
    %v9328 = vsel %vm8967, %v8984, %v9327
    %v9329 = vsel %vm8970, %v8887, %v9328
    %v9330 = vsel %vm8952, %v8988, %v8986
    %v9331 = vsel %vm8955, %v8990, %v9330
    %v9332 = vsel %vm8958, %v8992, %v9331
    %v9333 = vsel %vm8961, %v8994, %v9332
    %v9334 = vsel %vm8964, %v8996, %v9333
    %v9335 = vsel %vm8967, %v8998, %v9334
    %v9336 = vsel %vm8970, %v8903, %v9335
    %v9337 = vsel %vm8952, %v9002, %v9000
    %v9338 = vsel %vm8955, %v9004, %v9337
    %v9339 = vsel %vm8958, %v9006, %v9338
    %v9340 = vsel %vm8961, %v9008, %v9339
    %v9341 = vsel %vm8964, %v9010, %v9340
    %v9342 = vsel %vm8967, %v9012, %v9341
    %9343 = vrot.lane.b32.xlu0 %v8855, 56
    %v9344 = vpop.permute.xlu0 %9343
    %9345 = vrot.lane.b32.xlu0 %v9322, 56
    %v9346 = vpop.permute.xlu0 %9345
    %9347 = vrot.lane.b32.xlu0 %v9329, 56
    %v9348 = vpop.permute.xlu0 %9347
    %9349 = vrot.lane.b32.xlu0 %v9336, 56
    %v9350 = vpop.permute.xlu0 %9349
    %9351 = vrot.lane.b32.xlu0 %v9342, 56
    %v9352 = vpop.permute.xlu0 %9351
    %vm9358 = vcmask 523719
    %9359 = vst.msk [vmem:[#allocation6 - $0x7] sm:$0x80] %vm9358, %v9344
    %9360 = vst.msk [vmem:[#allocation6 + $0x1] sm:$0xff] %vm7442, %v9346
    %9361 = vst.msk [vmem:[#allocation6 + $0x9] sm:$0xff] %vm7442, %v9348
    %9362 = vst.msk [vmem:[#allocation6 + $0x11] sm:$0xff] %vm7442, %v9350
    %vm9363 = vcmask 522688
    %9364 = vst.msk [vmem:[#allocation6 + $0x19] sm:$0x7f] %vm9363, %v9352
    %v9397 = vrot.slane %v8858, 7
    %v9398 = vsel %vm8952, %v9397, %v8856
    %v9399 = vrot.slane %v8860, 6
    %v9400 = vsel %vm8955, %v9399, %v9398
    %v9401 = vrot.slane %v8862, 5
    %v9402 = vsel %vm8958, %v9401, %v9400
    %v9403 = vrot.slane %v8864, 4
    %v9404 = vsel %vm8961, %v9403, %v9402
    %v9405 = vrot.slane %v8866, 3
    %v9406 = vsel %vm8964, %v9405, %v9404
    %v9407 = vrot.slane %v8868, 2
    %v9408 = vsel %vm8967, %v9407, %v9406
    %v9409 = vrot.slane %v8870, 1
    %v9410 = vsel %vm8970, %v9409, %v9408
    %v9411 = vrot.slane %v8874, 7
    %v9412 = vsel %vm8952, %v9411, %v8872
    %v9413 = vrot.slane %v8876, 6
    %v9414 = vsel %vm8955, %v9413, %v9412
    %v9415 = vrot.slane %v8878, 5
    %v9416 = vsel %vm8958, %v9415, %v9414
    %v9417 = vrot.slane %v8880, 4
    %v9418 = vsel %vm8961, %v9417, %v9416
    %v9419 = vrot.slane %v8882, 3
    %v9420 = vsel %vm8964, %v9419, %v9418
    %v9421 = vrot.slane %v8884, 2
    %v9422 = vsel %vm8967, %v9421, %v9420
    %v9423 = vrot.slane %v8886, 1
    %v9424 = vsel %vm8970, %v9423, %v9422
    %v9425 = vrot.slane %v8890, 7
    %v9426 = vsel %vm8952, %v9425, %v8888
    %v9427 = vrot.slane %v8892, 6
    %v9428 = vsel %vm8955, %v9427, %v9426
    %v9429 = vrot.slane %v8894, 5
    %v9430 = vsel %vm8958, %v9429, %v9428
    %v9431 = vrot.slane %v8896, 4
    %v9432 = vsel %vm8961, %v9431, %v9430
    %v9433 = vrot.slane %v8898, 3
    %v9434 = vsel %vm8964, %v9433, %v9432
    %v9435 = vrot.slane %v8900, 2
    %v9436 = vsel %vm8967, %v9435, %v9434
    %v9437 = vrot.slane %v8902, 1
    %v9438 = vsel %vm8970, %v9437, %v9436
    %v9439 = vrot.slane %v8906, 7
    %v9440 = vsel %vm8952, %v9439, %v8904
    %v9441 = vrot.slane %v8908, 6
    %v9442 = vsel %vm8955, %v9441, %v9440
    %v9443 = vrot.slane %v8910, 5
    %v9444 = vsel %vm8958, %v9443, %v9442
    %v9445 = vrot.slane %v8912, 4
    %v9446 = vsel %vm8961, %v9445, %v9444
    %v9447 = vrot.slane %v8914, 3
    %v9448 = vsel %vm8964, %v9447, %v9446
    %v9449 = vrot.slane %v8916, 2
    %v9450 = vsel %vm8967, %v9449, %v9448
    %v9451 = vrot.slane %v8918, 1
    %v9452 = vsel %vm8970, %v9451, %v9450
    %9453 = vrot.lane.b32.xlu0 %v9410, 64
    %v9454 = vpop.permute.xlu0 %9453
    %9455 = vrot.lane.b32.xlu0 %v9424, 64
    %v9456 = vpop.permute.xlu0 %9455
    %9457 = vrot.lane.b32.xlu0 %v9438, 64
    %v9458 = vpop.permute.xlu0 %9457
    %9459 = vrot.lane.b32.xlu0 %v9452, 64
    %v9460 = vpop.permute.xlu0 %9459
    %9465 = vst.msk [vmem:[#allocation6] sm:$0xff] %vm7827, %v9454
    %9466 = vst.msk [vmem:[#allocation6 + $0x8] sm:$0xff] %vm7827, %v9456
    %9467 = vst.msk [vmem:[#allocation6 + $0x10] sm:$0xff] %vm7827, %v9458
    %9468 = vst.msk [vmem:[#allocation6 + $0x18] sm:$0xff] %vm7827, %v9460
    %v9469 = vsel %vm8955, %v9397, %v8856
    %v9470 = vsel %vm8958, %v9399, %v9469
    %v9471 = vsel %vm8961, %v9401, %v9470
    %v9472 = vsel %vm8964, %v9403, %v9471
    %v9473 = vsel %vm8967, %v9405, %v9472
    %v9474 = vsel %vm8970, %v9407, %v9473
    %v9475 = vsel %vm8952, %v8872, %v9409
    %v9476 = vsel %vm8955, %v9411, %v9475
    %v9477 = vsel %vm8958, %v9413, %v9476
    %v9478 = vsel %vm8961, %v9415, %v9477
    %v9479 = vsel %vm8964, %v9417, %v9478
    %v9480 = vsel %vm8967, %v9419, %v9479
    %v9481 = vsel %vm8970, %v9421, %v9480
    %v9482 = vsel %vm8952, %v8888, %v9423
    %v9483 = vsel %vm8955, %v9425, %v9482
    %v9484 = vsel %vm8958, %v9427, %v9483
    %v9485 = vsel %vm8961, %v9429, %v9484
    %v9486 = vsel %vm8964, %v9431, %v9485
    %v9487 = vsel %vm8967, %v9433, %v9486
    %v9488 = vsel %vm8970, %v9435, %v9487
    %v9489 = vsel %vm8952, %v8904, %v9437
    %v9490 = vsel %vm8955, %v9439, %v9489
    %v9491 = vsel %vm8958, %v9441, %v9490
    %v9492 = vsel %vm8961, %v9443, %v9491
    %v9493 = vsel %vm8964, %v9445, %v9492
    %v9494 = vsel %vm8967, %v9447, %v9493
    %v9495 = vsel %vm8970, %v9449, %v9494
    %9496 = vrot.lane.b32.xlu0 %v9474, 72
    %v9497 = vpop.permute.xlu0 %9496
    %9498 = vrot.lane.b32.xlu0 %v9481, 72
    %v9499 = vpop.permute.xlu0 %9498
    %9500 = vrot.lane.b32.xlu0 %v9488, 72
    %v9501 = vpop.permute.xlu0 %9500
    %9502 = vrot.lane.b32.xlu0 %v9495, 72
    %v9503 = vpop.permute.xlu0 %9502
    %9504 = vrot.lane.b32.xlu0 %v9451, 72
    %v9505 = vpop.permute.xlu0 %9504
    %vm9511 = vcmask 654913
    %9512 = vst.msk [vmem:[#allocation6 - $0x1] sm:$0xfe] %vm9511, %v9497
    %vm9513 = vcmask 654912
    %9514 = vst.msk [vmem:[#allocation6 + $0x7] sm:$0xff] %vm9513, %v9499
    %9515 = vst.msk [vmem:[#allocation6 + $0xf] sm:$0xff] %vm9513, %v9501
    %9516 = vst.msk [vmem:[#allocation6 + $0x17] sm:$0xff] %vm9513, %v9503
    %vm9517 = vcmask 647744
    %9518 = vst.msk [vmem:[#allocation6 + $0x1f] sm:$0x1] %vm9517, %v9505
    %v9519 = vsel %vm8958, %v9397, %v8856
    %v9520 = vsel %vm8961, %v9399, %v9519
    %v9521 = vsel %vm8964, %v9401, %v9520
    %v9522 = vsel %vm8967, %v9403, %v9521
    %v9523 = vsel %vm8970, %v9405, %v9522
    %v9524 = vsel %vm8952, %v9409, %v9407
    %v9525 = vsel %vm8955, %v8872, %v9524
    %v9526 = vsel %vm8958, %v9411, %v9525
    %v9527 = vsel %vm8961, %v9413, %v9526
    %v9528 = vsel %vm8964, %v9415, %v9527
    %v9529 = vsel %vm8967, %v9417, %v9528
    %v9530 = vsel %vm8970, %v9419, %v9529
    %v9531 = vsel %vm8952, %v9423, %v9421
    %v9532 = vsel %vm8955, %v8888, %v9531
    %v9533 = vsel %vm8958, %v9425, %v9532
    %v9534 = vsel %vm8961, %v9427, %v9533
    %v9535 = vsel %vm8964, %v9429, %v9534
    %v9536 = vsel %vm8967, %v9431, %v9535
    %v9537 = vsel %vm8970, %v9433, %v9536
    %v9538 = vsel %vm8952, %v9437, %v9435
    %v9539 = vsel %vm8955, %v8904, %v9538
    %v9540 = vsel %vm8958, %v9439, %v9539
    %v9541 = vsel %vm8961, %v9441, %v9540
    %v9542 = vsel %vm8964, %v9443, %v9541
    %v9543 = vsel %vm8967, %v9445, %v9542
    %v9544 = vsel %vm8970, %v9447, %v9543
    %v9545 = vsel %vm8952, %v9451, %v9449
    %9546 = vrot.lane.b32.xlu0 %v9523, 80
    %v9547 = vpop.permute.xlu0 %9546
    %9548 = vrot.lane.b32.xlu0 %v9530, 80
    %v9549 = vpop.permute.xlu0 %9548
    %9550 = vrot.lane.b32.xlu0 %v9537, 80
    %v9551 = vpop.permute.xlu0 %9550
    %9552 = vrot.lane.b32.xlu0 %v9544, 80
    %v9553 = vpop.permute.xlu0 %9552
    %9554 = vrot.lane.b32.xlu0 %v9545, 80
    %v9555 = vpop.permute.xlu0 %9554
    %vm9561 = vcmask 720514
    %9562 = vst.msk [vmem:[#allocation6 - $0x2] sm:$0xfc] %vm9561, %v9547
    %vm9563 = vcmask 720512
    %9564 = vst.msk [vmem:[#allocation6 + $0x6] sm:$0xff] %vm9563, %v9549
    %9565 = vst.msk [vmem:[#allocation6 + $0xe] sm:$0xff] %vm9563, %v9551
    %9566 = vst.msk [vmem:[#allocation6 + $0x16] sm:$0xff] %vm9563, %v9553
    %vm9567 = vcmask 714368
    %9568 = vst.msk [vmem:[#allocation6 + $0x1e] sm:$0x3] %vm9567, %v9555
    %v9569 = vsel %vm8961, %v9397, %v8856
    %v9570 = vsel %vm8964, %v9399, %v9569
    %v9571 = vsel %vm8967, %v9401, %v9570
    %v9572 = vsel %vm8970, %v9403, %v9571
    %v9573 = vsel %vm8952, %v9407, %v9405
    %v9574 = vsel %vm8955, %v9409, %v9573
    %v9575 = vsel %vm8958, %v8872, %v9574
    %v9576 = vsel %vm8961, %v9411, %v9575
    %v9577 = vsel %vm8964, %v9413, %v9576
    %v9578 = vsel %vm8967, %v9415, %v9577
    %v9579 = vsel %vm8970, %v9417, %v9578
    %v9580 = vsel %vm8952, %v9421, %v9419
    %v9581 = vsel %vm8955, %v9423, %v9580
    %v9582 = vsel %vm8958, %v8888, %v9581
    %v9583 = vsel %vm8961, %v9425, %v9582
    %v9584 = vsel %vm8964, %v9427, %v9583
    %v9585 = vsel %vm8967, %v9429, %v9584
    %v9586 = vsel %vm8970, %v9431, %v9585
    %v9587 = vsel %vm8952, %v9435, %v9433
    %v9588 = vsel %vm8955, %v9437, %v9587
    %v9589 = vsel %vm8958, %v8904, %v9588
    %v9590 = vsel %vm8961, %v9439, %v9589
    %v9591 = vsel %vm8964, %v9441, %v9590
    %v9592 = vsel %vm8967, %v9443, %v9591
    %v9593 = vsel %vm8970, %v9445, %v9592
    %v9594 = vsel %vm8952, %v9449, %v9447
    %v9595 = vsel %vm8955, %v9451, %v9594
    %9596 = vrot.lane.b32.xlu0 %v9572, 88
    %v9597 = vpop.permute.xlu0 %9596
    %9598 = vrot.lane.b32.xlu0 %v9579, 88
    %v9599 = vpop.permute.xlu0 %9598
    %9600 = vrot.lane.b32.xlu0 %v9586, 88
    %v9601 = vpop.permute.xlu0 %9600
    %9602 = vrot.lane.b32.xlu0 %v9593, 88
    %v9603 = vpop.permute.xlu0 %9602
    %9604 = vrot.lane.b32.xlu0 %v9595, 88
    %v9605 = vpop.permute.xlu0 %9604
    %vm9611 = vcmask 786115
    %9612 = vst.msk [vmem:[#allocation6 - $0x3] sm:$0xf8] %vm9611, %v9597
    %vm9613 = vcmask 786112
    %9614 = vst.msk [vmem:[#allocation6 + $0x5] sm:$0xff] %vm9613, %v9599
    %9615 = vst.msk [vmem:[#allocation6 + $0xd] sm:$0xff] %vm9613, %v9601
    %9616 = vst.msk [vmem:[#allocation6 + $0x15] sm:$0xff] %vm9613, %v9603
    %vm9617 = vcmask 780992
    %9618 = vst.msk [vmem:[#allocation6 + $0x1d] sm:$0x7] %vm9617, %v9605
    %v9619 = vsel %vm8964, %v9397, %v8856
    %v9620 = vsel %vm8967, %v9399, %v9619
    %v9621 = vsel %vm8970, %v9401, %v9620
    %v9622 = vsel %vm8952, %v9405, %v9403
    %v9623 = vsel %vm8955, %v9407, %v9622
    %v9624 = vsel %vm8958, %v9409, %v9623
    %v9625 = vsel %vm8961, %v8872, %v9624
    %v9626 = vsel %vm8964, %v9411, %v9625
    %v9627 = vsel %vm8967, %v9413, %v9626
    %v9628 = vsel %vm8970, %v9415, %v9627
    %v9629 = vsel %vm8952, %v9419, %v9417
    %v9630 = vsel %vm8955, %v9421, %v9629
    %v9631 = vsel %vm8958, %v9423, %v9630
    %v9632 = vsel %vm8961, %v8888, %v9631
    %v9633 = vsel %vm8964, %v9425, %v9632
    %v9634 = vsel %vm8967, %v9427, %v9633
    %v9635 = vsel %vm8970, %v9429, %v9634
    %v9636 = vsel %vm8952, %v9433, %v9431
    %v9637 = vsel %vm8955, %v9435, %v9636
    %v9638 = vsel %vm8958, %v9437, %v9637
    %v9639 = vsel %vm8961, %v8904, %v9638
    %v9640 = vsel %vm8964, %v9439, %v9639
    %v9641 = vsel %vm8967, %v9441, %v9640
    %v9642 = vsel %vm8970, %v9443, %v9641
    %v9643 = vsel %vm8952, %v9447, %v9445
    %v9644 = vsel %vm8955, %v9449, %v9643
    %v9645 = vsel %vm8958, %v9451, %v9644
    %9646 = vrot.lane.b32.xlu0 %v9621, 96
    %v9647 = vpop.permute.xlu0 %9646
    %9648 = vrot.lane.b32.xlu0 %v9628, 96
    %v9649 = vpop.permute.xlu0 %9648
    %9650 = vrot.lane.b32.xlu0 %v9635, 96
    %v9651 = vpop.permute.xlu0 %9650
    %9652 = vrot.lane.b32.xlu0 %v9642, 96
    %v9653 = vpop.permute.xlu0 %9652
    %9654 = vrot.lane.b32.xlu0 %v9645, 96
    %v9655 = vpop.permute.xlu0 %9654
    %vm9661 = vcmask 851716
    %9662 = vst.msk [vmem:[#allocation6 - $0x4] sm:$0xf0] %vm9661, %v9647
    %vm9663 = vcmask 851712
    %9664 = vst.msk [vmem:[#allocation6 + $0x4] sm:$0xff] %vm9663, %v9649
    %9665 = vst.msk [vmem:[#allocation6 + $0xc] sm:$0xff] %vm9663, %v9651
    %9666 = vst.msk [vmem:[#allocation6 + $0x14] sm:$0xff] %vm9663, %v9653
    %vm9667 = vcmask 847616
    %9668 = vst.msk [vmem:[#allocation6 + $0x1c] sm:$0xf] %vm9667, %v9655
    %v9669 = vsel %vm8967, %v9397, %v8856
    %v9670 = vsel %vm8970, %v9399, %v9669
    %v9671 = vsel %vm8952, %v9403, %v9401
    %v9672 = vsel %vm8955, %v9405, %v9671
    %v9673 = vsel %vm8958, %v9407, %v9672
    %v9674 = vsel %vm8961, %v9409, %v9673
    %v9675 = vsel %vm8964, %v8872, %v9674
    %v9676 = vsel %vm8967, %v9411, %v9675
    %v9677 = vsel %vm8970, %v9413, %v9676
    %v9678 = vsel %vm8952, %v9417, %v9415
    %v9679 = vsel %vm8955, %v9419, %v9678
    %v9680 = vsel %vm8958, %v9421, %v9679
    %v9681 = vsel %vm8961, %v9423, %v9680
    %v9682 = vsel %vm8964, %v8888, %v9681
    %v9683 = vsel %vm8967, %v9425, %v9682
    %v9684 = vsel %vm8970, %v9427, %v9683
    %v9685 = vsel %vm8952, %v9431, %v9429
    %v9686 = vsel %vm8955, %v9433, %v9685
    %v9687 = vsel %vm8958, %v9435, %v9686
    %v9688 = vsel %vm8961, %v9437, %v9687
    %v9689 = vsel %vm8964, %v8904, %v9688
    %v9690 = vsel %vm8967, %v9439, %v9689
    %v9691 = vsel %vm8970, %v9441, %v9690
    %v9692 = vsel %vm8952, %v9445, %v9443
    %v9693 = vsel %vm8955, %v9447, %v9692
    %v9694 = vsel %vm8958, %v9449, %v9693
    %v9695 = vsel %vm8961, %v9451, %v9694
    %9696 = vrot.lane.b32.xlu0 %v9670, 104
    %v9697 = vpop.permute.xlu0 %9696
    %9698 = vrot.lane.b32.xlu0 %v9677, 104
    %v9699 = vpop.permute.xlu0 %9698
    %9700 = vrot.lane.b32.xlu0 %v9684, 104
    %v9701 = vpop.permute.xlu0 %9700
    %9702 = vrot.lane.b32.xlu0 %v9691, 104
    %v9703 = vpop.permute.xlu0 %9702
    %9704 = vrot.lane.b32.xlu0 %v9695, 104
    %v9705 = vpop.permute.xlu0 %9704
    %vm9711 = vcmask 917317
    %9712 = vst.msk [vmem:[#allocation6 - $0x5] sm:$0xe0] %vm9711, %v9697
    %vm9713 = vcmask 917312
    %9714 = vst.msk [vmem:[#allocation6 + $0x3] sm:$0xff] %vm9713, %v9699
    %9715 = vst.msk [vmem:[#allocation6 + $0xb] sm:$0xff] %vm9713, %v9701
    %9716 = vst.msk [vmem:[#allocation6 + $0x13] sm:$0xff] %vm9713, %v9703
    %vm9717 = vcmask 914240
    %9718 = vst.msk [vmem:[#allocation6 + $0x1b] sm:$0x1f] %vm9717, %v9705
    %v9719 = vsel %vm8970, %v9397, %v8856
    %v9720 = vsel %vm8952, %v9401, %v9399
    %v9721 = vsel %vm8955, %v9403, %v9720
    %v9722 = vsel %vm8958, %v9405, %v9721
    %v9723 = vsel %vm8961, %v9407, %v9722
    %v9724 = vsel %vm8964, %v9409, %v9723
    %v9725 = vsel %vm8967, %v8872, %v9724
    %v9726 = vsel %vm8970, %v9411, %v9725
    %v9727 = vsel %vm8952, %v9415, %v9413
    %v9728 = vsel %vm8955, %v9417, %v9727
    %v9729 = vsel %vm8958, %v9419, %v9728
    %v9730 = vsel %vm8961, %v9421, %v9729
    %v9731 = vsel %vm8964, %v9423, %v9730
    %v9732 = vsel %vm8967, %v8888, %v9731
    %v9733 = vsel %vm8970, %v9425, %v9732
    %v9734 = vsel %vm8952, %v9429, %v9427
    %v9735 = vsel %vm8955, %v9431, %v9734
    %v9736 = vsel %vm8958, %v9433, %v9735
    %v9737 = vsel %vm8961, %v9435, %v9736
    %v9738 = vsel %vm8964, %v9437, %v9737
    %v9739 = vsel %vm8967, %v8904, %v9738
    %v9740 = vsel %vm8970, %v9439, %v9739
    %v9741 = vsel %vm8952, %v9443, %v9441
    %v9742 = vsel %vm8955, %v9445, %v9741
    %v9743 = vsel %vm8958, %v9447, %v9742
    %v9744 = vsel %vm8961, %v9449, %v9743
    %v9745 = vsel %vm8964, %v9451, %v9744
    %9746 = vrot.lane.b32.xlu0 %v9719, 112
    %v9747 = vpop.permute.xlu0 %9746
    %9748 = vrot.lane.b32.xlu0 %v9726, 112
    %v9749 = vpop.permute.xlu0 %9748
    %9750 = vrot.lane.b32.xlu0 %v9733, 112
    %v9751 = vpop.permute.xlu0 %9750
    %9752 = vrot.lane.b32.xlu0 %v9740, 112
    %v9753 = vpop.permute.xlu0 %9752
    %9754 = vrot.lane.b32.xlu0 %v9745, 112
    %v9755 = vpop.permute.xlu0 %9754
    %vm9761 = vcmask 982918
    %9762 = vst.msk [vmem:[#allocation6 - $0x6] sm:$0xc0] %vm9761, %v9747
    %vm9763 = vcmask 982912
    %9764 = vst.msk [vmem:[#allocation6 + $0x2] sm:$0xff] %vm9763, %v9749
    %9765 = vst.msk [vmem:[#allocation6 + $0xa] sm:$0xff] %vm9763, %v9751
    %9766 = vst.msk [vmem:[#allocation6 + $0x12] sm:$0xff] %vm9763, %v9753
    %vm9767 = vcmask 980864
    %9768 = vst.msk [vmem:[#allocation6 + $0x1a] sm:$0x3f] %vm9767, %v9755
    %v9769 = vsel %vm8952, %v9399, %v9397
    %v9770 = vsel %vm8955, %v9401, %v9769
    %v9771 = vsel %vm8958, %v9403, %v9770
    %v9772 = vsel %vm8961, %v9405, %v9771
    %v9773 = vsel %vm8964, %v9407, %v9772
    %v9774 = vsel %vm8967, %v9409, %v9773
    %v9775 = vsel %vm8970, %v8872, %v9774
    %v9776 = vsel %vm8952, %v9413, %v9411
    %v9777 = vsel %vm8955, %v9415, %v9776
    %v9778 = vsel %vm8958, %v9417, %v9777
    %v9779 = vsel %vm8961, %v9419, %v9778
    %v9780 = vsel %vm8964, %v9421, %v9779
    %v9781 = vsel %vm8967, %v9423, %v9780
    %v9782 = vsel %vm8970, %v8888, %v9781
    %v9783 = vsel %vm8952, %v9427, %v9425
    %v9784 = vsel %vm8955, %v9429, %v9783
    %v9785 = vsel %vm8958, %v9431, %v9784
    %v9786 = vsel %vm8961, %v9433, %v9785
    %v9787 = vsel %vm8964, %v9435, %v9786
    %v9788 = vsel %vm8967, %v9437, %v9787
    %v9789 = vsel %vm8970, %v8904, %v9788
    %v9790 = vsel %vm8952, %v9441, %v9439
    %v9791 = vsel %vm8955, %v9443, %v9790
    %v9792 = vsel %vm8958, %v9445, %v9791
    %v9793 = vsel %vm8961, %v9447, %v9792
    %v9794 = vsel %vm8964, %v9449, %v9793
    %v9795 = vsel %vm8967, %v9451, %v9794
    %9796 = vrot.lane.b32.xlu0 %v8856, 120
    %v9797 = vpop.permute.xlu0 %9796
    %9798 = vrot.lane.b32.xlu0 %v9775, 120
    %v9799 = vpop.permute.xlu0 %9798
    %9800 = vrot.lane.b32.xlu0 %v9782, 120
    %v9801 = vpop.permute.xlu0 %9800
    %9802 = vrot.lane.b32.xlu0 %v9789, 120
    %v9803 = vpop.permute.xlu0 %9802
    %9804 = vrot.lane.b32.xlu0 %v9795, 120
    %v9805 = vpop.permute.xlu0 %9804
    %vm9811 = vcmask 1048519
    %9812 = vst.msk [vmem:[#allocation6 - $0x7] sm:$0x80] %vm9811, %v9797
    %vm9813 = vcmask 1048512
    %9814 = vst.msk [vmem:[#allocation6 + $0x1] sm:$0xff] %vm9813, %v9799
    %9815 = vst.msk [vmem:[#allocation6 + $0x9] sm:$0xff] %vm9813, %v9801
    %9816 = vst.msk [vmem:[#allocation6 + $0x11] sm:$0xff] %vm9813, %v9803
    %vm9817 = vcmask 1047488
    %9818 = vst.msk [vmem:[#allocation6 + $0x19] sm:$0x7f] %vm9817, %v9805
    // Predicated region
    $region38: #{tpu_custom_call.1} parent=1 // pred_check
      _
    $region39: #{tpu_custom_call.1} parent=1 // pred_check_branch
      %9820 = sbr.rel (0) target = $region41
    $region40: #{tpu_custom_call.1} parent=1 // pred_region
      %9822 = vsyncadd [#allocation7], 0
      %s9823 = sshll.u32 [#allocation6], 4
      %s9824 = int_to_ptr.vmem [resolvable:$true] %s9823
      %s9825 = sshll.u32 %s9, 4
      %s9826 = int_to_ptr.hbm [resolvable:$true] %s9825
      %9831 = dma.vmem_to_hbm [thread:$0]  %s9824, 512, %s9826, [#allocation7], 128, 128, 8
    $region41: #{tpu_custom_call.1} parent=1 // pred_fallthru
      _
    // Predicated region
    $region42: #{tpu_custom_call.1} parent=1 // pred_check
      _
    $region43: #{tpu_custom_call.1} parent=1 // pred_check_branch
      %9833 = sbr.rel (0) target = $region45
    $region44: #{tpu_custom_call.1} parent=1 // pred_region
      %9835 = dma.done [#allocation7], 512
    $region45: #{tpu_custom_call.1} parent=1 // pred_fallthru
      _
    %9836 = vsyncpa [#allocation7], 1

</llo_original>
